<compile_context>
chip_gen: v7x
topology: tpu7x:2x2x1
jax: 0.10.0
libtpu: 0.0.40
codegen_flags: <defaults>
</compile_context>

<pallas_src>
import functools

import jax
import jax.numpy as jnp
from jax import lax
from jax.experimental import pallas as pl
from jax.experimental.pallas import tpu as pltpu


def _round_up(x, m):
    return (x + m - 1) // m * m


# -----------------------------------------------------------------------------
# Fused kernel
# -----------------------------------------------------------------------------
def _basic_block_kernel(x_ref, w1_ref, b1_ref, w2_ref, b2_ref, o_ref,
                        xh_ref, mid_ref, *, H, W, Cp):
    """One batch element per grid step.

    x_ref:   (1, H*W, Cp)       activation-layout input (also the residual)
    w1_ref:  (9*Cp, Cp)         im2col weights, BN1 scale folded in
    b1_ref:  (1, Cp) f32        BN1 bias
    w2_ref:  (9*Cp, Cp)         im2col weights, BN2 scale folded in
    b2_ref:  (1, Cp) f32        BN2 bias
    o_ref:   (1, H*W, Cp)       block output (lane-dense, reshape-free store)
    xh_ref:  (H+2, W+2, Cp)     VMEM scratch: input with zero spatial halo
    mid_ref: (H+2, W+2, Cp)     VMEM scratch: conv1 activation with zero halo
    """
    HW = H * W
    cdt = xh_ref.dtype  # MXU operand dtype (bf16 default; f32 path available)

    # --- zero ONLY the 1-px halo of both scratches.  The interiors are fully
    #     overwritten every grid step, so this is all the zeroing needed, and
    #     doing it per step (rather than once at program_id==0) stays correct
    #     if the "parallel" batch axis is split across TensorCores. -----------
    zrow = jnp.zeros((1, W + 2, Cp), cdt)
    zcol = jnp.zeros((H + 2, 1, Cp), cdt)
    for ref in (xh_ref, mid_ref):
        ref[0:1, :, :] = zrow
        ref[H + 1:H + 2, :, :] = zrow
        ref[:, 0:1, :] = zcol
        ref[:, W + 1:W + 2, :] = zcol

    # --- stage x (with zero halo) in VMEM; x itself is the residual identity.
    x = x_ref[0]                                            # (HW, Cp)
    xh_ref[1:1 + H, 1:1 + W, :] = x.reshape(H, W, Cp)

    def conv3x3(src_ref, w_ref):
        # Three row-grouped matmuls (K = 3*Cp each) accumulated in f32 instead
        # of one materialized (HW, 9*Cp) im2col buffer.  Taps are already in
        # the compute dtype (bf16 by default), so no full-tensor casts here.
        acc = None
        for kh in range(3):
            p = jnp.concatenate(
                [src_ref[kh:kh + H, kw:kw + W, :].reshape(HW, Cp)
                 for kw in range(3)], axis=-1)              # (HW, 3*Cp)
            part = jnp.dot(p, w_ref[3 * Cp * kh:3 * Cp * (kh + 1), :],
                           preferred_element_type=jnp.float32)
            acc = part if acc is None else acc + part
        return acc                                          # (HW, Cp) f32

    # ---- conv1 (BN1 scale pre-folded) + bias + ReLU -> VMEM scratch ---------
    y1 = jnp.maximum(conv3x3(xh_ref, w1_ref) + b1_ref[0, :], 0.0)
    mid_ref[1:1 + H, 1:1 + W, :] = y1.astype(cdt).reshape(H, W, Cp)

    # ---- conv2 (BN2 scale pre-folded) + bias + residual + ReLU (f32 math) ---
    y2 = conv3x3(mid_ref, w2_ref) + b2_ref[0, :] + x.astype(jnp.float32)
    o_ref[0] = jnp.maximum(y2, 0.0).astype(o_ref.dtype)


# -----------------------------------------------------------------------------
# Parameter / layout preparation (done once per block, outside the hot path)
# -----------------------------------------------------------------------------
def _fold_bn(gamma, beta, mean, var, eps=1e-5):
    scale = gamma / jnp.sqrt(var + eps)
    bias = beta - mean * scale
    return scale.astype(jnp.float32), bias.astype(jnp.float32)


def _prep_conv_weight(w_oihw, bn_scale, Cp, compute_dtype):
    """OIHW conv weight -> (9*Cp, Cp) im2col matrix with BN scale folded in."""
    Cout, Cin, KH, KW = w_oihw.shape
    w = jnp.transpose(w_oihw.astype(jnp.float32), (2, 3, 1, 0))    # -> HWIO
    w = w * bn_scale[None, None, None, :]                          # fold BN scale
    w = jnp.pad(w, ((0, 0), (0, 0), (0, Cp - Cin), (0, Cp - Cout)))
    return w.reshape(KH * KW * Cp, Cp).astype(compute_dtype)


def prepare_block_params(params, C, Cp, compute_dtype):
    s1, b1 = _fold_bn(params["bn1_gamma"], params["bn1_beta"],
                      params["bn1_mean"], params["bn1_var"])
    s2, b2 = _fold_bn(params["bn2_gamma"], params["bn2_beta"],
                      params["bn2_mean"], params["bn2_var"])
    w1 = _prep_conv_weight(params["conv1_w"], s1, Cp, compute_dtype)
    w2 = _prep_conv_weight(params["conv2_w"], s2, Cp, compute_dtype)
    b1 = jnp.pad(b1, (0, Cp - C)).reshape(1, Cp)
    b2 = jnp.pad(b2, (0, Cp - C)).reshape(1, Cp)
    return w1, b1, w2, b2


def _to_activation_layout(x_nchw, Cp, dtype):
    """NCHW f32 -> (N, H*W, Cp) channel-padded, lane-dense activation layout."""
    N, C, H, W = x_nchw.shape
    x = jnp.transpose(x_nchw, (0, 2, 3, 1))                        # NHWC
    x = jnp.pad(x, ((0, 0), (0, 0), (0, 0), (0, Cp - C)))
    return x.reshape(N, H * W, Cp).astype(dtype)


def _from_activation_layout(y_flat, C, H, W, out_dtype):
    N = y_flat.shape[0]
    y = y_flat.reshape(N, H, W, -1)[:, :, :, :C]
    return jnp.transpose(y, (0, 3, 1, 2)).astype(out_dtype)


# -----------------------------------------------------------------------------
# Core apply (activation layout in / activation layout out — chainable)
# -----------------------------------------------------------------------------
def basic_block_apply(x_act, w1, b1, w2, b2, *, H, W,
                      single_buffer_weights=True):
    N, HW, Cp = x_act.shape
    assert HW == H * W
    cdt = x_act.dtype
    kernel = functools.partial(_basic_block_kernel, H=H, W=W, Cp=Cp)

    def build(single_buf):
        def inv_spec(shape):
            # Grid-invariant operand: constant index_map; request single
            # buffering so weights are not double-buffered in VMEM.
            if single_buf:
                return pl.BlockSpec(shape, lambda n: (0,) * len(shape),
                                    pipeline_mode=pl.Buffered(1))
            return pl.BlockSpec(shape, lambda n: (0,) * len(shape))

        return pl.pallas_call(
            kernel,
            out_shape=jax.ShapeDtypeStruct((N, HW, Cp), cdt),
            grid_spec=pltpu.PrefetchScalarGridSpec(
                num_scalar_prefetch=0,
                grid=(N,),
                in_specs=[
                    pl.BlockSpec((1, HW, Cp), lambda n: (n, 0, 0)),
                    inv_spec((9 * Cp, Cp)),
                    inv_spec((1, Cp)),
                    inv_spec((9 * Cp, Cp)),
                    inv_spec((1, Cp)),
                ],
                out_specs=pl.BlockSpec((1, HW, Cp), lambda n: (n, 0, 0)),
                scratch_shapes=[pltpu.VMEM((H + 2, W + 2, Cp), cdt),
                                pltpu.VMEM((H + 2, W + 2, Cp), cdt)],
            ),
            compiler_params=pltpu.CompilerParams(
                dimension_semantics=("parallel",),
                vmem_limit_bytes=32 * 1024 * 1024),
        )

    if single_buffer_weights:
        try:
            return build(True)(x_act, w1, b1, w2, b2)
        except Exception:
            # Fallback if this JAX version rejects Buffered(1) pipeline_mode:
            # identical numerics, weights are just double-buffered.
            pass
    return build(False)(x_act, w1, b1, w2, b2)


# -----------------------------------------------------------------------------
# PyTorch-layout wrapper (boundary conversion only; a full ResNet would keep
# the (N, H*W, Cp) activation layout between blocks and skip these passes)
# -----------------------------------------------------------------------------
def basic_block_forward(x_nchw, params, *, compute_dtype=jnp.bfloat16,
                        single_buffer_weights=True):
    N, C, H, W = x_nchw.shape
    assert params["conv1_w"].shape[:2] == (C, C), "stride=1 block needs Cin==Cout"
    Cp = _round_up(C, 128)

    x_act = _to_activation_layout(x_nchw, Cp, compute_dtype)
    w1, b1, w2, b2 = prepare_block_params(params, C, Cp, compute_dtype)
    y_act = basic_block_apply(x_act, w1, b1, w2, b2, H=H, W=W,
                              single_buffer_weights=single_buffer_weights)
    return _from_activation_layout(y_act, C, H, W, jnp.float32)


# -----------------------------------------------------------------------------
# Pure-JAX reference (for correctness check)
# -----------------------------------------------------------------------------
def _ref_forward(x_nchw, params):
    x = x_nchw.astype(jnp.float32)

    def conv(v, w_oihw):
        return lax.conv_general_dilated(
            v, w_oihw.astype(jnp.float32), window_strides=(1, 1),
            padding=((1, 1), (1, 1)),
            dimension_numbers=("NCHW", "OIHW", "NCHW"))

    def bn(v, g, b, m, var, eps=1e-5):
        g, b, m, var = (a.reshape(1, -1, 1, 1) for a in (g, b, m, var))
        return (v - m) / jnp.sqrt(var + eps) * g + b

    out = conv(x, params["conv1_w"])
    out = bn(out, params["bn1_gamma"], params["bn1_beta"],
             params["bn1_mean"], params["bn1_var"])
    out = jnp.maximum(out, 0.0)
    out = conv(out, params["conv2_w"])
    out = bn(out, params["bn2_gamma"], params["bn2_beta"],
             params["bn2_mean"], params["bn2_var"])
    out = out + x
    return jnp.maximum(out, 0.0)


# -----------------------------------------------------------------------------
if __name__ == "__main__":
    N, C, H, W = 2, 4, 16, 16            # in_channels == out_channels, stride=1
    key = jax.random.PRNGKey(0)
    kx, k1, k2 = jax.random.split(key, 3)

    x = jax.random.normal(kx, (N, C, H, W), dtype=jnp.float32)

    params = {
        # conv weights, PyTorch OIHW layout, no bias
        "conv1_w": jax.random.normal(k1, (C, C, 3, 3), dtype=jnp.float32) * 0.1,
        "conv2_w": jax.random.normal(k2, (C, C, 3, 3), dtype=jnp.float32) * 0.1,
        # BatchNorm2d fresh-init parameters / running stats (eval mode)
        "bn1_gamma": jnp.ones((C,), jnp.float32),
        "bn1_beta":  jnp.zeros((C,), jnp.float32),
        "bn1_mean":  jnp.zeros((C,), jnp.float32),
        "bn1_var":   jnp.ones((C,), jnp.float32),
        "bn2_gamma": jnp.ones((C,), jnp.float32),
        "bn2_beta":  jnp.zeros((C,), jnp.float32),
        "bn2_mean":  jnp.zeros((C,), jnp.float32),
        "bn2_var":   jnp.ones((C,), jnp.float32),
    }

    ref = jax.block_until_ready(_ref_forward(x, params))

    # f32 operand path: tight tolerance vs the XLA reference.
    out_f32 = jax.block_until_ready(
        basic_block_forward(x, params, compute_dtype=jnp.float32))
    assert out_f32.shape == (N, C, H, W), out_f32.shape
    assert jnp.allclose(out_f32, ref, atol=1e-4, rtol=1e-4), (
        float(jnp.max(jnp.abs(out_f32 - ref))))

    # Default bf16 MXU-operand path (f32 accumulation): looser tolerance.
    out_bf16 = jax.block_until_ready(basic_block_forward(x, params))
    assert out_bf16.shape == (N, C, H, W), out_bf16.shape
    assert jnp.allclose(out_bf16, ref, atol=5e-2, rtol=5e-2), (
        float(jnp.max(jnp.abs(out_bf16 - ref))))

    print("KERNEL_OK")
</pallas_src>

<mosaic_0001>
module attributes {stable_mosaic.version = 11 : i64} {
  func.func @_basic_block_kernel(%arg0: i32, %arg1: memref<1x256x128xf32, #tpu.memory_space<vmem>>, %arg2: memref<1152x128xf32, #tpu.memory_space<vmem>>, %arg3: memref<1x128xf32, #tpu.memory_space<vmem>>, %arg4: memref<1152x128xf32, #tpu.memory_space<vmem>>, %arg5: memref<1x128xf32, #tpu.memory_space<vmem>>, %arg6: memref<1x256x128xf32, #tpu.memory_space<vmem>>, %arg7: memref<18x18x128xf32, #tpu.memory_space<vmem>>, %arg8: memref<18x18x128xf32, #tpu.memory_space<vmem>>) attributes {dimension_semantics = [#tpu.dimension_semantics<parallel>], iteration_bounds = array<i64: 2>, scalar_prefetch = 0 : i64, scratch_operands = 2 : i64, tpu.core_type = #tpu.core_type<tc>, window_params = [{transform_indices = @transform_0, window_bounds = array<i64: 1, 256, 128>}, {pipeline_mode = #tpu.pipeline_mode<synchronous>, transform_indices = @transform_1, window_bounds = array<i64: 1152, 128>}, {pipeline_mode = #tpu.pipeline_mode<synchronous>, transform_indices = @transform_2, window_bounds = array<i64: 1, 128>}, {pipeline_mode = #tpu.pipeline_mode<synchronous>, transform_indices = @transform_3, window_bounds = array<i64: 1152, 128>}, {pipeline_mode = #tpu.pipeline_mode<synchronous>, transform_indices = @transform_4, window_bounds = array<i64: 1, 128>}, {transform_indices = @transform_5, window_bounds = array<i64: 1, 256, 128>}]} {
    %cst = arith.constant 0.000000e+00 : f32
    %0 = vector.broadcast %cst : f32 to vector<1x18x128xf32>
    %cst_0 = arith.constant 0.000000e+00 : f32
    %1 = vector.broadcast %cst_0 : f32 to vector<18x1x128xf32>
    %c0 = arith.constant 0 : index
    %c0_1 = arith.constant 0 : index
    %c0_2 = arith.constant 0 : index
    %2 = vector.load %arg7[%c0, %c0_1, %c0_2] : memref<18x18x128xf32, #tpu.memory_space<vmem>>, vector<1x18x128xf32>
    tpu.vector_store %arg7[%c0, %c0_1, %c0_2], %0 {strides = array<i32>} : memref<18x18x128xf32, #tpu.memory_space<vmem>>, vector<1x18x128xf32>,
    %c17 = arith.constant 17 : index
    %c0_3 = arith.constant 0 : index
    %c0_4 = arith.constant 0 : index
    %3 = vector.load %arg7[%c17, %c0_3, %c0_4] : memref<18x18x128xf32, #tpu.memory_space<vmem>>, vector<1x18x128xf32>
    tpu.vector_store %arg7[%c17, %c0_3, %c0_4], %0 {strides = array<i32>} : memref<18x18x128xf32, #tpu.memory_space<vmem>>, vector<1x18x128xf32>,
    %c0_5 = arith.constant 0 : index
    %c0_6 = arith.constant 0 : index
    %c0_7 = arith.constant 0 : index
    %4 = vector.load %arg7[%c0_5, %c0_6, %c0_7] : memref<18x18x128xf32, #tpu.memory_space<vmem>>, vector<18x1x128xf32>
    tpu.vector_store %arg7[%c0_5, %c0_6, %c0_7], %1 {strides = array<i32>} : memref<18x18x128xf32, #tpu.memory_space<vmem>>, vector<18x1x128xf32>,
    %c0_8 = arith.constant 0 : index
    %c17_9 = arith.constant 17 : index
    %c0_10 = arith.constant 0 : index
    %5 = vector.load %arg7[%c0_8, %c17_9, %c0_10] : memref<18x18x128xf32, #tpu.memory_space<vmem>>, vector<18x1x128xf32>
    tpu.vector_store %arg7[%c0_8, %c17_9, %c0_10], %1 {strides = array<i32>} : memref<18x18x128xf32, #tpu.memory_space<vmem>>, vector<18x1x128xf32>,
    %c0_11 = arith.constant 0 : index
    %c0_12 = arith.constant 0 : index
    %c0_13 = arith.constant 0 : index
    %6 = vector.load %arg8[%c0_11, %c0_12, %c0_13] : memref<18x18x128xf32, #tpu.memory_space<vmem>>, vector<1x18x128xf32>
    tpu.vector_store %arg8[%c0_11, %c0_12, %c0_13], %0 {strides = array<i32>} : memref<18x18x128xf32, #tpu.memory_space<vmem>>, vector<1x18x128xf32>,
    %c17_14 = arith.constant 17 : index
    %c0_15 = arith.constant 0 : index
    %c0_16 = arith.constant 0 : index
    %7 = vector.load %arg8[%c17_14, %c0_15, %c0_16] : memref<18x18x128xf32, #tpu.memory_space<vmem>>, vector<1x18x128xf32>
    tpu.vector_store %arg8[%c17_14, %c0_15, %c0_16], %0 {strides = array<i32>} : memref<18x18x128xf32, #tpu.memory_space<vmem>>, vector<1x18x128xf32>,
    %c0_17 = arith.constant 0 : index
    %c0_18 = arith.constant 0 : index
    %c0_19 = arith.constant 0 : index
    %8 = vector.load %arg8[%c0_17, %c0_18, %c0_19] : memref<18x18x128xf32, #tpu.memory_space<vmem>>, vector<18x1x128xf32>
    tpu.vector_store %arg8[%c0_17, %c0_18, %c0_19], %1 {strides = array<i32>} : memref<18x18x128xf32, #tpu.memory_space<vmem>>, vector<18x1x128xf32>,
    %c0_20 = arith.constant 0 : index
    %c17_21 = arith.constant 17 : index
    %c0_22 = arith.constant 0 : index
    %9 = vector.load %arg8[%c0_20, %c17_21, %c0_22] : memref<18x18x128xf32, #tpu.memory_space<vmem>>, vector<18x1x128xf32>
    tpu.vector_store %arg8[%c0_20, %c17_21, %c0_22], %1 {strides = array<i32>} : memref<18x18x128xf32, #tpu.memory_space<vmem>>, vector<18x1x128xf32>,
    %c0_23 = arith.constant 0 : index
    %c0_24 = arith.constant 0 : index
    %c0_25 = arith.constant 0 : index
    %10 = vector.load %arg1[%c0_23, %c0_24, %c0_25] : memref<1x256x128xf32, #tpu.memory_space<vmem>>, vector<1x256x128xf32>
    %11 = vector.shape_cast %10 : vector<1x256x128xf32> to vector<256x128xf32>
    %12 = vector.shape_cast %11 : vector<256x128xf32> to vector<16x16x128xf32>
    %c1 = arith.constant 1 : index
    %c1_26 = arith.constant 1 : index
    %c0_27 = arith.constant 0 : index
    %13 = vector.load %arg7[%c1, %c1_26, %c0_27] : memref<18x18x128xf32, #tpu.memory_space<vmem>>, vector<16x16x128xf32>
    tpu.vector_store %arg7[%c1, %c1_26, %c0_27], %12 {strides = array<i32>} : memref<18x18x128xf32, #tpu.memory_space<vmem>>, vector<16x16x128xf32>,
    %c0_28 = arith.constant 0 : index
    %c0_29 = arith.constant 0 : index
    %c0_30 = arith.constant 0 : index
    %14 = vector.load %arg7[%c0_28, %c0_29, %c0_30] : memref<18x18x128xf32, #tpu.memory_space<vmem>>, vector<16x16x128xf32>
    %15 = vector.shape_cast %14 : vector<16x16x128xf32> to vector<256x128xf32>
    %c0_31 = arith.constant 0 : index
    %c1_32 = arith.constant 1 : index
    %c0_33 = arith.constant 0 : index
    %16 = vector.load %arg7[%c0_31, %c1_32, %c0_33] : memref<18x18x128xf32, #tpu.memory_space<vmem>>, vector<16x16x128xf32>
    %17 = vector.shape_cast %16 : vector<16x16x128xf32> to vector<256x128xf32>
    %c0_34 = arith.constant 0 : index
    %c2 = arith.constant 2 : index
    %c0_35 = arith.constant 0 : index
    %18 = vector.load %arg7[%c0_34, %c2, %c0_35] : memref<18x18x128xf32, #tpu.memory_space<vmem>>, vector<16x16x128xf32>
    %19 = vector.shape_cast %18 : vector<16x16x128xf32> to vector<256x128xf32>
    %20 = tpu.concatenate %15, %17, %19 in 1 : vector<256x128xf32>, vector<256x128xf32>, vector<256x128xf32> -> vector<256x384xf32>
    %c0_36 = arith.constant 0 : index
    %c0_37 = arith.constant 0 : index
    %21 = vector.load %arg2[%c0_36, %c0_37] : memref<1152x128xf32, #tpu.memory_space<vmem>>, vector<384x128xf32>
    %cst_38 = arith.constant dense<0.000000e+00> : vector<256x128xf32>
    %22 = tpu.matmul %20, %21, %cst_38 {dimension_numbers = #tpu.dot_dimension_numbers<[1], [0], [0], [1], [0, 0, 1, 1], [], []>} : vector<256x384xf32>, vector<384x128xf32>, vector<256x128xf32> -> vector<256x128xf32>
    %c1_39 = arith.constant 1 : index
    %c0_40 = arith.constant 0 : index
    %c0_41 = arith.constant 0 : index
    %23 = vector.load %arg7[%c1_39, %c0_40, %c0_41] : memref<18x18x128xf32, #tpu.memory_space<vmem>>, vector<16x16x128xf32>
    %24 = vector.shape_cast %23 : vector<16x16x128xf32> to vector<256x128xf32>
    %c1_42 = arith.constant 1 : index
    %c1_43 = arith.constant 1 : index
    %c0_44 = arith.constant 0 : index
    %25 = vector.load %arg7[%c1_42, %c1_43, %c0_44] : memref<18x18x128xf32, #tpu.memory_space<vmem>>, vector<16x16x128xf32>
    %26 = vector.shape_cast %25 : vector<16x16x128xf32> to vector<256x128xf32>
    %c1_45 = arith.constant 1 : index
    %c2_46 = arith.constant 2 : index
    %c0_47 = arith.constant 0 : index
    %27 = vector.load %arg7[%c1_45, %c2_46, %c0_47] : memref<18x18x128xf32, #tpu.memory_space<vmem>>, vector<16x16x128xf32>
    %28 = vector.shape_cast %27 : vector<16x16x128xf32> to vector<256x128xf32>
    %29 = tpu.concatenate %24, %26, %28 in 1 : vector<256x128xf32>, vector<256x128xf32>, vector<256x128xf32> -> vector<256x384xf32>
    %c384 = arith.constant 384 : index
    %c0_48 = arith.constant 0 : index
    %30 = vector.load %arg2[%c384, %c0_48] : memref<1152x128xf32, #tpu.memory_space<vmem>>, vector<384x128xf32>
    %cst_49 = arith.constant dense<0.000000e+00> : vector<256x128xf32>
    %31 = tpu.matmul %29, %30, %cst_49 {dimension_numbers = #tpu.dot_dimension_numbers<[1], [0], [0], [1], [0, 0, 1, 1], [], []>} : vector<256x384xf32>, vector<384x128xf32>, vector<256x128xf32> -> vector<256x128xf32>
    %32 = arith.addf %22, %31 : vector<256x128xf32>
    %c2_50 = arith.constant 2 : index
    %c0_51 = arith.constant 0 : index
    %c0_52 = arith.constant 0 : index
    %33 = vector.load %arg7[%c2_50, %c0_51, %c0_52] : memref<18x18x128xf32, #tpu.memory_space<vmem>>, vector<16x16x128xf32>
    %34 = vector.shape_cast %33 : vector<16x16x128xf32> to vector<256x128xf32>
    %c2_53 = arith.constant 2 : index
    %c1_54 = arith.constant 1 : index
    %c0_55 = arith.constant 0 : index
    %35 = vector.load %arg7[%c2_53, %c1_54, %c0_55] : memref<18x18x128xf32, #tpu.memory_space<vmem>>, vector<16x16x128xf32>
    %36 = vector.shape_cast %35 : vector<16x16x128xf32> to vector<256x128xf32>
    %c2_56 = arith.constant 2 : index
    %c2_57 = arith.constant 2 : index
    %c0_58 = arith.constant 0 : index
    %37 = vector.load %arg7[%c2_56, %c2_57, %c0_58] : memref<18x18x128xf32, #tpu.memory_space<vmem>>, vector<16x16x128xf32>
    %38 = vector.shape_cast %37 : vector<16x16x128xf32> to vector<256x128xf32>
    %39 = tpu.concatenate %34, %36, %38 in 1 : vector<256x128xf32>, vector<256x128xf32>, vector<256x128xf32> -> vector<256x384xf32>
    %c768 = arith.constant 768 : index
    %c0_59 = arith.constant 0 : index
    %40 = vector.load %arg2[%c768, %c0_59] : memref<1152x128xf32, #tpu.memory_space<vmem>>, vector<384x128xf32>
    %cst_60 = arith.constant dense<0.000000e+00> : vector<256x128xf32>
    %41 = tpu.matmul %39, %40, %cst_60 {dimension_numbers = #tpu.dot_dimension_numbers<[1], [0], [0], [1], [0, 0, 1, 1], [], []>} : vector<256x384xf32>, vector<384x128xf32>, vector<256x128xf32> -> vector<256x128xf32>
    %42 = arith.addf %32, %41 : vector<256x128xf32>
    %c0_61 = arith.constant 0 : index
    %c0_62 = arith.constant 0 : index
    %43 = vector.load %arg3[%c0_61, %c0_62] : memref<1x128xf32, #tpu.memory_space<vmem>>, vector<1x128xf32>
    %44 = vector.shape_cast %43 : vector<1x128xf32> to vector<128xf32>
    %45 = vector.shape_cast %44 : vector<128xf32> to vector<1x128xf32>
    %46 = vector.broadcast %45 : vector<1x128xf32> to vector<256x128xf32>
    %47 = arith.addf %42, %46 : vector<256x128xf32>
    %cst_63 = arith.constant 0.000000e+00 : f32
    %48 = vector.broadcast %cst_63 : f32 to vector<256x128xf32>
    %49 = arith.maximumf %47, %48 : vector<256x128xf32>
    %50 = vector.shape_cast %49 : vector<256x128xf32> to vector<16x16x128xf32>
    %c1_64 = arith.constant 1 : index
    %c1_65 = arith.constant 1 : index
    %c0_66 = arith.constant 0 : index
    %51 = vector.load %arg8[%c1_64, %c1_65, %c0_66] : memref<18x18x128xf32, #tpu.memory_space<vmem>>, vector<16x16x128xf32>
    tpu.vector_store %arg8[%c1_64, %c1_65, %c0_66], %50 {strides = array<i32>} : memref<18x18x128xf32, #tpu.memory_space<vmem>>, vector<16x16x128xf32>,
    %c0_67 = arith.constant 0 : index
    %c0_68 = arith.constant 0 : index
    %c0_69 = arith.constant 0 : index
    %52 = vector.load %arg8[%c0_67, %c0_68, %c0_69] : memref<18x18x128xf32, #tpu.memory_space<vmem>>, vector<16x16x128xf32>
    %53 = vector.shape_cast %52 : vector<16x16x128xf32> to vector<256x128xf32>
    %c0_70 = arith.constant 0 : index
    %c1_71 = arith.constant 1 : index
    %c0_72 = arith.constant 0 : index
    %54 = vector.load %arg8[%c0_70, %c1_71, %c0_72] : memref<18x18x128xf32, #tpu.memory_space<vmem>>, vector<16x16x128xf32>
    %55 = vector.shape_cast %54 : vector<16x16x128xf32> to vector<256x128xf32>
    %c0_73 = arith.constant 0 : index
    %c2_74 = arith.constant 2 : index
    %c0_75 = arith.constant 0 : index
    %56 = vector.load %arg8[%c0_73, %c2_74, %c0_75] : memref<18x18x128xf32, #tpu.memory_space<vmem>>, vector<16x16x128xf32>
    %57 = vector.shape_cast %56 : vector<16x16x128xf32> to vector<256x128xf32>
    %58 = tpu.concatenate %53, %55, %57 in 1 : vector<256x128xf32>, vector<256x128xf32>, vector<256x128xf32> -> vector<256x384xf32>
    %c0_76 = arith.constant 0 : index
    %c0_77 = arith.constant 0 : index
    %59 = vector.load %arg4[%c0_76, %c0_77] : memref<1152x128xf32, #tpu.memory_space<vmem>>, vector<384x128xf32>
    %cst_78 = arith.constant dense<0.000000e+00> : vector<256x128xf32>
    %60 = tpu.matmul %58, %59, %cst_78 {dimension_numbers = #tpu.dot_dimension_numbers<[1], [0], [0], [1], [0, 0, 1, 1], [], []>} : vector<256x384xf32>, vector<384x128xf32>, vector<256x128xf32> -> vector<256x128xf32>
    %c1_79 = arith.constant 1 : index
    %c0_80 = arith.constant 0 : index
    %c0_81 = arith.constant 0 : index
    %61 = vector.load %arg8[%c1_79, %c0_80, %c0_81] : memref<18x18x128xf32, #tpu.memory_space<vmem>>, vector<16x16x128xf32>
    %62 = vector.shape_cast %61 : vector<16x16x128xf32> to vector<256x128xf32>
    %c1_82 = arith.constant 1 : index
    %c1_83 = arith.constant 1 : index
    %c0_84 = arith.constant 0 : index
    %63 = vector.load %arg8[%c1_82, %c1_83, %c0_84] : memref<18x18x128xf32, #tpu.memory_space<vmem>>, vector<16x16x128xf32>
    %64 = vector.shape_cast %63 : vector<16x16x128xf32> to vector<256x128xf32>
    %c1_85 = arith.constant 1 : index
    %c2_86 = arith.constant 2 : index
    %c0_87 = arith.constant 0 : index
    %65 = vector.load %arg8[%c1_85, %c2_86, %c0_87] : memref<18x18x128xf32, #tpu.memory_space<vmem>>, vector<16x16x128xf32>
    %66 = vector.shape_cast %65 : vector<16x16x128xf32> to vector<256x128xf32>
    %67 = tpu.concatenate %62, %64, %66 in 1 : vector<256x128xf32>, vector<256x128xf32>, vector<256x128xf32> -> vector<256x384xf32>
    %c384_88 = arith.constant 384 : index
    %c0_89 = arith.constant 0 : index
    %68 = vector.load %arg4[%c384_88, %c0_89] : memref<1152x128xf32, #tpu.memory_space<vmem>>, vector<384x128xf32>
    %cst_90 = arith.constant dense<0.000000e+00> : vector<256x128xf32>
    %69 = tpu.matmul %67, %68, %cst_90 {dimension_numbers = #tpu.dot_dimension_numbers<[1], [0], [0], [1], [0, 0, 1, 1], [], []>} : vector<256x384xf32>, vector<384x128xf32>, vector<256x128xf32> -> vector<256x128xf32>
    %70 = arith.addf %60, %69 : vector<256x128xf32>
    %c2_91 = arith.constant 2 : index
    %c0_92 = arith.constant 0 : index
    %c0_93 = arith.constant 0 : index
    %71 = vector.load %arg8[%c2_91, %c0_92, %c0_93] : memref<18x18x128xf32, #tpu.memory_space<vmem>>, vector<16x16x128xf32>
    %72 = vector.shape_cast %71 : vector<16x16x128xf32> to vector<256x128xf32>
    %c2_94 = arith.constant 2 : index
    %c1_95 = arith.constant 1 : index
    %c0_96 = arith.constant 0 : index
    %73 = vector.load %arg8[%c2_94, %c1_95, %c0_96] : memref<18x18x128xf32, #tpu.memory_space<vmem>>, vector<16x16x128xf32>
    %74 = vector.shape_cast %73 : vector<16x16x128xf32> to vector<256x128xf32>
    %c2_97 = arith.constant 2 : index
    %c2_98 = arith.constant 2 : index
    %c0_99 = arith.constant 0 : index
    %75 = vector.load %arg8[%c2_97, %c2_98, %c0_99] : memref<18x18x128xf32, #tpu.memory_space<vmem>>, vector<16x16x128xf32>
    %76 = vector.shape_cast %75 : vector<16x16x128xf32> to vector<256x128xf32>
    %77 = tpu.concatenate %72, %74, %76 in 1 : vector<256x128xf32>, vector<256x128xf32>, vector<256x128xf32> -> vector<256x384xf32>
    %c768_100 = arith.constant 768 : index
    %c0_101 = arith.constant 0 : index
    %78 = vector.load %arg4[%c768_100, %c0_101] : memref<1152x128xf32, #tpu.memory_space<vmem>>, vector<384x128xf32>
    %cst_102 = arith.constant dense<0.000000e+00> : vector<256x128xf32>
    %79 = tpu.matmul %77, %78, %cst_102 {dimension_numbers = #tpu.dot_dimension_numbers<[1], [0], [0], [1], [0, 0, 1, 1], [], []>} : vector<256x384xf32>, vector<384x128xf32>, vector<256x128xf32> -> vector<256x128xf32>
    %80 = arith.addf %70, %79 : vector<256x128xf32>
    %c0_103 = arith.constant 0 : index
    %c0_104 = arith.constant 0 : index
    %81 = vector.load %arg5[%c0_103, %c0_104] : memref<1x128xf32, #tpu.memory_space<vmem>>, vector<1x128xf32>
    %82 = vector.shape_cast %81 : vector<1x128xf32> to vector<128xf32>
    %83 = vector.shape_cast %82 : vector<128xf32> to vector<1x128xf32>
    %84 = vector.broadcast %83 : vector<1x128xf32> to vector<256x128xf32>
    %85 = arith.addf %80, %84 : vector<256x128xf32>
    %86 = arith.addf %85, %11 : vector<256x128xf32>
    %cst_105 = arith.constant 0.000000e+00 : f32
    %87 = vector.broadcast %cst_105 : f32 to vector<256x128xf32>
    %88 = arith.maximumf %86, %87 : vector<256x128xf32>
    %c0_106 = arith.constant 0 : index
    %c0_107 = arith.constant 0 : index
    %c0_108 = arith.constant 0 : index
    %89 = vector.load %arg6[%c0_106, %c0_107, %c0_108] : memref<1x256x128xf32, #tpu.memory_space<vmem>>, vector<1x256x128xf32>
    %90 = vector.shape_cast %89 : vector<1x256x128xf32> to vector<256x128xf32>
    %91 = vector.shape_cast %88 : vector<256x128xf32> to vector<1x256x128xf32>
    tpu.vector_store %arg6[%c0_106, %c0_107, %c0_108], %91 {strides = array<i32>} : memref<1x256x128xf32, #tpu.memory_space<vmem>>, vector<1x256x128xf32>,
    return
  }
  func.func @transform_0(%arg0: i32) -> (i32, i32, i32) {
    %c0_i32 = arith.constant 0 : i32
    %c0_i32_0 = arith.constant 0 : i32
    %c0_i32_1 = arith.constant 0 : i32
    return %arg0, %c0_i32, %c0_i32_0 : i32, i32, i32
  }
  func.func @transform_1(%arg0: i32) -> (i32, i32) {
    %c0_i32 = arith.constant 0 : i32
    %c0_i32_0 = arith.constant 0 : i32
    %c0_i32_1 = arith.constant 0 : i32
    return %c0_i32, %c0_i32_0 : i32, i32
  }
  func.func @transform_2(%arg0: i32) -> (i32, i32) {
    %c0_i32 = arith.constant 0 : i32
    %c0_i32_0 = arith.constant 0 : i32
    %c0_i32_1 = arith.constant 0 : i32
    return %c0_i32, %c0_i32_0 : i32, i32
  }
  func.func @transform_3(%arg0: i32) -> (i32, i32) {
    %c0_i32 = arith.constant 0 : i32
    %c0_i32_0 = arith.constant 0 : i32
    %c0_i32_1 = arith.constant 0 : i32
    return %c0_i32, %c0_i32_0 : i32, i32
  }
  func.func @transform_4(%arg0: i32) -> (i32, i32) {
    %c0_i32 = arith.constant 0 : i32
    %c0_i32_0 = arith.constant 0 : i32
    %c0_i32_1 = arith.constant 0 : i32
    return %c0_i32, %c0_i32_0 : i32, i32
  }
  func.func @transform_5(%arg0: i32) -> (i32, i32, i32) {
    %c0_i32 = arith.constant 0 : i32
    %c0_i32_0 = arith.constant 0 : i32
    %c0_i32_1 = arith.constant 0 : i32
    return %arg0, %c0_i32, %c0_i32_0 : i32, i32, i32
  }
}

module attributes {stable_mosaic.version = 11 : i64} {
  func.func @_basic_block_kernel(%arg0: i32, %arg1: memref<1x256x128xf32, #tpu.memory_space<vmem>>, %arg2: memref<1152x128xf32, #tpu.memory_space<vmem>>, %arg3: memref<1x128xf32, #tpu.memory_space<vmem>>, %arg4: memref<1152x128xf32, #tpu.memory_space<vmem>>, %arg5: memref<1x128xf32, #tpu.memory_space<vmem>>, %arg6: memref<1x256x128xf32, #tpu.memory_space<vmem>>, %arg7: memref<18x18x128xf32, #tpu.memory_space<vmem>>, %arg8: memref<18x18x128xf32, #tpu.memory_space<vmem>>) attributes {dimension_semantics = [#tpu.dimension_semantics<parallel>], iteration_bounds = array<i64: 2>, scalar_prefetch = 0 : i64, scratch_operands = 2 : i64, tpu.core_type = #tpu.core_type<tc>, window_params = [{transform_indices = @transform_0, window_bounds = array<i64: 1, 256, 128>}, {pipeline_mode = #tpu.pipeline_mode<synchronous>, transform_indices = @transform_1, window_bounds = array<i64: 1152, 128>}, {pipeline_mode = #tpu.pipeline_mode<synchronous>, transform_indices = @transform_2, window_bounds = array<i64: 1, 128>}, {pipeline_mode = #tpu.pipeline_mode<synchronous>, transform_indices = @transform_3, window_bounds = array<i64: 1152, 128>}, {pipeline_mode = #tpu.pipeline_mode<synchronous>, transform_indices = @transform_4, window_bounds = array<i64: 1, 128>}, {transform_indices = @transform_5, window_bounds = array<i64: 1, 256, 128>}]} {
    %cst = arith.constant 0.000000e+00 : f32
    %0 = vector.broadcast %cst : f32 to vector<1x18x128xf32>
    %cst_0 = arith.constant 0.000000e+00 : f32
    %1 = vector.broadcast %cst_0 : f32 to vector<18x1x128xf32>
    %c0 = arith.constant 0 : index
    %c0_1 = arith.constant 0 : index
    %c0_2 = arith.constant 0 : index
    %2 = vector.load %arg7[%c0, %c0_1, %c0_2] : memref<18x18x128xf32, #tpu.memory_space<vmem>>, vector<1x18x128xf32>
    tpu.vector_store %arg7[%c0, %c0_1, %c0_2], %0 {strides = array<i32>} : memref<18x18x128xf32, #tpu.memory_space<vmem>>, vector<1x18x128xf32>,
    %c17 = arith.constant 17 : index
    %c0_3 = arith.constant 0 : index
    %c0_4 = arith.constant 0 : index
    %3 = vector.load %arg7[%c17, %c0_3, %c0_4] : memref<18x18x128xf32, #tpu.memory_space<vmem>>, vector<1x18x128xf32>
    tpu.vector_store %arg7[%c17, %c0_3, %c0_4], %0 {strides = array<i32>} : memref<18x18x128xf32, #tpu.memory_space<vmem>>, vector<1x18x128xf32>,
    %c0_5 = arith.constant 0 : index
    %c0_6 = arith.constant 0 : index
    %c0_7 = arith.constant 0 : index
    %4 = vector.load %arg7[%c0_5, %c0_6, %c0_7] : memref<18x18x128xf32, #tpu.memory_space<vmem>>, vector<18x1x128xf32>
    tpu.vector_store %arg7[%c0_5, %c0_6, %c0_7], %1 {strides = array<i32>} : memref<18x18x128xf32, #tpu.memory_space<vmem>>, vector<18x1x128xf32>,
    %c0_8 = arith.constant 0 : index
    %c17_9 = arith.constant 17 : index
    %c0_10 = arith.constant 0 : index
    %5 = vector.load %arg7[%c0_8, %c17_9, %c0_10] : memref<18x18x128xf32, #tpu.memory_space<vmem>>, vector<18x1x128xf32>
    tpu.vector_store %arg7[%c0_8, %c17_9, %c0_10], %1 {strides = array<i32>} : memref<18x18x128xf32, #tpu.memory_space<vmem>>, vector<18x1x128xf32>,
    %c0_11 = arith.constant 0 : index
    %c0_12 = arith.constant 0 : index
    %c0_13 = arith.constant 0 : index
    %6 = vector.load %arg8[%c0_11, %c0_12, %c0_13] : memref<18x18x128xf32, #tpu.memory_space<vmem>>, vector<1x18x128xf32>
    tpu.vector_store %arg8[%c0_11, %c0_12, %c0_13], %0 {strides = array<i32>} : memref<18x18x128xf32, #tpu.memory_space<vmem>>, vector<1x18x128xf32>,
    %c17_14 = arith.constant 17 : index
    %c0_15 = arith.constant 0 : index
    %c0_16 = arith.constant 0 : index
    %7 = vector.load %arg8[%c17_14, %c0_15, %c0_16] : memref<18x18x128xf32, #tpu.memory_space<vmem>>, vector<1x18x128xf32>
    tpu.vector_store %arg8[%c17_14, %c0_15, %c0_16], %0 {strides = array<i32>} : memref<18x18x128xf32, #tpu.memory_space<vmem>>, vector<1x18x128xf32>,
    %c0_17 = arith.constant 0 : index
    %c0_18 = arith.constant 0 : index
    %c0_19 = arith.constant 0 : index
    %8 = vector.load %arg8[%c0_17, %c0_18, %c0_19] : memref<18x18x128xf32, #tpu.memory_space<vmem>>, vector<18x1x128xf32>
    tpu.vector_store %arg8[%c0_17, %c0_18, %c0_19], %1 {strides = array<i32>} : memref<18x18x128xf32, #tpu.memory_space<vmem>>, vector<18x1x128xf32>,
    %c0_20 = arith.constant 0 : index
    %c17_21 = arith.constant 17 : index
    %c0_22 = arith.constant 0 : index
    %9 = vector.load %arg8[%c0_20, %c17_21, %c0_22] : memref<18x18x128xf32, #tpu.memory_space<vmem>>, vector<18x1x128xf32>
    tpu.vector_store %arg8[%c0_20, %c17_21, %c0_22], %1 {strides = array<i32>} : memref<18x18x128xf32, #tpu.memory_space<vmem>>, vector<18x1x128xf32>,
    %c0_23 = arith.constant 0 : index
    %c0_24 = arith.constant 0 : index
    %c0_25 = arith.constant 0 : index
    %10 = vector.load %arg1[%c0_23, %c0_24, %c0_25] : memref<1x256x128xf32, #tpu.memory_space<vmem>>, vector<1x256x128xf32>
    %11 = vector.shape_cast %10 : vector<1x256x128xf32> to vector<256x128xf32>
    %12 = vector.shape_cast %11 : vector<256x128xf32> to vector<16x16x128xf32>
    %c1 = arith.constant 1 : index
    %c1_26 = arith.constant 1 : index
    %c0_27 = arith.constant 0 : index
    %13 = vector.load %arg7[%c1, %c1_26, %c0_27] : memref<18x18x128xf32, #tpu.memory_space<vmem>>, vector<16x16x128xf32>
    tpu.vector_store %arg7[%c1, %c1_26, %c0_27], %12 {strides = array<i32>} : memref<18x18x128xf32, #tpu.memory_space<vmem>>, vector<16x16x128xf32>,
    %c0_28 = arith.constant 0 : index
    %c0_29 = arith.constant 0 : index
    %c0_30 = arith.constant 0 : index
    %14 = vector.load %arg7[%c0_28, %c0_29, %c0_30] : memref<18x18x128xf32, #tpu.memory_space<vmem>>, vector<16x16x128xf32>
    %15 = vector.shape_cast %14 : vector<16x16x128xf32> to vector<256x128xf32>
    %c0_31 = arith.constant 0 : index
    %c1_32 = arith.constant 1 : index
    %c0_33 = arith.constant 0 : index
    %16 = vector.load %arg7[%c0_31, %c1_32, %c0_33] : memref<18x18x128xf32, #tpu.memory_space<vmem>>, vector<16x16x128xf32>
    %17 = vector.shape_cast %16 : vector<16x16x128xf32> to vector<256x128xf32>
    %c0_34 = arith.constant 0 : index
    %c2 = arith.constant 2 : index
    %c0_35 = arith.constant 0 : index
    %18 = vector.load %arg7[%c0_34, %c2, %c0_35] : memref<18x18x128xf32, #tpu.memory_space<vmem>>, vector<16x16x128xf32>
    %19 = vector.shape_cast %18 : vector<16x16x128xf32> to vector<256x128xf32>
    %20 = tpu.concatenate %15, %17, %19 in 1 : vector<256x128xf32>, vector<256x128xf32>, vector<256x128xf32> -> vector<256x384xf32>
    %c0_36 = arith.constant 0 : index
    %c0_37 = arith.constant 0 : index
    %21 = vector.load %arg2[%c0_36, %c0_37] : memref<1152x128xf32, #tpu.memory_space<vmem>>, vector<384x128xf32>
    %cst_38 = arith.constant dense<0.000000e+00> : vector<256x128xf32>
    %22 = tpu.matmul %20, %21, %cst_38 {dimension_numbers = #tpu.dot_dimension_numbers<[1], [0], [0], [1], [0, 0, 1, 1], [], []>} : vector<256x384xf32>, vector<384x128xf32>, vector<256x128xf32> -> vector<256x128xf32>
    %c1_39 = arith.constant 1 : index
    %c0_40 = arith.constant 0 : index
    %c0_41 = arith.constant 0 : index
    %23 = vector.load %arg7[%c1_39, %c0_40, %c0_41] : memref<18x18x128xf32, #tpu.memory_space<vmem>>, vector<16x16x128xf32>
    %24 = vector.shape_cast %23 : vector<16x16x128xf32> to vector<256x128xf32>
    %c1_42 = arith.constant 1 : index
    %c1_43 = arith.constant 1 : index
    %c0_44 = arith.constant 0 : index
    %25 = vector.load %arg7[%c1_42, %c1_43, %c0_44] : memref<18x18x128xf32, #tpu.memory_space<vmem>>, vector<16x16x128xf32>
    %26 = vector.shape_cast %25 : vector<16x16x128xf32> to vector<256x128xf32>
    %c1_45 = arith.constant 1 : index
    %c2_46 = arith.constant 2 : index
    %c0_47 = arith.constant 0 : index
    %27 = vector.load %arg7[%c1_45, %c2_46, %c0_47] : memref<18x18x128xf32, #tpu.memory_space<vmem>>, vector<16x16x128xf32>
    %28 = vector.shape_cast %27 : vector<16x16x128xf32> to vector<256x128xf32>
    %29 = tpu.concatenate %24, %26, %28 in 1 : vector<256x128xf32>, vector<256x128xf32>, vector<256x128xf32> -> vector<256x384xf32>
    %c384 = arith.constant 384 : index
    %c0_48 = arith.constant 0 : index
    %30 = vector.load %arg2[%c384, %c0_48] : memref<1152x128xf32, #tpu.memory_space<vmem>>, vector<384x128xf32>
    %cst_49 = arith.constant dense<0.000000e+00> : vector<256x128xf32>
    %31 = tpu.matmul %29, %30, %cst_49 {dimension_numbers = #tpu.dot_dimension_numbers<[1], [0], [0], [1], [0, 0, 1, 1], [], []>} : vector<256x384xf32>, vector<384x128xf32>, vector<256x128xf32> -> vector<256x128xf32>
    %32 = arith.addf %22, %31 : vector<256x128xf32>
    %c2_50 = arith.constant 2 : index
    %c0_51 = arith.constant 0 : index
    %c0_52 = arith.constant 0 : index
    %33 = vector.load %arg7[%c2_50, %c0_51, %c0_52] : memref<18x18x128xf32, #tpu.memory_space<vmem>>, vector<16x16x128xf32>
    %34 = vector.shape_cast %33 : vector<16x16x128xf32> to vector<256x128xf32>
    %c2_53 = arith.constant 2 : index
    %c1_54 = arith.constant 1 : index
    %c0_55 = arith.constant 0 : index
    %35 = vector.load %arg7[%c2_53, %c1_54, %c0_55] : memref<18x18x128xf32, #tpu.memory_space<vmem>>, vector<16x16x128xf32>
    %36 = vector.shape_cast %35 : vector<16x16x128xf32> to vector<256x128xf32>
    %c2_56 = arith.constant 2 : index
    %c2_57 = arith.constant 2 : index
    %c0_58 = arith.constant 0 : index
    %37 = vector.load %arg7[%c2_56, %c2_57, %c0_58] : memref<18x18x128xf32, #tpu.memory_space<vmem>>, vector<16x16x128xf32>
    %38 = vector.shape_cast %37 : vector<16x16x128xf32> to vector<256x128xf32>
    %39 = tpu.concatenate %34, %36, %38 in 1 : vector<256x128xf32>, vector<256x128xf32>, vector<256x128xf32> -> vector<256x384xf32>
    %c768 = arith.constant 768 : index
    %c0_59 = arith.constant 0 : index
    %40 = vector.load %arg2[%c768, %c0_59] : memref<1152x128xf32, #tpu.memory_space<vmem>>, vector<384x128xf32>
    %cst_60 = arith.constant dense<0.000000e+00> : vector<256x128xf32>
    %41 = tpu.matmul %39, %40, %cst_60 {dimension_numbers = #tpu.dot_dimension_numbers<[1], [0], [0], [1], [0, 0, 1, 1], [], []>} : vector<256x384xf32>, vector<384x128xf32>, vector<256x128xf32> -> vector<256x128xf32>
    %42 = arith.addf %32, %41 : vector<256x128xf32>
    %c0_61 = arith.constant 0 : index
    %c0_62 = arith.constant 0 : index
    %43 = vector.load %arg3[%c0_61, %c0_62] : memref<1x128xf32, #tpu.memory_space<vmem>>, vector<1x128xf32>
    %44 = vector.shape_cast %43 : vector<1x128xf32> to vector<128xf32>
    %45 = vector.shape_cast %44 : vector<128xf32> to vector<1x128xf32>
    %46 = vector.broadcast %45 : vector<1x128xf32> to vector<256x128xf32>
    %47 = arith.addf %42, %46 : vector<256x128xf32>
    %cst_63 = arith.constant 0.000000e+00 : f32
    %48 = vector.broadcast %cst_63 : f32 to vector<256x128xf32>
    %49 = arith.maximumf %47, %48 : vector<256x128xf32>
    %50 = vector.shape_cast %49 : vector<256x128xf32> to vector<16x16x128xf32>
    %c1_64 = arith.constant 1 : index
    %c1_65 = arith.constant 1 : index
    %c0_66 = arith.constant 0 : index
    %51 = vector.load %arg8[%c1_64, %c1_65, %c0_66] : memref<18x18x128xf32, #tpu.memory_space<vmem>>, vector<16x16x128xf32>
    tpu.vector_store %arg8[%c1_64, %c1_65, %c0_66], %50 {strides = array<i32>} : memref<18x18x128xf32, #tpu.memory_space<vmem>>, vector<16x16x128xf32>,
    %c0_67 = arith.constant 0 : index
    %c0_68 = arith.constant 0 : index
    %c0_69 = arith.constant 0 : index
    %52 = vector.load %arg8[%c0_67, %c0_68, %c0_69] : memref<18x18x128xf32, #tpu.memory_space<vmem>>, vector<16x16x128xf32>
    %53 = vector.shape_cast %52 : vector<16x16x128xf32> to vector<256x128xf32>
    %c0_70 = arith.constant 0 : index
    %c1_71 = arith.constant 1 : index
    %c0_72 = arith.constant 0 : index
    %54 = vector.load %arg8[%c0_70, %c1_71, %c0_72] : memref<18x18x128xf32, #tpu.memory_space<vmem>>, vector<16x16x128xf32>
    %55 = vector.shape_cast %54 : vector<16x16x128xf32> to vector<256x128xf32>
    %c0_73 = arith.constant 0 : index
    %c2_74 = arith.constant 2 : index
    %c0_75 = arith.constant 0 : index
    %56 = vector.load %arg8[%c0_73, %c2_74, %c0_75] : memref<18x18x128xf32, #tpu.memory_space<vmem>>, vector<16x16x128xf32>
    %57 = vector.shape_cast %56 : vector<16x16x128xf32> to vector<256x128xf32>
    %58 = tpu.concatenate %53, %55, %57 in 1 : vector<256x128xf32>, vector<256x128xf32>, vector<256x128xf32> -> vector<256x384xf32>
    %c0_76 = arith.constant 0 : index
    %c0_77 = arith.constant 0 : index
    %59 = vector.load %arg4[%c0_76, %c0_77] : memref<1152x128xf32, #tpu.memory_space<vmem>>, vector<384x128xf32>
    %cst_78 = arith.constant dense<0.000000e+00> : vector<256x128xf32>
    %60 = tpu.matmul %58, %59, %cst_78 {dimension_numbers = #tpu.dot_dimension_numbers<[1], [0], [0], [1], [0, 0, 1, 1], [], []>} : vector<256x384xf32>, vector<384x128xf32>, vector<256x128xf32> -> vector<256x128xf32>
    %c1_79 = arith.constant 1 : index
    %c0_80 = arith.constant 0 : index
    %c0_81 = arith.constant 0 : index
    %61 = vector.load %arg8[%c1_79, %c0_80, %c0_81] : memref<18x18x128xf32, #tpu.memory_space<vmem>>, vector<16x16x128xf32>
    %62 = vector.shape_cast %61 : vector<16x16x128xf32> to vector<256x128xf32>
    %c1_82 = arith.constant 1 : index
    %c1_83 = arith.constant 1 : index
    %c0_84 = arith.constant 0 : index
    %63 = vector.load %arg8[%c1_82, %c1_83, %c0_84] : memref<18x18x128xf32, #tpu.memory_space<vmem>>, vector<16x16x128xf32>
    %64 = vector.shape_cast %63 : vector<16x16x128xf32> to vector<256x128xf32>
    %c1_85 = arith.constant 1 : index
    %c2_86 = arith.constant 2 : index
    %c0_87 = arith.constant 0 : index
    %65 = vector.load %arg8[%c1_85, %c2_86, %c0_87] : memref<18x18x128xf32, #tpu.memory_space<vmem>>, vector<16x16x128xf32>
    %66 = vector.shape_cast %65 : vector<16x16x128xf32> to vector<256x128xf32>
    %67 = tpu.concatenate %62, %64, %66 in 1 : vector<256x128xf32>, vector<256x128xf32>, vector<256x128xf32> -> vector<256x384xf32>
    %c384_88 = arith.constant 384 : index
    %c0_89 = arith.constant 0 : index
    %68 = vector.load %arg4[%c384_88, %c0_89] : memref<1152x128xf32, #tpu.memory_space<vmem>>, vector<384x128xf32>
    %cst_90 = arith.constant dense<0.000000e+00> : vector<256x128xf32>
    %69 = tpu.matmul %67, %68, %cst_90 {dimension_numbers = #tpu.dot_dimension_numbers<[1], [0], [0], [1], [0, 0, 1, 1], [], []>} : vector<256x384xf32>, vector<384x128xf32>, vector<256x128xf32> -> vector<256x128xf32>
    %70 = arith.addf %60, %69 : vector<256x128xf32>
    %c2_91 = arith.constant 2 : index
    %c0_92 = arith.constant 0 : index
    %c0_93 = arith.constant 0 : index
    %71 = vector.load %arg8[%c2_91, %c0_92, %c0_93] : memref<18x18x128xf32, #tpu.memory_space<vmem>>, vector<16x16x128xf32>
    %72 = vector.shape_cast %71 : vector<16x16x128xf32> to vector<256x128xf32>
    %c2_94 = arith.constant 2 : index
    %c1_95 = arith.constant 1 : index
    %c0_96 = arith.constant 0 : index
    %73 = vector.load %arg8[%c2_94, %c1_95, %c0_96] : memref<18x18x128xf32, #tpu.memory_space<vmem>>, vector<16x16x128xf32>
    %74 = vector.shape_cast %73 : vector<16x16x128xf32> to vector<256x128xf32>
    %c2_97 = arith.constant 2 : index
    %c2_98 = arith.constant 2 : index
    %c0_99 = arith.constant 0 : index
    %75 = vector.load %arg8[%c2_97, %c2_98, %c0_99] : memref<18x18x128xf32, #tpu.memory_space<vmem>>, vector<16x16x128xf32>
    %76 = vector.shape_cast %75 : vector<16x16x128xf32> to vector<256x128xf32>
    %77 = tpu.concatenate %72, %74, %76 in 1 : vector<256x128xf32>, vector<256x128xf32>, vector<256x128xf32> -> vector<256x384xf32>
    %c768_100 = arith.constant 768 : index
    %c0_101 = arith.constant 0 : index
    %78 = vector.load %arg4[%c768_100, %c0_101] : memref<1152x128xf32, #tpu.memory_space<vmem>>, vector<384x128xf32>
    %cst_102 = arith.constant dense<0.000000e+00> : vector<256x128xf32>
    %79 = tpu.matmul %77, %78, %cst_102 {dimension_numbers = #tpu.dot_dimension_numbers<[1], [0], [0], [1], [0, 0, 1, 1], [], []>} : vector<256x384xf32>, vector<384x128xf32>, vector<256x128xf32> -> vector<256x128xf32>
    %80 = arith.addf %70, %79 : vector<256x128xf32>
    %c0_103 = arith.constant 0 : index
    %c0_104 = arith.constant 0 : index
    %81 = vector.load %arg5[%c0_103, %c0_104] : memref<1x128xf32, #tpu.memory_space<vmem>>, vector<1x128xf32>
    %82 = vector.shape_cast %81 : vector<1x128xf32> to vector<128xf32>
    %83 = vector.shape_cast %82 : vector<128xf32> to vector<1x128xf32>
    %84 = vector.broadcast %83 : vector<1x128xf32> to vector<256x128xf32>
    %85 = arith.addf %80, %84 : vector<256x128xf32>
    %86 = arith.addf %85, %11 : vector<256x128xf32>
    %cst_105 = arith.constant 0.000000e+00 : f32
    %87 = vector.broadcast %cst_105 : f32 to vector<256x128xf32>
    %88 = arith.maximumf %86, %87 : vector<256x128xf32>
    %c0_106 = arith.constant 0 : index
    %c0_107 = arith.constant 0 : index
    %c0_108 = arith.constant 0 : index
    %89 = vector.load %arg6[%c0_106, %c0_107, %c0_108] : memref<1x256x128xf32, #tpu.memory_space<vmem>>, vector<1x256x128xf32>
    %90 = vector.shape_cast %89 : vector<1x256x128xf32> to vector<256x128xf32>
    %91 = vector.shape_cast %88 : vector<256x128xf32> to vector<1x256x128xf32>
    tpu.vector_store %arg6[%c0_106, %c0_107, %c0_108], %91 {strides = array<i32>} : memref<1x256x128xf32, #tpu.memory_space<vmem>>, vector<1x256x128xf32>,
    return
  }
  func.func @transform_0(%arg0: i32) -> (i32, i32, i32) {
    %c0_i32 = arith.constant 0 : i32
    %c0_i32_0 = arith.constant 0 : i32
    %c0_i32_1 = arith.constant 0 : i32
    return %arg0, %c0_i32, %c0_i32_0 : i32, i32, i32
  }
  func.func @transform_1(%arg0: i32) -> (i32, i32) {
    %c0_i32 = arith.constant 0 : i32
    %c0_i32_0 = arith.constant 0 : i32
    %c0_i32_1 = arith.constant 0 : i32
    return %c0_i32, %c0_i32_0 : i32, i32
  }
  func.func @transform_2(%arg0: i32) -> (i32, i32) {
    %c0_i32 = arith.constant 0 : i32
    %c0_i32_0 = arith.constant 0 : i32
    %c0_i32_1 = arith.constant 0 : i32
    return %c0_i32, %c0_i32_0 : i32, i32
  }
  func.func @transform_3(%arg0: i32) -> (i32, i32) {
    %c0_i32 = arith.constant 0 : i32
    %c0_i32_0 = arith.constant 0 : i32
    %c0_i32_1 = arith.constant 0 : i32
    return %c0_i32, %c0_i32_0 : i32, i32
  }
  func.func @transform_4(%arg0: i32) -> (i32, i32) {
    %c0_i32 = arith.constant 0 : i32
    %c0_i32_0 = arith.constant 0 : i32
    %c0_i32_1 = arith.constant 0 : i32
    return %c0_i32, %c0_i32_0 : i32, i32
  }
  func.func @transform_5(%arg0: i32) -> (i32, i32, i32) {
    %c0_i32 = arith.constant 0 : i32
    %c0_i32_0 = arith.constant 0 : i32
    %c0_i32_1 = arith.constant 0 : i32
    return %arg0, %c0_i32, %c0_i32_0 : i32, i32, i32
  }
}

</mosaic_0001>

<llo_original>
// kernel: tpu_custom_call.1
$region0: #{tpu_custom_call.1}
  #allocation0 [shape = 'u32[]', space=smem, size = 0x4, offset = 0x4, fixed_abs, tag = 'smem constant byte address 0x4 - core index']
  #allocation1 [shape = 'u32[144,128]{1,0:T(1,128)}', space=vmem, size = 0x12000, scoped, tag = 'internal scratch']
  #allocation2 [shape = 'f32[18,18,128]{2,1,0:T(8,128)}', space=vmem, size = 0x36000, scoped, tag = 'scratch operand']
  #allocation3 [shape = 'f32[18,18,128]{2,1,0:T(8,128)}', space=vmem, size = 0x36000, scoped, tag = 'scratch operand']
  %s0 = inlined_call_operand.hbm [shape: f32[2,256,128], index: 0, kind: input, shape index: {}]
  %s1 = inlined_call_operand.hbm [shape: f32[1152,128], index: 1, kind: input, shape index: {}]
  %s2 = inlined_call_operand.vmem [shape: f32[1,128], index: 2, kind: input, shape index: {}]
  %s3 = inlined_call_operand.hbm [shape: f32[1152,128], index: 3, kind: input, shape index: {}]
  %s4 = inlined_call_operand.vmem [shape: f32[1,128], index: 4, kind: input, shape index: {}]
  %s5 = inlined_call_operand.hbm [shape: f32[2,256,128], index: 5, kind: output, shape index: {}]
  %s6 = sld [smem:[#allocation0]]
  $region65: #{tpu_custom_call.1} parent=0
    _
  %s8 = ssub.s32 1, %s6
  %s9 = scalar_select 0, %s8, %s6
  $region1: #{tpu_custom_call.1} parent=0
    #allocation4 [shape = 'u8[262144]{0}', space=vmem, size = 0x40000, scoped, tag = 'input window, operand 0']
    #allocation5 [shape = 's32[2]{0}', space=sflag, size = 0x8, scoped, tag = 'scoped memory for tpu_custom_call.1']
    #allocation6 [shape = 's32[2]{0}', space=sflag, size = 0x8, scoped, tag = 'scoped memory for tpu_custom_call.1']
    #allocation7 [shape = 'u8[589824]{0}', space=vmem, size = 0x90000, scoped, tag = 'input window, operand 1, single buffered']
    #allocation8 [shape = 's32[1]{0}', space=sflag, size = 0x4, scoped, tag = 'scoped memory for tpu_custom_call.1']
    #allocation9 [shape = 'u8[589824]{0}', space=vmem, size = 0x90000, scoped, tag = 'input window, operand 3, single buffered']
    #allocation10 [shape = 'u8[262144]{0}', space=vmem, size = 0x40000, scoped, tag = 'output window, operand 0']
    %10 = vsyncpa [#allocation5], 0
    %s11 = scalar_lea.sflag [#allocation5], 1
    %12 = vsyncpa %s11, 0
    %13 = vsyncpa [#allocation8], 0
    %14 = vsyncpa [#allocation6], 0
    %s15 = scalar_lea.sflag [#allocation6], 1
    %16 = vsyncpa %s15, 0
    loop: start=0, step=1, limit=4
    $region2: #{tpu_custom_call.1} parent=1 // loop_pre_header
      _
    $region3: #{tpu_custom_call.1} parent=1 // loop_header
      %s18 = sphi 0, %s22
      %p19 = scmp.ge.s32.totalorder %s18, 4
      %s28 = sphi 0, %s30
      %s31 = sphi 0, %s28
      %s32 = sphi 0, %s31
      %s48 = sphi 0, %s32
      %s52 = sphi 0, %s52
      %s54 = sphi 0, %s52
      %s55 = sphi 0, %s54
      %s69 = sphi 0, %s55
      %s73 = sphi 0, %s73
      %s75 = sphi 0, %s73
      %s76 = sphi 0, %s75
      %s90 = sphi 0, %s76
      %s94 = sphi 0, %s94
      %s96 = sphi 0, %s94
      %s97 = sphi 0, %s96
      %s111 = sphi 0, %s97
      %s115 = sphi 0, %s115
      %s117 = sphi 0, %s115
      %s118 = sphi 0, %s117
      %s132 = sphi 0, %s118
      %s138 = sphi 0, %s140
      %s141 = sphi 0, %s138
      %s142 = sphi 0, %s141
      %s158 = sphi 0, %s142
    $region4: #{tpu_custom_call.1} parent=1 // loop_header_branch
      %21 = sbr.rel (%p19) target = $region8
    $region5: #{tpu_custom_call.1} parent=1 // loop_body
      %s23 = ssub.s32 %s18, 1
      %s24 = ssub.s32 %s18, 2
      %s25 = sadd.s32 %s18, 1
      %s26 = ssub.s32 %s18, %s25
      %p27 = scmp.eq.s32.totalorder %s26, 0
      %s29 = sadd.s32 %s28, 1
      %s30 = scalar_select %p27, %s28, %s29
      %p33 = pneg %p27
      %p34 = scmp.eq.s32.totalorder %s18, 1
      %p35 = por %p33, %p34
      %p36 = scmp.ne.s32.totalorder %s28, %s31
      %p37 = scmp.eq.s32.totalorder %s18, 0
      %p38 = por %p36, %p37
      %p39 = scmp.ne.s32.totalorder %s28, %s31
      %p40 = scmp.eq.s32.totalorder %s23, 1
      %p41 = por %p39, %p40
      %p42 = scmp.ne.s32.totalorder %s31, %s32
      %p43 = scmp.eq.s32.totalorder %s23, 0
      %p44 = por %p42, %p43
      %p45 = scmp.ne.s32.totalorder %s31, %s32
      %p46 = scmp.eq.s32.totalorder %s24, 1
      %p47 = por %p45, %p46
      %p49 = scmp.ne.s32.totalorder %s32, %s48
      %p50 = scmp.eq.s32.totalorder %s24, 0
      %p51 = por %p49, %p50
      %s53 = sadd.s32 %s52, 1
      %p56 = scmp.eq.s32.totalorder %s18, 1
      %p57 = scmp.ne.s32.totalorder %s52, %s54
      %p58 = scmp.eq.s32.totalorder %s18, 0
      %p59 = por %p57, %p58
      %p60 = scmp.ne.s32.totalorder %s52, %s54
      %p61 = scmp.eq.s32.totalorder %s23, 1
      %p62 = por %p60, %p61
      %p63 = scmp.ne.s32.totalorder %s54, %s55
      %p64 = scmp.eq.s32.totalorder %s23, 0
      %p65 = por %p63, %p64
      %p66 = scmp.ne.s32.totalorder %s54, %s55
      %p67 = scmp.eq.s32.totalorder %s24, 1
      %p68 = por %p66, %p67
      %p70 = scmp.ne.s32.totalorder %s55, %s69
      %p71 = scmp.eq.s32.totalorder %s24, 0
      %p72 = por %p70, %p71
      %s74 = sadd.s32 %s73, 1
      %p77 = scmp.eq.s32.totalorder %s18, 1
      %p78 = scmp.ne.s32.totalorder %s73, %s75
      %p79 = scmp.eq.s32.totalorder %s18, 0
      %p80 = por %p78, %p79
      %p81 = scmp.ne.s32.totalorder %s73, %s75
      %p82 = scmp.eq.s32.totalorder %s23, 1
      %p83 = por %p81, %p82
      %p84 = scmp.ne.s32.totalorder %s75, %s76
      %p85 = scmp.eq.s32.totalorder %s23, 0
      %p86 = por %p84, %p85
      %p87 = scmp.ne.s32.totalorder %s75, %s76
      %p88 = scmp.eq.s32.totalorder %s24, 1
      %p89 = por %p87, %p88
      %p91 = scmp.ne.s32.totalorder %s76, %s90
      %p92 = scmp.eq.s32.totalorder %s24, 0
      %p93 = por %p91, %p92
      %s95 = sadd.s32 %s94, 1
      %p98 = scmp.eq.s32.totalorder %s18, 1
      %p99 = scmp.ne.s32.totalorder %s94, %s96
      %p100 = scmp.eq.s32.totalorder %s18, 0
      %p101 = por %p99, %p100
      %p102 = scmp.ne.s32.totalorder %s94, %s96
      %p103 = scmp.eq.s32.totalorder %s23, 1
      %p104 = por %p102, %p103
      %p105 = scmp.ne.s32.totalorder %s96, %s97
      %p106 = scmp.eq.s32.totalorder %s23, 0
      %p107 = por %p105, %p106
      %p108 = scmp.ne.s32.totalorder %s96, %s97
      %p109 = scmp.eq.s32.totalorder %s24, 1
      %p110 = por %p108, %p109
      %p112 = scmp.ne.s32.totalorder %s97, %s111
      %p113 = scmp.eq.s32.totalorder %s24, 0
      %p114 = por %p112, %p113
      %s116 = sadd.s32 %s115, 1
      %p119 = scmp.eq.s32.totalorder %s18, 1
      %p120 = scmp.ne.s32.totalorder %s115, %s117
      %p121 = scmp.eq.s32.totalorder %s18, 0
      %p122 = por %p120, %p121
      %p123 = scmp.ne.s32.totalorder %s115, %s117
      %p124 = scmp.eq.s32.totalorder %s23, 1
      %p125 = por %p123, %p124
      %p126 = scmp.ne.s32.totalorder %s117, %s118
      %p127 = scmp.eq.s32.totalorder %s23, 0
      %p128 = por %p126, %p127
      %p129 = scmp.ne.s32.totalorder %s117, %s118
      %p130 = scmp.eq.s32.totalorder %s24, 1
      %p131 = por %p129, %p130
      %p133 = scmp.ne.s32.totalorder %s118, %s132
      %p134 = scmp.eq.s32.totalorder %s24, 0
      %p135 = por %p133, %p134
      %s136 = ssub.s32 %s18, %s25
      %p137 = scmp.eq.s32.totalorder %s136, 0
      %s139 = sadd.s32 %s138, 1
      %s140 = scalar_select %p137, %s138, %s139
      %p143 = pneg %p137
      %p144 = scmp.eq.s32.totalorder %s18, 1
      %p145 = por %p143, %p144
      %p146 = scmp.ne.s32.totalorder %s138, %s141
      %p147 = scmp.eq.s32.totalorder %s18, 0
      %p148 = por %p146, %p147
      %p149 = scmp.ne.s32.totalorder %s138, %s141
      %p150 = scmp.eq.s32.totalorder %s23, 1
      %p151 = por %p149, %p150
      %p152 = scmp.ne.s32.totalorder %s141, %s142
      %p153 = scmp.eq.s32.totalorder %s23, 0
      %p154 = por %p152, %p153
      %p155 = scmp.ne.s32.totalorder %s141, %s142
      %p156 = scmp.eq.s32.totalorder %s24, 1
      %p157 = por %p155, %p156
      %p159 = scmp.ne.s32.totalorder %s142, %s158
      %p160 = scmp.eq.s32.totalorder %s24, 0
      %p161 = por %p159, %p160
      %p162 = scmp.le.s32.totalorder 1, %s18
      %p163 = scmp.lt.s32.totalorder %s18, 3
      %p164 = pnand %p162, %p163
      %p165 = pneg %p164
      // Predicated region
      $region9: #{tpu_custom_call.1} parent=5 // pred_check
        _
      $region10: #{tpu_custom_call.1} parent=5 // pred_check_branch
        %167 = sbr.rel (%p164) target = $region12
      $region11: #{tpu_custom_call.1} parent=5 // pred_region
        %s168 = ssub.s32 %s18, 1
        // Predicated region
        $region13: #{tpu_custom_call.1} parent=11 // pred_check
          %p169 = pneg %p65
        $region14: #{tpu_custom_call.1} parent=11 // pred_check_branch
          %171 = sbr.rel (%p169) target = $region16
        $region15: #{tpu_custom_call.1} parent=11 // pred_region
          %s173 = ssub.s32 18432, 18432
          %174 = vsyncadd [#allocation8], %s173
          %s175 = sshll.u32 [#allocation7], 4
          %s176 = int_to_ptr.vmem [resolvable:$true] %s175
          %181 = dma.hbm_to_vmem [thread:$0]  %s1, 18432, %s176, [#allocation8], 128, 128, 8
        $region16: #{tpu_custom_call.1} parent=11 // pred_fallthru
          _
        // Predicated region
        $region17: #{tpu_custom_call.1} parent=11 // pred_check
          %p182 = pneg %p86
        $region18: #{tpu_custom_call.1} parent=11 // pred_check_branch
          %184 = sbr.rel (%p182) target = $region20
        $region19: #{tpu_custom_call.1} parent=11 // pred_region
          _
        $region20: #{tpu_custom_call.1} parent=11 // pred_fallthru
          _
        // Predicated region
        $region21: #{tpu_custom_call.1} parent=11 // pred_check
          %p185 = pneg %p107
        $region22: #{tpu_custom_call.1} parent=11 // pred_check_branch
          %187 = sbr.rel (%p185) target = $region24
        $region23: #{tpu_custom_call.1} parent=11 // pred_region
          %s189 = ssub.s32 18432, 18432
          %190 = vsyncadd [#allocation8], %s189
          %s191 = sshll.u32 [#allocation9], 4
          %s192 = int_to_ptr.vmem [resolvable:$true] %s191
          %197 = dma.hbm_to_vmem [thread:$0]  %s3, 18432, %s192, [#allocation8], 128, 128, 8
        $region24: #{tpu_custom_call.1} parent=11 // pred_fallthru
          _
        // Predicated region
        $region25: #{tpu_custom_call.1} parent=11 // pred_check
          %p198 = pneg %p128
        $region26: #{tpu_custom_call.1} parent=11 // pred_check_branch
          %200 = sbr.rel (%p198) target = $region28
        $region27: #{tpu_custom_call.1} parent=11 // pred_region
          _
        $region28: #{tpu_custom_call.1} parent=11 // pred_fallthru
          _
      $region12: #{tpu_custom_call.1} parent=5 // pred_fallthru
        _
      %p201 = scmp.lt.s32.totalorder %s18, 2
      // Predicated region
      $region29: #{tpu_custom_call.1} parent=5 // pred_check
        %p202 = pneg %p201
      $region30: #{tpu_custom_call.1} parent=5 // pred_check_branch
        %204 = sbr.rel (%p202) target = $region32
      $region31: #{tpu_custom_call.1} parent=5 // pred_region
        // Predicated region
        $region33: #{tpu_custom_call.1} parent=31 // pred_check
          %p205 = pneg %p38
        $region34: #{tpu_custom_call.1} parent=31 // pred_check_branch
          %207 = sbr.rel (%p205) target = $region36
        $region35: #{tpu_custom_call.1} parent=31 // pred_region
          %s208 = sand.u32 %s28, 1
          %s209 = scalar_lea.sflag [#allocation5], %s208
          %s210 = sand.u32 %s28, 1
          %s211 = smul.addr %s210, 256
          %s212 = scalar_lea.vmem [#allocation4], %s211
          %s214 = ssub.s32 4096, 4096
          %215 = vsyncadd %s209, %s214
          %s216 = smul.addr %s18, 32
          %s217 = smul.addr %s216, 128
          %s218 = scalar_lea.hbm %s0, %s217
          %s219 = sshll.u32 %s212, 4
          %s220 = int_to_ptr.vmem [resolvable:$true] %s219
          %225 = dma.hbm_to_vmem [thread:$0]  %s218, 4096, %s220, %s209, 128, 128, 8
        $region36: #{tpu_custom_call.1} parent=31 // pred_fallthru
          _
      $region32: #{tpu_custom_call.1} parent=5 // pred_fallthru
        _
      %p226 = scmp.le.s32.totalorder 1, %s18
      %p227 = scmp.lt.s32.totalorder %s18, 3
      %p228 = pnand %p226, %p227
      %p229 = pneg %p228
      // Predicated region
      $region37: #{tpu_custom_call.1} parent=5 // pred_check
        _
      $region38: #{tpu_custom_call.1} parent=5 // pred_check_branch
        %231 = sbr.rel (%p228) target = $region40
      $region39: #{tpu_custom_call.1} parent=5 // pred_region
        %s232 = ssub.s32 %s18, 1
        %s233 = sand.u32 %s31, 1
        %s234 = scalar_lea.sflag [#allocation5], %s233
        %s235 = sand.u32 %s31, 1
        %s236 = smul.addr %s235, 256
        %s237 = scalar_lea.vmem [#allocation4], %s236
        // Predicated region
        $region41: #{tpu_custom_call.1} parent=39 // pred_check
          %p238 = pneg %p44
        $region42: #{tpu_custom_call.1} parent=39 // pred_check_branch
          %240 = sbr.rel (%p238) target = $region44
        $region43: #{tpu_custom_call.1} parent=39 // pred_region
          %241 = dma.done %s234, 4096
        $region44: #{tpu_custom_call.1} parent=39 // pred_fallthru
          _
        // Predicated region
        $region45: #{tpu_custom_call.1} parent=39 // pred_check
          %p242 = pneg %p65
        $region46: #{tpu_custom_call.1} parent=39 // pred_check_branch
          %244 = sbr.rel (%p242) target = $region48
        $region47: #{tpu_custom_call.1} parent=39 // pred_region
          %245 = dma.done [#allocation8], 18432
        $region48: #{tpu_custom_call.1} parent=39 // pred_fallthru
          _
        // Predicated region
        $region49: #{tpu_custom_call.1} parent=39 // pred_check
          %p246 = pneg %p107
        $region50: #{tpu_custom_call.1} parent=39 // pred_check_branch
          %248 = sbr.rel (%p246) target = $region52
        $region51: #{tpu_custom_call.1} parent=39 // pred_region
          %249 = dma.done [#allocation8], 18432
        $region52: #{tpu_custom_call.1} parent=39 // pred_fallthru
          _
        %s250 = sand.u32 %s31, 1
        %s251 = scalar_lea.sflag [#allocation5], %s250
        %s252 = sand.u32 %s31, 1
        %s253 = smul.addr %s252, 256
        %s254 = scalar_lea.vmem [#allocation4], %s253
        %p255 = pneg %p44
        %p256 = pneg %p41
        %p257 = pneg %p65
        %p258 = pneg %p62
        %p259 = pneg %p86
        %p260 = pneg %p83
        %p261 = pneg %p107
        %p262 = pneg %p104
        %p263 = pneg %p128
        %p264 = pneg %p125
        %p265 = pneg %p154
        %p266 = pneg %p151
        %s267 = sand.u32 %s141, 1
        %s268 = scalar_lea.sflag [#allocation6], %s267
        %s269 = sand.u32 %s141, 1
        %s270 = smul.addr %s269, 256
        %s271 = scalar_lea.vmem [#allocation10], %s270
        %272 = vst [vmem:[#allocation2] sm:$0xff] 0.0
        %273 = vst [vmem:[#allocation2 + $0x8] sm:$0xff] 0.0
        %274 = vst [vmem:[#allocation2 + $0x10] sm:$0x3] 0.0
        %s275 = scalar_lea.vmem [#allocation2], 408
        %276 = vst [vmem:[%s275] sm:$0xff] 0.0
        %277 = vst [vmem:[%s275 + $0x8] sm:$0xff] 0.0
        %278 = vst [vmem:[%s275 + $0x10] sm:$0x3] 0.0
        %279 = vst [vmem:[#allocation2] sm:$0x1] 0.0
        %280 = vst [vmem:[#allocation2 + $0x18] sm:$0x1] 0.0
        %281 = vst [vmem:[#allocation2 + $0x30] sm:$0x1] 0.0
        %282 = vst [vmem:[#allocation2 + $0x48] sm:$0x1] 0.0
        %283 = vst [vmem:[#allocation2 + $0x60] sm:$0x1] 0.0
        %284 = vst [vmem:[#allocation2 + $0x78] sm:$0x1] 0.0
        %285 = vst [vmem:[#allocation2 + $0x90] sm:$0x1] 0.0
        %286 = vst [vmem:[#allocation2 + $0xa8] sm:$0x1] 0.0
        %287 = vst [vmem:[#allocation2 + $0xc0] sm:$0x1] 0.0
        %288 = vst [vmem:[#allocation2 + $0xd8] sm:$0x1] 0.0
        %289 = vst [vmem:[#allocation2 + $0xf0] sm:$0x1] 0.0
        %290 = vst [vmem:[#allocation2 + $0x108] sm:$0x1] 0.0
        %291 = vst [vmem:[#allocation2 + $0x120] sm:$0x1] 0.0
        %292 = vst [vmem:[#allocation2 + $0x138] sm:$0x1] 0.0
        %293 = vst [vmem:[#allocation2 + $0x150] sm:$0x1] 0.0
        %294 = vst [vmem:[#allocation2 + $0x168] sm:$0x1] 0.0
        %295 = vst [vmem:[#allocation2 + $0x180] sm:$0x1] 0.0
        %296 = vst [vmem:[#allocation2 + $0x198] sm:$0x1] 0.0
        %297 = vst [vmem:[#allocation2 + $0x11] sm:$0x1] 0.0
        %298 = vst [vmem:[#allocation2 + $0x29] sm:$0x1] 0.0
        %299 = vst [vmem:[#allocation2 + $0x41] sm:$0x1] 0.0
        %300 = vst [vmem:[#allocation2 + $0x59] sm:$0x1] 0.0
        %301 = vst [vmem:[#allocation2 + $0x71] sm:$0x1] 0.0
        %302 = vst [vmem:[#allocation2 + $0x89] sm:$0x1] 0.0
        %303 = vst [vmem:[#allocation2 + $0xa1] sm:$0x1] 0.0
        %304 = vst [vmem:[#allocation2 + $0xb9] sm:$0x1] 0.0
        %305 = vst [vmem:[#allocation2 + $0xd1] sm:$0x1] 0.0
        %306 = vst [vmem:[#allocation2 + $0xe9] sm:$0x1] 0.0
        %307 = vst [vmem:[#allocation2 + $0x101] sm:$0x1] 0.0
        %308 = vst [vmem:[#allocation2 + $0x119] sm:$0x1] 0.0
        %309 = vst [vmem:[#allocation2 + $0x131] sm:$0x1] 0.0
        %310 = vst [vmem:[#allocation2 + $0x149] sm:$0x1] 0.0
        %311 = vst [vmem:[#allocation2 + $0x161] sm:$0x1] 0.0
        %312 = vst [vmem:[#allocation2 + $0x179] sm:$0x1] 0.0
        %313 = vst [vmem:[#allocation2 + $0x191] sm:$0x1] 0.0
        %314 = vst [vmem:[#allocation2 + $0x1a9] sm:$0x1] 0.0
        %315 = vst [vmem:[#allocation3] sm:$0xff] 0.0
        %316 = vst [vmem:[#allocation3 + $0x8] sm:$0xff] 0.0
        %317 = vst [vmem:[#allocation3 + $0x10] sm:$0x3] 0.0
        %s318 = scalar_lea.vmem [#allocation3], 408
        %319 = vst [vmem:[%s318] sm:$0xff] 0.0
        %320 = vst [vmem:[%s318 + $0x8] sm:$0xff] 0.0
        %321 = vst [vmem:[%s318 + $0x10] sm:$0x3] 0.0
        %322 = vst [vmem:[#allocation3] sm:$0x1] 0.0
        %323 = vst [vmem:[#allocation3 + $0x18] sm:$0x1] 0.0
        %324 = vst [vmem:[#allocation3 + $0x30] sm:$0x1] 0.0
        %325 = vst [vmem:[#allocation3 + $0x48] sm:$0x1] 0.0
        %326 = vst [vmem:[#allocation3 + $0x60] sm:$0x1] 0.0
        %327 = vst [vmem:[#allocation3 + $0x78] sm:$0x1] 0.0
        %328 = vst [vmem:[#allocation3 + $0x90] sm:$0x1] 0.0
        %329 = vst [vmem:[#allocation3 + $0xa8] sm:$0x1] 0.0
        %330 = vst [vmem:[#allocation3 + $0xc0] sm:$0x1] 0.0
        %331 = vst [vmem:[#allocation3 + $0xd8] sm:$0x1] 0.0
        %332 = vst [vmem:[#allocation3 + $0xf0] sm:$0x1] 0.0
        %333 = vst [vmem:[#allocation3 + $0x108] sm:$0x1] 0.0
        %334 = vst [vmem:[#allocation3 + $0x120] sm:$0x1] 0.0
        %335 = vst [vmem:[#allocation3 + $0x138] sm:$0x1] 0.0
        %336 = vst [vmem:[#allocation3 + $0x150] sm:$0x1] 0.0
        %337 = vst [vmem:[#allocation3 + $0x168] sm:$0x1] 0.0
        %338 = vst [vmem:[#allocation3 + $0x180] sm:$0x1] 0.0
        %339 = vst [vmem:[#allocation3 + $0x198] sm:$0x1] 0.0
        %340 = vst [vmem:[#allocation3 + $0x11] sm:$0x1] 0.0
        %341 = vst [vmem:[#allocation3 + $0x29] sm:$0x1] 0.0
        %342 = vst [vmem:[#allocation3 + $0x41] sm:$0x1] 0.0
        %343 = vst [vmem:[#allocation3 + $0x59] sm:$0x1] 0.0
        %344 = vst [vmem:[#allocation3 + $0x71] sm:$0x1] 0.0
        %345 = vst [vmem:[#allocation3 + $0x89] sm:$0x1] 0.0
        %346 = vst [vmem:[#allocation3 + $0xa1] sm:$0x1] 0.0
        %347 = vst [vmem:[#allocation3 + $0xb9] sm:$0x1] 0.0
        %348 = vst [vmem:[#allocation3 + $0xd1] sm:$0x1] 0.0
        %349 = vst [vmem:[#allocation3 + $0xe9] sm:$0x1] 0.0
        %350 = vst [vmem:[#allocation3 + $0x101] sm:$0x1] 0.0
        %351 = vst [vmem:[#allocation3 + $0x119] sm:$0x1] 0.0
        %352 = vst [vmem:[#allocation3 + $0x131] sm:$0x1] 0.0
        %353 = vst [vmem:[#allocation3 + $0x149] sm:$0x1] 0.0
        %354 = vst [vmem:[#allocation3 + $0x161] sm:$0x1] 0.0
        %355 = vst [vmem:[#allocation3 + $0x179] sm:$0x1] 0.0
        %356 = vst [vmem:[#allocation3 + $0x191] sm:$0x1] 0.0
        %357 = vst [vmem:[#allocation3 + $0x1a9] sm:$0x1] 0.0
        %v358 = vld [vmem:[%s237] sm:$0xff]
        %v359 = vld [vmem:[%s237 + $0x8] sm:$0xff]
        %v360 = vld [vmem:[%s237 + $0x10] sm:$0xff]
        %v361 = vld [vmem:[%s237 + $0x18] sm:$0xff]
        %v362 = vld [vmem:[%s237 + $0x20] sm:$0xff]
        %v363 = vld [vmem:[%s237 + $0x28] sm:$0xff]
        %v364 = vld [vmem:[%s237 + $0x30] sm:$0xff]
        %v365 = vld [vmem:[%s237 + $0x38] sm:$0xff]
        %v366 = vld [vmem:[%s237 + $0x40] sm:$0xff]
        %v367 = vld [vmem:[%s237 + $0x48] sm:$0xff]
        %v368 = vld [vmem:[%s237 + $0x50] sm:$0xff]
        %v369 = vld [vmem:[%s237 + $0x58] sm:$0xff]
        %v370 = vld [vmem:[%s237 + $0x60] sm:$0xff]
        %v371 = vld [vmem:[%s237 + $0x68] sm:$0xff]
        %v372 = vld [vmem:[%s237 + $0x70] sm:$0xff]
        %v373 = vld [vmem:[%s237 + $0x78] sm:$0xff]
        %v374 = vld [vmem:[%s237 + $0x80] sm:$0xff]
        %v375 = vld [vmem:[%s237 + $0x88] sm:$0xff]
        %v376 = vld [vmem:[%s237 + $0x90] sm:$0xff]
        %v377 = vld [vmem:[%s237 + $0x98] sm:$0xff]
        %v378 = vld [vmem:[%s237 + $0xa0] sm:$0xff]
        %v379 = vld [vmem:[%s237 + $0xa8] sm:$0xff]
        %v380 = vld [vmem:[%s237 + $0xb0] sm:$0xff]
        %v381 = vld [vmem:[%s237 + $0xb8] sm:$0xff]
        %v382 = vld [vmem:[%s237 + $0xc0] sm:$0xff]
        %v383 = vld [vmem:[%s237 + $0xc8] sm:$0xff]
        %v384 = vld [vmem:[%s237 + $0xd0] sm:$0xff]
        %v385 = vld [vmem:[%s237 + $0xd8] sm:$0xff]
        %v386 = vld [vmem:[%s237 + $0xe0] sm:$0xff]
        %v387 = vld [vmem:[%s237 + $0xe8] sm:$0xff]
        %v388 = vld [vmem:[%s237 + $0xf0] sm:$0xff]
        %v389 = vld [vmem:[%s237 + $0xf8] sm:$0xff]
        %s390 = scalar_lea.vmem [#allocation2], 24
        %391 = vst [vmem:[%s390 + $0x1] sm:$0xff] %v358
        %392 = vst [vmem:[%s390 + $0x9] sm:$0xff] %v359
        %393 = vst [vmem:[%s390 + $0x19] sm:$0xff] %v360
        %394 = vst [vmem:[%s390 + $0x21] sm:$0xff] %v361
        %395 = vst [vmem:[%s390 + $0x31] sm:$0xff] %v362
        %396 = vst [vmem:[%s390 + $0x39] sm:$0xff] %v363
        %397 = vst [vmem:[%s390 + $0x49] sm:$0xff] %v364
        %398 = vst [vmem:[%s390 + $0x51] sm:$0xff] %v365
        %399 = vst [vmem:[%s390 + $0x61] sm:$0xff] %v366
        %400 = vst [vmem:[%s390 + $0x69] sm:$0xff] %v367
        %401 = vst [vmem:[%s390 + $0x79] sm:$0xff] %v368
        %402 = vst [vmem:[%s390 + $0x81] sm:$0xff] %v369
        %403 = vst [vmem:[%s390 + $0x91] sm:$0xff] %v370
        %404 = vst [vmem:[%s390 + $0x99] sm:$0xff] %v371
        %405 = vst [vmem:[%s390 + $0xa9] sm:$0xff] %v372
        %406 = vst [vmem:[%s390 + $0xb1] sm:$0xff] %v373
        %407 = vst [vmem:[%s390 + $0xc1] sm:$0xff] %v374
        %408 = vst [vmem:[%s390 + $0xc9] sm:$0xff] %v375
        %409 = vst [vmem:[%s390 + $0xd9] sm:$0xff] %v376
        %410 = vst [vmem:[%s390 + $0xe1] sm:$0xff] %v377
        %411 = vst [vmem:[%s390 + $0xf1] sm:$0xff] %v378
        %412 = vst [vmem:[%s390 + $0xf9] sm:$0xff] %v379
        %413 = vst [vmem:[%s390 + $0x109] sm:$0xff] %v380
        %414 = vst [vmem:[%s390 + $0x111] sm:$0xff] %v381
        %415 = vst [vmem:[%s390 + $0x121] sm:$0xff] %v382
        %416 = vst [vmem:[%s390 + $0x129] sm:$0xff] %v383
        %417 = vst [vmem:[%s390 + $0x139] sm:$0xff] %v384
        %418 = vst [vmem:[%s390 + $0x141] sm:$0xff] %v385
        %419 = vst [vmem:[%s390 + $0x151] sm:$0xff] %v386
        %420 = vst [vmem:[%s390 + $0x159] sm:$0xff] %v387
        %421 = vst [vmem:[%s390 + $0x169] sm:$0xff] %v388
        %422 = vst [vmem:[%s390 + $0x171] sm:$0xff] %v389
        %v423 = vld [vmem:[#allocation2] sm:$0xff]
        %v424 = vld [vmem:[#allocation2 + $0x8] sm:$0xff]
        %v425 = vld [vmem:[#allocation2 + $0x18] sm:$0xff]
        %v426 = vld [vmem:[#allocation2 + $0x20] sm:$0xff]
        %v427 = vld [vmem:[#allocation2 + $0x30] sm:$0xff]
        %v428 = vld [vmem:[#allocation2 + $0x38] sm:$0xff]
        %v429 = vld [vmem:[#allocation2 + $0x48] sm:$0xff]
        %v430 = vld [vmem:[#allocation2 + $0x50] sm:$0xff]
        %v431 = vld [vmem:[#allocation2 + $0x60] sm:$0xff]
        %v432 = vld [vmem:[#allocation2 + $0x68] sm:$0xff]
        %v433 = vld [vmem:[#allocation2 + $0x78] sm:$0xff]
        %v434 = vld [vmem:[#allocation2 + $0x80] sm:$0xff]
        %v435 = vld [vmem:[#allocation2 + $0x90] sm:$0xff]
        %v436 = vld [vmem:[#allocation2 + $0x98] sm:$0xff]
        %v437 = vld [vmem:[#allocation2 + $0xa8] sm:$0xff]
        %v438 = vld [vmem:[#allocation2 + $0xb0] sm:$0xff]
        %v439 = vld [vmem:[#allocation2 + $0xc0] sm:$0xff]
        %v440 = vld [vmem:[#allocation2 + $0xc8] sm:$0xff]
        %v441 = vld [vmem:[#allocation2 + $0xd8] sm:$0xff]
        %v442 = vld [vmem:[#allocation2 + $0xe0] sm:$0xff]
        %v443 = vld [vmem:[#allocation2 + $0xf0] sm:$0xff]
        %v444 = vld [vmem:[#allocation2 + $0xf8] sm:$0xff]
        %v445 = vld [vmem:[#allocation2 + $0x108] sm:$0xff]
        %v446 = vld [vmem:[#allocation2 + $0x110] sm:$0xff]
        %v447 = vld [vmem:[#allocation2 + $0x120] sm:$0xff]
        %v448 = vld [vmem:[#allocation2 + $0x128] sm:$0xff]
        %v449 = vld [vmem:[#allocation2 + $0x138] sm:$0xff]
        %v450 = vld [vmem:[#allocation2 + $0x140] sm:$0xff]
        %v451 = vld [vmem:[#allocation2 + $0x150] sm:$0xff]
        %v452 = vld [vmem:[#allocation2 + $0x158] sm:$0xff]
        %v453 = vld [vmem:[#allocation2 + $0x168] sm:$0xff]
        %v454 = vld [vmem:[#allocation2 + $0x170] sm:$0xff]
        %v455 = vld [vmem:[#allocation2 + $0x1] sm:$0xff]
        %v456 = vld [vmem:[#allocation2 + $0x9] sm:$0xff]
        %v457 = vld [vmem:[#allocation2 + $0x19] sm:$0xff]
        %v458 = vld [vmem:[#allocation2 + $0x21] sm:$0xff]
        %v459 = vld [vmem:[#allocation2 + $0x31] sm:$0xff]
        %v460 = vld [vmem:[#allocation2 + $0x39] sm:$0xff]
        %v461 = vld [vmem:[#allocation2 + $0x49] sm:$0xff]
        %v462 = vld [vmem:[#allocation2 + $0x51] sm:$0xff]
        %v463 = vld [vmem:[#allocation2 + $0x61] sm:$0xff]
        %v464 = vld [vmem:[#allocation2 + $0x69] sm:$0xff]
        %v465 = vld [vmem:[#allocation2 + $0x79] sm:$0xff]
        %v466 = vld [vmem:[#allocation2 + $0x81] sm:$0xff]
        %v467 = vld [vmem:[#allocation2 + $0x91] sm:$0xff]
        %v468 = vld [vmem:[#allocation2 + $0x99] sm:$0xff]
        %v469 = vld [vmem:[#allocation2 + $0xa9] sm:$0xff]
        %v470 = vld [vmem:[#allocation2 + $0xb1] sm:$0xff]
        %v471 = vld [vmem:[#allocation2 + $0xc1] sm:$0xff]
        %v472 = vld [vmem:[#allocation2 + $0xc9] sm:$0xff]
        %v473 = vld [vmem:[#allocation2 + $0xd9] sm:$0xff]
        %v474 = vld [vmem:[#allocation2 + $0xe1] sm:$0xff]
        %v475 = vld [vmem:[#allocation2 + $0xf1] sm:$0xff]
        %v476 = vld [vmem:[#allocation2 + $0xf9] sm:$0xff]
        %v477 = vld [vmem:[#allocation2 + $0x109] sm:$0xff]
        %v478 = vld [vmem:[#allocation2 + $0x111] sm:$0xff]
        %v479 = vld [vmem:[#allocation2 + $0x121] sm:$0xff]
        %v480 = vld [vmem:[#allocation2 + $0x129] sm:$0xff]
        %v481 = vld [vmem:[#allocation2 + $0x139] sm:$0xff]
        %v482 = vld [vmem:[#allocation2 + $0x141] sm:$0xff]
        %v483 = vld [vmem:[#allocation2 + $0x151] sm:$0xff]
        %v484 = vld [vmem:[#allocation2 + $0x159] sm:$0xff]
        %v485 = vld [vmem:[#allocation2 + $0x169] sm:$0xff]
        %v486 = vld [vmem:[#allocation2 + $0x171] sm:$0xff]
        %v487 = vld [vmem:[#allocation2 + $0x2] sm:$0xff]
        %v488 = vld [vmem:[#allocation2 + $0xa] sm:$0xff]
        %v489 = vld [vmem:[#allocation2 + $0x1a] sm:$0xff]
        %v490 = vld [vmem:[#allocation2 + $0x22] sm:$0xff]
        %v491 = vld [vmem:[#allocation2 + $0x32] sm:$0xff]
        %v492 = vld [vmem:[#allocation2 + $0x3a] sm:$0xff]
        %v493 = vld [vmem:[#allocation2 + $0x4a] sm:$0xff]
        %v494 = vld [vmem:[#allocation2 + $0x52] sm:$0xff]
        %v495 = vld [vmem:[#allocation2 + $0x62] sm:$0xff]
        %v496 = vld [vmem:[#allocation2 + $0x6a] sm:$0xff]
        %v497 = vld [vmem:[#allocation2 + $0x7a] sm:$0xff]
        %v498 = vld [vmem:[#allocation2 + $0x82] sm:$0xff]
        %v499 = vld [vmem:[#allocation2 + $0x92] sm:$0xff]
        %v500 = vld [vmem:[#allocation2 + $0x9a] sm:$0xff]
        %v501 = vld [vmem:[#allocation2 + $0xaa] sm:$0xff]
        %v502 = vld [vmem:[#allocation2 + $0xb2] sm:$0xff]
        %v503 = vld [vmem:[#allocation2 + $0xc2] sm:$0xff]
        %v504 = vld [vmem:[#allocation2 + $0xca] sm:$0xff]
        %v505 = vld [vmem:[#allocation2 + $0xda] sm:$0xff]
        %v506 = vld [vmem:[#allocation2 + $0xe2] sm:$0xff]
        %v507 = vld [vmem:[#allocation2 + $0xf2] sm:$0xff]
        %v508 = vld [vmem:[#allocation2 + $0xfa] sm:$0xff]
        %v509 = vld [vmem:[#allocation2 + $0x10a] sm:$0xff]
        %v510 = vld [vmem:[#allocation2 + $0x112] sm:$0xff]
        %v511 = vld [vmem:[#allocation2 + $0x122] sm:$0xff]
        %v512 = vld [vmem:[#allocation2 + $0x12a] sm:$0xff]
        %v513 = vld [vmem:[#allocation2 + $0x13a] sm:$0xff]
        %v514 = vld [vmem:[#allocation2 + $0x142] sm:$0xff]
        %v515 = vld [vmem:[#allocation2 + $0x152] sm:$0xff]
        %v516 = vld [vmem:[#allocation2 + $0x15a] sm:$0xff]
        %v517 = vld [vmem:[#allocation2 + $0x16a] sm:$0xff]
        %v518 = vld [vmem:[#allocation2 + $0x172] sm:$0xff]
        %v519 = vld [vmem:[#allocation7] sm:$0xff]
        %v520 = vld [vmem:[#allocation7 + $0x8] sm:$0xff]
        %v521 = vld [vmem:[#allocation7 + $0x10] sm:$0xff]
        %v522 = vld [vmem:[#allocation7 + $0x18] sm:$0xff]
        %v523 = vld [vmem:[#allocation7 + $0x20] sm:$0xff]
        %v524 = vld [vmem:[#allocation7 + $0x28] sm:$0xff]
        %v525 = vld [vmem:[#allocation7 + $0x30] sm:$0xff]
        %v526 = vld [vmem:[#allocation7 + $0x38] sm:$0xff]
        %v527 = vld [vmem:[#allocation7 + $0x40] sm:$0xff]
        %v528 = vld [vmem:[#allocation7 + $0x48] sm:$0xff]
        %v529 = vld [vmem:[#allocation7 + $0x50] sm:$0xff]
        %v530 = vld [vmem:[#allocation7 + $0x58] sm:$0xff]
        %v531 = vld [vmem:[#allocation7 + $0x60] sm:$0xff]
        %v532 = vld [vmem:[#allocation7 + $0x68] sm:$0xff]
        %v533 = vld [vmem:[#allocation7 + $0x70] sm:$0xff]
        %v534 = vld [vmem:[#allocation7 + $0x78] sm:$0xff]
        %v535 = vld [vmem:[#allocation7 + $0x80] sm:$0xff]
        %v536 = vld [vmem:[#allocation7 + $0x88] sm:$0xff]
        %v537 = vld [vmem:[#allocation7 + $0x90] sm:$0xff]
        %v538 = vld [vmem:[#allocation7 + $0x98] sm:$0xff]
        %v539 = vld [vmem:[#allocation7 + $0xa0] sm:$0xff]
        %v540 = vld [vmem:[#allocation7 + $0xa8] sm:$0xff]
        %v541 = vld [vmem:[#allocation7 + $0xb0] sm:$0xff]
        %v542 = vld [vmem:[#allocation7 + $0xb8] sm:$0xff]
        %v543 = vld [vmem:[#allocation7 + $0xc0] sm:$0xff]
        %v544 = vld [vmem:[#allocation7 + $0xc8] sm:$0xff]
        %v545 = vld [vmem:[#allocation7 + $0xd0] sm:$0xff]
        %v546 = vld [vmem:[#allocation7 + $0xd8] sm:$0xff]
        %v547 = vld [vmem:[#allocation7 + $0xe0] sm:$0xff]
        %v548 = vld [vmem:[#allocation7 + $0xe8] sm:$0xff]
        %v549 = vld [vmem:[#allocation7 + $0xf0] sm:$0xff]
        %v550 = vld [vmem:[#allocation7 + $0xf8] sm:$0xff]
        %v551 = vld [vmem:[#allocation7 + $0x100] sm:$0xff]
        %v552 = vld [vmem:[#allocation7 + $0x108] sm:$0xff]
        %v553 = vld [vmem:[#allocation7 + $0x110] sm:$0xff]
        %v554 = vld [vmem:[#allocation7 + $0x118] sm:$0xff]
        %v555 = vld [vmem:[#allocation7 + $0x120] sm:$0xff]
        %v556 = vld [vmem:[#allocation7 + $0x128] sm:$0xff]
        %v557 = vld [vmem:[#allocation7 + $0x130] sm:$0xff]
        %v558 = vld [vmem:[#allocation7 + $0x138] sm:$0xff]
        %v559 = vld [vmem:[#allocation7 + $0x140] sm:$0xff]
        %v560 = vld [vmem:[#allocation7 + $0x148] sm:$0xff]
        %v561 = vld [vmem:[#allocation7 + $0x150] sm:$0xff]
        %v562 = vld [vmem:[#allocation7 + $0x158] sm:$0xff]
        %v563 = vld [vmem:[#allocation7 + $0x160] sm:$0xff]
        %v564 = vld [vmem:[#allocation7 + $0x168] sm:$0xff]
        %v565 = vld [vmem:[#allocation7 + $0x170] sm:$0xff]
        %v566 = vld [vmem:[#allocation7 + $0x178] sm:$0xff]
        %v567 = vld [vmem:[%s390] sm:$0xff]
        %v568 = vld [vmem:[%s390 + $0x8] sm:$0xff]
        %v569 = vld [vmem:[%s390 + $0x18] sm:$0xff]
        %v570 = vld [vmem:[%s390 + $0x20] sm:$0xff]
        %v571 = vld [vmem:[%s390 + $0x30] sm:$0xff]
        %v572 = vld [vmem:[%s390 + $0x38] sm:$0xff]
        %v573 = vld [vmem:[%s390 + $0x48] sm:$0xff]
        %v574 = vld [vmem:[%s390 + $0x50] sm:$0xff]
        %v575 = vld [vmem:[%s390 + $0x60] sm:$0xff]
        %v576 = vld [vmem:[%s390 + $0x68] sm:$0xff]
        %v577 = vld [vmem:[%s390 + $0x78] sm:$0xff]
        %v578 = vld [vmem:[%s390 + $0x80] sm:$0xff]
        %v579 = vld [vmem:[%s390 + $0x90] sm:$0xff]
        %v580 = vld [vmem:[%s390 + $0x98] sm:$0xff]
        %v581 = vld [vmem:[%s390 + $0xa8] sm:$0xff]
        %v582 = vld [vmem:[%s390 + $0xb0] sm:$0xff]
        %v583 = vld [vmem:[%s390 + $0xc0] sm:$0xff]
        %v584 = vld [vmem:[%s390 + $0xc8] sm:$0xff]
        %v585 = vld [vmem:[%s390 + $0xd8] sm:$0xff]
        %v586 = vld [vmem:[%s390 + $0xe0] sm:$0xff]
        %v587 = vld [vmem:[%s390 + $0xf0] sm:$0xff]
        %v588 = vld [vmem:[%s390 + $0xf8] sm:$0xff]
        %v589 = vld [vmem:[%s390 + $0x108] sm:$0xff]
        %v590 = vld [vmem:[%s390 + $0x110] sm:$0xff]
        %v591 = vld [vmem:[%s390 + $0x120] sm:$0xff]
        %v592 = vld [vmem:[%s390 + $0x128] sm:$0xff]
        %v593 = vld [vmem:[%s390 + $0x138] sm:$0xff]
        %v594 = vld [vmem:[%s390 + $0x140] sm:$0xff]
        %v595 = vld [vmem:[%s390 + $0x150] sm:$0xff]
        %v596 = vld [vmem:[%s390 + $0x158] sm:$0xff]
        %v597 = vld [vmem:[%s390 + $0x168] sm:$0xff]
        %v598 = vld [vmem:[%s390 + $0x170] sm:$0xff]
        %v599 = vld [vmem:[%s390 + $0x1] sm:$0xff]
        %v600 = vld [vmem:[%s390 + $0x9] sm:$0xff]
        %v601 = vld [vmem:[%s390 + $0x19] sm:$0xff]
        %v602 = vld [vmem:[%s390 + $0x21] sm:$0xff]
        %v603 = vld [vmem:[%s390 + $0x31] sm:$0xff]
        %v604 = vld [vmem:[%s390 + $0x39] sm:$0xff]
        %v605 = vld [vmem:[%s390 + $0x49] sm:$0xff]
        %v606 = vld [vmem:[%s390 + $0x51] sm:$0xff]
        %v607 = vld [vmem:[%s390 + $0x61] sm:$0xff]
        %v608 = vld [vmem:[%s390 + $0x69] sm:$0xff]
        %v609 = vld [vmem:[%s390 + $0x79] sm:$0xff]
        %v610 = vld [vmem:[%s390 + $0x81] sm:$0xff]
        %v611 = vld [vmem:[%s390 + $0x91] sm:$0xff]
        %v612 = vld [vmem:[%s390 + $0x99] sm:$0xff]
        %v613 = vld [vmem:[%s390 + $0xa9] sm:$0xff]
        %v614 = vld [vmem:[%s390 + $0xb1] sm:$0xff]
        %v615 = vld [vmem:[%s390 + $0xc1] sm:$0xff]
        %v616 = vld [vmem:[%s390 + $0xc9] sm:$0xff]
        %v617 = vld [vmem:[%s390 + $0xd9] sm:$0xff]
        %v618 = vld [vmem:[%s390 + $0xe1] sm:$0xff]
        %v619 = vld [vmem:[%s390 + $0xf1] sm:$0xff]
        %v620 = vld [vmem:[%s390 + $0xf9] sm:$0xff]
        %v621 = vld [vmem:[%s390 + $0x109] sm:$0xff]
        %v622 = vld [vmem:[%s390 + $0x111] sm:$0xff]
        %v623 = vld [vmem:[%s390 + $0x121] sm:$0xff]
        %v624 = vld [vmem:[%s390 + $0x129] sm:$0xff]
        %v625 = vld [vmem:[%s390 + $0x139] sm:$0xff]
        %v626 = vld [vmem:[%s390 + $0x141] sm:$0xff]
        %v627 = vld [vmem:[%s390 + $0x151] sm:$0xff]
        %v628 = vld [vmem:[%s390 + $0x159] sm:$0xff]
        %v629 = vld [vmem:[%s390 + $0x169] sm:$0xff]
        %v630 = vld [vmem:[%s390 + $0x171] sm:$0xff]
        %v631 = vld [vmem:[%s390 + $0x2] sm:$0xff]
        %v632 = vld [vmem:[%s390 + $0xa] sm:$0xff]
        %v633 = vld [vmem:[%s390 + $0x1a] sm:$0xff]
        %v634 = vld [vmem:[%s390 + $0x22] sm:$0xff]
        %v635 = vld [vmem:[%s390 + $0x32] sm:$0xff]
        %v636 = vld [vmem:[%s390 + $0x3a] sm:$0xff]
        %v637 = vld [vmem:[%s390 + $0x4a] sm:$0xff]
        %v638 = vld [vmem:[%s390 + $0x52] sm:$0xff]
        %v639 = vld [vmem:[%s390 + $0x62] sm:$0xff]
        %v640 = vld [vmem:[%s390 + $0x6a] sm:$0xff]
        %v641 = vld [vmem:[%s390 + $0x7a] sm:$0xff]
        %v642 = vld [vmem:[%s390 + $0x82] sm:$0xff]
        %v643 = vld [vmem:[%s390 + $0x92] sm:$0xff]
        %v644 = vld [vmem:[%s390 + $0x9a] sm:$0xff]
        %v645 = vld [vmem:[%s390 + $0xaa] sm:$0xff]
        %v646 = vld [vmem:[%s390 + $0xb2] sm:$0xff]
        %v647 = vld [vmem:[%s390 + $0xc2] sm:$0xff]
        %v648 = vld [vmem:[%s390 + $0xca] sm:$0xff]
        %v649 = vld [vmem:[%s390 + $0xda] sm:$0xff]
        %v650 = vld [vmem:[%s390 + $0xe2] sm:$0xff]
        %v651 = vld [vmem:[%s390 + $0xf2] sm:$0xff]
        %v652 = vld [vmem:[%s390 + $0xfa] sm:$0xff]
        %v653 = vld [vmem:[%s390 + $0x10a] sm:$0xff]
        %v654 = vld [vmem:[%s390 + $0x112] sm:$0xff]
        %v655 = vld [vmem:[%s390 + $0x122] sm:$0xff]
        %v656 = vld [vmem:[%s390 + $0x12a] sm:$0xff]
        %v657 = vld [vmem:[%s390 + $0x13a] sm:$0xff]
        %v658 = vld [vmem:[%s390 + $0x142] sm:$0xff]
        %v659 = vld [vmem:[%s390 + $0x152] sm:$0xff]
        %v660 = vld [vmem:[%s390 + $0x15a] sm:$0xff]
        %v661 = vld [vmem:[%s390 + $0x16a] sm:$0xff]
        %v662 = vld [vmem:[%s390 + $0x172] sm:$0xff]
        %v663 = vld [vmem:[#allocation7 + $0x180] sm:$0xff]
        %v664 = vld [vmem:[#allocation7 + $0x188] sm:$0xff]
        %v665 = vld [vmem:[#allocation7 + $0x190] sm:$0xff]
        %v666 = vld [vmem:[#allocation7 + $0x198] sm:$0xff]
        %v667 = vld [vmem:[#allocation7 + $0x1a0] sm:$0xff]
        %v668 = vld [vmem:[#allocation7 + $0x1a8] sm:$0xff]
        %v669 = vld [vmem:[#allocation7 + $0x1b0] sm:$0xff]
        %v670 = vld [vmem:[#allocation7 + $0x1b8] sm:$0xff]
        %v671 = vld [vmem:[#allocation7 + $0x1c0] sm:$0xff]
        %v672 = vld [vmem:[#allocation7 + $0x1c8] sm:$0xff]
        %v673 = vld [vmem:[#allocation7 + $0x1d0] sm:$0xff]
        %v674 = vld [vmem:[#allocation7 + $0x1d8] sm:$0xff]
        %v675 = vld [vmem:[#allocation7 + $0x1e0] sm:$0xff]
        %v676 = vld [vmem:[#allocation7 + $0x1e8] sm:$0xff]
        %v677 = vld [vmem:[#allocation7 + $0x1f0] sm:$0xff]
        %v678 = vld [vmem:[#allocation7 + $0x1f8] sm:$0xff]
        %v679 = vld [vmem:[#allocation7 + $0x200] sm:$0xff]
        %v680 = vld [vmem:[#allocation7 + $0x208] sm:$0xff]
        %v681 = vld [vmem:[#allocation7 + $0x210] sm:$0xff]
        %v682 = vld [vmem:[#allocation7 + $0x218] sm:$0xff]
        %v683 = vld [vmem:[#allocation7 + $0x220] sm:$0xff]
        %v684 = vld [vmem:[#allocation7 + $0x228] sm:$0xff]
        %v685 = vld [vmem:[#allocation7 + $0x230] sm:$0xff]
        %v686 = vld [vmem:[#allocation7 + $0x238] sm:$0xff]
        %v687 = vld [vmem:[#allocation7 + $0x240] sm:$0xff]
        %v688 = vld [vmem:[#allocation7 + $0x248] sm:$0xff]
        %v689 = vld [vmem:[#allocation7 + $0x250] sm:$0xff]
        %v690 = vld [vmem:[#allocation7 + $0x258] sm:$0xff]
        %v691 = vld [vmem:[#allocation7 + $0x260] sm:$0xff]
        %v692 = vld [vmem:[#allocation7 + $0x268] sm:$0xff]
        %v693 = vld [vmem:[#allocation7 + $0x270] sm:$0xff]
        %v694 = vld [vmem:[#allocation7 + $0x278] sm:$0xff]
        %v695 = vld [vmem:[#allocation7 + $0x280] sm:$0xff]
        %v696 = vld [vmem:[#allocation7 + $0x288] sm:$0xff]
        %v697 = vld [vmem:[#allocation7 + $0x290] sm:$0xff]
        %v698 = vld [vmem:[#allocation7 + $0x298] sm:$0xff]
        %v699 = vld [vmem:[#allocation7 + $0x2a0] sm:$0xff]
        %v700 = vld [vmem:[#allocation7 + $0x2a8] sm:$0xff]
        %v701 = vld [vmem:[#allocation7 + $0x2b0] sm:$0xff]
        %v702 = vld [vmem:[#allocation7 + $0x2b8] sm:$0xff]
        %v703 = vld [vmem:[#allocation7 + $0x2c0] sm:$0xff]
        %v704 = vld [vmem:[#allocation7 + $0x2c8] sm:$0xff]
        %v705 = vld [vmem:[#allocation7 + $0x2d0] sm:$0xff]
        %v706 = vld [vmem:[#allocation7 + $0x2d8] sm:$0xff]
        %v707 = vld [vmem:[#allocation7 + $0x2e0] sm:$0xff]
        %v708 = vld [vmem:[#allocation7 + $0x2e8] sm:$0xff]
        %v709 = vld [vmem:[#allocation7 + $0x2f0] sm:$0xff]
        %v710 = vld [vmem:[#allocation7 + $0x2f8] sm:$0xff]
        %711 = vmatprep.subr.mxu0 0.0
        %712 = vmatpush1.msra.mxu0 %v663
        %713 = vmatprep.subr.mxu0 0.0
        %714 = vmatpush1.msra.mxu0 %v664
        %715 = vmatprep.subr.mxu0 0.0
        %716 = vmatpush1.msra.mxu0 %v665
        %717 = vmatprep.subr.mxu0 0.0
        %718 = vmatpush1.msra.mxu0 %v666
        %719 = vmatprep.subr.mxu0 0.0
        %720 = vmatpush1.msra.mxu0 %v667
        %721 = vmatprep.subr.mxu0 0.0
        %722 = vmatpush1.msra.mxu0 %v668
        %723 = vmatprep.subr.mxu0 0.0
        %724 = vmatpush1.msra.mxu0 %v669
        %725 = vmatprep.subr.mxu0 0.0
        %726 = vmatpush1.msra.mxu0 %v670
        %727 = vmatprep.subr.mxu0 0.0
        %728 = vmatpush1.msra.mxu0 %v671
        %729 = vmatprep.subr.mxu0 0.0
        %730 = vmatpush1.msra.mxu0 %v672
        %731 = vmatprep.subr.mxu0 0.0
        %732 = vmatpush1.msra.mxu0 %v673
        %733 = vmatprep.subr.mxu0 0.0
        %734 = vmatpush1.msra.mxu0 %v674
        %735 = vmatprep.subr.mxu0 0.0
        %736 = vmatpush1.msra.mxu0 %v675
        %737 = vmatprep.subr.mxu0 0.0
        %738 = vmatpush1.msra.mxu0 %v676
        %739 = vmatprep.subr.mxu0 0.0
        %740 = vmatpush1.msra.mxu0 %v677
        %741 = vmatprep.subr.mxu0 0.0
        %742 = vmatpush1.msra.mxu0 %v678
        %743 = vmatprep.subr.mxu0 0.0
        %744 = vmatpush1.msra.mxu0 %v679
        %745 = vmatprep.subr.mxu0 0.0
        %746 = vmatpush1.msra.mxu0 %v680
        %747 = vmatprep.subr.mxu0 0.0
        %748 = vmatpush1.msra.mxu0 %v681
        %749 = vmatprep.subr.mxu0 0.0
        %750 = vmatpush1.msra.mxu0 %v682
        %751 = vmatprep.subr.mxu0 0.0
        %752 = vmatpush1.msra.mxu0 %v683
        %753 = vmatprep.subr.mxu0 0.0
        %754 = vmatpush1.msra.mxu0 %v684
        %755 = vmatprep.subr.mxu0 0.0
        %756 = vmatpush1.msra.mxu0 %v685
        %757 = vmatprep.subr.mxu0 0.0
        %758 = vmatpush1.msra.mxu0 %v686
        %759 = vmatprep.subr.mxu0 0.0
        %760 = vmatpush1.msra.mxu0 %v687
        %761 = vmatprep.subr.mxu0 0.0
        %762 = vmatpush1.msra.mxu0 %v688
        %763 = vmatprep.subr.mxu0 0.0
        %764 = vmatpush1.msra.mxu0 %v689
        %765 = vmatprep.subr.mxu0 0.0
        %766 = vmatpush1.msra.mxu0 %v690
        %767 = vmatprep.subr.mxu0 0.0
        %768 = vmatpush1.msra.mxu0 %v691
        %769 = vmatprep.subr.mxu0 0.0
        %770 = vmatpush1.msra.mxu0 %v692
        %771 = vmatprep.subr.mxu0 0.0
        %772 = vmatpush1.msra.mxu0 %v693
        %773 = vmatprep.subr.mxu0 0.0
        %774 = vmatpush1.msra.mxu0 %v694
        %775 = vmatprep.mubr.f32.mxu0 %v599
        %776 = vmatmul.mubr.f32.gmra.mrb[0].mxu0 %v567
        %v777 = vpop.f32.mrb[0].mxu0
        %v778 = vadd.f32 0.0, %v777
        %v779 = vpop.f32.mrb[0].mxu0
        %780 = vmatprep.mubr.f32.mxu0 %v600
        %781 = vmatmul.mubr.f32.gmra.mrb[0].mxu0 %v568
        %v782 = vpop.f32.mrb[0].mxu0
        %v783 = vadd.f32 0.0, %v782
        %v784 = vpop.f32.mrb[0].mxu0
        %785 = vmatprep.mubr.f32.mxu0 %v601
        %786 = vmatmul.mubr.f32.gmra.mrb[0].mxu0 %v569
        %v787 = vpop.f32.mrb[0].mxu0
        %v788 = vadd.f32 0.0, %v787
        %v789 = vpop.f32.mrb[0].mxu0
        %790 = vmatprep.mubr.f32.mxu0 %v602
        %791 = vmatmul.mubr.f32.gmra.mrb[0].mxu0 %v570
        %v792 = vpop.f32.mrb[0].mxu0
        %v793 = vadd.f32 0.0, %v792
        %v794 = vpop.f32.mrb[0].mxu0
        %795 = vmatprep.mubr.f32.mxu0 %v603
        %796 = vmatmul.mubr.f32.gmra.mrb[0].mxu0 %v571
        %v797 = vpop.f32.mrb[0].mxu0
        %v798 = vadd.f32 0.0, %v797
        %v799 = vpop.f32.mrb[0].mxu0
        %800 = vmatprep.mubr.f32.mxu0 %v604
        %801 = vmatmul.mubr.f32.gmra.mrb[0].mxu0 %v572
        %v802 = vpop.f32.mrb[0].mxu0
        %v803 = vadd.f32 0.0, %v802
        %v804 = vpop.f32.mrb[0].mxu0
        %805 = vmatprep.mubr.f32.mxu0 %v605
        %806 = vmatmul.mubr.f32.gmra.mrb[0].mxu0 %v573
        %v807 = vpop.f32.mrb[0].mxu0
        %v808 = vadd.f32 0.0, %v807
        %v809 = vpop.f32.mrb[0].mxu0
        %810 = vmatprep.mubr.f32.mxu0 %v606
        %811 = vmatmul.mubr.f32.gmra.mrb[0].mxu0 %v574
        %v812 = vpop.f32.mrb[0].mxu0
        %v813 = vadd.f32 0.0, %v812
        %v814 = vpop.f32.mrb[0].mxu0
        %815 = vmatprep.mubr.f32.mxu0 %v607
        %816 = vmatmul.mubr.f32.gmra.mrb[0].mxu0 %v575
        %v817 = vpop.f32.mrb[0].mxu0
        %v818 = vadd.f32 0.0, %v817
        %v819 = vpop.f32.mrb[0].mxu0
        %820 = vmatprep.mubr.f32.mxu0 %v608
        %821 = vmatmul.mubr.f32.gmra.mrb[0].mxu0 %v576
        %v822 = vpop.f32.mrb[0].mxu0
        %v823 = vadd.f32 0.0, %v822
        %v824 = vpop.f32.mrb[0].mxu0
        %825 = vmatprep.mubr.f32.mxu0 %v609
        %826 = vmatmul.mubr.f32.gmra.mrb[0].mxu0 %v577
        %v827 = vpop.f32.mrb[0].mxu0
        %v828 = vadd.f32 0.0, %v827
        %v829 = vpop.f32.mrb[0].mxu0
        %830 = vmatprep.mubr.f32.mxu0 %v610
        %831 = vmatmul.mubr.f32.gmra.mrb[0].mxu0 %v578
        %v832 = vpop.f32.mrb[0].mxu0
        %v833 = vadd.f32 0.0, %v832
        %v834 = vpop.f32.mrb[0].mxu0
        %835 = vmatprep.mubr.f32.mxu0 %v611
        %836 = vmatmul.mubr.f32.gmra.mrb[0].mxu0 %v579
        %v837 = vpop.f32.mrb[0].mxu0
        %v838 = vadd.f32 0.0, %v837
        %v839 = vpop.f32.mrb[0].mxu0
        %840 = vmatprep.mubr.f32.mxu0 %v612
        %841 = vmatmul.mubr.f32.gmra.mrb[0].mxu0 %v580
        %v842 = vpop.f32.mrb[0].mxu0
        %v843 = vadd.f32 0.0, %v842
        %v844 = vpop.f32.mrb[0].mxu0
        %845 = vmatprep.mubr.f32.mxu0 %v613
        %846 = vmatmul.mubr.f32.gmra.mrb[0].mxu0 %v581
        %v847 = vpop.f32.mrb[0].mxu0
        %v848 = vadd.f32 0.0, %v847
        %v849 = vpop.f32.mrb[0].mxu0
        %850 = vmatprep.mubr.f32.mxu0 %v614
        %851 = vmatmul.mubr.f32.gmra.mrb[0].mxu0 %v582
        %v852 = vpop.f32.mrb[0].mxu0
        %v853 = vadd.f32 0.0, %v852
        %v854 = vpop.f32.mrb[0].mxu0
        %855 = vmatprep.mubr.f32.mxu0 %v615
        %856 = vmatmul.mubr.f32.gmra.mrb[0].mxu0 %v583
        %v857 = vpop.f32.mrb[0].mxu0
        %v858 = vadd.f32 0.0, %v857
        %v859 = vpop.f32.mrb[0].mxu0
        %860 = vmatprep.mubr.f32.mxu0 %v616
        %861 = vmatmul.mubr.f32.gmra.mrb[0].mxu0 %v584
        %v862 = vpop.f32.mrb[0].mxu0
        %v863 = vadd.f32 0.0, %v862
        %v864 = vpop.f32.mrb[0].mxu0
        %865 = vmatprep.mubr.f32.mxu0 %v617
        %866 = vmatmul.mubr.f32.gmra.mrb[0].mxu0 %v585
        %v867 = vpop.f32.mrb[0].mxu0
        %v868 = vadd.f32 0.0, %v867
        %v869 = vpop.f32.mrb[0].mxu0
        %870 = vmatprep.mubr.f32.mxu0 %v618
        %871 = vmatmul.mubr.f32.gmra.mrb[0].mxu0 %v586
        %v872 = vpop.f32.mrb[0].mxu0
        %v873 = vadd.f32 0.0, %v872
        %v874 = vpop.f32.mrb[0].mxu0
        %875 = vmatprep.mubr.f32.mxu0 %v619
        %876 = vmatmul.mubr.f32.gmra.mrb[0].mxu0 %v587
        %v877 = vpop.f32.mrb[0].mxu0
        %v878 = vadd.f32 0.0, %v877
        %v879 = vpop.f32.mrb[0].mxu0
        %880 = vmatprep.mubr.f32.mxu0 %v620
        %881 = vmatmul.mubr.f32.gmra.mrb[0].mxu0 %v588
        %v882 = vpop.f32.mrb[0].mxu0
        %v883 = vadd.f32 0.0, %v882
        %v884 = vpop.f32.mrb[0].mxu0
        %885 = vmatprep.mubr.f32.mxu0 %v621
        %886 = vmatmul.mubr.f32.gmra.mrb[0].mxu0 %v589
        %v887 = vpop.f32.mrb[0].mxu0
        %v888 = vadd.f32 0.0, %v887
        %v889 = vpop.f32.mrb[0].mxu0
        %890 = vmatprep.mubr.f32.mxu0 %v622
        %891 = vmatmul.mubr.f32.gmra.mrb[0].mxu0 %v590
        %v892 = vpop.f32.mrb[0].mxu0
        %v893 = vadd.f32 0.0, %v892
        %v894 = vpop.f32.mrb[0].mxu0
        %895 = vmatprep.mubr.f32.mxu0 %v623
        %896 = vmatmul.mubr.f32.gmra.mrb[0].mxu0 %v591
        %v897 = vpop.f32.mrb[0].mxu0
        %v898 = vadd.f32 0.0, %v897
        %v899 = vpop.f32.mrb[0].mxu0
        %900 = vmatprep.mubr.f32.mxu0 %v624
        %901 = vmatmul.mubr.f32.gmra.mrb[0].mxu0 %v592
        %v902 = vpop.f32.mrb[0].mxu0
        %v903 = vadd.f32 0.0, %v902
        %v904 = vpop.f32.mrb[0].mxu0
        %905 = vmatprep.mubr.f32.mxu0 %v625
        %906 = vmatmul.mubr.f32.gmra.mrb[0].mxu0 %v593
        %v907 = vpop.f32.mrb[0].mxu0
        %v908 = vadd.f32 0.0, %v907
        %v909 = vpop.f32.mrb[0].mxu0
        %910 = vmatprep.mubr.f32.mxu0 %v626
        %911 = vmatmul.mubr.f32.gmra.mrb[0].mxu0 %v594
        %v912 = vpop.f32.mrb[0].mxu0
        %v913 = vadd.f32 0.0, %v912
        %v914 = vpop.f32.mrb[0].mxu0
        %915 = vmatprep.mubr.f32.mxu0 %v627
        %916 = vmatmul.mubr.f32.gmra.mrb[0].mxu0 %v595
        %v917 = vpop.f32.mrb[0].mxu0
        %v918 = vadd.f32 0.0, %v917
        %v919 = vpop.f32.mrb[0].mxu0
        %920 = vmatprep.mubr.f32.mxu0 %v628
        %921 = vmatmul.mubr.f32.gmra.mrb[0].mxu0 %v596
        %v922 = vpop.f32.mrb[0].mxu0
        %v923 = vadd.f32 0.0, %v922
        %v924 = vpop.f32.mrb[0].mxu0
        %925 = vmatprep.mubr.f32.mxu0 %v629
        %926 = vmatmul.mubr.f32.gmra.mrb[0].mxu0 %v597
        %v927 = vpop.f32.mrb[0].mxu0
        %v928 = vadd.f32 0.0, %v927
        %v929 = vpop.f32.mrb[0].mxu0
        %930 = vmatprep.mubr.f32.mxu0 %v630
        %931 = vmatmul.mubr.f32.gmra.mrb[0].mxu0 %v598
        %v932 = vpop.f32.mrb[0].mxu0
        %v933 = vadd.f32 0.0, %v932
        %v934 = vpop.f32.mrb[0].mxu0
        %935 = vdwg.mxu0
        %936 = vmatprep.subr.mxu0 0.0
        %937 = vmatpush1.msra.mxu0 %v695
        %938 = vmatprep.subr.mxu0 0.0
        %939 = vmatpush1.msra.mxu0 %v696
        %940 = vmatprep.subr.mxu0 0.0
        %941 = vmatpush1.msra.mxu0 %v697
        %942 = vmatprep.subr.mxu0 0.0
        %943 = vmatpush1.msra.mxu0 %v698
        %944 = vmatprep.subr.mxu0 0.0
        %945 = vmatpush1.msra.mxu0 %v699
        %946 = vmatprep.subr.mxu0 0.0
        %947 = vmatpush1.msra.mxu0 %v700
        %948 = vmatprep.subr.mxu0 0.0
        %949 = vmatpush1.msra.mxu0 %v701
        %950 = vmatprep.subr.mxu0 0.0
        %951 = vmatpush1.msra.mxu0 %v702
        %952 = vmatprep.subr.mxu0 0.0
        %953 = vmatpush1.msra.mxu0 %v703
        %954 = vmatprep.subr.mxu0 0.0
        %955 = vmatpush1.msra.mxu0 %v704
        %956 = vmatprep.subr.mxu0 0.0
        %957 = vmatpush1.msra.mxu0 %v705
        %958 = vmatprep.subr.mxu0 0.0
        %959 = vmatpush1.msra.mxu0 %v706
        %960 = vmatprep.subr.mxu0 0.0
        %961 = vmatpush1.msra.mxu0 %v707
        %962 = vmatprep.subr.mxu0 0.0
        %963 = vmatpush1.msra.mxu0 %v708
        %964 = vmatprep.subr.mxu0 0.0
        %965 = vmatpush1.msra.mxu0 %v709
        %966 = vmatprep.subr.mxu0 0.0
        %967 = vmatpush1.msra.mxu0 %v710
        %968 = vmatprep.subr.mxu0 0.0
        %969 = vmatpush1.msra.mxu0 0.0
        %970 = vmatprep.subr.mxu0 0.0
        %971 = vmatpush1.msra.mxu0 0.0
        %972 = vmatprep.subr.mxu0 0.0
        %973 = vmatpush1.msra.mxu0 0.0
        %974 = vmatprep.subr.mxu0 0.0
        %975 = vmatpush1.msra.mxu0 0.0
        %976 = vmatprep.subr.mxu0 0.0
        %977 = vmatpush1.msra.mxu0 0.0
        %978 = vmatprep.subr.mxu0 0.0
        %979 = vmatpush1.msra.mxu0 0.0
        %980 = vmatprep.subr.mxu0 0.0
        %981 = vmatpush1.msra.mxu0 0.0
        %982 = vmatprep.subr.mxu0 0.0
        %983 = vmatpush1.msra.mxu0 0.0
        %984 = vmatprep.subr.mxu0 0.0
        %985 = vmatpush1.msra.mxu0 0.0
        %986 = vmatprep.subr.mxu0 0.0
        %987 = vmatpush1.msra.mxu0 0.0
        %988 = vmatprep.subr.mxu0 0.0
        %989 = vmatpush1.msra.mxu0 0.0
        %990 = vmatprep.subr.mxu0 0.0
        %991 = vmatpush1.msra.mxu0 0.0
        %992 = vmatprep.subr.mxu0 0.0
        %993 = vmatpush1.msra.mxu0 0.0
        %994 = vmatprep.subr.mxu0 0.0
        %995 = vmatpush1.msra.mxu0 0.0
        %996 = vmatprep.subr.mxu0 0.0
        %997 = vmatpush1.msra.mxu0 0.0
        %998 = vmatprep.subr.mxu0 0.0
        %999 = vmatpush1.msra.mxu0 0.0
        %1000 = vmatprep.mubr.f32.mxu0 0.0
        %1001 = vmatmul.mubr.f32.gmra.mrb[0].mxu0 %v631
        %v1002 = vpop.f32.mrb[0].mxu0
        %v1003 = vadd.f32 %v778, %v1002
        %v1004 = vpop.f32.mrb[0].mxu0
        %1005 = vmatprep.mubr.f32.mxu0 0.0
        %1006 = vmatmul.mubr.f32.gmra.mrb[0].mxu0 %v632
        %v1007 = vpop.f32.mrb[0].mxu0
        %v1008 = vadd.f32 %v783, %v1007
        %v1009 = vpop.f32.mrb[0].mxu0
        %1010 = vmatprep.mubr.f32.mxu0 0.0
        %1011 = vmatmul.mubr.f32.gmra.mrb[0].mxu0 %v633
        %v1012 = vpop.f32.mrb[0].mxu0
        %v1013 = vadd.f32 %v788, %v1012
        %v1014 = vpop.f32.mrb[0].mxu0
        %1015 = vmatprep.mubr.f32.mxu0 0.0
        %1016 = vmatmul.mubr.f32.gmra.mrb[0].mxu0 %v634
        %v1017 = vpop.f32.mrb[0].mxu0
        %v1018 = vadd.f32 %v793, %v1017
        %v1019 = vpop.f32.mrb[0].mxu0
        %1020 = vmatprep.mubr.f32.mxu0 0.0
        %1021 = vmatmul.mubr.f32.gmra.mrb[0].mxu0 %v635
        %v1022 = vpop.f32.mrb[0].mxu0
        %v1023 = vadd.f32 %v798, %v1022
        %v1024 = vpop.f32.mrb[0].mxu0
        %1025 = vmatprep.mubr.f32.mxu0 0.0
        %1026 = vmatmul.mubr.f32.gmra.mrb[0].mxu0 %v636
        %v1027 = vpop.f32.mrb[0].mxu0
        %v1028 = vadd.f32 %v803, %v1027
        %v1029 = vpop.f32.mrb[0].mxu0
        %1030 = vmatprep.mubr.f32.mxu0 0.0
        %1031 = vmatmul.mubr.f32.gmra.mrb[0].mxu0 %v637
        %v1032 = vpop.f32.mrb[0].mxu0
        %v1033 = vadd.f32 %v808, %v1032
        %v1034 = vpop.f32.mrb[0].mxu0
        %1035 = vmatprep.mubr.f32.mxu0 0.0
        %1036 = vmatmul.mubr.f32.gmra.mrb[0].mxu0 %v638
        %v1037 = vpop.f32.mrb[0].mxu0
        %v1038 = vadd.f32 %v813, %v1037
        %v1039 = vpop.f32.mrb[0].mxu0
        %1040 = vmatprep.mubr.f32.mxu0 0.0
        %1041 = vmatmul.mubr.f32.gmra.mrb[0].mxu0 %v639
        %v1042 = vpop.f32.mrb[0].mxu0
        %v1043 = vadd.f32 %v818, %v1042
        %v1044 = vpop.f32.mrb[0].mxu0
        %1045 = vmatprep.mubr.f32.mxu0 0.0
        %1046 = vmatmul.mubr.f32.gmra.mrb[0].mxu0 %v640
        %v1047 = vpop.f32.mrb[0].mxu0
        %v1048 = vadd.f32 %v823, %v1047
        %v1049 = vpop.f32.mrb[0].mxu0
        %1050 = vmatprep.mubr.f32.mxu0 0.0
        %1051 = vmatmul.mubr.f32.gmra.mrb[0].mxu0 %v641
        %v1052 = vpop.f32.mrb[0].mxu0
        %v1053 = vadd.f32 %v828, %v1052
        %v1054 = vpop.f32.mrb[0].mxu0
        %1055 = vmatprep.mubr.f32.mxu0 0.0
        %1056 = vmatmul.mubr.f32.gmra.mrb[0].mxu0 %v642
        %v1057 = vpop.f32.mrb[0].mxu0
        %v1058 = vadd.f32 %v833, %v1057
        %v1059 = vpop.f32.mrb[0].mxu0
        %1060 = vmatprep.mubr.f32.mxu0 0.0
        %1061 = vmatmul.mubr.f32.gmra.mrb[0].mxu0 %v643
        %v1062 = vpop.f32.mrb[0].mxu0
        %v1063 = vadd.f32 %v838, %v1062
        %v1064 = vpop.f32.mrb[0].mxu0
        %1065 = vmatprep.mubr.f32.mxu0 0.0
        %1066 = vmatmul.mubr.f32.gmra.mrb[0].mxu0 %v644
        %v1067 = vpop.f32.mrb[0].mxu0
        %v1068 = vadd.f32 %v843, %v1067
        %v1069 = vpop.f32.mrb[0].mxu0
        %1070 = vmatprep.mubr.f32.mxu0 0.0
        %1071 = vmatmul.mubr.f32.gmra.mrb[0].mxu0 %v645
        %v1072 = vpop.f32.mrb[0].mxu0
        %v1073 = vadd.f32 %v848, %v1072
        %v1074 = vpop.f32.mrb[0].mxu0
        %1075 = vmatprep.mubr.f32.mxu0 0.0
        %1076 = vmatmul.mubr.f32.gmra.mrb[0].mxu0 %v646
        %v1077 = vpop.f32.mrb[0].mxu0
        %v1078 = vadd.f32 %v853, %v1077
        %v1079 = vpop.f32.mrb[0].mxu0
        %1080 = vmatprep.mubr.f32.mxu0 0.0
        %1081 = vmatmul.mubr.f32.gmra.mrb[0].mxu0 %v647
        %v1082 = vpop.f32.mrb[0].mxu0
        %v1083 = vadd.f32 %v858, %v1082
        %v1084 = vpop.f32.mrb[0].mxu0
        %1085 = vmatprep.mubr.f32.mxu0 0.0
        %1086 = vmatmul.mubr.f32.gmra.mrb[0].mxu0 %v648
        %v1087 = vpop.f32.mrb[0].mxu0
        %v1088 = vadd.f32 %v863, %v1087
        %v1089 = vpop.f32.mrb[0].mxu0
        %1090 = vmatprep.mubr.f32.mxu0 0.0
        %1091 = vmatmul.mubr.f32.gmra.mrb[0].mxu0 %v649
        %v1092 = vpop.f32.mrb[0].mxu0
        %v1093 = vadd.f32 %v868, %v1092
        %v1094 = vpop.f32.mrb[0].mxu0
        %1095 = vmatprep.mubr.f32.mxu0 0.0
        %1096 = vmatmul.mubr.f32.gmra.mrb[0].mxu0 %v650
        %v1097 = vpop.f32.mrb[0].mxu0
        %v1098 = vadd.f32 %v873, %v1097
        %v1099 = vpop.f32.mrb[0].mxu0
        %1100 = vmatprep.mubr.f32.mxu0 0.0
        %1101 = vmatmul.mubr.f32.gmra.mrb[0].mxu0 %v651
        %v1102 = vpop.f32.mrb[0].mxu0
        %v1103 = vadd.f32 %v878, %v1102
        %v1104 = vpop.f32.mrb[0].mxu0
        %1105 = vmatprep.mubr.f32.mxu0 0.0
        %1106 = vmatmul.mubr.f32.gmra.mrb[0].mxu0 %v652
        %v1107 = vpop.f32.mrb[0].mxu0
        %v1108 = vadd.f32 %v883, %v1107
        %v1109 = vpop.f32.mrb[0].mxu0
        %1110 = vmatprep.mubr.f32.mxu0 0.0
        %1111 = vmatmul.mubr.f32.gmra.mrb[0].mxu0 %v653
        %v1112 = vpop.f32.mrb[0].mxu0
        %v1113 = vadd.f32 %v888, %v1112
        %v1114 = vpop.f32.mrb[0].mxu0
        %1115 = vmatprep.mubr.f32.mxu0 0.0
        %1116 = vmatmul.mubr.f32.gmra.mrb[0].mxu0 %v654
        %v1117 = vpop.f32.mrb[0].mxu0
        %v1118 = vadd.f32 %v893, %v1117
        %v1119 = vpop.f32.mrb[0].mxu0
        %1120 = vmatprep.mubr.f32.mxu0 0.0
        %1121 = vmatmul.mubr.f32.gmra.mrb[0].mxu0 %v655
        %v1122 = vpop.f32.mrb[0].mxu0
        %v1123 = vadd.f32 %v898, %v1122
        %v1124 = vpop.f32.mrb[0].mxu0
        %1125 = vmatprep.mubr.f32.mxu0 0.0
        %1126 = vmatmul.mubr.f32.gmra.mrb[0].mxu0 %v656
        %v1127 = vpop.f32.mrb[0].mxu0
        %v1128 = vadd.f32 %v903, %v1127
        %v1129 = vpop.f32.mrb[0].mxu0
        %1130 = vmatprep.mubr.f32.mxu0 0.0
        %1131 = vmatmul.mubr.f32.gmra.mrb[0].mxu0 %v657
        %v1132 = vpop.f32.mrb[0].mxu0
        %v1133 = vadd.f32 %v908, %v1132
        %v1134 = vpop.f32.mrb[0].mxu0
        %1135 = vmatprep.mubr.f32.mxu0 0.0
        %1136 = vmatmul.mubr.f32.gmra.mrb[0].mxu0 %v658
        %v1137 = vpop.f32.mrb[0].mxu0
        %v1138 = vadd.f32 %v913, %v1137
        %v1139 = vpop.f32.mrb[0].mxu0
        %1140 = vmatprep.mubr.f32.mxu0 0.0
        %1141 = vmatmul.mubr.f32.gmra.mrb[0].mxu0 %v659
        %v1142 = vpop.f32.mrb[0].mxu0
        %v1143 = vadd.f32 %v918, %v1142
        %v1144 = vpop.f32.mrb[0].mxu0
        %1145 = vmatprep.mubr.f32.mxu0 0.0
        %1146 = vmatmul.mubr.f32.gmra.mrb[0].mxu0 %v660
        %v1147 = vpop.f32.mrb[0].mxu0
        %v1148 = vadd.f32 %v923, %v1147
        %v1149 = vpop.f32.mrb[0].mxu0
        %1150 = vmatprep.mubr.f32.mxu0 0.0
        %1151 = vmatmul.mubr.f32.gmra.mrb[0].mxu0 %v661
        %v1152 = vpop.f32.mrb[0].mxu0
        %v1153 = vadd.f32 %v928, %v1152
        %v1154 = vpop.f32.mrb[0].mxu0
        %1155 = vmatprep.mubr.f32.mxu0 0.0
        %1156 = vmatmul.mubr.f32.gmra.mrb[0].mxu0 %v662
        %v1157 = vpop.f32.mrb[0].mxu0
        %v1158 = vadd.f32 %v933, %v1157
        %v1159 = vpop.f32.mrb[0].mxu0
        %1160 = vdwg.mxu0
        %1161 = vmatprep.subr.mxu0 0.0
        %1162 = vmatpush1.msra.mxu0 %v519
        %1163 = vmatprep.subr.mxu0 0.0
        %1164 = vmatpush1.msra.mxu0 %v520
        %1165 = vmatprep.subr.mxu0 0.0
        %1166 = vmatpush1.msra.mxu0 %v521
        %1167 = vmatprep.subr.mxu0 0.0
        %1168 = vmatpush1.msra.mxu0 %v522
        %1169 = vmatprep.subr.mxu0 0.0
        %1170 = vmatpush1.msra.mxu0 %v523
        %1171 = vmatprep.subr.mxu0 0.0
        %1172 = vmatpush1.msra.mxu0 %v524
        %1173 = vmatprep.subr.mxu0 0.0
        %1174 = vmatpush1.msra.mxu0 %v525
        %1175 = vmatprep.subr.mxu0 0.0
        %1176 = vmatpush1.msra.mxu0 %v526
        %1177 = vmatprep.subr.mxu0 0.0
        %1178 = vmatpush1.msra.mxu0 %v527
        %1179 = vmatprep.subr.mxu0 0.0
        %1180 = vmatpush1.msra.mxu0 %v528
        %1181 = vmatprep.subr.mxu0 0.0
        %1182 = vmatpush1.msra.mxu0 %v529
        %1183 = vmatprep.subr.mxu0 0.0
        %1184 = vmatpush1.msra.mxu0 %v530
        %1185 = vmatprep.subr.mxu0 0.0
        %1186 = vmatpush1.msra.mxu0 %v531
        %1187 = vmatprep.subr.mxu0 0.0
        %1188 = vmatpush1.msra.mxu0 %v532
        %1189 = vmatprep.subr.mxu0 0.0
        %1190 = vmatpush1.msra.mxu0 %v533
        %1191 = vmatprep.subr.mxu0 0.0
        %1192 = vmatpush1.msra.mxu0 %v534
        %1193 = vmatprep.subr.mxu0 0.0
        %1194 = vmatpush1.msra.mxu0 %v535
        %1195 = vmatprep.subr.mxu0 0.0
        %1196 = vmatpush1.msra.mxu0 %v536
        %1197 = vmatprep.subr.mxu0 0.0
        %1198 = vmatpush1.msra.mxu0 %v537
        %1199 = vmatprep.subr.mxu0 0.0
        %1200 = vmatpush1.msra.mxu0 %v538
        %1201 = vmatprep.subr.mxu0 0.0
        %1202 = vmatpush1.msra.mxu0 %v539
        %1203 = vmatprep.subr.mxu0 0.0
        %1204 = vmatpush1.msra.mxu0 %v540
        %1205 = vmatprep.subr.mxu0 0.0
        %1206 = vmatpush1.msra.mxu0 %v541
        %1207 = vmatprep.subr.mxu0 0.0
        %1208 = vmatpush1.msra.mxu0 %v542
        %1209 = vmatprep.subr.mxu0 0.0
        %1210 = vmatpush1.msra.mxu0 %v543
        %1211 = vmatprep.subr.mxu0 0.0
        %1212 = vmatpush1.msra.mxu0 %v544
        %1213 = vmatprep.subr.mxu0 0.0
        %1214 = vmatpush1.msra.mxu0 %v545
        %1215 = vmatprep.subr.mxu0 0.0
        %1216 = vmatpush1.msra.mxu0 %v546
        %1217 = vmatprep.subr.mxu0 0.0
        %1218 = vmatpush1.msra.mxu0 %v547
        %1219 = vmatprep.subr.mxu0 0.0
        %1220 = vmatpush1.msra.mxu0 %v548
        %1221 = vmatprep.subr.mxu0 0.0
        %1222 = vmatpush1.msra.mxu0 %v549
        %1223 = vmatprep.subr.mxu0 0.0
        %1224 = vmatpush1.msra.mxu0 %v550
        %1225 = vmatprep.mubr.f32.mxu0 %v455
        %1226 = vmatmul.mubr.f32.gmra.mrb[0].mxu0 %v423
        %v1227 = vpop.f32.mrb[0].mxu0
        %v1228 = vadd.f32 %v1003, %v1227
        %v1229 = vpop.f32.mrb[0].mxu0
        %1230 = vmatprep.mubr.f32.mxu0 %v456
        %1231 = vmatmul.mubr.f32.gmra.mrb[0].mxu0 %v424
        %v1232 = vpop.f32.mrb[0].mxu0
        %v1233 = vadd.f32 %v1008, %v1232
        %v1234 = vpop.f32.mrb[0].mxu0
        %1235 = vmatprep.mubr.f32.mxu0 %v457
        %1236 = vmatmul.mubr.f32.gmra.mrb[0].mxu0 %v425
        %v1237 = vpop.f32.mrb[0].mxu0
        %v1238 = vadd.f32 %v1013, %v1237
        %v1239 = vpop.f32.mrb[0].mxu0
        %1240 = vmatprep.mubr.f32.mxu0 %v458
        %1241 = vmatmul.mubr.f32.gmra.mrb[0].mxu0 %v426
        %v1242 = vpop.f32.mrb[0].mxu0
        %v1243 = vadd.f32 %v1018, %v1242
        %v1244 = vpop.f32.mrb[0].mxu0
        %1245 = vmatprep.mubr.f32.mxu0 %v459
        %1246 = vmatmul.mubr.f32.gmra.mrb[0].mxu0 %v427
        %v1247 = vpop.f32.mrb[0].mxu0
        %v1248 = vadd.f32 %v1023, %v1247
        %v1249 = vpop.f32.mrb[0].mxu0
        %1250 = vmatprep.mubr.f32.mxu0 %v460
        %1251 = vmatmul.mubr.f32.gmra.mrb[0].mxu0 %v428
        %v1252 = vpop.f32.mrb[0].mxu0
        %v1253 = vadd.f32 %v1028, %v1252
        %v1254 = vpop.f32.mrb[0].mxu0
        %1255 = vmatprep.mubr.f32.mxu0 %v461
        %1256 = vmatmul.mubr.f32.gmra.mrb[0].mxu0 %v429
        %v1257 = vpop.f32.mrb[0].mxu0
        %v1258 = vadd.f32 %v1033, %v1257
        %v1259 = vpop.f32.mrb[0].mxu0
        %1260 = vmatprep.mubr.f32.mxu0 %v462
        %1261 = vmatmul.mubr.f32.gmra.mrb[0].mxu0 %v430
        %v1262 = vpop.f32.mrb[0].mxu0
        %v1263 = vadd.f32 %v1038, %v1262
        %v1264 = vpop.f32.mrb[0].mxu0
        %1265 = vmatprep.mubr.f32.mxu0 %v463
        %1266 = vmatmul.mubr.f32.gmra.mrb[0].mxu0 %v431
        %v1267 = vpop.f32.mrb[0].mxu0
        %v1268 = vadd.f32 %v1043, %v1267
        %v1269 = vpop.f32.mrb[0].mxu0
        %1270 = vmatprep.mubr.f32.mxu0 %v464
        %1271 = vmatmul.mubr.f32.gmra.mrb[0].mxu0 %v432
        %v1272 = vpop.f32.mrb[0].mxu0
        %v1273 = vadd.f32 %v1048, %v1272
        %v1274 = vpop.f32.mrb[0].mxu0
        %1275 = vmatprep.mubr.f32.mxu0 %v465
        %1276 = vmatmul.mubr.f32.gmra.mrb[0].mxu0 %v433
        %v1277 = vpop.f32.mrb[0].mxu0
        %v1278 = vadd.f32 %v1053, %v1277
        %v1279 = vpop.f32.mrb[0].mxu0
        %1280 = vmatprep.mubr.f32.mxu0 %v466
        %1281 = vmatmul.mubr.f32.gmra.mrb[0].mxu0 %v434
        %v1282 = vpop.f32.mrb[0].mxu0
        %v1283 = vadd.f32 %v1058, %v1282
        %v1284 = vpop.f32.mrb[0].mxu0
        %1285 = vmatprep.mubr.f32.mxu0 %v467
        %1286 = vmatmul.mubr.f32.gmra.mrb[0].mxu0 %v435
        %v1287 = vpop.f32.mrb[0].mxu0
        %v1288 = vadd.f32 %v1063, %v1287
        %v1289 = vpop.f32.mrb[0].mxu0
        %1290 = vmatprep.mubr.f32.mxu0 %v468
        %1291 = vmatmul.mubr.f32.gmra.mrb[0].mxu0 %v436
        %v1292 = vpop.f32.mrb[0].mxu0
        %v1293 = vadd.f32 %v1068, %v1292
        %v1294 = vpop.f32.mrb[0].mxu0
        %1295 = vmatprep.mubr.f32.mxu0 %v469
        %1296 = vmatmul.mubr.f32.gmra.mrb[0].mxu0 %v437
        %v1297 = vpop.f32.mrb[0].mxu0
        %v1298 = vadd.f32 %v1073, %v1297
        %v1299 = vpop.f32.mrb[0].mxu0
        %1300 = vmatprep.mubr.f32.mxu0 %v470
        %1301 = vmatmul.mubr.f32.gmra.mrb[0].mxu0 %v438
        %v1302 = vpop.f32.mrb[0].mxu0
        %v1303 = vadd.f32 %v1078, %v1302
        %v1304 = vpop.f32.mrb[0].mxu0
        %1305 = vmatprep.mubr.f32.mxu0 %v471
        %1306 = vmatmul.mubr.f32.gmra.mrb[0].mxu0 %v439
        %v1307 = vpop.f32.mrb[0].mxu0
        %v1308 = vadd.f32 %v1083, %v1307
        %v1309 = vpop.f32.mrb[0].mxu0
        %1310 = vmatprep.mubr.f32.mxu0 %v472
        %1311 = vmatmul.mubr.f32.gmra.mrb[0].mxu0 %v440
        %v1312 = vpop.f32.mrb[0].mxu0
        %v1313 = vadd.f32 %v1088, %v1312
        %v1314 = vpop.f32.mrb[0].mxu0
        %1315 = vmatprep.mubr.f32.mxu0 %v473
        %1316 = vmatmul.mubr.f32.gmra.mrb[0].mxu0 %v441
        %v1317 = vpop.f32.mrb[0].mxu0
        %v1318 = vadd.f32 %v1093, %v1317
        %v1319 = vpop.f32.mrb[0].mxu0
        %1320 = vmatprep.mubr.f32.mxu0 %v474
        %1321 = vmatmul.mubr.f32.gmra.mrb[0].mxu0 %v442
        %v1322 = vpop.f32.mrb[0].mxu0
        %v1323 = vadd.f32 %v1098, %v1322
        %v1324 = vpop.f32.mrb[0].mxu0
        %1325 = vmatprep.mubr.f32.mxu0 %v475
        %1326 = vmatmul.mubr.f32.gmra.mrb[0].mxu0 %v443
        %v1327 = vpop.f32.mrb[0].mxu0
        %v1328 = vadd.f32 %v1103, %v1327
        %v1329 = vpop.f32.mrb[0].mxu0
        %1330 = vmatprep.mubr.f32.mxu0 %v476
        %1331 = vmatmul.mubr.f32.gmra.mrb[0].mxu0 %v444
        %v1332 = vpop.f32.mrb[0].mxu0
        %v1333 = vadd.f32 %v1108, %v1332
        %v1334 = vpop.f32.mrb[0].mxu0
        %1335 = vmatprep.mubr.f32.mxu0 %v477
        %1336 = vmatmul.mubr.f32.gmra.mrb[0].mxu0 %v445
        %v1337 = vpop.f32.mrb[0].mxu0
        %v1338 = vadd.f32 %v1113, %v1337
        %v1339 = vpop.f32.mrb[0].mxu0
        %1340 = vmatprep.mubr.f32.mxu0 %v478
        %1341 = vmatmul.mubr.f32.gmra.mrb[0].mxu0 %v446
        %v1342 = vpop.f32.mrb[0].mxu0
        %v1343 = vadd.f32 %v1118, %v1342
        %v1344 = vpop.f32.mrb[0].mxu0
        %1345 = vmatprep.mubr.f32.mxu0 %v479
        %1346 = vmatmul.mubr.f32.gmra.mrb[0].mxu0 %v447
        %v1347 = vpop.f32.mrb[0].mxu0
        %v1348 = vadd.f32 %v1123, %v1347
        %v1349 = vpop.f32.mrb[0].mxu0
        %1350 = vmatprep.mubr.f32.mxu0 %v480
        %1351 = vmatmul.mubr.f32.gmra.mrb[0].mxu0 %v448
        %v1352 = vpop.f32.mrb[0].mxu0
        %v1353 = vadd.f32 %v1128, %v1352
        %v1354 = vpop.f32.mrb[0].mxu0
        %1355 = vmatprep.mubr.f32.mxu0 %v481
        %1356 = vmatmul.mubr.f32.gmra.mrb[0].mxu0 %v449
        %v1357 = vpop.f32.mrb[0].mxu0
        %v1358 = vadd.f32 %v1133, %v1357
        %v1359 = vpop.f32.mrb[0].mxu0
        %1360 = vmatprep.mubr.f32.mxu0 %v482
        %1361 = vmatmul.mubr.f32.gmra.mrb[0].mxu0 %v450
        %v1362 = vpop.f32.mrb[0].mxu0
        %v1363 = vadd.f32 %v1138, %v1362
        %v1364 = vpop.f32.mrb[0].mxu0
        %1365 = vmatprep.mubr.f32.mxu0 %v483
        %1366 = vmatmul.mubr.f32.gmra.mrb[0].mxu0 %v451
        %v1367 = vpop.f32.mrb[0].mxu0
        %v1368 = vadd.f32 %v1143, %v1367
        %v1369 = vpop.f32.mrb[0].mxu0
        %1370 = vmatprep.mubr.f32.mxu0 %v484
        %1371 = vmatmul.mubr.f32.gmra.mrb[0].mxu0 %v452
        %v1372 = vpop.f32.mrb[0].mxu0
        %v1373 = vadd.f32 %v1148, %v1372
        %v1374 = vpop.f32.mrb[0].mxu0
        %1375 = vmatprep.mubr.f32.mxu0 %v485
        %1376 = vmatmul.mubr.f32.gmra.mrb[0].mxu0 %v453
        %v1377 = vpop.f32.mrb[0].mxu0
        %v1378 = vadd.f32 %v1153, %v1377
        %v1379 = vpop.f32.mrb[0].mxu0
        %1380 = vmatprep.mubr.f32.mxu0 %v486
        %1381 = vmatmul.mubr.f32.gmra.mrb[0].mxu0 %v454
        %v1382 = vpop.f32.mrb[0].mxu0
        %v1383 = vadd.f32 %v1158, %v1382
        %v1384 = vpop.f32.mrb[0].mxu0
        %1385 = vdwg.mxu0
        %1386 = vmatprep.subr.mxu0 0.0
        %1387 = vmatpush1.msra.mxu0 %v551
        %1388 = vmatprep.subr.mxu0 0.0
        %1389 = vmatpush1.msra.mxu0 %v552
        %1390 = vmatprep.subr.mxu0 0.0
        %1391 = vmatpush1.msra.mxu0 %v553
        %1392 = vmatprep.subr.mxu0 0.0
        %1393 = vmatpush1.msra.mxu0 %v554
        %1394 = vmatprep.subr.mxu0 0.0
        %1395 = vmatpush1.msra.mxu0 %v555
        %1396 = vmatprep.subr.mxu0 0.0
        %1397 = vmatpush1.msra.mxu0 %v556
        %1398 = vmatprep.subr.mxu0 0.0
        %1399 = vmatpush1.msra.mxu0 %v557
        %1400 = vmatprep.subr.mxu0 0.0
        %1401 = vmatpush1.msra.mxu0 %v558
        %1402 = vmatprep.subr.mxu0 0.0
        %1403 = vmatpush1.msra.mxu0 %v559
        %1404 = vmatprep.subr.mxu0 0.0
        %1405 = vmatpush1.msra.mxu0 %v560
        %1406 = vmatprep.subr.mxu0 0.0
        %1407 = vmatpush1.msra.mxu0 %v561
        %1408 = vmatprep.subr.mxu0 0.0
        %1409 = vmatpush1.msra.mxu0 %v562
        %1410 = vmatprep.subr.mxu0 0.0
        %1411 = vmatpush1.msra.mxu0 %v563
        %1412 = vmatprep.subr.mxu0 0.0
        %1413 = vmatpush1.msra.mxu0 %v564
        %1414 = vmatprep.subr.mxu0 0.0
        %1415 = vmatpush1.msra.mxu0 %v565
        %1416 = vmatprep.subr.mxu0 0.0
        %1417 = vmatpush1.msra.mxu0 %v566
        %1418 = vmatprep.subr.mxu0 0.0
        %1419 = vmatpush1.msra.mxu0 0.0
        %1420 = vmatprep.subr.mxu0 0.0
        %1421 = vmatpush1.msra.mxu0 0.0
        %1422 = vmatprep.subr.mxu0 0.0
        %1423 = vmatpush1.msra.mxu0 0.0
        %1424 = vmatprep.subr.mxu0 0.0
        %1425 = vmatpush1.msra.mxu0 0.0
        %1426 = vmatprep.subr.mxu0 0.0
        %1427 = vmatpush1.msra.mxu0 0.0
        %1428 = vmatprep.subr.mxu0 0.0
        %1429 = vmatpush1.msra.mxu0 0.0
        %1430 = vmatprep.subr.mxu0 0.0
        %1431 = vmatpush1.msra.mxu0 0.0
        %1432 = vmatprep.subr.mxu0 0.0
        %1433 = vmatpush1.msra.mxu0 0.0
        %1434 = vmatprep.subr.mxu0 0.0
        %1435 = vmatpush1.msra.mxu0 0.0
        %1436 = vmatprep.subr.mxu0 0.0
        %1437 = vmatpush1.msra.mxu0 0.0
        %1438 = vmatprep.subr.mxu0 0.0
        %1439 = vmatpush1.msra.mxu0 0.0
        %1440 = vmatprep.subr.mxu0 0.0
        %1441 = vmatpush1.msra.mxu0 0.0
        %1442 = vmatprep.subr.mxu0 0.0
        %1443 = vmatpush1.msra.mxu0 0.0
        %1444 = vmatprep.subr.mxu0 0.0
        %1445 = vmatpush1.msra.mxu0 0.0
        %1446 = vmatprep.subr.mxu0 0.0
        %1447 = vmatpush1.msra.mxu0 0.0
        %1448 = vmatprep.subr.mxu0 0.0
        %1449 = vmatpush1.msra.mxu0 0.0
        %1450 = vmatprep.mubr.f32.mxu0 0.0
        %1451 = vmatmul.mubr.f32.gmra.mrb[0].mxu0 %v487
        %v1452 = vpop.f32.mrb[0].mxu0
        %v1453 = vadd.f32 %v1228, %v1452
        %v1454 = vpop.f32.mrb[0].mxu0
        %1455 = vmatprep.mubr.f32.mxu0 0.0
        %1456 = vmatmul.mubr.f32.gmra.mrb[0].mxu0 %v488
        %v1457 = vpop.f32.mrb[0].mxu0
        %v1458 = vadd.f32 %v1233, %v1457
        %v1459 = vpop.f32.mrb[0].mxu0
        %1460 = vmatprep.mubr.f32.mxu0 0.0
        %1461 = vmatmul.mubr.f32.gmra.mrb[0].mxu0 %v489
        %v1462 = vpop.f32.mrb[0].mxu0
        %v1463 = vadd.f32 %v1238, %v1462
        %v1464 = vpop.f32.mrb[0].mxu0
        %1465 = vmatprep.mubr.f32.mxu0 0.0
        %1466 = vmatmul.mubr.f32.gmra.mrb[0].mxu0 %v490
        %v1467 = vpop.f32.mrb[0].mxu0
        %v1468 = vadd.f32 %v1243, %v1467
        %v1469 = vpop.f32.mrb[0].mxu0
        %1470 = vmatprep.mubr.f32.mxu0 0.0
        %1471 = vmatmul.mubr.f32.gmra.mrb[0].mxu0 %v491
        %v1472 = vpop.f32.mrb[0].mxu0
        %v1473 = vadd.f32 %v1248, %v1472
        %v1474 = vpop.f32.mrb[0].mxu0
        %1475 = vmatprep.mubr.f32.mxu0 0.0
        %1476 = vmatmul.mubr.f32.gmra.mrb[0].mxu0 %v492
        %v1477 = vpop.f32.mrb[0].mxu0
        %v1478 = vadd.f32 %v1253, %v1477
        %v1479 = vpop.f32.mrb[0].mxu0
        %1480 = vmatprep.mubr.f32.mxu0 0.0
        %1481 = vmatmul.mubr.f32.gmra.mrb[0].mxu0 %v493
        %v1482 = vpop.f32.mrb[0].mxu0
        %v1483 = vadd.f32 %v1258, %v1482
        %v1484 = vpop.f32.mrb[0].mxu0
        %1485 = vmatprep.mubr.f32.mxu0 0.0
        %1486 = vmatmul.mubr.f32.gmra.mrb[0].mxu0 %v494
        %v1487 = vpop.f32.mrb[0].mxu0
        %v1488 = vadd.f32 %v1263, %v1487
        %v1489 = vpop.f32.mrb[0].mxu0
        %1490 = vmatprep.mubr.f32.mxu0 0.0
        %1491 = vmatmul.mubr.f32.gmra.mrb[0].mxu0 %v495
        %v1492 = vpop.f32.mrb[0].mxu0
        %v1493 = vadd.f32 %v1268, %v1492
        %v1494 = vpop.f32.mrb[0].mxu0
        %1495 = vmatprep.mubr.f32.mxu0 0.0
        %1496 = vmatmul.mubr.f32.gmra.mrb[0].mxu0 %v496
        %v1497 = vpop.f32.mrb[0].mxu0
        %v1498 = vadd.f32 %v1273, %v1497
        %v1499 = vpop.f32.mrb[0].mxu0
        %1500 = vmatprep.mubr.f32.mxu0 0.0
        %1501 = vmatmul.mubr.f32.gmra.mrb[0].mxu0 %v497
        %v1502 = vpop.f32.mrb[0].mxu0
        %v1503 = vadd.f32 %v1278, %v1502
        %v1504 = vpop.f32.mrb[0].mxu0
        %1505 = vmatprep.mubr.f32.mxu0 0.0
        %1506 = vmatmul.mubr.f32.gmra.mrb[0].mxu0 %v498
        %v1507 = vpop.f32.mrb[0].mxu0
        %v1508 = vadd.f32 %v1283, %v1507
        %v1509 = vpop.f32.mrb[0].mxu0
        %1510 = vmatprep.mubr.f32.mxu0 0.0
        %1511 = vmatmul.mubr.f32.gmra.mrb[0].mxu0 %v499
        %v1512 = vpop.f32.mrb[0].mxu0
        %v1513 = vadd.f32 %v1288, %v1512
        %v1514 = vpop.f32.mrb[0].mxu0
        %1515 = vmatprep.mubr.f32.mxu0 0.0
        %1516 = vmatmul.mubr.f32.gmra.mrb[0].mxu0 %v500
        %v1517 = vpop.f32.mrb[0].mxu0
        %v1518 = vadd.f32 %v1293, %v1517
        %v1519 = vpop.f32.mrb[0].mxu0
        %1520 = vmatprep.mubr.f32.mxu0 0.0
        %1521 = vmatmul.mubr.f32.gmra.mrb[0].mxu0 %v501
        %v1522 = vpop.f32.mrb[0].mxu0
        %v1523 = vadd.f32 %v1298, %v1522
        %v1524 = vpop.f32.mrb[0].mxu0
        %1525 = vmatprep.mubr.f32.mxu0 0.0
        %1526 = vmatmul.mubr.f32.gmra.mrb[0].mxu0 %v502
        %v1527 = vpop.f32.mrb[0].mxu0
        %v1528 = vadd.f32 %v1303, %v1527
        %v1529 = vpop.f32.mrb[0].mxu0
        %1530 = vmatprep.mubr.f32.mxu0 0.0
        %1531 = vmatmul.mubr.f32.gmra.mrb[0].mxu0 %v503
        %v1532 = vpop.f32.mrb[0].mxu0
        %v1533 = vadd.f32 %v1308, %v1532
        %v1534 = vpop.f32.mrb[0].mxu0
        %1535 = vmatprep.mubr.f32.mxu0 0.0
        %1536 = vmatmul.mubr.f32.gmra.mrb[0].mxu0 %v504
        %v1537 = vpop.f32.mrb[0].mxu0
        %v1538 = vadd.f32 %v1313, %v1537
        %v1539 = vpop.f32.mrb[0].mxu0
        %1540 = vmatprep.mubr.f32.mxu0 0.0
        %1541 = vmatmul.mubr.f32.gmra.mrb[0].mxu0 %v505
        %v1542 = vpop.f32.mrb[0].mxu0
        %v1543 = vadd.f32 %v1318, %v1542
        %v1544 = vpop.f32.mrb[0].mxu0
        %1545 = vmatprep.mubr.f32.mxu0 0.0
        %1546 = vmatmul.mubr.f32.gmra.mrb[0].mxu0 %v506
        %v1547 = vpop.f32.mrb[0].mxu0
        %v1548 = vadd.f32 %v1323, %v1547
        %v1549 = vpop.f32.mrb[0].mxu0
        %1550 = vmatprep.mubr.f32.mxu0 0.0
        %1551 = vmatmul.mubr.f32.gmra.mrb[0].mxu0 %v507
        %v1552 = vpop.f32.mrb[0].mxu0
        %v1553 = vadd.f32 %v1328, %v1552
        %v1554 = vpop.f32.mrb[0].mxu0
        %1555 = vmatprep.mubr.f32.mxu0 0.0
        %1556 = vmatmul.mubr.f32.gmra.mrb[0].mxu0 %v508
        %v1557 = vpop.f32.mrb[0].mxu0
        %v1558 = vadd.f32 %v1333, %v1557
        %v1559 = vpop.f32.mrb[0].mxu0
        %1560 = vmatprep.mubr.f32.mxu0 0.0
        %1561 = vmatmul.mubr.f32.gmra.mrb[0].mxu0 %v509
        %v1562 = vpop.f32.mrb[0].mxu0
        %v1563 = vadd.f32 %v1338, %v1562
        %v1564 = vpop.f32.mrb[0].mxu0
        %1565 = vmatprep.mubr.f32.mxu0 0.0
        %1566 = vmatmul.mubr.f32.gmra.mrb[0].mxu0 %v510
        %v1567 = vpop.f32.mrb[0].mxu0
        %v1568 = vadd.f32 %v1343, %v1567
        %v1569 = vpop.f32.mrb[0].mxu0
        %1570 = vmatprep.mubr.f32.mxu0 0.0
        %1571 = vmatmul.mubr.f32.gmra.mrb[0].mxu0 %v511
        %v1572 = vpop.f32.mrb[0].mxu0
        %v1573 = vadd.f32 %v1348, %v1572
        %v1574 = vpop.f32.mrb[0].mxu0
        %1575 = vmatprep.mubr.f32.mxu0 0.0
        %1576 = vmatmul.mubr.f32.gmra.mrb[0].mxu0 %v512
        %v1577 = vpop.f32.mrb[0].mxu0
        %v1578 = vadd.f32 %v1353, %v1577
        %v1579 = vpop.f32.mrb[0].mxu0
        %1580 = vmatprep.mubr.f32.mxu0 0.0
        %1581 = vmatmul.mubr.f32.gmra.mrb[0].mxu0 %v513
        %v1582 = vpop.f32.mrb[0].mxu0
        %v1583 = vadd.f32 %v1358, %v1582
        %v1584 = vpop.f32.mrb[0].mxu0
        %1585 = vmatprep.mubr.f32.mxu0 0.0
        %1586 = vmatmul.mubr.f32.gmra.mrb[0].mxu0 %v514
        %v1587 = vpop.f32.mrb[0].mxu0
        %v1588 = vadd.f32 %v1363, %v1587
        %v1589 = vpop.f32.mrb[0].mxu0
        %1590 = vmatprep.mubr.f32.mxu0 0.0
        %1591 = vmatmul.mubr.f32.gmra.mrb[0].mxu0 %v515
        %v1592 = vpop.f32.mrb[0].mxu0
        %v1593 = vadd.f32 %v1368, %v1592
        %v1594 = vpop.f32.mrb[0].mxu0
        %1595 = vmatprep.mubr.f32.mxu0 0.0
        %1596 = vmatmul.mubr.f32.gmra.mrb[0].mxu0 %v516
        %v1597 = vpop.f32.mrb[0].mxu0
        %v1598 = vadd.f32 %v1373, %v1597
        %v1599 = vpop.f32.mrb[0].mxu0
        %1600 = vmatprep.mubr.f32.mxu0 0.0
        %1601 = vmatmul.mubr.f32.gmra.mrb[0].mxu0 %v517
        %v1602 = vpop.f32.mrb[0].mxu0
        %v1603 = vadd.f32 %v1378, %v1602
        %v1604 = vpop.f32.mrb[0].mxu0
        %1605 = vmatprep.mubr.f32.mxu0 0.0
        %1606 = vmatmul.mubr.f32.gmra.mrb[0].mxu0 %v518
        %v1607 = vpop.f32.mrb[0].mxu0
        %v1608 = vadd.f32 %v1383, %v1607
        %v1609 = vpop.f32.mrb[0].mxu0
        %1610 = vdwg.mxu0
        %s1611 = scalar_lea.vmem [#allocation2], 48
        %v1612 = vld [vmem:[%s1611] sm:$0xff]
        %v1613 = vld [vmem:[%s1611 + $0x8] sm:$0xff]
        %v1614 = vld [vmem:[%s1611 + $0x18] sm:$0xff]
        %v1615 = vld [vmem:[%s1611 + $0x20] sm:$0xff]
        %v1616 = vld [vmem:[%s1611 + $0x30] sm:$0xff]
        %v1617 = vld [vmem:[%s1611 + $0x38] sm:$0xff]
        %v1618 = vld [vmem:[%s1611 + $0x48] sm:$0xff]
        %v1619 = vld [vmem:[%s1611 + $0x50] sm:$0xff]
        %v1620 = vld [vmem:[%s1611 + $0x60] sm:$0xff]
        %v1621 = vld [vmem:[%s1611 + $0x68] sm:$0xff]
        %v1622 = vld [vmem:[%s1611 + $0x78] sm:$0xff]
        %v1623 = vld [vmem:[%s1611 + $0x80] sm:$0xff]
        %v1624 = vld [vmem:[%s1611 + $0x90] sm:$0xff]
        %v1625 = vld [vmem:[%s1611 + $0x98] sm:$0xff]
        %v1626 = vld [vmem:[%s1611 + $0xa8] sm:$0xff]
        %v1627 = vld [vmem:[%s1611 + $0xb0] sm:$0xff]
        %v1628 = vld [vmem:[%s1611 + $0xc0] sm:$0xff]
        %v1629 = vld [vmem:[%s1611 + $0xc8] sm:$0xff]
        %v1630 = vld [vmem:[%s1611 + $0xd8] sm:$0xff]
        %v1631 = vld [vmem:[%s1611 + $0xe0] sm:$0xff]
        %v1632 = vld [vmem:[%s1611 + $0xf0] sm:$0xff]
        %v1633 = vld [vmem:[%s1611 + $0xf8] sm:$0xff]
        %v1634 = vld [vmem:[%s1611 + $0x108] sm:$0xff]
        %v1635 = vld [vmem:[%s1611 + $0x110] sm:$0xff]
        %v1636 = vld [vmem:[%s1611 + $0x120] sm:$0xff]
        %v1637 = vld [vmem:[%s1611 + $0x128] sm:$0xff]
        %v1638 = vld [vmem:[%s1611 + $0x138] sm:$0xff]
        %v1639 = vld [vmem:[%s1611 + $0x140] sm:$0xff]
        %v1640 = vld [vmem:[%s1611 + $0x150] sm:$0xff]
        %v1641 = vld [vmem:[%s1611 + $0x158] sm:$0xff]
        %v1642 = vld [vmem:[%s1611 + $0x168] sm:$0xff]
        %v1643 = vld [vmem:[%s1611 + $0x170] sm:$0xff]
        %v1644 = vld [vmem:[%s1611 + $0x1] sm:$0xff]
        %v1645 = vld [vmem:[%s1611 + $0x9] sm:$0xff]
        %v1646 = vld [vmem:[%s1611 + $0x19] sm:$0xff]
        %v1647 = vld [vmem:[%s1611 + $0x21] sm:$0xff]
        %v1648 = vld [vmem:[%s1611 + $0x31] sm:$0xff]
        %v1649 = vld [vmem:[%s1611 + $0x39] sm:$0xff]
        %v1650 = vld [vmem:[%s1611 + $0x49] sm:$0xff]
        %v1651 = vld [vmem:[%s1611 + $0x51] sm:$0xff]
        %v1652 = vld [vmem:[%s1611 + $0x61] sm:$0xff]
        %v1653 = vld [vmem:[%s1611 + $0x69] sm:$0xff]
        %v1654 = vld [vmem:[%s1611 + $0x79] sm:$0xff]
        %v1655 = vld [vmem:[%s1611 + $0x81] sm:$0xff]
        %v1656 = vld [vmem:[%s1611 + $0x91] sm:$0xff]
        %v1657 = vld [vmem:[%s1611 + $0x99] sm:$0xff]
        %v1658 = vld [vmem:[%s1611 + $0xa9] sm:$0xff]
        %v1659 = vld [vmem:[%s1611 + $0xb1] sm:$0xff]
        %v1660 = vld [vmem:[%s1611 + $0xc1] sm:$0xff]
        %v1661 = vld [vmem:[%s1611 + $0xc9] sm:$0xff]
        %v1662 = vld [vmem:[%s1611 + $0xd9] sm:$0xff]
        %v1663 = vld [vmem:[%s1611 + $0xe1] sm:$0xff]
        %v1664 = vld [vmem:[%s1611 + $0xf1] sm:$0xff]
        %v1665 = vld [vmem:[%s1611 + $0xf9] sm:$0xff]
        %v1666 = vld [vmem:[%s1611 + $0x109] sm:$0xff]
        %v1667 = vld [vmem:[%s1611 + $0x111] sm:$0xff]
        %v1668 = vld [vmem:[%s1611 + $0x121] sm:$0xff]
        %v1669 = vld [vmem:[%s1611 + $0x129] sm:$0xff]
        %v1670 = vld [vmem:[%s1611 + $0x139] sm:$0xff]
        %v1671 = vld [vmem:[%s1611 + $0x141] sm:$0xff]
        %v1672 = vld [vmem:[%s1611 + $0x151] sm:$0xff]
        %v1673 = vld [vmem:[%s1611 + $0x159] sm:$0xff]
        %v1674 = vld [vmem:[%s1611 + $0x169] sm:$0xff]
        %v1675 = vld [vmem:[%s1611 + $0x171] sm:$0xff]
        %v1676 = vld [vmem:[%s1611 + $0x2] sm:$0xff]
        %v1677 = vld [vmem:[%s1611 + $0xa] sm:$0xff]
        %v1678 = vld [vmem:[%s1611 + $0x1a] sm:$0xff]
        %v1679 = vld [vmem:[%s1611 + $0x22] sm:$0xff]
        %v1680 = vld [vmem:[%s1611 + $0x32] sm:$0xff]
        %v1681 = vld [vmem:[%s1611 + $0x3a] sm:$0xff]
        %v1682 = vld [vmem:[%s1611 + $0x4a] sm:$0xff]
        %v1683 = vld [vmem:[%s1611 + $0x52] sm:$0xff]
        %v1684 = vld [vmem:[%s1611 + $0x62] sm:$0xff]
        %v1685 = vld [vmem:[%s1611 + $0x6a] sm:$0xff]
        %v1686 = vld [vmem:[%s1611 + $0x7a] sm:$0xff]
        %v1687 = vld [vmem:[%s1611 + $0x82] sm:$0xff]
        %v1688 = vld [vmem:[%s1611 + $0x92] sm:$0xff]
        %v1689 = vld [vmem:[%s1611 + $0x9a] sm:$0xff]
        %v1690 = vld [vmem:[%s1611 + $0xaa] sm:$0xff]
        %v1691 = vld [vmem:[%s1611 + $0xb2] sm:$0xff]
        %v1692 = vld [vmem:[%s1611 + $0xc2] sm:$0xff]
        %v1693 = vld [vmem:[%s1611 + $0xca] sm:$0xff]
        %v1694 = vld [vmem:[%s1611 + $0xda] sm:$0xff]
        %v1695 = vld [vmem:[%s1611 + $0xe2] sm:$0xff]
        %v1696 = vld [vmem:[%s1611 + $0xf2] sm:$0xff]
        %v1697 = vld [vmem:[%s1611 + $0xfa] sm:$0xff]
        %v1698 = vld [vmem:[%s1611 + $0x10a] sm:$0xff]
        %v1699 = vld [vmem:[%s1611 + $0x112] sm:$0xff]
        %v1700 = vld [vmem:[%s1611 + $0x122] sm:$0xff]
        %v1701 = vld [vmem:[%s1611 + $0x12a] sm:$0xff]
        %v1702 = vld [vmem:[%s1611 + $0x13a] sm:$0xff]
        %v1703 = vld [vmem:[%s1611 + $0x142] sm:$0xff]
        %v1704 = vld [vmem:[%s1611 + $0x152] sm:$0xff]
        %v1705 = vld [vmem:[%s1611 + $0x15a] sm:$0xff]
        %v1706 = vld [vmem:[%s1611 + $0x16a] sm:$0xff]
        %v1707 = vld [vmem:[%s1611 + $0x172] sm:$0xff]
        %v1708 = vld [vmem:[#allocation7 + $0x300] sm:$0xff]
        %v1709 = vld [vmem:[#allocation7 + $0x308] sm:$0xff]
        %v1710 = vld [vmem:[#allocation7 + $0x310] sm:$0xff]
        %v1711 = vld [vmem:[#allocation7 + $0x318] sm:$0xff]
        %v1712 = vld [vmem:[#allocation7 + $0x320] sm:$0xff]
        %v1713 = vld [vmem:[#allocation7 + $0x328] sm:$0xff]
        %v1714 = vld [vmem:[#allocation7 + $0x330] sm:$0xff]
        %v1715 = vld [vmem:[#allocation7 + $0x338] sm:$0xff]
        %v1716 = vld [vmem:[#allocation7 + $0x340] sm:$0xff]
        %v1717 = vld [vmem:[#allocation7 + $0x348] sm:$0xff]
        %v1718 = vld [vmem:[#allocation7 + $0x350] sm:$0xff]
        %v1719 = vld [vmem:[#allocation7 + $0x358] sm:$0xff]
        %v1720 = vld [vmem:[#allocation7 + $0x360] sm:$0xff]
        %v1721 = vld [vmem:[#allocation7 + $0x368] sm:$0xff]
        %v1722 = vld [vmem:[#allocation7 + $0x370] sm:$0xff]
        %v1723 = vld [vmem:[#allocation7 + $0x378] sm:$0xff]
        %v1724 = vld [vmem:[#allocation7 + $0x380] sm:$0xff]
        %v1725 = vld [vmem:[#allocation7 + $0x388] sm:$0xff]
        %v1726 = vld [vmem:[#allocation7 + $0x390] sm:$0xff]
        %v1727 = vld [vmem:[#allocation7 + $0x398] sm:$0xff]
        %v1728 = vld [vmem:[#allocation7 + $0x3a0] sm:$0xff]
        %v1729 = vld [vmem:[#allocation7 + $0x3a8] sm:$0xff]
        %v1730 = vld [vmem:[#allocation7 + $0x3b0] sm:$0xff]
        %v1731 = vld [vmem:[#allocation7 + $0x3b8] sm:$0xff]
        %v1732 = vld [vmem:[#allocation7 + $0x3c0] sm:$0xff]
        %v1733 = vld [vmem:[#allocation7 + $0x3c8] sm:$0xff]
        %v1734 = vld [vmem:[#allocation7 + $0x3d0] sm:$0xff]
        %v1735 = vld [vmem:[#allocation7 + $0x3d8] sm:$0xff]
        %v1736 = vld [vmem:[#allocation7 + $0x3e0] sm:$0xff]
        %v1737 = vld [vmem:[#allocation7 + $0x3e8] sm:$0xff]
        %v1738 = vld [vmem:[#allocation7 + $0x3f0] sm:$0xff]
        %v1739 = vld [vmem:[#allocation7 + $0x3f8] sm:$0xff]
        %v1740 = vld [vmem:[#allocation7 + $0x400] sm:$0xff]
        %v1741 = vld [vmem:[#allocation7 + $0x408] sm:$0xff]
        %v1742 = vld [vmem:[#allocation7 + $0x410] sm:$0xff]
        %v1743 = vld [vmem:[#allocation7 + $0x418] sm:$0xff]
        %v1744 = vld [vmem:[#allocation7 + $0x420] sm:$0xff]
        %v1745 = vld [vmem:[#allocation7 + $0x428] sm:$0xff]
        %v1746 = vld [vmem:[#allocation7 + $0x430] sm:$0xff]
        %v1747 = vld [vmem:[#allocation7 + $0x438] sm:$0xff]
        %v1748 = vld [vmem:[#allocation7 + $0x440] sm:$0xff]
        %v1749 = vld [vmem:[#allocation7 + $0x448] sm:$0xff]
        %v1750 = vld [vmem:[#allocation7 + $0x450] sm:$0xff]
        %v1751 = vld [vmem:[#allocation7 + $0x458] sm:$0xff]
        %v1752 = vld [vmem:[#allocation7 + $0x460] sm:$0xff]
        %v1753 = vld [vmem:[#allocation7 + $0x468] sm:$0xff]
        %v1754 = vld [vmem:[#allocation7 + $0x470] sm:$0xff]
        %v1755 = vld [vmem:[#allocation7 + $0x478] sm:$0xff]
        %1756 = vmatprep.subr.mxu0 0.0
        %1757 = vmatpush1.msra.mxu0 %v1708
        %1758 = vmatprep.subr.mxu0 0.0
        %1759 = vmatpush1.msra.mxu0 %v1709
        %1760 = vmatprep.subr.mxu0 0.0
        %1761 = vmatpush1.msra.mxu0 %v1710
        %1762 = vmatprep.subr.mxu0 0.0
        %1763 = vmatpush1.msra.mxu0 %v1711
        %1764 = vmatprep.subr.mxu0 0.0
        %1765 = vmatpush1.msra.mxu0 %v1712
        %1766 = vmatprep.subr.mxu0 0.0
        %1767 = vmatpush1.msra.mxu0 %v1713
        %1768 = vmatprep.subr.mxu0 0.0
        %1769 = vmatpush1.msra.mxu0 %v1714
        %1770 = vmatprep.subr.mxu0 0.0
        %1771 = vmatpush1.msra.mxu0 %v1715
        %1772 = vmatprep.subr.mxu0 0.0
        %1773 = vmatpush1.msra.mxu0 %v1716
        %1774 = vmatprep.subr.mxu0 0.0
        %1775 = vmatpush1.msra.mxu0 %v1717
        %1776 = vmatprep.subr.mxu0 0.0
        %1777 = vmatpush1.msra.mxu0 %v1718
        %1778 = vmatprep.subr.mxu0 0.0
        %1779 = vmatpush1.msra.mxu0 %v1719
        %1780 = vmatprep.subr.mxu0 0.0
        %1781 = vmatpush1.msra.mxu0 %v1720
        %1782 = vmatprep.subr.mxu0 0.0
        %1783 = vmatpush1.msra.mxu0 %v1721
        %1784 = vmatprep.subr.mxu0 0.0
        %1785 = vmatpush1.msra.mxu0 %v1722
        %1786 = vmatprep.subr.mxu0 0.0
        %1787 = vmatpush1.msra.mxu0 %v1723
        %1788 = vmatprep.subr.mxu0 0.0
        %1789 = vmatpush1.msra.mxu0 %v1724
        %1790 = vmatprep.subr.mxu0 0.0
        %1791 = vmatpush1.msra.mxu0 %v1725
        %1792 = vmatprep.subr.mxu0 0.0
        %1793 = vmatpush1.msra.mxu0 %v1726
        %1794 = vmatprep.subr.mxu0 0.0
        %1795 = vmatpush1.msra.mxu0 %v1727
        %1796 = vmatprep.subr.mxu0 0.0
        %1797 = vmatpush1.msra.mxu0 %v1728
        %1798 = vmatprep.subr.mxu0 0.0
        %1799 = vmatpush1.msra.mxu0 %v1729
        %1800 = vmatprep.subr.mxu0 0.0
        %1801 = vmatpush1.msra.mxu0 %v1730
        %1802 = vmatprep.subr.mxu0 0.0
        %1803 = vmatpush1.msra.mxu0 %v1731
        %1804 = vmatprep.subr.mxu0 0.0
        %1805 = vmatpush1.msra.mxu0 %v1732
        %1806 = vmatprep.subr.mxu0 0.0
        %1807 = vmatpush1.msra.mxu0 %v1733
        %1808 = vmatprep.subr.mxu0 0.0
        %1809 = vmatpush1.msra.mxu0 %v1734
        %1810 = vmatprep.subr.mxu0 0.0
        %1811 = vmatpush1.msra.mxu0 %v1735
        %1812 = vmatprep.subr.mxu0 0.0
        %1813 = vmatpush1.msra.mxu0 %v1736
        %1814 = vmatprep.subr.mxu0 0.0
        %1815 = vmatpush1.msra.mxu0 %v1737
        %1816 = vmatprep.subr.mxu0 0.0
        %1817 = vmatpush1.msra.mxu0 %v1738
        %1818 = vmatprep.subr.mxu0 0.0
        %1819 = vmatpush1.msra.mxu0 %v1739
        %1820 = vmatprep.mubr.f32.mxu0 %v1644
        %1821 = vmatmul.mubr.f32.gmra.mrb[0].mxu0 %v1612
        %v1822 = vpop.f32.mrb[0].mxu0
        %v1823 = vadd.f32 0.0, %v1822
        %v1824 = vpop.f32.mrb[0].mxu0
        %1825 = vmatprep.mubr.f32.mxu0 %v1645
        %1826 = vmatmul.mubr.f32.gmra.mrb[0].mxu0 %v1613
        %v1827 = vpop.f32.mrb[0].mxu0
        %v1828 = vadd.f32 0.0, %v1827
        %v1829 = vpop.f32.mrb[0].mxu0
        %1830 = vmatprep.mubr.f32.mxu0 %v1646
        %1831 = vmatmul.mubr.f32.gmra.mrb[0].mxu0 %v1614
        %v1832 = vpop.f32.mrb[0].mxu0
        %v1833 = vadd.f32 0.0, %v1832
        %v1834 = vpop.f32.mrb[0].mxu0
        %1835 = vmatprep.mubr.f32.mxu0 %v1647
        %1836 = vmatmul.mubr.f32.gmra.mrb[0].mxu0 %v1615
        %v1837 = vpop.f32.mrb[0].mxu0
        %v1838 = vadd.f32 0.0, %v1837
        %v1839 = vpop.f32.mrb[0].mxu0
        %1840 = vmatprep.mubr.f32.mxu0 %v1648
        %1841 = vmatmul.mubr.f32.gmra.mrb[0].mxu0 %v1616
        %v1842 = vpop.f32.mrb[0].mxu0
        %v1843 = vadd.f32 0.0, %v1842
        %v1844 = vpop.f32.mrb[0].mxu0
        %1845 = vmatprep.mubr.f32.mxu0 %v1649
        %1846 = vmatmul.mubr.f32.gmra.mrb[0].mxu0 %v1617
        %v1847 = vpop.f32.mrb[0].mxu0
        %v1848 = vadd.f32 0.0, %v1847
        %v1849 = vpop.f32.mrb[0].mxu0
        %1850 = vmatprep.mubr.f32.mxu0 %v1650
        %1851 = vmatmul.mubr.f32.gmra.mrb[0].mxu0 %v1618
        %v1852 = vpop.f32.mrb[0].mxu0
        %v1853 = vadd.f32 0.0, %v1852
        %v1854 = vpop.f32.mrb[0].mxu0
        %1855 = vmatprep.mubr.f32.mxu0 %v1651
        %1856 = vmatmul.mubr.f32.gmra.mrb[0].mxu0 %v1619
        %v1857 = vpop.f32.mrb[0].mxu0
        %v1858 = vadd.f32 0.0, %v1857
        %v1859 = vpop.f32.mrb[0].mxu0
        %1860 = vmatprep.mubr.f32.mxu0 %v1652
        %1861 = vmatmul.mubr.f32.gmra.mrb[0].mxu0 %v1620
        %v1862 = vpop.f32.mrb[0].mxu0
        %v1863 = vadd.f32 0.0, %v1862
        %v1864 = vpop.f32.mrb[0].mxu0
        %1865 = vmatprep.mubr.f32.mxu0 %v1653
        %1866 = vmatmul.mubr.f32.gmra.mrb[0].mxu0 %v1621
        %v1867 = vpop.f32.mrb[0].mxu0
        %v1868 = vadd.f32 0.0, %v1867
        %v1869 = vpop.f32.mrb[0].mxu0
        %1870 = vmatprep.mubr.f32.mxu0 %v1654
        %1871 = vmatmul.mubr.f32.gmra.mrb[0].mxu0 %v1622
        %v1872 = vpop.f32.mrb[0].mxu0
        %v1873 = vadd.f32 0.0, %v1872
        %v1874 = vpop.f32.mrb[0].mxu0
        %1875 = vmatprep.mubr.f32.mxu0 %v1655
        %1876 = vmatmul.mubr.f32.gmra.mrb[0].mxu0 %v1623
        %v1877 = vpop.f32.mrb[0].mxu0
        %v1878 = vadd.f32 0.0, %v1877
        %v1879 = vpop.f32.mrb[0].mxu0
        %1880 = vmatprep.mubr.f32.mxu0 %v1656
        %1881 = vmatmul.mubr.f32.gmra.mrb[0].mxu0 %v1624
        %v1882 = vpop.f32.mrb[0].mxu0
        %v1883 = vadd.f32 0.0, %v1882
        %v1884 = vpop.f32.mrb[0].mxu0
        %1885 = vmatprep.mubr.f32.mxu0 %v1657
        %1886 = vmatmul.mubr.f32.gmra.mrb[0].mxu0 %v1625
        %v1887 = vpop.f32.mrb[0].mxu0
        %v1888 = vadd.f32 0.0, %v1887
        %v1889 = vpop.f32.mrb[0].mxu0
        %1890 = vmatprep.mubr.f32.mxu0 %v1658
        %1891 = vmatmul.mubr.f32.gmra.mrb[0].mxu0 %v1626
        %v1892 = vpop.f32.mrb[0].mxu0
        %v1893 = vadd.f32 0.0, %v1892
        %v1894 = vpop.f32.mrb[0].mxu0
        %1895 = vmatprep.mubr.f32.mxu0 %v1659
        %1896 = vmatmul.mubr.f32.gmra.mrb[0].mxu0 %v1627
        %v1897 = vpop.f32.mrb[0].mxu0
        %v1898 = vadd.f32 0.0, %v1897
        %v1899 = vpop.f32.mrb[0].mxu0
        %1900 = vmatprep.mubr.f32.mxu0 %v1660
        %1901 = vmatmul.mubr.f32.gmra.mrb[0].mxu0 %v1628
        %v1902 = vpop.f32.mrb[0].mxu0
        %v1903 = vadd.f32 0.0, %v1902
        %v1904 = vpop.f32.mrb[0].mxu0
        %1905 = vmatprep.mubr.f32.mxu0 %v1661
        %1906 = vmatmul.mubr.f32.gmra.mrb[0].mxu0 %v1629
        %v1907 = vpop.f32.mrb[0].mxu0
        %v1908 = vadd.f32 0.0, %v1907
        %v1909 = vpop.f32.mrb[0].mxu0
        %1910 = vmatprep.mubr.f32.mxu0 %v1662
        %1911 = vmatmul.mubr.f32.gmra.mrb[0].mxu0 %v1630
        %v1912 = vpop.f32.mrb[0].mxu0
        %v1913 = vadd.f32 0.0, %v1912
        %v1914 = vpop.f32.mrb[0].mxu0
        %1915 = vmatprep.mubr.f32.mxu0 %v1663
        %1916 = vmatmul.mubr.f32.gmra.mrb[0].mxu0 %v1631
        %v1917 = vpop.f32.mrb[0].mxu0
        %v1918 = vadd.f32 0.0, %v1917
        %v1919 = vpop.f32.mrb[0].mxu0
        %1920 = vmatprep.mubr.f32.mxu0 %v1664
        %1921 = vmatmul.mubr.f32.gmra.mrb[0].mxu0 %v1632
        %v1922 = vpop.f32.mrb[0].mxu0
        %v1923 = vadd.f32 0.0, %v1922
        %v1924 = vpop.f32.mrb[0].mxu0
        %1925 = vmatprep.mubr.f32.mxu0 %v1665
        %1926 = vmatmul.mubr.f32.gmra.mrb[0].mxu0 %v1633
        %v1927 = vpop.f32.mrb[0].mxu0
        %v1928 = vadd.f32 0.0, %v1927
        %v1929 = vpop.f32.mrb[0].mxu0
        %1930 = vmatprep.mubr.f32.mxu0 %v1666
        %1931 = vmatmul.mubr.f32.gmra.mrb[0].mxu0 %v1634
        %v1932 = vpop.f32.mrb[0].mxu0
        %v1933 = vadd.f32 0.0, %v1932
        %v1934 = vpop.f32.mrb[0].mxu0
        %1935 = vmatprep.mubr.f32.mxu0 %v1667
        %1936 = vmatmul.mubr.f32.gmra.mrb[0].mxu0 %v1635
        %v1937 = vpop.f32.mrb[0].mxu0
        %v1938 = vadd.f32 0.0, %v1937
        %v1939 = vpop.f32.mrb[0].mxu0
        %1940 = vmatprep.mubr.f32.mxu0 %v1668
        %1941 = vmatmul.mubr.f32.gmra.mrb[0].mxu0 %v1636
        %v1942 = vpop.f32.mrb[0].mxu0
        %v1943 = vadd.f32 0.0, %v1942
        %v1944 = vpop.f32.mrb[0].mxu0
        %1945 = vmatprep.mubr.f32.mxu0 %v1669
        %1946 = vmatmul.mubr.f32.gmra.mrb[0].mxu0 %v1637
        %v1947 = vpop.f32.mrb[0].mxu0
        %v1948 = vadd.f32 0.0, %v1947
        %v1949 = vpop.f32.mrb[0].mxu0
        %1950 = vmatprep.mubr.f32.mxu0 %v1670
        %1951 = vmatmul.mubr.f32.gmra.mrb[0].mxu0 %v1638
        %v1952 = vpop.f32.mrb[0].mxu0
        %v1953 = vadd.f32 0.0, %v1952
        %v1954 = vpop.f32.mrb[0].mxu0
        %1955 = vmatprep.mubr.f32.mxu0 %v1671
        %1956 = vmatmul.mubr.f32.gmra.mrb[0].mxu0 %v1639
        %v1957 = vpop.f32.mrb[0].mxu0
        %v1958 = vadd.f32 0.0, %v1957
        %v1959 = vpop.f32.mrb[0].mxu0
        %1960 = vmatprep.mubr.f32.mxu0 %v1672
        %1961 = vmatmul.mubr.f32.gmra.mrb[0].mxu0 %v1640
        %v1962 = vpop.f32.mrb[0].mxu0
        %v1963 = vadd.f32 0.0, %v1962
        %v1964 = vpop.f32.mrb[0].mxu0
        %1965 = vmatprep.mubr.f32.mxu0 %v1673
        %1966 = vmatmul.mubr.f32.gmra.mrb[0].mxu0 %v1641
        %v1967 = vpop.f32.mrb[0].mxu0
        %v1968 = vadd.f32 0.0, %v1967
        %v1969 = vpop.f32.mrb[0].mxu0
        %1970 = vmatprep.mubr.f32.mxu0 %v1674
        %1971 = vmatmul.mubr.f32.gmra.mrb[0].mxu0 %v1642
        %v1972 = vpop.f32.mrb[0].mxu0
        %v1973 = vadd.f32 0.0, %v1972
        %v1974 = vpop.f32.mrb[0].mxu0
        %1975 = vmatprep.mubr.f32.mxu0 %v1675
        %1976 = vmatmul.mubr.f32.gmra.mrb[0].mxu0 %v1643
        %v1977 = vpop.f32.mrb[0].mxu0
        %v1978 = vadd.f32 0.0, %v1977
        %v1979 = vpop.f32.mrb[0].mxu0
        %1980 = vdwg.mxu0
        %1981 = vmatprep.subr.mxu0 0.0
        %1982 = vmatpush1.msra.mxu0 %v1740
        %1983 = vmatprep.subr.mxu0 0.0
        %1984 = vmatpush1.msra.mxu0 %v1741
        %1985 = vmatprep.subr.mxu0 0.0
        %1986 = vmatpush1.msra.mxu0 %v1742
        %1987 = vmatprep.subr.mxu0 0.0
        %1988 = vmatpush1.msra.mxu0 %v1743
        %1989 = vmatprep.subr.mxu0 0.0
        %1990 = vmatpush1.msra.mxu0 %v1744
        %1991 = vmatprep.subr.mxu0 0.0
        %1992 = vmatpush1.msra.mxu0 %v1745
        %1993 = vmatprep.subr.mxu0 0.0
        %1994 = vmatpush1.msra.mxu0 %v1746
        %1995 = vmatprep.subr.mxu0 0.0
        %1996 = vmatpush1.msra.mxu0 %v1747
        %1997 = vmatprep.subr.mxu0 0.0
        %1998 = vmatpush1.msra.mxu0 %v1748
        %1999 = vmatprep.subr.mxu0 0.0
        %2000 = vmatpush1.msra.mxu0 %v1749
        %2001 = vmatprep.subr.mxu0 0.0
        %2002 = vmatpush1.msra.mxu0 %v1750
        %2003 = vmatprep.subr.mxu0 0.0
        %2004 = vmatpush1.msra.mxu0 %v1751
        %2005 = vmatprep.subr.mxu0 0.0
        %2006 = vmatpush1.msra.mxu0 %v1752
        %2007 = vmatprep.subr.mxu0 0.0
        %2008 = vmatpush1.msra.mxu0 %v1753
        %2009 = vmatprep.subr.mxu0 0.0
        %2010 = vmatpush1.msra.mxu0 %v1754
        %2011 = vmatprep.subr.mxu0 0.0
        %2012 = vmatpush1.msra.mxu0 %v1755
        %2013 = vmatprep.subr.mxu0 0.0
        %2014 = vmatpush1.msra.mxu0 0.0
        %2015 = vmatprep.subr.mxu0 0.0
        %2016 = vmatpush1.msra.mxu0 0.0
        %2017 = vmatprep.subr.mxu0 0.0
        %2018 = vmatpush1.msra.mxu0 0.0
        %2019 = vmatprep.subr.mxu0 0.0
        %2020 = vmatpush1.msra.mxu0 0.0
        %2021 = vmatprep.subr.mxu0 0.0
        %2022 = vmatpush1.msra.mxu0 0.0
        %2023 = vmatprep.subr.mxu0 0.0
        %2024 = vmatpush1.msra.mxu0 0.0
        %2025 = vmatprep.subr.mxu0 0.0
        %2026 = vmatpush1.msra.mxu0 0.0
        %2027 = vmatprep.subr.mxu0 0.0
        %2028 = vmatpush1.msra.mxu0 0.0
        %2029 = vmatprep.subr.mxu0 0.0
        %2030 = vmatpush1.msra.mxu0 0.0
        %2031 = vmatprep.subr.mxu0 0.0
        %2032 = vmatpush1.msra.mxu0 0.0
        %2033 = vmatprep.subr.mxu0 0.0
        %2034 = vmatpush1.msra.mxu0 0.0
        %2035 = vmatprep.subr.mxu0 0.0
        %2036 = vmatpush1.msra.mxu0 0.0
        %2037 = vmatprep.subr.mxu0 0.0
        %2038 = vmatpush1.msra.mxu0 0.0
        %2039 = vmatprep.subr.mxu0 0.0
        %2040 = vmatpush1.msra.mxu0 0.0
        %2041 = vmatprep.subr.mxu0 0.0
        %2042 = vmatpush1.msra.mxu0 0.0
        %2043 = vmatprep.subr.mxu0 0.0
        %2044 = vmatpush1.msra.mxu0 0.0
        %2045 = vmatprep.mubr.f32.mxu0 0.0
        %2046 = vmatmul.mubr.f32.gmra.mrb[0].mxu0 %v1676
        %v2047 = vpop.f32.mrb[0].mxu0
        %v2048 = vadd.f32 %v1823, %v2047
        %v2049 = vpop.f32.mrb[0].mxu0
        %2050 = vmatprep.mubr.f32.mxu0 0.0
        %2051 = vmatmul.mubr.f32.gmra.mrb[0].mxu0 %v1677
        %v2052 = vpop.f32.mrb[0].mxu0
        %v2053 = vadd.f32 %v1828, %v2052
        %v2054 = vpop.f32.mrb[0].mxu0
        %2055 = vmatprep.mubr.f32.mxu0 0.0
        %2056 = vmatmul.mubr.f32.gmra.mrb[0].mxu0 %v1678
        %v2057 = vpop.f32.mrb[0].mxu0
        %v2058 = vadd.f32 %v1833, %v2057
        %v2059 = vpop.f32.mrb[0].mxu0
        %2060 = vmatprep.mubr.f32.mxu0 0.0
        %2061 = vmatmul.mubr.f32.gmra.mrb[0].mxu0 %v1679
        %v2062 = vpop.f32.mrb[0].mxu0
        %v2063 = vadd.f32 %v1838, %v2062
        %v2064 = vpop.f32.mrb[0].mxu0
        %2065 = vmatprep.mubr.f32.mxu0 0.0
        %2066 = vmatmul.mubr.f32.gmra.mrb[0].mxu0 %v1680
        %v2067 = vpop.f32.mrb[0].mxu0
        %v2068 = vadd.f32 %v1843, %v2067
        %v2069 = vpop.f32.mrb[0].mxu0
        %2070 = vmatprep.mubr.f32.mxu0 0.0
        %2071 = vmatmul.mubr.f32.gmra.mrb[0].mxu0 %v1681
        %v2072 = vpop.f32.mrb[0].mxu0
        %v2073 = vadd.f32 %v1848, %v2072
        %v2074 = vpop.f32.mrb[0].mxu0
        %2075 = vmatprep.mubr.f32.mxu0 0.0
        %2076 = vmatmul.mubr.f32.gmra.mrb[0].mxu0 %v1682
        %v2077 = vpop.f32.mrb[0].mxu0
        %v2078 = vadd.f32 %v1853, %v2077
        %v2079 = vpop.f32.mrb[0].mxu0
        %2080 = vmatprep.mubr.f32.mxu0 0.0
        %2081 = vmatmul.mubr.f32.gmra.mrb[0].mxu0 %v1683
        %v2082 = vpop.f32.mrb[0].mxu0
        %v2083 = vadd.f32 %v1858, %v2082
        %v2084 = vpop.f32.mrb[0].mxu0
        %2085 = vmatprep.mubr.f32.mxu0 0.0
        %2086 = vmatmul.mubr.f32.gmra.mrb[0].mxu0 %v1684
        %v2087 = vpop.f32.mrb[0].mxu0
        %v2088 = vadd.f32 %v1863, %v2087
        %v2089 = vpop.f32.mrb[0].mxu0
        %2090 = vmatprep.mubr.f32.mxu0 0.0
        %2091 = vmatmul.mubr.f32.gmra.mrb[0].mxu0 %v1685
        %v2092 = vpop.f32.mrb[0].mxu0
        %v2093 = vadd.f32 %v1868, %v2092
        %v2094 = vpop.f32.mrb[0].mxu0
        %2095 = vmatprep.mubr.f32.mxu0 0.0
        %2096 = vmatmul.mubr.f32.gmra.mrb[0].mxu0 %v1686
        %v2097 = vpop.f32.mrb[0].mxu0
        %v2098 = vadd.f32 %v1873, %v2097
        %v2099 = vpop.f32.mrb[0].mxu0
        %2100 = vmatprep.mubr.f32.mxu0 0.0
        %2101 = vmatmul.mubr.f32.gmra.mrb[0].mxu0 %v1687
        %v2102 = vpop.f32.mrb[0].mxu0
        %v2103 = vadd.f32 %v1878, %v2102
        %v2104 = vpop.f32.mrb[0].mxu0
        %2105 = vmatprep.mubr.f32.mxu0 0.0
        %2106 = vmatmul.mubr.f32.gmra.mrb[0].mxu0 %v1688
        %v2107 = vpop.f32.mrb[0].mxu0
        %v2108 = vadd.f32 %v1883, %v2107
        %v2109 = vpop.f32.mrb[0].mxu0
        %2110 = vmatprep.mubr.f32.mxu0 0.0
        %2111 = vmatmul.mubr.f32.gmra.mrb[0].mxu0 %v1689
        %v2112 = vpop.f32.mrb[0].mxu0
        %v2113 = vadd.f32 %v1888, %v2112
        %v2114 = vpop.f32.mrb[0].mxu0
        %2115 = vmatprep.mubr.f32.mxu0 0.0
        %2116 = vmatmul.mubr.f32.gmra.mrb[0].mxu0 %v1690
        %v2117 = vpop.f32.mrb[0].mxu0
        %v2118 = vadd.f32 %v1893, %v2117
        %v2119 = vpop.f32.mrb[0].mxu0
        %2120 = vmatprep.mubr.f32.mxu0 0.0
        %2121 = vmatmul.mubr.f32.gmra.mrb[0].mxu0 %v1691
        %v2122 = vpop.f32.mrb[0].mxu0
        %v2123 = vadd.f32 %v1898, %v2122
        %v2124 = vpop.f32.mrb[0].mxu0
        %2125 = vmatprep.mubr.f32.mxu0 0.0
        %2126 = vmatmul.mubr.f32.gmra.mrb[0].mxu0 %v1692
        %v2127 = vpop.f32.mrb[0].mxu0
        %v2128 = vadd.f32 %v1903, %v2127
        %v2129 = vpop.f32.mrb[0].mxu0
        %2130 = vmatprep.mubr.f32.mxu0 0.0
        %2131 = vmatmul.mubr.f32.gmra.mrb[0].mxu0 %v1693
        %v2132 = vpop.f32.mrb[0].mxu0
        %v2133 = vadd.f32 %v1908, %v2132
        %v2134 = vpop.f32.mrb[0].mxu0
        %2135 = vmatprep.mubr.f32.mxu0 0.0
        %2136 = vmatmul.mubr.f32.gmra.mrb[0].mxu0 %v1694
        %v2137 = vpop.f32.mrb[0].mxu0
        %v2138 = vadd.f32 %v1913, %v2137
        %v2139 = vpop.f32.mrb[0].mxu0
        %2140 = vmatprep.mubr.f32.mxu0 0.0
        %2141 = vmatmul.mubr.f32.gmra.mrb[0].mxu0 %v1695
        %v2142 = vpop.f32.mrb[0].mxu0
        %v2143 = vadd.f32 %v1918, %v2142
        %v2144 = vpop.f32.mrb[0].mxu0
        %2145 = vmatprep.mubr.f32.mxu0 0.0
        %2146 = vmatmul.mubr.f32.gmra.mrb[0].mxu0 %v1696
        %v2147 = vpop.f32.mrb[0].mxu0
        %v2148 = vadd.f32 %v1923, %v2147
        %v2149 = vpop.f32.mrb[0].mxu0
        %2150 = vmatprep.mubr.f32.mxu0 0.0
        %2151 = vmatmul.mubr.f32.gmra.mrb[0].mxu0 %v1697
        %v2152 = vpop.f32.mrb[0].mxu0
        %v2153 = vadd.f32 %v1928, %v2152
        %v2154 = vpop.f32.mrb[0].mxu0
        %2155 = vmatprep.mubr.f32.mxu0 0.0
        %2156 = vmatmul.mubr.f32.gmra.mrb[0].mxu0 %v1698
        %v2157 = vpop.f32.mrb[0].mxu0
        %v2158 = vadd.f32 %v1933, %v2157
        %v2159 = vpop.f32.mrb[0].mxu0
        %2160 = vmatprep.mubr.f32.mxu0 0.0
        %2161 = vmatmul.mubr.f32.gmra.mrb[0].mxu0 %v1699
        %v2162 = vpop.f32.mrb[0].mxu0
        %v2163 = vadd.f32 %v1938, %v2162
        %v2164 = vpop.f32.mrb[0].mxu0
        %2165 = vmatprep.mubr.f32.mxu0 0.0
        %2166 = vmatmul.mubr.f32.gmra.mrb[0].mxu0 %v1700
        %v2167 = vpop.f32.mrb[0].mxu0
        %v2168 = vadd.f32 %v1943, %v2167
        %v2169 = vpop.f32.mrb[0].mxu0
        %2170 = vmatprep.mubr.f32.mxu0 0.0
        %2171 = vmatmul.mubr.f32.gmra.mrb[0].mxu0 %v1701
        %v2172 = vpop.f32.mrb[0].mxu0
        %v2173 = vadd.f32 %v1948, %v2172
        %v2174 = vpop.f32.mrb[0].mxu0
        %2175 = vmatprep.mubr.f32.mxu0 0.0
        %2176 = vmatmul.mubr.f32.gmra.mrb[0].mxu0 %v1702
        %v2177 = vpop.f32.mrb[0].mxu0
        %v2178 = vadd.f32 %v1953, %v2177
        %v2179 = vpop.f32.mrb[0].mxu0
        %2180 = vmatprep.mubr.f32.mxu0 0.0
        %2181 = vmatmul.mubr.f32.gmra.mrb[0].mxu0 %v1703
        %v2182 = vpop.f32.mrb[0].mxu0
        %v2183 = vadd.f32 %v1958, %v2182
        %v2184 = vpop.f32.mrb[0].mxu0
        %2185 = vmatprep.mubr.f32.mxu0 0.0
        %2186 = vmatmul.mubr.f32.gmra.mrb[0].mxu0 %v1704
        %v2187 = vpop.f32.mrb[0].mxu0
        %v2188 = vadd.f32 %v1963, %v2187
        %v2189 = vpop.f32.mrb[0].mxu0
        %2190 = vmatprep.mubr.f32.mxu0 0.0
        %2191 = vmatmul.mubr.f32.gmra.mrb[0].mxu0 %v1705
        %v2192 = vpop.f32.mrb[0].mxu0
        %v2193 = vadd.f32 %v1968, %v2192
        %v2194 = vpop.f32.mrb[0].mxu0
        %2195 = vmatprep.mubr.f32.mxu0 0.0
        %2196 = vmatmul.mubr.f32.gmra.mrb[0].mxu0 %v1706
        %v2197 = vpop.f32.mrb[0].mxu0
        %v2198 = vadd.f32 %v1973, %v2197
        %v2199 = vpop.f32.mrb[0].mxu0
        %2200 = vmatprep.mubr.f32.mxu0 0.0
        %2201 = vmatmul.mubr.f32.gmra.mrb[0].mxu0 %v1707
        %v2202 = vpop.f32.mrb[0].mxu0
        %v2203 = vadd.f32 %v1978, %v2202
        %v2204 = vpop.f32.mrb[0].mxu0
        %2205 = vdwg.mxu0
        %v2206 = vadd.f32 %v1453, %v2048
        %v2207 = vadd.f32 %v1458, %v2053
        %v2208 = vadd.f32 %v1463, %v2058
        %v2209 = vadd.f32 %v1468, %v2063
        %v2210 = vadd.f32 %v1473, %v2068
        %v2211 = vadd.f32 %v1478, %v2073
        %v2212 = vadd.f32 %v1483, %v2078
        %v2213 = vadd.f32 %v1488, %v2083
        %v2214 = vadd.f32 %v1493, %v2088
        %v2215 = vadd.f32 %v1498, %v2093
        %v2216 = vadd.f32 %v1503, %v2098
        %v2217 = vadd.f32 %v1508, %v2103
        %v2218 = vadd.f32 %v1513, %v2108
        %v2219 = vadd.f32 %v1518, %v2113
        %v2220 = vadd.f32 %v1523, %v2118
        %v2221 = vadd.f32 %v1528, %v2123
        %v2222 = vadd.f32 %v1533, %v2128
        %v2223 = vadd.f32 %v1538, %v2133
        %v2224 = vadd.f32 %v1543, %v2138
        %v2225 = vadd.f32 %v1548, %v2143
        %v2226 = vadd.f32 %v1553, %v2148
        %v2227 = vadd.f32 %v1558, %v2153
        %v2228 = vadd.f32 %v1563, %v2158
        %v2229 = vadd.f32 %v1568, %v2163
        %v2230 = vadd.f32 %v1573, %v2168
        %v2231 = vadd.f32 %v1578, %v2173
        %v2232 = vadd.f32 %v1583, %v2178
        %v2233 = vadd.f32 %v1588, %v2183
        %v2234 = vadd.f32 %v1593, %v2188
        %v2235 = vadd.f32 %v1598, %v2193
        %v2236 = vadd.f32 %v1603, %v2198
        %v2237 = vadd.f32 %v1608, %v2203
        %v2238 = vld [vmem:[%s2] sm:$0x1]
        %v2240 = vlaneseq
        %v2241 = vshrl.u32 %v2240, 7
        %v2242 = vsub.s32 0, %v2241
        %v2243 = vrot.slane %v2238, %v2242
        %v2245 = vadd.f32 %v2206, %v2243
        %v2246 = vadd.f32 %v2207, %v2243
        %v2247 = vadd.f32 %v2208, %v2243
        %v2248 = vadd.f32 %v2209, %v2243
        %v2249 = vadd.f32 %v2210, %v2243
        %v2250 = vadd.f32 %v2211, %v2243
        %v2251 = vadd.f32 %v2212, %v2243
        %v2252 = vadd.f32 %v2213, %v2243
        %v2253 = vadd.f32 %v2214, %v2243
        %v2254 = vadd.f32 %v2215, %v2243
        %v2255 = vadd.f32 %v2216, %v2243
        %v2256 = vadd.f32 %v2217, %v2243
        %v2257 = vadd.f32 %v2218, %v2243
        %v2258 = vadd.f32 %v2219, %v2243
        %v2259 = vadd.f32 %v2220, %v2243
        %v2260 = vadd.f32 %v2221, %v2243
        %v2261 = vadd.f32 %v2222, %v2243
        %v2262 = vadd.f32 %v2223, %v2243
        %v2263 = vadd.f32 %v2224, %v2243
        %v2264 = vadd.f32 %v2225, %v2243
        %v2265 = vadd.f32 %v2226, %v2243
        %v2266 = vadd.f32 %v2227, %v2243
        %v2267 = vadd.f32 %v2228, %v2243
        %v2268 = vadd.f32 %v2229, %v2243
        %v2269 = vadd.f32 %v2230, %v2243
        %v2270 = vadd.f32 %v2231, %v2243
        %v2271 = vadd.f32 %v2232, %v2243
        %v2272 = vadd.f32 %v2233, %v2243
        %v2273 = vadd.f32 %v2234, %v2243
        %v2274 = vadd.f32 %v2235, %v2243
        %v2275 = vadd.f32 %v2236, %v2243
        %v2276 = vadd.f32 %v2237, %v2243
        %v2277 = vmax.f32 %v2245, 0.0
        %v2278 = vmax.f32 %v2246, 0.0
        %v2279 = vmax.f32 %v2247, 0.0
        %v2280 = vmax.f32 %v2248, 0.0
        %v2281 = vmax.f32 %v2249, 0.0
        %v2282 = vmax.f32 %v2250, 0.0
        %v2283 = vmax.f32 %v2251, 0.0
        %v2284 = vmax.f32 %v2252, 0.0
        %v2285 = vmax.f32 %v2253, 0.0
        %v2286 = vmax.f32 %v2254, 0.0
        %v2287 = vmax.f32 %v2255, 0.0
        %v2288 = vmax.f32 %v2256, 0.0
        %v2289 = vmax.f32 %v2257, 0.0
        %v2290 = vmax.f32 %v2258, 0.0
        %v2291 = vmax.f32 %v2259, 0.0
        %v2292 = vmax.f32 %v2260, 0.0
        %v2293 = vmax.f32 %v2261, 0.0
        %v2294 = vmax.f32 %v2262, 0.0
        %v2295 = vmax.f32 %v2263, 0.0
        %v2296 = vmax.f32 %v2264, 0.0
        %v2297 = vmax.f32 %v2265, 0.0
        %v2298 = vmax.f32 %v2266, 0.0
        %v2299 = vmax.f32 %v2267, 0.0
        %v2300 = vmax.f32 %v2268, 0.0
        %v2301 = vmax.f32 %v2269, 0.0
        %v2302 = vmax.f32 %v2270, 0.0
        %v2303 = vmax.f32 %v2271, 0.0
        %v2304 = vmax.f32 %v2272, 0.0
        %v2305 = vmax.f32 %v2273, 0.0
        %v2306 = vmax.f32 %v2274, 0.0
        %v2307 = vmax.f32 %v2275, 0.0
        %v2308 = vmax.f32 %v2276, 0.0
        %s2309 = scalar_lea.vmem [#allocation3], 24
        %2310 = vst [vmem:[%s2309 + $0x1] sm:$0xff] %v2277
        %2311 = vst [vmem:[%s2309 + $0x9] sm:$0xff] %v2278
        %2312 = vst [vmem:[%s2309 + $0x19] sm:$0xff] %v2279
        %2313 = vst [vmem:[%s2309 + $0x21] sm:$0xff] %v2280
        %2314 = vst [vmem:[%s2309 + $0x31] sm:$0xff] %v2281
        %2315 = vst [vmem:[%s2309 + $0x39] sm:$0xff] %v2282
        %2316 = vst [vmem:[%s2309 + $0x49] sm:$0xff] %v2283
        %2317 = vst [vmem:[%s2309 + $0x51] sm:$0xff] %v2284
        %2318 = vst [vmem:[%s2309 + $0x61] sm:$0xff] %v2285
        %2319 = vst [vmem:[%s2309 + $0x69] sm:$0xff] %v2286
        %2320 = vst [vmem:[%s2309 + $0x79] sm:$0xff] %v2287
        %2321 = vst [vmem:[%s2309 + $0x81] sm:$0xff] %v2288
        %2322 = vst [vmem:[%s2309 + $0x91] sm:$0xff] %v2289
        %2323 = vst [vmem:[%s2309 + $0x99] sm:$0xff] %v2290
        %2324 = vst [vmem:[%s2309 + $0xa9] sm:$0xff] %v2291
        %2325 = vst [vmem:[%s2309 + $0xb1] sm:$0xff] %v2292
        %2326 = vst [vmem:[%s2309 + $0xc1] sm:$0xff] %v2293
        %2327 = vst [vmem:[%s2309 + $0xc9] sm:$0xff] %v2294
        %2328 = vst [vmem:[%s2309 + $0xd9] sm:$0xff] %v2295
        %2329 = vst [vmem:[%s2309 + $0xe1] sm:$0xff] %v2296
        %2330 = vst [vmem:[%s2309 + $0xf1] sm:$0xff] %v2297
        %2331 = vst [vmem:[%s2309 + $0xf9] sm:$0xff] %v2298
        %2332 = vst [vmem:[%s2309 + $0x109] sm:$0xff] %v2299
        %2333 = vst [vmem:[%s2309 + $0x111] sm:$0xff] %v2300
        %2334 = vst [vmem:[%s2309 + $0x121] sm:$0xff] %v2301
        %2335 = vst [vmem:[%s2309 + $0x129] sm:$0xff] %v2302
        %2336 = vst [vmem:[%s2309 + $0x139] sm:$0xff] %v2303
        %2337 = vst [vmem:[%s2309 + $0x141] sm:$0xff] %v2304
        %2338 = vst [vmem:[%s2309 + $0x151] sm:$0xff] %v2305
        %2339 = vst [vmem:[%s2309 + $0x159] sm:$0xff] %v2306
        %2340 = vst [vmem:[%s2309 + $0x169] sm:$0xff] %v2307
        %2341 = vst [vmem:[%s2309 + $0x171] sm:$0xff] %v2308
        %v2342 = vld [vmem:[#allocation3] sm:$0xff]
        %v2343 = vld [vmem:[#allocation3 + $0x8] sm:$0xff]
        %v2344 = vld [vmem:[#allocation3 + $0x18] sm:$0xff]
        %v2345 = vld [vmem:[#allocation3 + $0x20] sm:$0xff]
        %v2346 = vld [vmem:[#allocation3 + $0x30] sm:$0xff]
        %v2347 = vld [vmem:[#allocation3 + $0x38] sm:$0xff]
        %v2348 = vld [vmem:[#allocation3 + $0x48] sm:$0xff]
        %v2349 = vld [vmem:[#allocation3 + $0x50] sm:$0xff]
        %v2350 = vld [vmem:[#allocation3 + $0x60] sm:$0xff]
        %v2351 = vld [vmem:[#allocation3 + $0x68] sm:$0xff]
        %v2352 = vld [vmem:[#allocation3 + $0x78] sm:$0xff]
        %v2353 = vld [vmem:[#allocation3 + $0x80] sm:$0xff]
        %v2354 = vld [vmem:[#allocation3 + $0x90] sm:$0xff]
        %v2355 = vld [vmem:[#allocation3 + $0x98] sm:$0xff]
        %v2356 = vld [vmem:[#allocation3 + $0xa8] sm:$0xff]
        %v2357 = vld [vmem:[#allocation3 + $0xb0] sm:$0xff]
        %v2358 = vld [vmem:[#allocation3 + $0xc0] sm:$0xff]
        %v2359 = vld [vmem:[#allocation3 + $0xc8] sm:$0xff]
        %v2360 = vld [vmem:[#allocation3 + $0xd8] sm:$0xff]
        %v2361 = vld [vmem:[#allocation3 + $0xe0] sm:$0xff]
        %v2362 = vld [vmem:[#allocation3 + $0xf0] sm:$0xff]
        %v2363 = vld [vmem:[#allocation3 + $0xf8] sm:$0xff]
        %v2364 = vld [vmem:[#allocation3 + $0x108] sm:$0xff]
        %v2365 = vld [vmem:[#allocation3 + $0x110] sm:$0xff]
        %v2366 = vld [vmem:[#allocation3 + $0x120] sm:$0xff]
        %v2367 = vld [vmem:[#allocation3 + $0x128] sm:$0xff]
        %v2368 = vld [vmem:[#allocation3 + $0x138] sm:$0xff]
        %v2369 = vld [vmem:[#allocation3 + $0x140] sm:$0xff]
        %v2370 = vld [vmem:[#allocation3 + $0x150] sm:$0xff]
        %v2371 = vld [vmem:[#allocation3 + $0x158] sm:$0xff]
        %v2372 = vld [vmem:[#allocation3 + $0x168] sm:$0xff]
        %v2373 = vld [vmem:[#allocation3 + $0x170] sm:$0xff]
        %v2374 = vld [vmem:[#allocation3 + $0x1] sm:$0xff]
        %v2375 = vld [vmem:[#allocation3 + $0x9] sm:$0xff]
        %v2376 = vld [vmem:[#allocation3 + $0x19] sm:$0xff]
        %v2377 = vld [vmem:[#allocation3 + $0x21] sm:$0xff]
        %v2378 = vld [vmem:[#allocation3 + $0x31] sm:$0xff]
        %v2379 = vld [vmem:[#allocation3 + $0x39] sm:$0xff]
        %v2380 = vld [vmem:[#allocation3 + $0x49] sm:$0xff]
        %v2381 = vld [vmem:[#allocation3 + $0x51] sm:$0xff]
        %v2382 = vld [vmem:[#allocation3 + $0x61] sm:$0xff]
        %v2383 = vld [vmem:[#allocation3 + $0x69] sm:$0xff]
        %v2384 = vld [vmem:[#allocation3 + $0x79] sm:$0xff]
        %v2385 = vld [vmem:[#allocation3 + $0x81] sm:$0xff]
        %v2386 = vld [vmem:[#allocation3 + $0x91] sm:$0xff]
        %v2387 = vld [vmem:[#allocation3 + $0x99] sm:$0xff]
        %v2388 = vld [vmem:[#allocation3 + $0xa9] sm:$0xff]
        %v2389 = vld [vmem:[#allocation3 + $0xb1] sm:$0xff]
        %v2390 = vld [vmem:[#allocation3 + $0xc1] sm:$0xff]
        %v2391 = vld [vmem:[#allocation3 + $0xc9] sm:$0xff]
        %v2392 = vld [vmem:[#allocation3 + $0xd9] sm:$0xff]
        %v2393 = vld [vmem:[#allocation3 + $0xe1] sm:$0xff]
        %v2394 = vld [vmem:[#allocation3 + $0xf1] sm:$0xff]
        %v2395 = vld [vmem:[#allocation3 + $0xf9] sm:$0xff]
        %v2396 = vld [vmem:[#allocation3 + $0x109] sm:$0xff]
        %v2397 = vld [vmem:[#allocation3 + $0x111] sm:$0xff]
        %v2398 = vld [vmem:[#allocation3 + $0x121] sm:$0xff]
        %v2399 = vld [vmem:[#allocation3 + $0x129] sm:$0xff]
        %v2400 = vld [vmem:[#allocation3 + $0x139] sm:$0xff]
        %v2401 = vld [vmem:[#allocation3 + $0x141] sm:$0xff]
        %v2402 = vld [vmem:[#allocation3 + $0x151] sm:$0xff]
        %v2403 = vld [vmem:[#allocation3 + $0x159] sm:$0xff]
        %v2404 = vld [vmem:[#allocation3 + $0x169] sm:$0xff]
        %v2405 = vld [vmem:[#allocation3 + $0x171] sm:$0xff]
        %v2406 = vld [vmem:[#allocation3 + $0x2] sm:$0xff]
        %v2407 = vld [vmem:[#allocation3 + $0xa] sm:$0xff]
        %v2408 = vld [vmem:[#allocation3 + $0x1a] sm:$0xff]
        %v2409 = vld [vmem:[#allocation3 + $0x22] sm:$0xff]
        %v2410 = vld [vmem:[#allocation3 + $0x32] sm:$0xff]
        %v2411 = vld [vmem:[#allocation3 + $0x3a] sm:$0xff]
        %v2412 = vld [vmem:[#allocation3 + $0x4a] sm:$0xff]
        %v2413 = vld [vmem:[#allocation3 + $0x52] sm:$0xff]
        %v2414 = vld [vmem:[#allocation3 + $0x62] sm:$0xff]
        %v2415 = vld [vmem:[#allocation3 + $0x6a] sm:$0xff]
        %v2416 = vld [vmem:[#allocation3 + $0x7a] sm:$0xff]
        %v2417 = vld [vmem:[#allocation3 + $0x82] sm:$0xff]
        %v2418 = vld [vmem:[#allocation3 + $0x92] sm:$0xff]
        %v2419 = vld [vmem:[#allocation3 + $0x9a] sm:$0xff]
        %v2420 = vld [vmem:[#allocation3 + $0xaa] sm:$0xff]
        %v2421 = vld [vmem:[#allocation3 + $0xb2] sm:$0xff]
        %v2422 = vld [vmem:[#allocation3 + $0xc2] sm:$0xff]
        %v2423 = vld [vmem:[#allocation3 + $0xca] sm:$0xff]
        %v2424 = vld [vmem:[#allocation3 + $0xda] sm:$0xff]
        %v2425 = vld [vmem:[#allocation3 + $0xe2] sm:$0xff]
        %v2426 = vld [vmem:[#allocation3 + $0xf2] sm:$0xff]
        %v2427 = vld [vmem:[#allocation3 + $0xfa] sm:$0xff]
        %v2428 = vld [vmem:[#allocation3 + $0x10a] sm:$0xff]
        %v2429 = vld [vmem:[#allocation3 + $0x112] sm:$0xff]
        %v2430 = vld [vmem:[#allocation3 + $0x122] sm:$0xff]
        %v2431 = vld [vmem:[#allocation3 + $0x12a] sm:$0xff]
        %v2432 = vld [vmem:[#allocation3 + $0x13a] sm:$0xff]
        %v2433 = vld [vmem:[#allocation3 + $0x142] sm:$0xff]
        %v2434 = vld [vmem:[#allocation3 + $0x152] sm:$0xff]
        %v2435 = vld [vmem:[#allocation3 + $0x15a] sm:$0xff]
        %v2436 = vld [vmem:[#allocation3 + $0x16a] sm:$0xff]
        %v2437 = vld [vmem:[#allocation3 + $0x172] sm:$0xff]
        %v2438 = vld [vmem:[#allocation9] sm:$0xff]
        %v2439 = vld [vmem:[#allocation9 + $0x8] sm:$0xff]
        %v2440 = vld [vmem:[#allocation9 + $0x10] sm:$0xff]
        %v2441 = vld [vmem:[#allocation9 + $0x18] sm:$0xff]
        %v2442 = vld [vmem:[#allocation9 + $0x20] sm:$0xff]
        %v2443 = vld [vmem:[#allocation9 + $0x28] sm:$0xff]
        %v2444 = vld [vmem:[#allocation9 + $0x30] sm:$0xff]
        %v2445 = vld [vmem:[#allocation9 + $0x38] sm:$0xff]
        %v2446 = vld [vmem:[#allocation9 + $0x40] sm:$0xff]
        %v2447 = vld [vmem:[#allocation9 + $0x48] sm:$0xff]
        %v2448 = vld [vmem:[#allocation9 + $0x50] sm:$0xff]
        %v2449 = vld [vmem:[#allocation9 + $0x58] sm:$0xff]
        %v2450 = vld [vmem:[#allocation9 + $0x60] sm:$0xff]
        %v2451 = vld [vmem:[#allocation9 + $0x68] sm:$0xff]
        %v2452 = vld [vmem:[#allocation9 + $0x70] sm:$0xff]
        %v2453 = vld [vmem:[#allocation9 + $0x78] sm:$0xff]
        %v2454 = vld [vmem:[#allocation9 + $0x80] sm:$0xff]
        %v2455 = vld [vmem:[#allocation9 + $0x88] sm:$0xff]
        %v2456 = vld [vmem:[#allocation9 + $0x90] sm:$0xff]
        %v2457 = vld [vmem:[#allocation9 + $0x98] sm:$0xff]
        %v2458 = vld [vmem:[#allocation9 + $0xa0] sm:$0xff]
        %v2459 = vld [vmem:[#allocation9 + $0xa8] sm:$0xff]
        %v2460 = vld [vmem:[#allocation9 + $0xb0] sm:$0xff]
        %v2461 = vld [vmem:[#allocation9 + $0xb8] sm:$0xff]
        %v2462 = vld [vmem:[#allocation9 + $0xc0] sm:$0xff]
        %v2463 = vld [vmem:[#allocation9 + $0xc8] sm:$0xff]
        %v2464 = vld [vmem:[#allocation9 + $0xd0] sm:$0xff]
        %v2465 = vld [vmem:[#allocation9 + $0xd8] sm:$0xff]
        %v2466 = vld [vmem:[#allocation9 + $0xe0] sm:$0xff]
        %v2467 = vld [vmem:[#allocation9 + $0xe8] sm:$0xff]
        %v2468 = vld [vmem:[#allocation9 + $0xf0] sm:$0xff]
        %v2469 = vld [vmem:[#allocation9 + $0xf8] sm:$0xff]
        %v2470 = vld [vmem:[#allocation9 + $0x100] sm:$0xff]
        %v2471 = vld [vmem:[#allocation9 + $0x108] sm:$0xff]
        %v2472 = vld [vmem:[#allocation9 + $0x110] sm:$0xff]
        %v2473 = vld [vmem:[#allocation9 + $0x118] sm:$0xff]
        %v2474 = vld [vmem:[#allocation9 + $0x120] sm:$0xff]
        %v2475 = vld [vmem:[#allocation9 + $0x128] sm:$0xff]
        %v2476 = vld [vmem:[#allocation9 + $0x130] sm:$0xff]
        %v2477 = vld [vmem:[#allocation9 + $0x138] sm:$0xff]
        %v2478 = vld [vmem:[#allocation9 + $0x140] sm:$0xff]
        %v2479 = vld [vmem:[#allocation9 + $0x148] sm:$0xff]
        %v2480 = vld [vmem:[#allocation9 + $0x150] sm:$0xff]
        %v2481 = vld [vmem:[#allocation9 + $0x158] sm:$0xff]
        %v2482 = vld [vmem:[#allocation9 + $0x160] sm:$0xff]
        %v2483 = vld [vmem:[#allocation9 + $0x168] sm:$0xff]
        %v2484 = vld [vmem:[#allocation9 + $0x170] sm:$0xff]
        %v2485 = vld [vmem:[#allocation9 + $0x178] sm:$0xff]
        %v2486 = vld [vmem:[%s2309] sm:$0xff]
        %v2487 = vld [vmem:[%s2309 + $0x8] sm:$0xff]
        %v2488 = vld [vmem:[%s2309 + $0x18] sm:$0xff]
        %v2489 = vld [vmem:[%s2309 + $0x20] sm:$0xff]
        %v2490 = vld [vmem:[%s2309 + $0x30] sm:$0xff]
        %v2491 = vld [vmem:[%s2309 + $0x38] sm:$0xff]
        %v2492 = vld [vmem:[%s2309 + $0x48] sm:$0xff]
        %v2493 = vld [vmem:[%s2309 + $0x50] sm:$0xff]
        %v2494 = vld [vmem:[%s2309 + $0x60] sm:$0xff]
        %v2495 = vld [vmem:[%s2309 + $0x68] sm:$0xff]
        %v2496 = vld [vmem:[%s2309 + $0x78] sm:$0xff]
        %v2497 = vld [vmem:[%s2309 + $0x80] sm:$0xff]
        %v2498 = vld [vmem:[%s2309 + $0x90] sm:$0xff]
        %v2499 = vld [vmem:[%s2309 + $0x98] sm:$0xff]
        %v2500 = vld [vmem:[%s2309 + $0xa8] sm:$0xff]
        %v2501 = vld [vmem:[%s2309 + $0xb0] sm:$0xff]
        %v2502 = vld [vmem:[%s2309 + $0xc0] sm:$0xff]
        %v2503 = vld [vmem:[%s2309 + $0xc8] sm:$0xff]
        %v2504 = vld [vmem:[%s2309 + $0xd8] sm:$0xff]
        %v2505 = vld [vmem:[%s2309 + $0xe0] sm:$0xff]
        %v2506 = vld [vmem:[%s2309 + $0xf0] sm:$0xff]
        %v2507 = vld [vmem:[%s2309 + $0xf8] sm:$0xff]
        %v2508 = vld [vmem:[%s2309 + $0x108] sm:$0xff]
        %v2509 = vld [vmem:[%s2309 + $0x110] sm:$0xff]
        %v2510 = vld [vmem:[%s2309 + $0x120] sm:$0xff]
        %v2511 = vld [vmem:[%s2309 + $0x128] sm:$0xff]
        %v2512 = vld [vmem:[%s2309 + $0x138] sm:$0xff]
        %v2513 = vld [vmem:[%s2309 + $0x140] sm:$0xff]
        %v2514 = vld [vmem:[%s2309 + $0x150] sm:$0xff]
        %v2515 = vld [vmem:[%s2309 + $0x158] sm:$0xff]
        %v2516 = vld [vmem:[%s2309 + $0x168] sm:$0xff]
        %v2517 = vld [vmem:[%s2309 + $0x170] sm:$0xff]
        %v2518 = vld [vmem:[%s2309 + $0x1] sm:$0xff]
        %v2519 = vld [vmem:[%s2309 + $0x9] sm:$0xff]
        %v2520 = vld [vmem:[%s2309 + $0x19] sm:$0xff]
        %v2521 = vld [vmem:[%s2309 + $0x21] sm:$0xff]
        %v2522 = vld [vmem:[%s2309 + $0x31] sm:$0xff]
        %v2523 = vld [vmem:[%s2309 + $0x39] sm:$0xff]
        %v2524 = vld [vmem:[%s2309 + $0x49] sm:$0xff]
        %v2525 = vld [vmem:[%s2309 + $0x51] sm:$0xff]
        %v2526 = vld [vmem:[%s2309 + $0x61] sm:$0xff]
        %v2527 = vld [vmem:[%s2309 + $0x69] sm:$0xff]
        %v2528 = vld [vmem:[%s2309 + $0x79] sm:$0xff]
        %v2529 = vld [vmem:[%s2309 + $0x81] sm:$0xff]
        %v2530 = vld [vmem:[%s2309 + $0x91] sm:$0xff]
        %v2531 = vld [vmem:[%s2309 + $0x99] sm:$0xff]
        %v2532 = vld [vmem:[%s2309 + $0xa9] sm:$0xff]
        %v2533 = vld [vmem:[%s2309 + $0xb1] sm:$0xff]
        %v2534 = vld [vmem:[%s2309 + $0xc1] sm:$0xff]
        %v2535 = vld [vmem:[%s2309 + $0xc9] sm:$0xff]
        %v2536 = vld [vmem:[%s2309 + $0xd9] sm:$0xff]
        %v2537 = vld [vmem:[%s2309 + $0xe1] sm:$0xff]
        %v2538 = vld [vmem:[%s2309 + $0xf1] sm:$0xff]
        %v2539 = vld [vmem:[%s2309 + $0xf9] sm:$0xff]
        %v2540 = vld [vmem:[%s2309 + $0x109] sm:$0xff]
        %v2541 = vld [vmem:[%s2309 + $0x111] sm:$0xff]
        %v2542 = vld [vmem:[%s2309 + $0x121] sm:$0xff]
        %v2543 = vld [vmem:[%s2309 + $0x129] sm:$0xff]
        %v2544 = vld [vmem:[%s2309 + $0x139] sm:$0xff]
        %v2545 = vld [vmem:[%s2309 + $0x141] sm:$0xff]
        %v2546 = vld [vmem:[%s2309 + $0x151] sm:$0xff]
        %v2547 = vld [vmem:[%s2309 + $0x159] sm:$0xff]
        %v2548 = vld [vmem:[%s2309 + $0x169] sm:$0xff]
        %v2549 = vld [vmem:[%s2309 + $0x171] sm:$0xff]
        %v2550 = vld [vmem:[%s2309 + $0x2] sm:$0xff]
        %v2551 = vld [vmem:[%s2309 + $0xa] sm:$0xff]
        %v2552 = vld [vmem:[%s2309 + $0x1a] sm:$0xff]
        %v2553 = vld [vmem:[%s2309 + $0x22] sm:$0xff]
        %v2554 = vld [vmem:[%s2309 + $0x32] sm:$0xff]
        %v2555 = vld [vmem:[%s2309 + $0x3a] sm:$0xff]
        %v2556 = vld [vmem:[%s2309 + $0x4a] sm:$0xff]
        %v2557 = vld [vmem:[%s2309 + $0x52] sm:$0xff]
        %v2558 = vld [vmem:[%s2309 + $0x62] sm:$0xff]
        %v2559 = vld [vmem:[%s2309 + $0x6a] sm:$0xff]
        %v2560 = vld [vmem:[%s2309 + $0x7a] sm:$0xff]
        %v2561 = vld [vmem:[%s2309 + $0x82] sm:$0xff]
        %v2562 = vld [vmem:[%s2309 + $0x92] sm:$0xff]
        %v2563 = vld [vmem:[%s2309 + $0x9a] sm:$0xff]
        %v2564 = vld [vmem:[%s2309 + $0xaa] sm:$0xff]
        %v2565 = vld [vmem:[%s2309 + $0xb2] sm:$0xff]
        %v2566 = vld [vmem:[%s2309 + $0xc2] sm:$0xff]
        %v2567 = vld [vmem:[%s2309 + $0xca] sm:$0xff]
        %v2568 = vld [vmem:[%s2309 + $0xda] sm:$0xff]
        %v2569 = vld [vmem:[%s2309 + $0xe2] sm:$0xff]
        %v2570 = vld [vmem:[%s2309 + $0xf2] sm:$0xff]
        %v2571 = vld [vmem:[%s2309 + $0xfa] sm:$0xff]
        %v2572 = vld [vmem:[%s2309 + $0x10a] sm:$0xff]
        %v2573 = vld [vmem:[%s2309 + $0x112] sm:$0xff]
        %v2574 = vld [vmem:[%s2309 + $0x122] sm:$0xff]
        %v2575 = vld [vmem:[%s2309 + $0x12a] sm:$0xff]
        %v2576 = vld [vmem:[%s2309 + $0x13a] sm:$0xff]
        %v2577 = vld [vmem:[%s2309 + $0x142] sm:$0xff]
        %v2578 = vld [vmem:[%s2309 + $0x152] sm:$0xff]
        %v2579 = vld [vmem:[%s2309 + $0x15a] sm:$0xff]
        %v2580 = vld [vmem:[%s2309 + $0x16a] sm:$0xff]
        %v2581 = vld [vmem:[%s2309 + $0x172] sm:$0xff]
        %v2582 = vld [vmem:[#allocation9 + $0x180] sm:$0xff]
        %v2583 = vld [vmem:[#allocation9 + $0x188] sm:$0xff]
        %v2584 = vld [vmem:[#allocation9 + $0x190] sm:$0xff]
        %v2585 = vld [vmem:[#allocation9 + $0x198] sm:$0xff]
        %v2586 = vld [vmem:[#allocation9 + $0x1a0] sm:$0xff]
        %v2587 = vld [vmem:[#allocation9 + $0x1a8] sm:$0xff]
        %v2588 = vld [vmem:[#allocation9 + $0x1b0] sm:$0xff]
        %v2589 = vld [vmem:[#allocation9 + $0x1b8] sm:$0xff]
        %v2590 = vld [vmem:[#allocation9 + $0x1c0] sm:$0xff]
        %v2591 = vld [vmem:[#allocation9 + $0x1c8] sm:$0xff]
        %v2592 = vld [vmem:[#allocation9 + $0x1d0] sm:$0xff]
        %v2593 = vld [vmem:[#allocation9 + $0x1d8] sm:$0xff]
        %v2594 = vld [vmem:[#allocation9 + $0x1e0] sm:$0xff]
        %v2595 = vld [vmem:[#allocation9 + $0x1e8] sm:$0xff]
        %v2596 = vld [vmem:[#allocation9 + $0x1f0] sm:$0xff]
        %v2597 = vld [vmem:[#allocation9 + $0x1f8] sm:$0xff]
        %v2598 = vld [vmem:[#allocation9 + $0x200] sm:$0xff]
        %v2599 = vld [vmem:[#allocation9 + $0x208] sm:$0xff]
        %v2600 = vld [vmem:[#allocation9 + $0x210] sm:$0xff]
        %v2601 = vld [vmem:[#allocation9 + $0x218] sm:$0xff]
        %v2602 = vld [vmem:[#allocation9 + $0x220] sm:$0xff]
        %v2603 = vld [vmem:[#allocation9 + $0x228] sm:$0xff]
        %v2604 = vld [vmem:[#allocation9 + $0x230] sm:$0xff]
        %v2605 = vld [vmem:[#allocation9 + $0x238] sm:$0xff]
        %v2606 = vld [vmem:[#allocation9 + $0x240] sm:$0xff]
        %v2607 = vld [vmem:[#allocation9 + $0x248] sm:$0xff]
        %v2608 = vld [vmem:[#allocation9 + $0x250] sm:$0xff]
        %v2609 = vld [vmem:[#allocation9 + $0x258] sm:$0xff]
        %v2610 = vld [vmem:[#allocation9 + $0x260] sm:$0xff]
        %v2611 = vld [vmem:[#allocation9 + $0x268] sm:$0xff]
        %v2612 = vld [vmem:[#allocation9 + $0x270] sm:$0xff]
        %v2613 = vld [vmem:[#allocation9 + $0x278] sm:$0xff]
        %v2614 = vld [vmem:[#allocation9 + $0x280] sm:$0xff]
        %v2615 = vld [vmem:[#allocation9 + $0x288] sm:$0xff]
        %v2616 = vld [vmem:[#allocation9 + $0x290] sm:$0xff]
        %v2617 = vld [vmem:[#allocation9 + $0x298] sm:$0xff]
        %v2618 = vld [vmem:[#allocation9 + $0x2a0] sm:$0xff]
        %v2619 = vld [vmem:[#allocation9 + $0x2a8] sm:$0xff]
        %v2620 = vld [vmem:[#allocation9 + $0x2b0] sm:$0xff]
        %v2621 = vld [vmem:[#allocation9 + $0x2b8] sm:$0xff]
        %v2622 = vld [vmem:[#allocation9 + $0x2c0] sm:$0xff]
        %v2623 = vld [vmem:[#allocation9 + $0x2c8] sm:$0xff]
        %v2624 = vld [vmem:[#allocation9 + $0x2d0] sm:$0xff]
        %v2625 = vld [vmem:[#allocation9 + $0x2d8] sm:$0xff]
        %v2626 = vld [vmem:[#allocation9 + $0x2e0] sm:$0xff]
        %v2627 = vld [vmem:[#allocation9 + $0x2e8] sm:$0xff]
        %v2628 = vld [vmem:[#allocation9 + $0x2f0] sm:$0xff]
        %v2629 = vld [vmem:[#allocation9 + $0x2f8] sm:$0xff]
        %2630 = vmatprep.subr.mxu0 0.0
        %2631 = vmatpush1.msra.mxu0 %v2582
        %2632 = vmatprep.subr.mxu0 0.0
        %2633 = vmatpush1.msra.mxu0 %v2583
        %2634 = vmatprep.subr.mxu0 0.0
        %2635 = vmatpush1.msra.mxu0 %v2584
        %2636 = vmatprep.subr.mxu0 0.0
        %2637 = vmatpush1.msra.mxu0 %v2585
        %2638 = vmatprep.subr.mxu0 0.0
        %2639 = vmatpush1.msra.mxu0 %v2586
        %2640 = vmatprep.subr.mxu0 0.0
        %2641 = vmatpush1.msra.mxu0 %v2587
        %2642 = vmatprep.subr.mxu0 0.0
        %2643 = vmatpush1.msra.mxu0 %v2588
        %2644 = vmatprep.subr.mxu0 0.0
        %2645 = vmatpush1.msra.mxu0 %v2589
        %2646 = vmatprep.subr.mxu0 0.0
        %2647 = vmatpush1.msra.mxu0 %v2590
        %2648 = vmatprep.subr.mxu0 0.0
        %2649 = vmatpush1.msra.mxu0 %v2591
        %2650 = vmatprep.subr.mxu0 0.0
        %2651 = vmatpush1.msra.mxu0 %v2592
        %2652 = vmatprep.subr.mxu0 0.0
        %2653 = vmatpush1.msra.mxu0 %v2593
        %2654 = vmatprep.subr.mxu0 0.0
        %2655 = vmatpush1.msra.mxu0 %v2594
        %2656 = vmatprep.subr.mxu0 0.0
        %2657 = vmatpush1.msra.mxu0 %v2595
        %2658 = vmatprep.subr.mxu0 0.0
        %2659 = vmatpush1.msra.mxu0 %v2596
        %2660 = vmatprep.subr.mxu0 0.0
        %2661 = vmatpush1.msra.mxu0 %v2597
        %2662 = vmatprep.subr.mxu0 0.0
        %2663 = vmatpush1.msra.mxu0 %v2598
        %2664 = vmatprep.subr.mxu0 0.0
        %2665 = vmatpush1.msra.mxu0 %v2599
        %2666 = vmatprep.subr.mxu0 0.0
        %2667 = vmatpush1.msra.mxu0 %v2600
        %2668 = vmatprep.subr.mxu0 0.0
        %2669 = vmatpush1.msra.mxu0 %v2601
        %2670 = vmatprep.subr.mxu0 0.0
        %2671 = vmatpush1.msra.mxu0 %v2602
        %2672 = vmatprep.subr.mxu0 0.0
        %2673 = vmatpush1.msra.mxu0 %v2603
        %2674 = vmatprep.subr.mxu0 0.0
        %2675 = vmatpush1.msra.mxu0 %v2604
        %2676 = vmatprep.subr.mxu0 0.0
        %2677 = vmatpush1.msra.mxu0 %v2605
        %2678 = vmatprep.subr.mxu0 0.0
        %2679 = vmatpush1.msra.mxu0 %v2606
        %2680 = vmatprep.subr.mxu0 0.0
        %2681 = vmatpush1.msra.mxu0 %v2607
        %2682 = vmatprep.subr.mxu0 0.0
        %2683 = vmatpush1.msra.mxu0 %v2608
        %2684 = vmatprep.subr.mxu0 0.0
        %2685 = vmatpush1.msra.mxu0 %v2609
        %2686 = vmatprep.subr.mxu0 0.0
        %2687 = vmatpush1.msra.mxu0 %v2610
        %2688 = vmatprep.subr.mxu0 0.0
        %2689 = vmatpush1.msra.mxu0 %v2611
        %2690 = vmatprep.subr.mxu0 0.0
        %2691 = vmatpush1.msra.mxu0 %v2612
        %2692 = vmatprep.subr.mxu0 0.0
        %2693 = vmatpush1.msra.mxu0 %v2613
        %2694 = vmatprep.mubr.f32.mxu0 %v2518
        %2695 = vmatmul.mubr.f32.gmra.mrb[0].mxu0 %v2486
        %v2696 = vpop.f32.mrb[0].mxu0
        %v2697 = vadd.f32 0.0, %v2696
        %v2698 = vpop.f32.mrb[0].mxu0
        %2699 = vmatprep.mubr.f32.mxu0 %v2519
        %2700 = vmatmul.mubr.f32.gmra.mrb[0].mxu0 %v2487
        %v2701 = vpop.f32.mrb[0].mxu0
        %v2702 = vadd.f32 0.0, %v2701
        %v2703 = vpop.f32.mrb[0].mxu0
        %2704 = vmatprep.mubr.f32.mxu0 %v2520
        %2705 = vmatmul.mubr.f32.gmra.mrb[0].mxu0 %v2488
        %v2706 = vpop.f32.mrb[0].mxu0
        %v2707 = vadd.f32 0.0, %v2706
        %v2708 = vpop.f32.mrb[0].mxu0
        %2709 = vmatprep.mubr.f32.mxu0 %v2521
        %2710 = vmatmul.mubr.f32.gmra.mrb[0].mxu0 %v2489
        %v2711 = vpop.f32.mrb[0].mxu0
        %v2712 = vadd.f32 0.0, %v2711
        %v2713 = vpop.f32.mrb[0].mxu0
        %2714 = vmatprep.mubr.f32.mxu0 %v2522
        %2715 = vmatmul.mubr.f32.gmra.mrb[0].mxu0 %v2490
        %v2716 = vpop.f32.mrb[0].mxu0
        %v2717 = vadd.f32 0.0, %v2716
        %v2718 = vpop.f32.mrb[0].mxu0
        %2719 = vmatprep.mubr.f32.mxu0 %v2523
        %2720 = vmatmul.mubr.f32.gmra.mrb[0].mxu0 %v2491
        %v2721 = vpop.f32.mrb[0].mxu0
        %v2722 = vadd.f32 0.0, %v2721
        %v2723 = vpop.f32.mrb[0].mxu0
        %2724 = vmatprep.mubr.f32.mxu0 %v2524
        %2725 = vmatmul.mubr.f32.gmra.mrb[0].mxu0 %v2492
        %v2726 = vpop.f32.mrb[0].mxu0
        %v2727 = vadd.f32 0.0, %v2726
        %v2728 = vpop.f32.mrb[0].mxu0
        %2729 = vmatprep.mubr.f32.mxu0 %v2525
        %2730 = vmatmul.mubr.f32.gmra.mrb[0].mxu0 %v2493
        %v2731 = vpop.f32.mrb[0].mxu0
        %v2732 = vadd.f32 0.0, %v2731
        %v2733 = vpop.f32.mrb[0].mxu0
        %2734 = vmatprep.mubr.f32.mxu0 %v2526
        %2735 = vmatmul.mubr.f32.gmra.mrb[0].mxu0 %v2494
        %v2736 = vpop.f32.mrb[0].mxu0
        %v2737 = vadd.f32 0.0, %v2736
        %v2738 = vpop.f32.mrb[0].mxu0
        %2739 = vmatprep.mubr.f32.mxu0 %v2527
        %2740 = vmatmul.mubr.f32.gmra.mrb[0].mxu0 %v2495
        %v2741 = vpop.f32.mrb[0].mxu0
        %v2742 = vadd.f32 0.0, %v2741
        %v2743 = vpop.f32.mrb[0].mxu0
        %2744 = vmatprep.mubr.f32.mxu0 %v2528
        %2745 = vmatmul.mubr.f32.gmra.mrb[0].mxu0 %v2496
        %v2746 = vpop.f32.mrb[0].mxu0
        %v2747 = vadd.f32 0.0, %v2746
        %v2748 = vpop.f32.mrb[0].mxu0
        %2749 = vmatprep.mubr.f32.mxu0 %v2529
        %2750 = vmatmul.mubr.f32.gmra.mrb[0].mxu0 %v2497
        %v2751 = vpop.f32.mrb[0].mxu0
        %v2752 = vadd.f32 0.0, %v2751
        %v2753 = vpop.f32.mrb[0].mxu0
        %2754 = vmatprep.mubr.f32.mxu0 %v2530
        %2755 = vmatmul.mubr.f32.gmra.mrb[0].mxu0 %v2498
        %v2756 = vpop.f32.mrb[0].mxu0
        %v2757 = vadd.f32 0.0, %v2756
        %v2758 = vpop.f32.mrb[0].mxu0
        %2759 = vmatprep.mubr.f32.mxu0 %v2531
        %2760 = vmatmul.mubr.f32.gmra.mrb[0].mxu0 %v2499
        %v2761 = vpop.f32.mrb[0].mxu0
        %v2762 = vadd.f32 0.0, %v2761
        %v2763 = vpop.f32.mrb[0].mxu0
        %2764 = vmatprep.mubr.f32.mxu0 %v2532
        %2765 = vmatmul.mubr.f32.gmra.mrb[0].mxu0 %v2500
        %v2766 = vpop.f32.mrb[0].mxu0
        %v2767 = vadd.f32 0.0, %v2766
        %v2768 = vpop.f32.mrb[0].mxu0
        %2769 = vmatprep.mubr.f32.mxu0 %v2533
        %2770 = vmatmul.mubr.f32.gmra.mrb[0].mxu0 %v2501
        %v2771 = vpop.f32.mrb[0].mxu0
        %v2772 = vadd.f32 0.0, %v2771
        %v2773 = vpop.f32.mrb[0].mxu0
        %2774 = vmatprep.mubr.f32.mxu0 %v2534
        %2775 = vmatmul.mubr.f32.gmra.mrb[0].mxu0 %v2502
        %v2776 = vpop.f32.mrb[0].mxu0
        %v2777 = vadd.f32 0.0, %v2776
        %v2778 = vpop.f32.mrb[0].mxu0
        %2779 = vmatprep.mubr.f32.mxu0 %v2535
        %2780 = vmatmul.mubr.f32.gmra.mrb[0].mxu0 %v2503
        %v2781 = vpop.f32.mrb[0].mxu0
        %v2782 = vadd.f32 0.0, %v2781
        %v2783 = vpop.f32.mrb[0].mxu0
        %2784 = vmatprep.mubr.f32.mxu0 %v2536
        %2785 = vmatmul.mubr.f32.gmra.mrb[0].mxu0 %v2504
        %v2786 = vpop.f32.mrb[0].mxu0
        %v2787 = vadd.f32 0.0, %v2786
        %v2788 = vpop.f32.mrb[0].mxu0
        %2789 = vmatprep.mubr.f32.mxu0 %v2537
        %2790 = vmatmul.mubr.f32.gmra.mrb[0].mxu0 %v2505
        %v2791 = vpop.f32.mrb[0].mxu0
        %v2792 = vadd.f32 0.0, %v2791
        %v2793 = vpop.f32.mrb[0].mxu0
        %2794 = vmatprep.mubr.f32.mxu0 %v2538
        %2795 = vmatmul.mubr.f32.gmra.mrb[0].mxu0 %v2506
        %v2796 = vpop.f32.mrb[0].mxu0
        %v2797 = vadd.f32 0.0, %v2796
        %v2798 = vpop.f32.mrb[0].mxu0
        %2799 = vmatprep.mubr.f32.mxu0 %v2539
        %2800 = vmatmul.mubr.f32.gmra.mrb[0].mxu0 %v2507
        %v2801 = vpop.f32.mrb[0].mxu0
        %v2802 = vadd.f32 0.0, %v2801
        %v2803 = vpop.f32.mrb[0].mxu0
        %2804 = vmatprep.mubr.f32.mxu0 %v2540
        %2805 = vmatmul.mubr.f32.gmra.mrb[0].mxu0 %v2508
        %v2806 = vpop.f32.mrb[0].mxu0
        %v2807 = vadd.f32 0.0, %v2806
        %v2808 = vpop.f32.mrb[0].mxu0
        %2809 = vmatprep.mubr.f32.mxu0 %v2541
        %2810 = vmatmul.mubr.f32.gmra.mrb[0].mxu0 %v2509
        %v2811 = vpop.f32.mrb[0].mxu0
        %v2812 = vadd.f32 0.0, %v2811
        %v2813 = vpop.f32.mrb[0].mxu0
        %2814 = vmatprep.mubr.f32.mxu0 %v2542
        %2815 = vmatmul.mubr.f32.gmra.mrb[0].mxu0 %v2510
        %v2816 = vpop.f32.mrb[0].mxu0
        %v2817 = vadd.f32 0.0, %v2816
        %v2818 = vpop.f32.mrb[0].mxu0
        %2819 = vmatprep.mubr.f32.mxu0 %v2543
        %2820 = vmatmul.mubr.f32.gmra.mrb[0].mxu0 %v2511
        %v2821 = vpop.f32.mrb[0].mxu0
        %v2822 = vadd.f32 0.0, %v2821
        %v2823 = vpop.f32.mrb[0].mxu0
        %2824 = vmatprep.mubr.f32.mxu0 %v2544
        %2825 = vmatmul.mubr.f32.gmra.mrb[0].mxu0 %v2512
        %v2826 = vpop.f32.mrb[0].mxu0
        %v2827 = vadd.f32 0.0, %v2826
        %v2828 = vpop.f32.mrb[0].mxu0
        %2829 = vmatprep.mubr.f32.mxu0 %v2545
        %2830 = vmatmul.mubr.f32.gmra.mrb[0].mxu0 %v2513
        %v2831 = vpop.f32.mrb[0].mxu0
        %v2832 = vadd.f32 0.0, %v2831
        %v2833 = vpop.f32.mrb[0].mxu0
        %2834 = vmatprep.mubr.f32.mxu0 %v2546
        %2835 = vmatmul.mubr.f32.gmra.mrb[0].mxu0 %v2514
        %v2836 = vpop.f32.mrb[0].mxu0
        %v2837 = vadd.f32 0.0, %v2836
        %v2838 = vpop.f32.mrb[0].mxu0
        %2839 = vmatprep.mubr.f32.mxu0 %v2547
        %2840 = vmatmul.mubr.f32.gmra.mrb[0].mxu0 %v2515
        %v2841 = vpop.f32.mrb[0].mxu0
        %v2842 = vadd.f32 0.0, %v2841
        %v2843 = vpop.f32.mrb[0].mxu0
        %2844 = vmatprep.mubr.f32.mxu0 %v2548
        %2845 = vmatmul.mubr.f32.gmra.mrb[0].mxu0 %v2516
        %v2846 = vpop.f32.mrb[0].mxu0
        %v2847 = vadd.f32 0.0, %v2846
        %v2848 = vpop.f32.mrb[0].mxu0
        %2849 = vmatprep.mubr.f32.mxu0 %v2549
        %2850 = vmatmul.mubr.f32.gmra.mrb[0].mxu0 %v2517
        %v2851 = vpop.f32.mrb[0].mxu0
        %v2852 = vadd.f32 0.0, %v2851
        %v2853 = vpop.f32.mrb[0].mxu0
        %2854 = vdwg.mxu0
        %2855 = vmatprep.subr.mxu0 0.0
        %2856 = vmatpush1.msra.mxu0 %v2614
        %2857 = vmatprep.subr.mxu0 0.0
        %2858 = vmatpush1.msra.mxu0 %v2615
        %2859 = vmatprep.subr.mxu0 0.0
        %2860 = vmatpush1.msra.mxu0 %v2616
        %2861 = vmatprep.subr.mxu0 0.0
        %2862 = vmatpush1.msra.mxu0 %v2617
        %2863 = vmatprep.subr.mxu0 0.0
        %2864 = vmatpush1.msra.mxu0 %v2618
        %2865 = vmatprep.subr.mxu0 0.0
        %2866 = vmatpush1.msra.mxu0 %v2619
        %2867 = vmatprep.subr.mxu0 0.0
        %2868 = vmatpush1.msra.mxu0 %v2620
        %2869 = vmatprep.subr.mxu0 0.0
        %2870 = vmatpush1.msra.mxu0 %v2621
        %2871 = vmatprep.subr.mxu0 0.0
        %2872 = vmatpush1.msra.mxu0 %v2622
        %2873 = vmatprep.subr.mxu0 0.0
        %2874 = vmatpush1.msra.mxu0 %v2623
        %2875 = vmatprep.subr.mxu0 0.0
        %2876 = vmatpush1.msra.mxu0 %v2624
        %2877 = vmatprep.subr.mxu0 0.0
        %2878 = vmatpush1.msra.mxu0 %v2625
        %2879 = vmatprep.subr.mxu0 0.0
        %2880 = vmatpush1.msra.mxu0 %v2626
        %2881 = vmatprep.subr.mxu0 0.0
        %2882 = vmatpush1.msra.mxu0 %v2627
        %2883 = vmatprep.subr.mxu0 0.0
        %2884 = vmatpush1.msra.mxu0 %v2628
        %2885 = vmatprep.subr.mxu0 0.0
        %2886 = vmatpush1.msra.mxu0 %v2629
        %2887 = vmatprep.subr.mxu0 0.0
        %2888 = vmatpush1.msra.mxu0 0.0
        %2889 = vmatprep.subr.mxu0 0.0
        %2890 = vmatpush1.msra.mxu0 0.0
        %2891 = vmatprep.subr.mxu0 0.0
        %2892 = vmatpush1.msra.mxu0 0.0
        %2893 = vmatprep.subr.mxu0 0.0
        %2894 = vmatpush1.msra.mxu0 0.0
        %2895 = vmatprep.subr.mxu0 0.0
        %2896 = vmatpush1.msra.mxu0 0.0
        %2897 = vmatprep.subr.mxu0 0.0
        %2898 = vmatpush1.msra.mxu0 0.0
        %2899 = vmatprep.subr.mxu0 0.0
        %2900 = vmatpush1.msra.mxu0 0.0
        %2901 = vmatprep.subr.mxu0 0.0
        %2902 = vmatpush1.msra.mxu0 0.0
        %2903 = vmatprep.subr.mxu0 0.0
        %2904 = vmatpush1.msra.mxu0 0.0
        %2905 = vmatprep.subr.mxu0 0.0
        %2906 = vmatpush1.msra.mxu0 0.0
        %2907 = vmatprep.subr.mxu0 0.0
        %2908 = vmatpush1.msra.mxu0 0.0
        %2909 = vmatprep.subr.mxu0 0.0
        %2910 = vmatpush1.msra.mxu0 0.0
        %2911 = vmatprep.subr.mxu0 0.0
        %2912 = vmatpush1.msra.mxu0 0.0
        %2913 = vmatprep.subr.mxu0 0.0
        %2914 = vmatpush1.msra.mxu0 0.0
        %2915 = vmatprep.subr.mxu0 0.0
        %2916 = vmatpush1.msra.mxu0 0.0
        %2917 = vmatprep.subr.mxu0 0.0
        %2918 = vmatpush1.msra.mxu0 0.0
        %2919 = vmatprep.mubr.f32.mxu0 0.0
        %2920 = vmatmul.mubr.f32.gmra.mrb[0].mxu0 %v2550
        %v2921 = vpop.f32.mrb[0].mxu0
        %v2922 = vadd.f32 %v2697, %v2921
        %v2923 = vpop.f32.mrb[0].mxu0
        %2924 = vmatprep.mubr.f32.mxu0 0.0
        %2925 = vmatmul.mubr.f32.gmra.mrb[0].mxu0 %v2551
        %v2926 = vpop.f32.mrb[0].mxu0
        %v2927 = vadd.f32 %v2702, %v2926
        %v2928 = vpop.f32.mrb[0].mxu0
        %2929 = vmatprep.mubr.f32.mxu0 0.0
        %2930 = vmatmul.mubr.f32.gmra.mrb[0].mxu0 %v2552
        %v2931 = vpop.f32.mrb[0].mxu0
        %v2932 = vadd.f32 %v2707, %v2931
        %v2933 = vpop.f32.mrb[0].mxu0
        %2934 = vmatprep.mubr.f32.mxu0 0.0
        %2935 = vmatmul.mubr.f32.gmra.mrb[0].mxu0 %v2553
        %v2936 = vpop.f32.mrb[0].mxu0
        %v2937 = vadd.f32 %v2712, %v2936
        %v2938 = vpop.f32.mrb[0].mxu0
        %2939 = vmatprep.mubr.f32.mxu0 0.0
        %2940 = vmatmul.mubr.f32.gmra.mrb[0].mxu0 %v2554
        %v2941 = vpop.f32.mrb[0].mxu0
        %v2942 = vadd.f32 %v2717, %v2941
        %v2943 = vpop.f32.mrb[0].mxu0
        %2944 = vmatprep.mubr.f32.mxu0 0.0
        %2945 = vmatmul.mubr.f32.gmra.mrb[0].mxu0 %v2555
        %v2946 = vpop.f32.mrb[0].mxu0
        %v2947 = vadd.f32 %v2722, %v2946
        %v2948 = vpop.f32.mrb[0].mxu0
        %2949 = vmatprep.mubr.f32.mxu0 0.0
        %2950 = vmatmul.mubr.f32.gmra.mrb[0].mxu0 %v2556
        %v2951 = vpop.f32.mrb[0].mxu0
        %v2952 = vadd.f32 %v2727, %v2951
        %v2953 = vpop.f32.mrb[0].mxu0
        %2954 = vmatprep.mubr.f32.mxu0 0.0
        %2955 = vmatmul.mubr.f32.gmra.mrb[0].mxu0 %v2557
        %v2956 = vpop.f32.mrb[0].mxu0
        %v2957 = vadd.f32 %v2732, %v2956
        %v2958 = vpop.f32.mrb[0].mxu0
        %2959 = vmatprep.mubr.f32.mxu0 0.0
        %2960 = vmatmul.mubr.f32.gmra.mrb[0].mxu0 %v2558
        %v2961 = vpop.f32.mrb[0].mxu0
        %v2962 = vadd.f32 %v2737, %v2961
        %v2963 = vpop.f32.mrb[0].mxu0
        %2964 = vmatprep.mubr.f32.mxu0 0.0
        %2965 = vmatmul.mubr.f32.gmra.mrb[0].mxu0 %v2559
        %v2966 = vpop.f32.mrb[0].mxu0
        %v2967 = vadd.f32 %v2742, %v2966
        %v2968 = vpop.f32.mrb[0].mxu0
        %2969 = vmatprep.mubr.f32.mxu0 0.0
        %2970 = vmatmul.mubr.f32.gmra.mrb[0].mxu0 %v2560
        %v2971 = vpop.f32.mrb[0].mxu0
        %v2972 = vadd.f32 %v2747, %v2971
        %v2973 = vpop.f32.mrb[0].mxu0
        %2974 = vmatprep.mubr.f32.mxu0 0.0
        %2975 = vmatmul.mubr.f32.gmra.mrb[0].mxu0 %v2561
        %v2976 = vpop.f32.mrb[0].mxu0
        %v2977 = vadd.f32 %v2752, %v2976
        %v2978 = vpop.f32.mrb[0].mxu0
        %2979 = vmatprep.mubr.f32.mxu0 0.0
        %2980 = vmatmul.mubr.f32.gmra.mrb[0].mxu0 %v2562
        %v2981 = vpop.f32.mrb[0].mxu0
        %v2982 = vadd.f32 %v2757, %v2981
        %v2983 = vpop.f32.mrb[0].mxu0
        %2984 = vmatprep.mubr.f32.mxu0 0.0
        %2985 = vmatmul.mubr.f32.gmra.mrb[0].mxu0 %v2563
        %v2986 = vpop.f32.mrb[0].mxu0
        %v2987 = vadd.f32 %v2762, %v2986
        %v2988 = vpop.f32.mrb[0].mxu0
        %2989 = vmatprep.mubr.f32.mxu0 0.0
        %2990 = vmatmul.mubr.f32.gmra.mrb[0].mxu0 %v2564
        %v2991 = vpop.f32.mrb[0].mxu0
        %v2992 = vadd.f32 %v2767, %v2991
        %v2993 = vpop.f32.mrb[0].mxu0
        %2994 = vmatprep.mubr.f32.mxu0 0.0
        %2995 = vmatmul.mubr.f32.gmra.mrb[0].mxu0 %v2565
        %v2996 = vpop.f32.mrb[0].mxu0
        %v2997 = vadd.f32 %v2772, %v2996
        %v2998 = vpop.f32.mrb[0].mxu0
        %2999 = vmatprep.mubr.f32.mxu0 0.0
        %3000 = vmatmul.mubr.f32.gmra.mrb[0].mxu0 %v2566
        %v3001 = vpop.f32.mrb[0].mxu0
        %v3002 = vadd.f32 %v2777, %v3001
        %v3003 = vpop.f32.mrb[0].mxu0
        %3004 = vmatprep.mubr.f32.mxu0 0.0
        %3005 = vmatmul.mubr.f32.gmra.mrb[0].mxu0 %v2567
        %v3006 = vpop.f32.mrb[0].mxu0
        %v3007 = vadd.f32 %v2782, %v3006
        %v3008 = vpop.f32.mrb[0].mxu0
        %3009 = vmatprep.mubr.f32.mxu0 0.0
        %3010 = vmatmul.mubr.f32.gmra.mrb[0].mxu0 %v2568
        %v3011 = vpop.f32.mrb[0].mxu0
        %v3012 = vadd.f32 %v2787, %v3011
        %v3013 = vpop.f32.mrb[0].mxu0
        %3014 = vmatprep.mubr.f32.mxu0 0.0
        %3015 = vmatmul.mubr.f32.gmra.mrb[0].mxu0 %v2569
        %v3016 = vpop.f32.mrb[0].mxu0
        %v3017 = vadd.f32 %v2792, %v3016
        %v3018 = vpop.f32.mrb[0].mxu0
        %3019 = vmatprep.mubr.f32.mxu0 0.0
        %3020 = vmatmul.mubr.f32.gmra.mrb[0].mxu0 %v2570
        %v3021 = vpop.f32.mrb[0].mxu0
        %v3022 = vadd.f32 %v2797, %v3021
        %v3023 = vpop.f32.mrb[0].mxu0
        %3024 = vmatprep.mubr.f32.mxu0 0.0
        %3025 = vmatmul.mubr.f32.gmra.mrb[0].mxu0 %v2571
        %v3026 = vpop.f32.mrb[0].mxu0
        %v3027 = vadd.f32 %v2802, %v3026
        %v3028 = vpop.f32.mrb[0].mxu0
        %3029 = vmatprep.mubr.f32.mxu0 0.0
        %3030 = vmatmul.mubr.f32.gmra.mrb[0].mxu0 %v2572
        %v3031 = vpop.f32.mrb[0].mxu0
        %v3032 = vadd.f32 %v2807, %v3031
        %v3033 = vpop.f32.mrb[0].mxu0
        %3034 = vmatprep.mubr.f32.mxu0 0.0
        %3035 = vmatmul.mubr.f32.gmra.mrb[0].mxu0 %v2573
        %v3036 = vpop.f32.mrb[0].mxu0
        %v3037 = vadd.f32 %v2812, %v3036
        %v3038 = vpop.f32.mrb[0].mxu0
        %3039 = vmatprep.mubr.f32.mxu0 0.0
        %3040 = vmatmul.mubr.f32.gmra.mrb[0].mxu0 %v2574
        %v3041 = vpop.f32.mrb[0].mxu0
        %v3042 = vadd.f32 %v2817, %v3041
        %v3043 = vpop.f32.mrb[0].mxu0
        %3044 = vmatprep.mubr.f32.mxu0 0.0
        %3045 = vmatmul.mubr.f32.gmra.mrb[0].mxu0 %v2575
        %v3046 = vpop.f32.mrb[0].mxu0
        %v3047 = vadd.f32 %v2822, %v3046
        %v3048 = vpop.f32.mrb[0].mxu0
        %3049 = vmatprep.mubr.f32.mxu0 0.0
        %3050 = vmatmul.mubr.f32.gmra.mrb[0].mxu0 %v2576
        %v3051 = vpop.f32.mrb[0].mxu0
        %v3052 = vadd.f32 %v2827, %v3051
        %v3053 = vpop.f32.mrb[0].mxu0
        %3054 = vmatprep.mubr.f32.mxu0 0.0
        %3055 = vmatmul.mubr.f32.gmra.mrb[0].mxu0 %v2577
        %v3056 = vpop.f32.mrb[0].mxu0
        %v3057 = vadd.f32 %v2832, %v3056
        %v3058 = vpop.f32.mrb[0].mxu0
        %3059 = vmatprep.mubr.f32.mxu0 0.0
        %3060 = vmatmul.mubr.f32.gmra.mrb[0].mxu0 %v2578
        %v3061 = vpop.f32.mrb[0].mxu0
        %v3062 = vadd.f32 %v2837, %v3061
        %v3063 = vpop.f32.mrb[0].mxu0
        %3064 = vmatprep.mubr.f32.mxu0 0.0
        %3065 = vmatmul.mubr.f32.gmra.mrb[0].mxu0 %v2579
        %v3066 = vpop.f32.mrb[0].mxu0
        %v3067 = vadd.f32 %v2842, %v3066
        %v3068 = vpop.f32.mrb[0].mxu0
        %3069 = vmatprep.mubr.f32.mxu0 0.0
        %3070 = vmatmul.mubr.f32.gmra.mrb[0].mxu0 %v2580
        %v3071 = vpop.f32.mrb[0].mxu0
        %v3072 = vadd.f32 %v2847, %v3071
        %v3073 = vpop.f32.mrb[0].mxu0
        %3074 = vmatprep.mubr.f32.mxu0 0.0
        %3075 = vmatmul.mubr.f32.gmra.mrb[0].mxu0 %v2581
        %v3076 = vpop.f32.mrb[0].mxu0
        %v3077 = vadd.f32 %v2852, %v3076
        %v3078 = vpop.f32.mrb[0].mxu0
        %3079 = vdwg.mxu0
        %3080 = vmatprep.subr.mxu0 0.0
        %3081 = vmatpush1.msra.mxu0 %v2438
        %3082 = vmatprep.subr.mxu0 0.0
        %3083 = vmatpush1.msra.mxu0 %v2439
        %3084 = vmatprep.subr.mxu0 0.0
        %3085 = vmatpush1.msra.mxu0 %v2440
        %3086 = vmatprep.subr.mxu0 0.0
        %3087 = vmatpush1.msra.mxu0 %v2441
        %3088 = vmatprep.subr.mxu0 0.0
        %3089 = vmatpush1.msra.mxu0 %v2442
        %3090 = vmatprep.subr.mxu0 0.0
        %3091 = vmatpush1.msra.mxu0 %v2443
        %3092 = vmatprep.subr.mxu0 0.0
        %3093 = vmatpush1.msra.mxu0 %v2444
        %3094 = vmatprep.subr.mxu0 0.0
        %3095 = vmatpush1.msra.mxu0 %v2445
        %3096 = vmatprep.subr.mxu0 0.0
        %3097 = vmatpush1.msra.mxu0 %v2446
        %3098 = vmatprep.subr.mxu0 0.0
        %3099 = vmatpush1.msra.mxu0 %v2447
        %3100 = vmatprep.subr.mxu0 0.0
        %3101 = vmatpush1.msra.mxu0 %v2448
        %3102 = vmatprep.subr.mxu0 0.0
        %3103 = vmatpush1.msra.mxu0 %v2449
        %3104 = vmatprep.subr.mxu0 0.0
        %3105 = vmatpush1.msra.mxu0 %v2450
        %3106 = vmatprep.subr.mxu0 0.0
        %3107 = vmatpush1.msra.mxu0 %v2451
        %3108 = vmatprep.subr.mxu0 0.0
        %3109 = vmatpush1.msra.mxu0 %v2452
        %3110 = vmatprep.subr.mxu0 0.0
        %3111 = vmatpush1.msra.mxu0 %v2453
        %3112 = vmatprep.subr.mxu0 0.0
        %3113 = vmatpush1.msra.mxu0 %v2454
        %3114 = vmatprep.subr.mxu0 0.0
        %3115 = vmatpush1.msra.mxu0 %v2455
        %3116 = vmatprep.subr.mxu0 0.0
        %3117 = vmatpush1.msra.mxu0 %v2456
        %3118 = vmatprep.subr.mxu0 0.0
        %3119 = vmatpush1.msra.mxu0 %v2457
        %3120 = vmatprep.subr.mxu0 0.0
        %3121 = vmatpush1.msra.mxu0 %v2458
        %3122 = vmatprep.subr.mxu0 0.0
        %3123 = vmatpush1.msra.mxu0 %v2459
        %3124 = vmatprep.subr.mxu0 0.0
        %3125 = vmatpush1.msra.mxu0 %v2460
        %3126 = vmatprep.subr.mxu0 0.0
        %3127 = vmatpush1.msra.mxu0 %v2461
        %3128 = vmatprep.subr.mxu0 0.0
        %3129 = vmatpush1.msra.mxu0 %v2462
        %3130 = vmatprep.subr.mxu0 0.0
        %3131 = vmatpush1.msra.mxu0 %v2463
        %3132 = vmatprep.subr.mxu0 0.0
        %3133 = vmatpush1.msra.mxu0 %v2464
        %3134 = vmatprep.subr.mxu0 0.0
        %3135 = vmatpush1.msra.mxu0 %v2465
        %3136 = vmatprep.subr.mxu0 0.0
        %3137 = vmatpush1.msra.mxu0 %v2466
        %3138 = vmatprep.subr.mxu0 0.0
        %3139 = vmatpush1.msra.mxu0 %v2467
        %3140 = vmatprep.subr.mxu0 0.0
        %3141 = vmatpush1.msra.mxu0 %v2468
        %3142 = vmatprep.subr.mxu0 0.0
        %3143 = vmatpush1.msra.mxu0 %v2469
        %3144 = vmatprep.mubr.f32.mxu0 %v2374
        %3145 = vmatmul.mubr.f32.gmra.mrb[0].mxu0 %v2342
        %v3146 = vpop.f32.mrb[0].mxu0
        %v3147 = vadd.f32 %v2922, %v3146
        %v3148 = vpop.f32.mrb[0].mxu0
        %3149 = vmatprep.mubr.f32.mxu0 %v2375
        %3150 = vmatmul.mubr.f32.gmra.mrb[0].mxu0 %v2343
        %v3151 = vpop.f32.mrb[0].mxu0
        %v3152 = vadd.f32 %v2927, %v3151
        %v3153 = vpop.f32.mrb[0].mxu0
        %3154 = vmatprep.mubr.f32.mxu0 %v2376
        %3155 = vmatmul.mubr.f32.gmra.mrb[0].mxu0 %v2344
        %v3156 = vpop.f32.mrb[0].mxu0
        %v3157 = vadd.f32 %v2932, %v3156
        %v3158 = vpop.f32.mrb[0].mxu0
        %3159 = vmatprep.mubr.f32.mxu0 %v2377
        %3160 = vmatmul.mubr.f32.gmra.mrb[0].mxu0 %v2345
        %v3161 = vpop.f32.mrb[0].mxu0
        %v3162 = vadd.f32 %v2937, %v3161
        %v3163 = vpop.f32.mrb[0].mxu0
        %3164 = vmatprep.mubr.f32.mxu0 %v2378
        %3165 = vmatmul.mubr.f32.gmra.mrb[0].mxu0 %v2346
        %v3166 = vpop.f32.mrb[0].mxu0
        %v3167 = vadd.f32 %v2942, %v3166
        %v3168 = vpop.f32.mrb[0].mxu0
        %3169 = vmatprep.mubr.f32.mxu0 %v2379
        %3170 = vmatmul.mubr.f32.gmra.mrb[0].mxu0 %v2347
        %v3171 = vpop.f32.mrb[0].mxu0
        %v3172 = vadd.f32 %v2947, %v3171
        %v3173 = vpop.f32.mrb[0].mxu0
        %3174 = vmatprep.mubr.f32.mxu0 %v2380
        %3175 = vmatmul.mubr.f32.gmra.mrb[0].mxu0 %v2348
        %v3176 = vpop.f32.mrb[0].mxu0
        %v3177 = vadd.f32 %v2952, %v3176
        %v3178 = vpop.f32.mrb[0].mxu0
        %3179 = vmatprep.mubr.f32.mxu0 %v2381
        %3180 = vmatmul.mubr.f32.gmra.mrb[0].mxu0 %v2349
        %v3181 = vpop.f32.mrb[0].mxu0
        %v3182 = vadd.f32 %v2957, %v3181
        %v3183 = vpop.f32.mrb[0].mxu0
        %3184 = vmatprep.mubr.f32.mxu0 %v2382
        %3185 = vmatmul.mubr.f32.gmra.mrb[0].mxu0 %v2350
        %v3186 = vpop.f32.mrb[0].mxu0
        %v3187 = vadd.f32 %v2962, %v3186
        %v3188 = vpop.f32.mrb[0].mxu0
        %3189 = vmatprep.mubr.f32.mxu0 %v2383
        %3190 = vmatmul.mubr.f32.gmra.mrb[0].mxu0 %v2351
        %v3191 = vpop.f32.mrb[0].mxu0
        %v3192 = vadd.f32 %v2967, %v3191
        %v3193 = vpop.f32.mrb[0].mxu0
        %3194 = vmatprep.mubr.f32.mxu0 %v2384
        %3195 = vmatmul.mubr.f32.gmra.mrb[0].mxu0 %v2352
        %v3196 = vpop.f32.mrb[0].mxu0
        %v3197 = vadd.f32 %v2972, %v3196
        %v3198 = vpop.f32.mrb[0].mxu0
        %3199 = vmatprep.mubr.f32.mxu0 %v2385
        %3200 = vmatmul.mubr.f32.gmra.mrb[0].mxu0 %v2353
        %v3201 = vpop.f32.mrb[0].mxu0
        %v3202 = vadd.f32 %v2977, %v3201
        %v3203 = vpop.f32.mrb[0].mxu0
        %3204 = vmatprep.mubr.f32.mxu0 %v2386
        %3205 = vmatmul.mubr.f32.gmra.mrb[0].mxu0 %v2354
        %v3206 = vpop.f32.mrb[0].mxu0
        %v3207 = vadd.f32 %v2982, %v3206
        %v3208 = vpop.f32.mrb[0].mxu0
        %3209 = vmatprep.mubr.f32.mxu0 %v2387
        %3210 = vmatmul.mubr.f32.gmra.mrb[0].mxu0 %v2355
        %v3211 = vpop.f32.mrb[0].mxu0
        %v3212 = vadd.f32 %v2987, %v3211
        %v3213 = vpop.f32.mrb[0].mxu0
        %3214 = vmatprep.mubr.f32.mxu0 %v2388
        %3215 = vmatmul.mubr.f32.gmra.mrb[0].mxu0 %v2356
        %v3216 = vpop.f32.mrb[0].mxu0
        %v3217 = vadd.f32 %v2992, %v3216
        %v3218 = vpop.f32.mrb[0].mxu0
        %3219 = vmatprep.mubr.f32.mxu0 %v2389
        %3220 = vmatmul.mubr.f32.gmra.mrb[0].mxu0 %v2357
        %v3221 = vpop.f32.mrb[0].mxu0
        %v3222 = vadd.f32 %v2997, %v3221
        %v3223 = vpop.f32.mrb[0].mxu0
        %3224 = vmatprep.mubr.f32.mxu0 %v2390
        %3225 = vmatmul.mubr.f32.gmra.mrb[0].mxu0 %v2358
        %v3226 = vpop.f32.mrb[0].mxu0
        %v3227 = vadd.f32 %v3002, %v3226
        %v3228 = vpop.f32.mrb[0].mxu0
        %3229 = vmatprep.mubr.f32.mxu0 %v2391
        %3230 = vmatmul.mubr.f32.gmra.mrb[0].mxu0 %v2359
        %v3231 = vpop.f32.mrb[0].mxu0
        %v3232 = vadd.f32 %v3007, %v3231
        %v3233 = vpop.f32.mrb[0].mxu0
        %3234 = vmatprep.mubr.f32.mxu0 %v2392
        %3235 = vmatmul.mubr.f32.gmra.mrb[0].mxu0 %v2360
        %v3236 = vpop.f32.mrb[0].mxu0
        %v3237 = vadd.f32 %v3012, %v3236
        %v3238 = vpop.f32.mrb[0].mxu0
        %3239 = vmatprep.mubr.f32.mxu0 %v2393
        %3240 = vmatmul.mubr.f32.gmra.mrb[0].mxu0 %v2361
        %v3241 = vpop.f32.mrb[0].mxu0
        %v3242 = vadd.f32 %v3017, %v3241
        %v3243 = vpop.f32.mrb[0].mxu0
        %3244 = vmatprep.mubr.f32.mxu0 %v2394
        %3245 = vmatmul.mubr.f32.gmra.mrb[0].mxu0 %v2362
        %v3246 = vpop.f32.mrb[0].mxu0
        %v3247 = vadd.f32 %v3022, %v3246
        %v3248 = vpop.f32.mrb[0].mxu0
        %3249 = vmatprep.mubr.f32.mxu0 %v2395
        %3250 = vmatmul.mubr.f32.gmra.mrb[0].mxu0 %v2363
        %v3251 = vpop.f32.mrb[0].mxu0
        %v3252 = vadd.f32 %v3027, %v3251
        %v3253 = vpop.f32.mrb[0].mxu0
        %3254 = vmatprep.mubr.f32.mxu0 %v2396
        %3255 = vmatmul.mubr.f32.gmra.mrb[0].mxu0 %v2364
        %v3256 = vpop.f32.mrb[0].mxu0
        %v3257 = vadd.f32 %v3032, %v3256
        %v3258 = vpop.f32.mrb[0].mxu0
        %3259 = vmatprep.mubr.f32.mxu0 %v2397
        %3260 = vmatmul.mubr.f32.gmra.mrb[0].mxu0 %v2365
        %v3261 = vpop.f32.mrb[0].mxu0
        %v3262 = vadd.f32 %v3037, %v3261
        %v3263 = vpop.f32.mrb[0].mxu0
        %3264 = vmatprep.mubr.f32.mxu0 %v2398
        %3265 = vmatmul.mubr.f32.gmra.mrb[0].mxu0 %v2366
        %v3266 = vpop.f32.mrb[0].mxu0
        %v3267 = vadd.f32 %v3042, %v3266
        %v3268 = vpop.f32.mrb[0].mxu0
        %3269 = vmatprep.mubr.f32.mxu0 %v2399
        %3270 = vmatmul.mubr.f32.gmra.mrb[0].mxu0 %v2367
        %v3271 = vpop.f32.mrb[0].mxu0
        %v3272 = vadd.f32 %v3047, %v3271
        %v3273 = vpop.f32.mrb[0].mxu0
        %3274 = vmatprep.mubr.f32.mxu0 %v2400
        %3275 = vmatmul.mubr.f32.gmra.mrb[0].mxu0 %v2368
        %v3276 = vpop.f32.mrb[0].mxu0
        %v3277 = vadd.f32 %v3052, %v3276
        %v3278 = vpop.f32.mrb[0].mxu0
        %3279 = vmatprep.mubr.f32.mxu0 %v2401
        %3280 = vmatmul.mubr.f32.gmra.mrb[0].mxu0 %v2369
        %v3281 = vpop.f32.mrb[0].mxu0
        %v3282 = vadd.f32 %v3057, %v3281
        %v3283 = vpop.f32.mrb[0].mxu0
        %3284 = vmatprep.mubr.f32.mxu0 %v2402
        %3285 = vmatmul.mubr.f32.gmra.mrb[0].mxu0 %v2370
        %v3286 = vpop.f32.mrb[0].mxu0
        %v3287 = vadd.f32 %v3062, %v3286
        %v3288 = vpop.f32.mrb[0].mxu0
        %3289 = vmatprep.mubr.f32.mxu0 %v2403
        %3290 = vmatmul.mubr.f32.gmra.mrb[0].mxu0 %v2371
        %v3291 = vpop.f32.mrb[0].mxu0
        %v3292 = vadd.f32 %v3067, %v3291
        %v3293 = vpop.f32.mrb[0].mxu0
        %3294 = vmatprep.mubr.f32.mxu0 %v2404
        %3295 = vmatmul.mubr.f32.gmra.mrb[0].mxu0 %v2372
        %v3296 = vpop.f32.mrb[0].mxu0
        %v3297 = vadd.f32 %v3072, %v3296
        %v3298 = vpop.f32.mrb[0].mxu0
        %3299 = vmatprep.mubr.f32.mxu0 %v2405
        %3300 = vmatmul.mubr.f32.gmra.mrb[0].mxu0 %v2373
        %v3301 = vpop.f32.mrb[0].mxu0
        %v3302 = vadd.f32 %v3077, %v3301
        %v3303 = vpop.f32.mrb[0].mxu0
        %3304 = vdwg.mxu0
        %3305 = vmatprep.subr.mxu0 0.0
        %3306 = vmatpush1.msra.mxu0 %v2470
        %3307 = vmatprep.subr.mxu0 0.0
        %3308 = vmatpush1.msra.mxu0 %v2471
        %3309 = vmatprep.subr.mxu0 0.0
        %3310 = vmatpush1.msra.mxu0 %v2472
        %3311 = vmatprep.subr.mxu0 0.0
        %3312 = vmatpush1.msra.mxu0 %v2473
        %3313 = vmatprep.subr.mxu0 0.0
        %3314 = vmatpush1.msra.mxu0 %v2474
        %3315 = vmatprep.subr.mxu0 0.0
        %3316 = vmatpush1.msra.mxu0 %v2475
        %3317 = vmatprep.subr.mxu0 0.0
        %3318 = vmatpush1.msra.mxu0 %v2476
        %3319 = vmatprep.subr.mxu0 0.0
        %3320 = vmatpush1.msra.mxu0 %v2477
        %3321 = vmatprep.subr.mxu0 0.0
        %3322 = vmatpush1.msra.mxu0 %v2478
        %3323 = vmatprep.subr.mxu0 0.0
        %3324 = vmatpush1.msra.mxu0 %v2479
        %3325 = vmatprep.subr.mxu0 0.0
        %3326 = vmatpush1.msra.mxu0 %v2480
        %3327 = vmatprep.subr.mxu0 0.0
        %3328 = vmatpush1.msra.mxu0 %v2481
        %3329 = vmatprep.subr.mxu0 0.0
        %3330 = vmatpush1.msra.mxu0 %v2482
        %3331 = vmatprep.subr.mxu0 0.0
        %3332 = vmatpush1.msra.mxu0 %v2483
        %3333 = vmatprep.subr.mxu0 0.0
        %3334 = vmatpush1.msra.mxu0 %v2484
        %3335 = vmatprep.subr.mxu0 0.0
        %3336 = vmatpush1.msra.mxu0 %v2485
        %3337 = vmatprep.subr.mxu0 0.0
        %3338 = vmatpush1.msra.mxu0 0.0
        %3339 = vmatprep.subr.mxu0 0.0
        %3340 = vmatpush1.msra.mxu0 0.0
        %3341 = vmatprep.subr.mxu0 0.0
        %3342 = vmatpush1.msra.mxu0 0.0
        %3343 = vmatprep.subr.mxu0 0.0
        %3344 = vmatpush1.msra.mxu0 0.0
        %3345 = vmatprep.subr.mxu0 0.0
        %3346 = vmatpush1.msra.mxu0 0.0
        %3347 = vmatprep.subr.mxu0 0.0
        %3348 = vmatpush1.msra.mxu0 0.0
        %3349 = vmatprep.subr.mxu0 0.0
        %3350 = vmatpush1.msra.mxu0 0.0
        %3351 = vmatprep.subr.mxu0 0.0
        %3352 = vmatpush1.msra.mxu0 0.0
        %3353 = vmatprep.subr.mxu0 0.0
        %3354 = vmatpush1.msra.mxu0 0.0
        %3355 = vmatprep.subr.mxu0 0.0
        %3356 = vmatpush1.msra.mxu0 0.0
        %3357 = vmatprep.subr.mxu0 0.0
        %3358 = vmatpush1.msra.mxu0 0.0
        %3359 = vmatprep.subr.mxu0 0.0
        %3360 = vmatpush1.msra.mxu0 0.0
        %3361 = vmatprep.subr.mxu0 0.0
        %3362 = vmatpush1.msra.mxu0 0.0
        %3363 = vmatprep.subr.mxu0 0.0
        %3364 = vmatpush1.msra.mxu0 0.0
        %3365 = vmatprep.subr.mxu0 0.0
        %3366 = vmatpush1.msra.mxu0 0.0
        %3367 = vmatprep.subr.mxu0 0.0
        %3368 = vmatpush1.msra.mxu0 0.0
        %3369 = vmatprep.mubr.f32.mxu0 0.0
        %3370 = vmatmul.mubr.f32.gmra.mrb[0].mxu0 %v2406
        %v3371 = vpop.f32.mrb[0].mxu0
        %v3372 = vadd.f32 %v3147, %v3371
        %v3373 = vpop.f32.mrb[0].mxu0
        %3374 = vmatprep.mubr.f32.mxu0 0.0
        %3375 = vmatmul.mubr.f32.gmra.mrb[0].mxu0 %v2407
        %v3376 = vpop.f32.mrb[0].mxu0
        %v3377 = vadd.f32 %v3152, %v3376
        %v3378 = vpop.f32.mrb[0].mxu0
        %3379 = vmatprep.mubr.f32.mxu0 0.0
        %3380 = vmatmul.mubr.f32.gmra.mrb[0].mxu0 %v2408
        %v3381 = vpop.f32.mrb[0].mxu0
        %v3382 = vadd.f32 %v3157, %v3381
        %v3383 = vpop.f32.mrb[0].mxu0
        %3384 = vmatprep.mubr.f32.mxu0 0.0
        %3385 = vmatmul.mubr.f32.gmra.mrb[0].mxu0 %v2409
        %v3386 = vpop.f32.mrb[0].mxu0
        %v3387 = vadd.f32 %v3162, %v3386
        %v3388 = vpop.f32.mrb[0].mxu0
        %3389 = vmatprep.mubr.f32.mxu0 0.0
        %3390 = vmatmul.mubr.f32.gmra.mrb[0].mxu0 %v2410
        %v3391 = vpop.f32.mrb[0].mxu0
        %v3392 = vadd.f32 %v3167, %v3391
        %v3393 = vpop.f32.mrb[0].mxu0
        %3394 = vmatprep.mubr.f32.mxu0 0.0
        %3395 = vmatmul.mubr.f32.gmra.mrb[0].mxu0 %v2411
        %v3396 = vpop.f32.mrb[0].mxu0
        %v3397 = vadd.f32 %v3172, %v3396
        %v3398 = vpop.f32.mrb[0].mxu0
        %3399 = vmatprep.mubr.f32.mxu0 0.0
        %3400 = vmatmul.mubr.f32.gmra.mrb[0].mxu0 %v2412
        %v3401 = vpop.f32.mrb[0].mxu0
        %v3402 = vadd.f32 %v3177, %v3401
        %v3403 = vpop.f32.mrb[0].mxu0
        %3404 = vmatprep.mubr.f32.mxu0 0.0
        %3405 = vmatmul.mubr.f32.gmra.mrb[0].mxu0 %v2413
        %v3406 = vpop.f32.mrb[0].mxu0
        %v3407 = vadd.f32 %v3182, %v3406
        %v3408 = vpop.f32.mrb[0].mxu0
        %3409 = vmatprep.mubr.f32.mxu0 0.0
        %3410 = vmatmul.mubr.f32.gmra.mrb[0].mxu0 %v2414
        %v3411 = vpop.f32.mrb[0].mxu0
        %v3412 = vadd.f32 %v3187, %v3411
        %v3413 = vpop.f32.mrb[0].mxu0
        %3414 = vmatprep.mubr.f32.mxu0 0.0
        %3415 = vmatmul.mubr.f32.gmra.mrb[0].mxu0 %v2415
        %v3416 = vpop.f32.mrb[0].mxu0
        %v3417 = vadd.f32 %v3192, %v3416
        %v3418 = vpop.f32.mrb[0].mxu0
        %3419 = vmatprep.mubr.f32.mxu0 0.0
        %3420 = vmatmul.mubr.f32.gmra.mrb[0].mxu0 %v2416
        %v3421 = vpop.f32.mrb[0].mxu0
        %v3422 = vadd.f32 %v3197, %v3421
        %v3423 = vpop.f32.mrb[0].mxu0
        %3424 = vmatprep.mubr.f32.mxu0 0.0
        %3425 = vmatmul.mubr.f32.gmra.mrb[0].mxu0 %v2417
        %v3426 = vpop.f32.mrb[0].mxu0
        %v3427 = vadd.f32 %v3202, %v3426
        %v3428 = vpop.f32.mrb[0].mxu0
        %3429 = vmatprep.mubr.f32.mxu0 0.0
        %3430 = vmatmul.mubr.f32.gmra.mrb[0].mxu0 %v2418
        %v3431 = vpop.f32.mrb[0].mxu0
        %v3432 = vadd.f32 %v3207, %v3431
        %v3433 = vpop.f32.mrb[0].mxu0
        %3434 = vmatprep.mubr.f32.mxu0 0.0
        %3435 = vmatmul.mubr.f32.gmra.mrb[0].mxu0 %v2419
        %v3436 = vpop.f32.mrb[0].mxu0
        %v3437 = vadd.f32 %v3212, %v3436
        %v3438 = vpop.f32.mrb[0].mxu0
        %3439 = vmatprep.mubr.f32.mxu0 0.0
        %3440 = vmatmul.mubr.f32.gmra.mrb[0].mxu0 %v2420
        %v3441 = vpop.f32.mrb[0].mxu0
        %v3442 = vadd.f32 %v3217, %v3441
        %v3443 = vpop.f32.mrb[0].mxu0
        %3444 = vmatprep.mubr.f32.mxu0 0.0
        %3445 = vmatmul.mubr.f32.gmra.mrb[0].mxu0 %v2421
        %v3446 = vpop.f32.mrb[0].mxu0
        %v3447 = vadd.f32 %v3222, %v3446
        %v3448 = vpop.f32.mrb[0].mxu0
        %3449 = vmatprep.mubr.f32.mxu0 0.0
        %3450 = vmatmul.mubr.f32.gmra.mrb[0].mxu0 %v2422
        %v3451 = vpop.f32.mrb[0].mxu0
        %v3452 = vadd.f32 %v3227, %v3451
        %v3453 = vpop.f32.mrb[0].mxu0
        %3454 = vmatprep.mubr.f32.mxu0 0.0
        %3455 = vmatmul.mubr.f32.gmra.mrb[0].mxu0 %v2423
        %v3456 = vpop.f32.mrb[0].mxu0
        %v3457 = vadd.f32 %v3232, %v3456
        %v3458 = vpop.f32.mrb[0].mxu0
        %3459 = vmatprep.mubr.f32.mxu0 0.0
        %3460 = vmatmul.mubr.f32.gmra.mrb[0].mxu0 %v2424
        %v3461 = vpop.f32.mrb[0].mxu0
        %v3462 = vadd.f32 %v3237, %v3461
        %v3463 = vpop.f32.mrb[0].mxu0
        %3464 = vmatprep.mubr.f32.mxu0 0.0
        %3465 = vmatmul.mubr.f32.gmra.mrb[0].mxu0 %v2425
        %v3466 = vpop.f32.mrb[0].mxu0
        %v3467 = vadd.f32 %v3242, %v3466
        %v3468 = vpop.f32.mrb[0].mxu0
        %3469 = vmatprep.mubr.f32.mxu0 0.0
        %3470 = vmatmul.mubr.f32.gmra.mrb[0].mxu0 %v2426
        %v3471 = vpop.f32.mrb[0].mxu0
        %v3472 = vadd.f32 %v3247, %v3471
        %v3473 = vpop.f32.mrb[0].mxu0
        %3474 = vmatprep.mubr.f32.mxu0 0.0
        %3475 = vmatmul.mubr.f32.gmra.mrb[0].mxu0 %v2427
        %v3476 = vpop.f32.mrb[0].mxu0
        %v3477 = vadd.f32 %v3252, %v3476
        %v3478 = vpop.f32.mrb[0].mxu0
        %3479 = vmatprep.mubr.f32.mxu0 0.0
        %3480 = vmatmul.mubr.f32.gmra.mrb[0].mxu0 %v2428
        %v3481 = vpop.f32.mrb[0].mxu0
        %v3482 = vadd.f32 %v3257, %v3481
        %v3483 = vpop.f32.mrb[0].mxu0
        %3484 = vmatprep.mubr.f32.mxu0 0.0
        %3485 = vmatmul.mubr.f32.gmra.mrb[0].mxu0 %v2429
        %v3486 = vpop.f32.mrb[0].mxu0
        %v3487 = vadd.f32 %v3262, %v3486
        %v3488 = vpop.f32.mrb[0].mxu0
        %3489 = vmatprep.mubr.f32.mxu0 0.0
        %3490 = vmatmul.mubr.f32.gmra.mrb[0].mxu0 %v2430
        %v3491 = vpop.f32.mrb[0].mxu0
        %v3492 = vadd.f32 %v3267, %v3491
        %v3493 = vpop.f32.mrb[0].mxu0
        %3494 = vmatprep.mubr.f32.mxu0 0.0
        %3495 = vmatmul.mubr.f32.gmra.mrb[0].mxu0 %v2431
        %v3496 = vpop.f32.mrb[0].mxu0
        %v3497 = vadd.f32 %v3272, %v3496
        %v3498 = vpop.f32.mrb[0].mxu0
        %3499 = vmatprep.mubr.f32.mxu0 0.0
        %3500 = vmatmul.mubr.f32.gmra.mrb[0].mxu0 %v2432
        %v3501 = vpop.f32.mrb[0].mxu0
        %v3502 = vadd.f32 %v3277, %v3501
        %v3503 = vpop.f32.mrb[0].mxu0
        %3504 = vmatprep.mubr.f32.mxu0 0.0
        %3505 = vmatmul.mubr.f32.gmra.mrb[0].mxu0 %v2433
        %v3506 = vpop.f32.mrb[0].mxu0
        %v3507 = vadd.f32 %v3282, %v3506
        %v3508 = vpop.f32.mrb[0].mxu0
        %3509 = vmatprep.mubr.f32.mxu0 0.0
        %3510 = vmatmul.mubr.f32.gmra.mrb[0].mxu0 %v2434
        %v3511 = vpop.f32.mrb[0].mxu0
        %v3512 = vadd.f32 %v3287, %v3511
        %v3513 = vpop.f32.mrb[0].mxu0
        %3514 = vmatprep.mubr.f32.mxu0 0.0
        %3515 = vmatmul.mubr.f32.gmra.mrb[0].mxu0 %v2435
        %v3516 = vpop.f32.mrb[0].mxu0
        %v3517 = vadd.f32 %v3292, %v3516
        %v3518 = vpop.f32.mrb[0].mxu0
        %3519 = vmatprep.mubr.f32.mxu0 0.0
        %3520 = vmatmul.mubr.f32.gmra.mrb[0].mxu0 %v2436
        %v3521 = vpop.f32.mrb[0].mxu0
        %v3522 = vadd.f32 %v3297, %v3521
        %v3523 = vpop.f32.mrb[0].mxu0
        %3524 = vmatprep.mubr.f32.mxu0 0.0
        %3525 = vmatmul.mubr.f32.gmra.mrb[0].mxu0 %v2437
        %v3526 = vpop.f32.mrb[0].mxu0
        %v3527 = vadd.f32 %v3302, %v3526
        %v3528 = vpop.f32.mrb[0].mxu0
        %3529 = vdwg.mxu0
        %s3530 = scalar_lea.vmem [#allocation3], 48
        %v3531 = vld [vmem:[%s3530] sm:$0xff]
        %v3532 = vld [vmem:[%s3530 + $0x8] sm:$0xff]
        %v3533 = vld [vmem:[%s3530 + $0x18] sm:$0xff]
        %v3534 = vld [vmem:[%s3530 + $0x20] sm:$0xff]
        %v3535 = vld [vmem:[%s3530 + $0x30] sm:$0xff]
        %v3536 = vld [vmem:[%s3530 + $0x38] sm:$0xff]
        %v3537 = vld [vmem:[%s3530 + $0x48] sm:$0xff]
        %v3538 = vld [vmem:[%s3530 + $0x50] sm:$0xff]
        %v3539 = vld [vmem:[%s3530 + $0x60] sm:$0xff]
        %v3540 = vld [vmem:[%s3530 + $0x68] sm:$0xff]
        %v3541 = vld [vmem:[%s3530 + $0x78] sm:$0xff]
        %v3542 = vld [vmem:[%s3530 + $0x80] sm:$0xff]
        %v3543 = vld [vmem:[%s3530 + $0x90] sm:$0xff]
        %v3544 = vld [vmem:[%s3530 + $0x98] sm:$0xff]
        %v3545 = vld [vmem:[%s3530 + $0xa8] sm:$0xff]
        %v3546 = vld [vmem:[%s3530 + $0xb0] sm:$0xff]
        %v3547 = vld [vmem:[%s3530 + $0xc0] sm:$0xff]
        %v3548 = vld [vmem:[%s3530 + $0xc8] sm:$0xff]
        %v3549 = vld [vmem:[%s3530 + $0xd8] sm:$0xff]
        %v3550 = vld [vmem:[%s3530 + $0xe0] sm:$0xff]
        %v3551 = vld [vmem:[%s3530 + $0xf0] sm:$0xff]
        %v3552 = vld [vmem:[%s3530 + $0xf8] sm:$0xff]
        %v3553 = vld [vmem:[%s3530 + $0x108] sm:$0xff]
        %v3554 = vld [vmem:[%s3530 + $0x110] sm:$0xff]
        %v3555 = vld [vmem:[%s3530 + $0x120] sm:$0xff]
        %v3556 = vld [vmem:[%s3530 + $0x128] sm:$0xff]
        %v3557 = vld [vmem:[%s3530 + $0x138] sm:$0xff]
        %v3558 = vld [vmem:[%s3530 + $0x140] sm:$0xff]
        %v3559 = vld [vmem:[%s3530 + $0x150] sm:$0xff]
        %v3560 = vld [vmem:[%s3530 + $0x158] sm:$0xff]
        %v3561 = vld [vmem:[%s3530 + $0x168] sm:$0xff]
        %v3562 = vld [vmem:[%s3530 + $0x170] sm:$0xff]
        %v3563 = vld [vmem:[%s3530 + $0x1] sm:$0xff]
        %v3564 = vld [vmem:[%s3530 + $0x9] sm:$0xff]
        %v3565 = vld [vmem:[%s3530 + $0x19] sm:$0xff]
        %v3566 = vld [vmem:[%s3530 + $0x21] sm:$0xff]
        %v3567 = vld [vmem:[%s3530 + $0x31] sm:$0xff]
        %v3568 = vld [vmem:[%s3530 + $0x39] sm:$0xff]
        %v3569 = vld [vmem:[%s3530 + $0x49] sm:$0xff]
        %v3570 = vld [vmem:[%s3530 + $0x51] sm:$0xff]
        %v3571 = vld [vmem:[%s3530 + $0x61] sm:$0xff]
        %v3572 = vld [vmem:[%s3530 + $0x69] sm:$0xff]
        %v3573 = vld [vmem:[%s3530 + $0x79] sm:$0xff]
        %v3574 = vld [vmem:[%s3530 + $0x81] sm:$0xff]
        %v3575 = vld [vmem:[%s3530 + $0x91] sm:$0xff]
        %v3576 = vld [vmem:[%s3530 + $0x99] sm:$0xff]
        %v3577 = vld [vmem:[%s3530 + $0xa9] sm:$0xff]
        %v3578 = vld [vmem:[%s3530 + $0xb1] sm:$0xff]
        %v3579 = vld [vmem:[%s3530 + $0xc1] sm:$0xff]
        %v3580 = vld [vmem:[%s3530 + $0xc9] sm:$0xff]
        %v3581 = vld [vmem:[%s3530 + $0xd9] sm:$0xff]
        %v3582 = vld [vmem:[%s3530 + $0xe1] sm:$0xff]
        %v3583 = vld [vmem:[%s3530 + $0xf1] sm:$0xff]
        %v3584 = vld [vmem:[%s3530 + $0xf9] sm:$0xff]
        %v3585 = vld [vmem:[%s3530 + $0x109] sm:$0xff]
        %v3586 = vld [vmem:[%s3530 + $0x111] sm:$0xff]
        %v3587 = vld [vmem:[%s3530 + $0x121] sm:$0xff]
        %v3588 = vld [vmem:[%s3530 + $0x129] sm:$0xff]
        %v3589 = vld [vmem:[%s3530 + $0x139] sm:$0xff]
        %v3590 = vld [vmem:[%s3530 + $0x141] sm:$0xff]
        %v3591 = vld [vmem:[%s3530 + $0x151] sm:$0xff]
        %v3592 = vld [vmem:[%s3530 + $0x159] sm:$0xff]
        %v3593 = vld [vmem:[%s3530 + $0x169] sm:$0xff]
        %v3594 = vld [vmem:[%s3530 + $0x171] sm:$0xff]
        %v3595 = vld [vmem:[%s3530 + $0x2] sm:$0xff]
        %v3596 = vld [vmem:[%s3530 + $0xa] sm:$0xff]
        %v3597 = vld [vmem:[%s3530 + $0x1a] sm:$0xff]
        %v3598 = vld [vmem:[%s3530 + $0x22] sm:$0xff]
        %v3599 = vld [vmem:[%s3530 + $0x32] sm:$0xff]
        %v3600 = vld [vmem:[%s3530 + $0x3a] sm:$0xff]
        %v3601 = vld [vmem:[%s3530 + $0x4a] sm:$0xff]
        %v3602 = vld [vmem:[%s3530 + $0x52] sm:$0xff]
        %v3603 = vld [vmem:[%s3530 + $0x62] sm:$0xff]
        %v3604 = vld [vmem:[%s3530 + $0x6a] sm:$0xff]
        %v3605 = vld [vmem:[%s3530 + $0x7a] sm:$0xff]
        %v3606 = vld [vmem:[%s3530 + $0x82] sm:$0xff]
        %v3607 = vld [vmem:[%s3530 + $0x92] sm:$0xff]
        %v3608 = vld [vmem:[%s3530 + $0x9a] sm:$0xff]
        %v3609 = vld [vmem:[%s3530 + $0xaa] sm:$0xff]
        %v3610 = vld [vmem:[%s3530 + $0xb2] sm:$0xff]
        %v3611 = vld [vmem:[%s3530 + $0xc2] sm:$0xff]
        %v3612 = vld [vmem:[%s3530 + $0xca] sm:$0xff]
        %v3613 = vld [vmem:[%s3530 + $0xda] sm:$0xff]
        %v3614 = vld [vmem:[%s3530 + $0xe2] sm:$0xff]
        %v3615 = vld [vmem:[%s3530 + $0xf2] sm:$0xff]
        %v3616 = vld [vmem:[%s3530 + $0xfa] sm:$0xff]
        %v3617 = vld [vmem:[%s3530 + $0x10a] sm:$0xff]
        %v3618 = vld [vmem:[%s3530 + $0x112] sm:$0xff]
        %v3619 = vld [vmem:[%s3530 + $0x122] sm:$0xff]
        %v3620 = vld [vmem:[%s3530 + $0x12a] sm:$0xff]
        %v3621 = vld [vmem:[%s3530 + $0x13a] sm:$0xff]
        %v3622 = vld [vmem:[%s3530 + $0x142] sm:$0xff]
        %v3623 = vld [vmem:[%s3530 + $0x152] sm:$0xff]
        %v3624 = vld [vmem:[%s3530 + $0x15a] sm:$0xff]
        %v3625 = vld [vmem:[%s3530 + $0x16a] sm:$0xff]
        %v3626 = vld [vmem:[%s3530 + $0x172] sm:$0xff]
        %v3627 = vld [vmem:[#allocation9 + $0x300] sm:$0xff]
        %v3628 = vld [vmem:[#allocation9 + $0x308] sm:$0xff]
        %v3629 = vld [vmem:[#allocation9 + $0x310] sm:$0xff]
        %v3630 = vld [vmem:[#allocation9 + $0x318] sm:$0xff]
        %v3631 = vld [vmem:[#allocation9 + $0x320] sm:$0xff]
        %v3632 = vld [vmem:[#allocation9 + $0x328] sm:$0xff]
        %v3633 = vld [vmem:[#allocation9 + $0x330] sm:$0xff]
        %v3634 = vld [vmem:[#allocation9 + $0x338] sm:$0xff]
        %v3635 = vld [vmem:[#allocation9 + $0x340] sm:$0xff]
        %v3636 = vld [vmem:[#allocation9 + $0x348] sm:$0xff]
        %v3637 = vld [vmem:[#allocation9 + $0x350] sm:$0xff]
        %v3638 = vld [vmem:[#allocation9 + $0x358] sm:$0xff]
        %v3639 = vld [vmem:[#allocation9 + $0x360] sm:$0xff]
        %v3640 = vld [vmem:[#allocation9 + $0x368] sm:$0xff]
        %v3641 = vld [vmem:[#allocation9 + $0x370] sm:$0xff]
        %v3642 = vld [vmem:[#allocation9 + $0x378] sm:$0xff]
        %v3643 = vld [vmem:[#allocation9 + $0x380] sm:$0xff]
        %v3644 = vld [vmem:[#allocation9 + $0x388] sm:$0xff]
        %v3645 = vld [vmem:[#allocation9 + $0x390] sm:$0xff]
        %v3646 = vld [vmem:[#allocation9 + $0x398] sm:$0xff]
        %v3647 = vld [vmem:[#allocation9 + $0x3a0] sm:$0xff]
        %v3648 = vld [vmem:[#allocation9 + $0x3a8] sm:$0xff]
        %v3649 = vld [vmem:[#allocation9 + $0x3b0] sm:$0xff]
        %v3650 = vld [vmem:[#allocation9 + $0x3b8] sm:$0xff]
        %v3651 = vld [vmem:[#allocation9 + $0x3c0] sm:$0xff]
        %v3652 = vld [vmem:[#allocation9 + $0x3c8] sm:$0xff]
        %v3653 = vld [vmem:[#allocation9 + $0x3d0] sm:$0xff]
        %v3654 = vld [vmem:[#allocation9 + $0x3d8] sm:$0xff]
        %v3655 = vld [vmem:[#allocation9 + $0x3e0] sm:$0xff]
        %v3656 = vld [vmem:[#allocation9 + $0x3e8] sm:$0xff]
        %v3657 = vld [vmem:[#allocation9 + $0x3f0] sm:$0xff]
        %v3658 = vld [vmem:[#allocation9 + $0x3f8] sm:$0xff]
        %v3659 = vld [vmem:[#allocation9 + $0x400] sm:$0xff]
        %v3660 = vld [vmem:[#allocation9 + $0x408] sm:$0xff]
        %v3661 = vld [vmem:[#allocation9 + $0x410] sm:$0xff]
        %v3662 = vld [vmem:[#allocation9 + $0x418] sm:$0xff]
        %v3663 = vld [vmem:[#allocation9 + $0x420] sm:$0xff]
        %v3664 = vld [vmem:[#allocation9 + $0x428] sm:$0xff]
        %v3665 = vld [vmem:[#allocation9 + $0x430] sm:$0xff]
        %v3666 = vld [vmem:[#allocation9 + $0x438] sm:$0xff]
        %v3667 = vld [vmem:[#allocation9 + $0x440] sm:$0xff]
        %v3668 = vld [vmem:[#allocation9 + $0x448] sm:$0xff]
        %v3669 = vld [vmem:[#allocation9 + $0x450] sm:$0xff]
        %v3670 = vld [vmem:[#allocation9 + $0x458] sm:$0xff]
        %v3671 = vld [vmem:[#allocation9 + $0x460] sm:$0xff]
        %v3672 = vld [vmem:[#allocation9 + $0x468] sm:$0xff]
        %v3673 = vld [vmem:[#allocation9 + $0x470] sm:$0xff]
        %v3674 = vld [vmem:[#allocation9 + $0x478] sm:$0xff]
        %3675 = vmatprep.subr.mxu0 0.0
        %3676 = vmatpush1.msra.mxu0 %v3627
        %3677 = vmatprep.subr.mxu0 0.0
        %3678 = vmatpush1.msra.mxu0 %v3628
        %3679 = vmatprep.subr.mxu0 0.0
        %3680 = vmatpush1.msra.mxu0 %v3629
        %3681 = vmatprep.subr.mxu0 0.0
        %3682 = vmatpush1.msra.mxu0 %v3630
        %3683 = vmatprep.subr.mxu0 0.0
        %3684 = vmatpush1.msra.mxu0 %v3631
        %3685 = vmatprep.subr.mxu0 0.0
        %3686 = vmatpush1.msra.mxu0 %v3632
        %3687 = vmatprep.subr.mxu0 0.0
        %3688 = vmatpush1.msra.mxu0 %v3633
        %3689 = vmatprep.subr.mxu0 0.0
        %3690 = vmatpush1.msra.mxu0 %v3634
        %3691 = vmatprep.subr.mxu0 0.0
        %3692 = vmatpush1.msra.mxu0 %v3635
        %3693 = vmatprep.subr.mxu0 0.0
        %3694 = vmatpush1.msra.mxu0 %v3636
        %3695 = vmatprep.subr.mxu0 0.0
        %3696 = vmatpush1.msra.mxu0 %v3637
        %3697 = vmatprep.subr.mxu0 0.0
        %3698 = vmatpush1.msra.mxu0 %v3638
        %3699 = vmatprep.subr.mxu0 0.0
        %3700 = vmatpush1.msra.mxu0 %v3639
        %3701 = vmatprep.subr.mxu0 0.0
        %3702 = vmatpush1.msra.mxu0 %v3640
        %3703 = vmatprep.subr.mxu0 0.0
        %3704 = vmatpush1.msra.mxu0 %v3641
        %3705 = vmatprep.subr.mxu0 0.0
        %3706 = vmatpush1.msra.mxu0 %v3642
        %3707 = vmatprep.subr.mxu0 0.0
        %3708 = vmatpush1.msra.mxu0 %v3643
        %3709 = vmatprep.subr.mxu0 0.0
        %3710 = vmatpush1.msra.mxu0 %v3644
        %3711 = vmatprep.subr.mxu0 0.0
        %3712 = vmatpush1.msra.mxu0 %v3645
        %3713 = vmatprep.subr.mxu0 0.0
        %3714 = vmatpush1.msra.mxu0 %v3646
        %3715 = vmatprep.subr.mxu0 0.0
        %3716 = vmatpush1.msra.mxu0 %v3647
        %3717 = vmatprep.subr.mxu0 0.0
        %3718 = vmatpush1.msra.mxu0 %v3648
        %3719 = vmatprep.subr.mxu0 0.0
        %3720 = vmatpush1.msra.mxu0 %v3649
        %3721 = vmatprep.subr.mxu0 0.0
        %3722 = vmatpush1.msra.mxu0 %v3650
        %3723 = vmatprep.subr.mxu0 0.0
        %3724 = vmatpush1.msra.mxu0 %v3651
        %3725 = vmatprep.subr.mxu0 0.0
        %3726 = vmatpush1.msra.mxu0 %v3652
        %3727 = vmatprep.subr.mxu0 0.0
        %3728 = vmatpush1.msra.mxu0 %v3653
        %3729 = vmatprep.subr.mxu0 0.0
        %3730 = vmatpush1.msra.mxu0 %v3654
        %3731 = vmatprep.subr.mxu0 0.0
        %3732 = vmatpush1.msra.mxu0 %v3655
        %3733 = vmatprep.subr.mxu0 0.0
        %3734 = vmatpush1.msra.mxu0 %v3656
        %3735 = vmatprep.subr.mxu0 0.0
        %3736 = vmatpush1.msra.mxu0 %v3657
        %3737 = vmatprep.subr.mxu0 0.0
        %3738 = vmatpush1.msra.mxu0 %v3658
        %3739 = vmatprep.mubr.f32.mxu0 %v3563
        %3740 = vmatmul.mubr.f32.gmra.mrb[0].mxu0 %v3531
        %v3741 = vpop.f32.mrb[0].mxu0
        %v3742 = vadd.f32 0.0, %v3741
        %v3743 = vpop.f32.mrb[0].mxu0
        %3744 = vmatprep.mubr.f32.mxu0 %v3564
        %3745 = vmatmul.mubr.f32.gmra.mrb[0].mxu0 %v3532
        %v3746 = vpop.f32.mrb[0].mxu0
        %v3747 = vadd.f32 0.0, %v3746
        %v3748 = vpop.f32.mrb[0].mxu0
        %3749 = vmatprep.mubr.f32.mxu0 %v3565
        %3750 = vmatmul.mubr.f32.gmra.mrb[0].mxu0 %v3533
        %v3751 = vpop.f32.mrb[0].mxu0
        %v3752 = vadd.f32 0.0, %v3751
        %v3753 = vpop.f32.mrb[0].mxu0
        %3754 = vmatprep.mubr.f32.mxu0 %v3566
        %3755 = vmatmul.mubr.f32.gmra.mrb[0].mxu0 %v3534
        %v3756 = vpop.f32.mrb[0].mxu0
        %v3757 = vadd.f32 0.0, %v3756
        %v3758 = vpop.f32.mrb[0].mxu0
        %3759 = vmatprep.mubr.f32.mxu0 %v3567
        %3760 = vmatmul.mubr.f32.gmra.mrb[0].mxu0 %v3535
        %v3761 = vpop.f32.mrb[0].mxu0
        %v3762 = vadd.f32 0.0, %v3761
        %v3763 = vpop.f32.mrb[0].mxu0
        %3764 = vmatprep.mubr.f32.mxu0 %v3568
        %3765 = vmatmul.mubr.f32.gmra.mrb[0].mxu0 %v3536
        %v3766 = vpop.f32.mrb[0].mxu0
        %v3767 = vadd.f32 0.0, %v3766
        %v3768 = vpop.f32.mrb[0].mxu0
        %3769 = vmatprep.mubr.f32.mxu0 %v3569
        %3770 = vmatmul.mubr.f32.gmra.mrb[0].mxu0 %v3537
        %v3771 = vpop.f32.mrb[0].mxu0
        %v3772 = vadd.f32 0.0, %v3771
        %v3773 = vpop.f32.mrb[0].mxu0
        %3774 = vmatprep.mubr.f32.mxu0 %v3570
        %3775 = vmatmul.mubr.f32.gmra.mrb[0].mxu0 %v3538
        %v3776 = vpop.f32.mrb[0].mxu0
        %v3777 = vadd.f32 0.0, %v3776
        %v3778 = vpop.f32.mrb[0].mxu0
        %3779 = vmatprep.mubr.f32.mxu0 %v3571
        %3780 = vmatmul.mubr.f32.gmra.mrb[0].mxu0 %v3539
        %v3781 = vpop.f32.mrb[0].mxu0
        %v3782 = vadd.f32 0.0, %v3781
        %v3783 = vpop.f32.mrb[0].mxu0
        %3784 = vmatprep.mubr.f32.mxu0 %v3572
        %3785 = vmatmul.mubr.f32.gmra.mrb[0].mxu0 %v3540
        %v3786 = vpop.f32.mrb[0].mxu0
        %v3787 = vadd.f32 0.0, %v3786
        %v3788 = vpop.f32.mrb[0].mxu0
        %3789 = vmatprep.mubr.f32.mxu0 %v3573
        %3790 = vmatmul.mubr.f32.gmra.mrb[0].mxu0 %v3541
        %v3791 = vpop.f32.mrb[0].mxu0
        %v3792 = vadd.f32 0.0, %v3791
        %v3793 = vpop.f32.mrb[0].mxu0
        %3794 = vmatprep.mubr.f32.mxu0 %v3574
        %3795 = vmatmul.mubr.f32.gmra.mrb[0].mxu0 %v3542
        %v3796 = vpop.f32.mrb[0].mxu0
        %v3797 = vadd.f32 0.0, %v3796
        %v3798 = vpop.f32.mrb[0].mxu0
        %3799 = vmatprep.mubr.f32.mxu0 %v3575
        %3800 = vmatmul.mubr.f32.gmra.mrb[0].mxu0 %v3543
        %v3801 = vpop.f32.mrb[0].mxu0
        %v3802 = vadd.f32 0.0, %v3801
        %v3803 = vpop.f32.mrb[0].mxu0
        %3804 = vmatprep.mubr.f32.mxu0 %v3576
        %3805 = vmatmul.mubr.f32.gmra.mrb[0].mxu0 %v3544
        %v3806 = vpop.f32.mrb[0].mxu0
        %v3807 = vadd.f32 0.0, %v3806
        %v3808 = vpop.f32.mrb[0].mxu0
        %3809 = vmatprep.mubr.f32.mxu0 %v3577
        %3810 = vmatmul.mubr.f32.gmra.mrb[0].mxu0 %v3545
        %v3811 = vpop.f32.mrb[0].mxu0
        %v3812 = vadd.f32 0.0, %v3811
        %v3813 = vpop.f32.mrb[0].mxu0
        %3814 = vmatprep.mubr.f32.mxu0 %v3578
        %3815 = vmatmul.mubr.f32.gmra.mrb[0].mxu0 %v3546
        %v3816 = vpop.f32.mrb[0].mxu0
        %v3817 = vadd.f32 0.0, %v3816
        %v3818 = vpop.f32.mrb[0].mxu0
        %3819 = vmatprep.mubr.f32.mxu0 %v3579
        %3820 = vmatmul.mubr.f32.gmra.mrb[0].mxu0 %v3547
        %v3821 = vpop.f32.mrb[0].mxu0
        %v3822 = vadd.f32 0.0, %v3821
        %v3823 = vpop.f32.mrb[0].mxu0
        %3824 = vmatprep.mubr.f32.mxu0 %v3580
        %3825 = vmatmul.mubr.f32.gmra.mrb[0].mxu0 %v3548
        %v3826 = vpop.f32.mrb[0].mxu0
        %v3827 = vadd.f32 0.0, %v3826
        %v3828 = vpop.f32.mrb[0].mxu0
        %3829 = vmatprep.mubr.f32.mxu0 %v3581
        %3830 = vmatmul.mubr.f32.gmra.mrb[0].mxu0 %v3549
        %v3831 = vpop.f32.mrb[0].mxu0
        %v3832 = vadd.f32 0.0, %v3831
        %v3833 = vpop.f32.mrb[0].mxu0
        %3834 = vmatprep.mubr.f32.mxu0 %v3582
        %3835 = vmatmul.mubr.f32.gmra.mrb[0].mxu0 %v3550
        %v3836 = vpop.f32.mrb[0].mxu0
        %v3837 = vadd.f32 0.0, %v3836
        %v3838 = vpop.f32.mrb[0].mxu0
        %3839 = vmatprep.mubr.f32.mxu0 %v3583
        %3840 = vmatmul.mubr.f32.gmra.mrb[0].mxu0 %v3551
        %v3841 = vpop.f32.mrb[0].mxu0
        %v3842 = vadd.f32 0.0, %v3841
        %v3843 = vpop.f32.mrb[0].mxu0
        %3844 = vmatprep.mubr.f32.mxu0 %v3584
        %3845 = vmatmul.mubr.f32.gmra.mrb[0].mxu0 %v3552
        %v3846 = vpop.f32.mrb[0].mxu0
        %v3847 = vadd.f32 0.0, %v3846
        %v3848 = vpop.f32.mrb[0].mxu0
        %3849 = vmatprep.mubr.f32.mxu0 %v3585
        %3850 = vmatmul.mubr.f32.gmra.mrb[0].mxu0 %v3553
        %v3851 = vpop.f32.mrb[0].mxu0
        %v3852 = vadd.f32 0.0, %v3851
        %v3853 = vpop.f32.mrb[0].mxu0
        %3854 = vmatprep.mubr.f32.mxu0 %v3586
        %3855 = vmatmul.mubr.f32.gmra.mrb[0].mxu0 %v3554
        %v3856 = vpop.f32.mrb[0].mxu0
        %v3857 = vadd.f32 0.0, %v3856
        %v3858 = vpop.f32.mrb[0].mxu0
        %3859 = vmatprep.mubr.f32.mxu0 %v3587
        %3860 = vmatmul.mubr.f32.gmra.mrb[0].mxu0 %v3555
        %v3861 = vpop.f32.mrb[0].mxu0
        %v3862 = vadd.f32 0.0, %v3861
        %v3863 = vpop.f32.mrb[0].mxu0
        %3864 = vmatprep.mubr.f32.mxu0 %v3588
        %3865 = vmatmul.mubr.f32.gmra.mrb[0].mxu0 %v3556
        %v3866 = vpop.f32.mrb[0].mxu0
        %v3867 = vadd.f32 0.0, %v3866
        %v3868 = vpop.f32.mrb[0].mxu0
        %3869 = vmatprep.mubr.f32.mxu0 %v3589
        %3870 = vmatmul.mubr.f32.gmra.mrb[0].mxu0 %v3557
        %v3871 = vpop.f32.mrb[0].mxu0
        %v3872 = vadd.f32 0.0, %v3871
        %v3873 = vpop.f32.mrb[0].mxu0
        %3874 = vmatprep.mubr.f32.mxu0 %v3590
        %3875 = vmatmul.mubr.f32.gmra.mrb[0].mxu0 %v3558
        %v3876 = vpop.f32.mrb[0].mxu0
        %v3877 = vadd.f32 0.0, %v3876
        %v3878 = vpop.f32.mrb[0].mxu0
        %3879 = vmatprep.mubr.f32.mxu0 %v3591
        %3880 = vmatmul.mubr.f32.gmra.mrb[0].mxu0 %v3559
        %v3881 = vpop.f32.mrb[0].mxu0
        %v3882 = vadd.f32 0.0, %v3881
        %v3883 = vpop.f32.mrb[0].mxu0
        %3884 = vmatprep.mubr.f32.mxu0 %v3592
        %3885 = vmatmul.mubr.f32.gmra.mrb[0].mxu0 %v3560
        %v3886 = vpop.f32.mrb[0].mxu0
        %v3887 = vadd.f32 0.0, %v3886
        %v3888 = vpop.f32.mrb[0].mxu0
        %3889 = vmatprep.mubr.f32.mxu0 %v3593
        %3890 = vmatmul.mubr.f32.gmra.mrb[0].mxu0 %v3561
        %v3891 = vpop.f32.mrb[0].mxu0
        %v3892 = vadd.f32 0.0, %v3891
        %v3893 = vpop.f32.mrb[0].mxu0
        %3894 = vmatprep.mubr.f32.mxu0 %v3594
        %3895 = vmatmul.mubr.f32.gmra.mrb[0].mxu0 %v3562
        %v3896 = vpop.f32.mrb[0].mxu0
        %v3897 = vadd.f32 0.0, %v3896
        %v3898 = vpop.f32.mrb[0].mxu0
        %3899 = vdwg.mxu0
        %3900 = vmatprep.subr.mxu0 0.0
        %3901 = vmatpush1.msra.mxu0 %v3659
        %3902 = vmatprep.subr.mxu0 0.0
        %3903 = vmatpush1.msra.mxu0 %v3660
        %3904 = vmatprep.subr.mxu0 0.0
        %3905 = vmatpush1.msra.mxu0 %v3661
        %3906 = vmatprep.subr.mxu0 0.0
        %3907 = vmatpush1.msra.mxu0 %v3662
        %3908 = vmatprep.subr.mxu0 0.0
        %3909 = vmatpush1.msra.mxu0 %v3663
        %3910 = vmatprep.subr.mxu0 0.0
        %3911 = vmatpush1.msra.mxu0 %v3664
        %3912 = vmatprep.subr.mxu0 0.0
        %3913 = vmatpush1.msra.mxu0 %v3665
        %3914 = vmatprep.subr.mxu0 0.0
        %3915 = vmatpush1.msra.mxu0 %v3666
        %3916 = vmatprep.subr.mxu0 0.0
        %3917 = vmatpush1.msra.mxu0 %v3667
        %3918 = vmatprep.subr.mxu0 0.0
        %3919 = vmatpush1.msra.mxu0 %v3668
        %3920 = vmatprep.subr.mxu0 0.0
        %3921 = vmatpush1.msra.mxu0 %v3669
        %3922 = vmatprep.subr.mxu0 0.0
        %3923 = vmatpush1.msra.mxu0 %v3670
        %3924 = vmatprep.subr.mxu0 0.0
        %3925 = vmatpush1.msra.mxu0 %v3671
        %3926 = vmatprep.subr.mxu0 0.0
        %3927 = vmatpush1.msra.mxu0 %v3672
        %3928 = vmatprep.subr.mxu0 0.0
        %3929 = vmatpush1.msra.mxu0 %v3673
        %3930 = vmatprep.subr.mxu0 0.0
        %3931 = vmatpush1.msra.mxu0 %v3674
        %3932 = vmatprep.subr.mxu0 0.0
        %3933 = vmatpush1.msra.mxu0 0.0
        %3934 = vmatprep.subr.mxu0 0.0
        %3935 = vmatpush1.msra.mxu0 0.0
        %3936 = vmatprep.subr.mxu0 0.0
        %3937 = vmatpush1.msra.mxu0 0.0
        %3938 = vmatprep.subr.mxu0 0.0
        %3939 = vmatpush1.msra.mxu0 0.0
        %3940 = vmatprep.subr.mxu0 0.0
        %3941 = vmatpush1.msra.mxu0 0.0
        %3942 = vmatprep.subr.mxu0 0.0
        %3943 = vmatpush1.msra.mxu0 0.0
        %3944 = vmatprep.subr.mxu0 0.0
        %3945 = vmatpush1.msra.mxu0 0.0
        %3946 = vmatprep.subr.mxu0 0.0
        %3947 = vmatpush1.msra.mxu0 0.0
        %3948 = vmatprep.subr.mxu0 0.0
        %3949 = vmatpush1.msra.mxu0 0.0
        %3950 = vmatprep.subr.mxu0 0.0
        %3951 = vmatpush1.msra.mxu0 0.0
        %3952 = vmatprep.subr.mxu0 0.0
        %3953 = vmatpush1.msra.mxu0 0.0
        %3954 = vmatprep.subr.mxu0 0.0
        %3955 = vmatpush1.msra.mxu0 0.0
        %3956 = vmatprep.subr.mxu0 0.0
        %3957 = vmatpush1.msra.mxu0 0.0
        %3958 = vmatprep.subr.mxu0 0.0
        %3959 = vmatpush1.msra.mxu0 0.0
        %3960 = vmatprep.subr.mxu0 0.0
        %3961 = vmatpush1.msra.mxu0 0.0
        %3962 = vmatprep.subr.mxu0 0.0
        %3963 = vmatpush1.msra.mxu0 0.0
        %3964 = vmatprep.mubr.f32.mxu0 0.0
        %3965 = vmatmul.mubr.f32.gmra.mrb[0].mxu0 %v3595
        %v3966 = vpop.f32.mrb[0].mxu0
        %v3967 = vadd.f32 %v3742, %v3966
        %v3968 = vpop.f32.mrb[0].mxu0
        %3969 = vmatprep.mubr.f32.mxu0 0.0
        %3970 = vmatmul.mubr.f32.gmra.mrb[0].mxu0 %v3596
        %v3971 = vpop.f32.mrb[0].mxu0
        %v3972 = vadd.f32 %v3747, %v3971
        %v3973 = vpop.f32.mrb[0].mxu0
        %3974 = vmatprep.mubr.f32.mxu0 0.0
        %3975 = vmatmul.mubr.f32.gmra.mrb[0].mxu0 %v3597
        %v3976 = vpop.f32.mrb[0].mxu0
        %v3977 = vadd.f32 %v3752, %v3976
        %v3978 = vpop.f32.mrb[0].mxu0
        %3979 = vmatprep.mubr.f32.mxu0 0.0
        %3980 = vmatmul.mubr.f32.gmra.mrb[0].mxu0 %v3598
        %v3981 = vpop.f32.mrb[0].mxu0
        %v3982 = vadd.f32 %v3757, %v3981
        %v3983 = vpop.f32.mrb[0].mxu0
        %3984 = vmatprep.mubr.f32.mxu0 0.0
        %3985 = vmatmul.mubr.f32.gmra.mrb[0].mxu0 %v3599
        %v3986 = vpop.f32.mrb[0].mxu0
        %v3987 = vadd.f32 %v3762, %v3986
        %v3988 = vpop.f32.mrb[0].mxu0
        %3989 = vmatprep.mubr.f32.mxu0 0.0
        %3990 = vmatmul.mubr.f32.gmra.mrb[0].mxu0 %v3600
        %v3991 = vpop.f32.mrb[0].mxu0
        %v3992 = vadd.f32 %v3767, %v3991
        %v3993 = vpop.f32.mrb[0].mxu0
        %3994 = vmatprep.mubr.f32.mxu0 0.0
        %3995 = vmatmul.mubr.f32.gmra.mrb[0].mxu0 %v3601
        %v3996 = vpop.f32.mrb[0].mxu0
        %v3997 = vadd.f32 %v3772, %v3996
        %v3998 = vpop.f32.mrb[0].mxu0
        %3999 = vmatprep.mubr.f32.mxu0 0.0
        %4000 = vmatmul.mubr.f32.gmra.mrb[0].mxu0 %v3602
        %v4001 = vpop.f32.mrb[0].mxu0
        %v4002 = vadd.f32 %v3777, %v4001
        %v4003 = vpop.f32.mrb[0].mxu0
        %4004 = vmatprep.mubr.f32.mxu0 0.0
        %4005 = vmatmul.mubr.f32.gmra.mrb[0].mxu0 %v3603
        %v4006 = vpop.f32.mrb[0].mxu0
        %v4007 = vadd.f32 %v3782, %v4006
        %v4008 = vpop.f32.mrb[0].mxu0
        %4009 = vmatprep.mubr.f32.mxu0 0.0
        %4010 = vmatmul.mubr.f32.gmra.mrb[0].mxu0 %v3604
        %v4011 = vpop.f32.mrb[0].mxu0
        %v4012 = vadd.f32 %v3787, %v4011
        %v4013 = vpop.f32.mrb[0].mxu0
        %4014 = vmatprep.mubr.f32.mxu0 0.0
        %4015 = vmatmul.mubr.f32.gmra.mrb[0].mxu0 %v3605
        %v4016 = vpop.f32.mrb[0].mxu0
        %v4017 = vadd.f32 %v3792, %v4016
        %v4018 = vpop.f32.mrb[0].mxu0
        %4019 = vmatprep.mubr.f32.mxu0 0.0
        %4020 = vmatmul.mubr.f32.gmra.mrb[0].mxu0 %v3606
        %v4021 = vpop.f32.mrb[0].mxu0
        %v4022 = vadd.f32 %v3797, %v4021
        %v4023 = vpop.f32.mrb[0].mxu0
        %4024 = vmatprep.mubr.f32.mxu0 0.0
        %4025 = vmatmul.mubr.f32.gmra.mrb[0].mxu0 %v3607
        %v4026 = vpop.f32.mrb[0].mxu0
        %v4027 = vadd.f32 %v3802, %v4026
        %v4028 = vpop.f32.mrb[0].mxu0
        %4029 = vmatprep.mubr.f32.mxu0 0.0
        %4030 = vmatmul.mubr.f32.gmra.mrb[0].mxu0 %v3608
        %v4031 = vpop.f32.mrb[0].mxu0
        %v4032 = vadd.f32 %v3807, %v4031
        %v4033 = vpop.f32.mrb[0].mxu0
        %4034 = vmatprep.mubr.f32.mxu0 0.0
        %4035 = vmatmul.mubr.f32.gmra.mrb[0].mxu0 %v3609
        %v4036 = vpop.f32.mrb[0].mxu0
        %v4037 = vadd.f32 %v3812, %v4036
        %v4038 = vpop.f32.mrb[0].mxu0
        %4039 = vmatprep.mubr.f32.mxu0 0.0
        %4040 = vmatmul.mubr.f32.gmra.mrb[0].mxu0 %v3610
        %v4041 = vpop.f32.mrb[0].mxu0
        %v4042 = vadd.f32 %v3817, %v4041
        %v4043 = vpop.f32.mrb[0].mxu0
        %4044 = vmatprep.mubr.f32.mxu0 0.0
        %4045 = vmatmul.mubr.f32.gmra.mrb[0].mxu0 %v3611
        %v4046 = vpop.f32.mrb[0].mxu0
        %v4047 = vadd.f32 %v3822, %v4046
        %v4048 = vpop.f32.mrb[0].mxu0
        %4049 = vmatprep.mubr.f32.mxu0 0.0
        %4050 = vmatmul.mubr.f32.gmra.mrb[0].mxu0 %v3612
        %v4051 = vpop.f32.mrb[0].mxu0
        %v4052 = vadd.f32 %v3827, %v4051
        %v4053 = vpop.f32.mrb[0].mxu0
        %4054 = vmatprep.mubr.f32.mxu0 0.0
        %4055 = vmatmul.mubr.f32.gmra.mrb[0].mxu0 %v3613
        %v4056 = vpop.f32.mrb[0].mxu0
        %v4057 = vadd.f32 %v3832, %v4056
        %v4058 = vpop.f32.mrb[0].mxu0
        %4059 = vmatprep.mubr.f32.mxu0 0.0
        %4060 = vmatmul.mubr.f32.gmra.mrb[0].mxu0 %v3614
        %v4061 = vpop.f32.mrb[0].mxu0
        %v4062 = vadd.f32 %v3837, %v4061
        %v4063 = vpop.f32.mrb[0].mxu0
        %4064 = vmatprep.mubr.f32.mxu0 0.0
        %4065 = vmatmul.mubr.f32.gmra.mrb[0].mxu0 %v3615
        %v4066 = vpop.f32.mrb[0].mxu0
        %v4067 = vadd.f32 %v3842, %v4066
        %v4068 = vpop.f32.mrb[0].mxu0
        %4069 = vmatprep.mubr.f32.mxu0 0.0
        %4070 = vmatmul.mubr.f32.gmra.mrb[0].mxu0 %v3616
        %v4071 = vpop.f32.mrb[0].mxu0
        %v4072 = vadd.f32 %v3847, %v4071
        %v4073 = vpop.f32.mrb[0].mxu0
        %4074 = vmatprep.mubr.f32.mxu0 0.0
        %4075 = vmatmul.mubr.f32.gmra.mrb[0].mxu0 %v3617
        %v4076 = vpop.f32.mrb[0].mxu0
        %v4077 = vadd.f32 %v3852, %v4076
        %v4078 = vpop.f32.mrb[0].mxu0
        %4079 = vmatprep.mubr.f32.mxu0 0.0
        %4080 = vmatmul.mubr.f32.gmra.mrb[0].mxu0 %v3618
        %v4081 = vpop.f32.mrb[0].mxu0
        %v4082 = vadd.f32 %v3857, %v4081
        %v4083 = vpop.f32.mrb[0].mxu0
        %4084 = vmatprep.mubr.f32.mxu0 0.0
        %4085 = vmatmul.mubr.f32.gmra.mrb[0].mxu0 %v3619
        %v4086 = vpop.f32.mrb[0].mxu0
        %v4087 = vadd.f32 %v3862, %v4086
        %v4088 = vpop.f32.mrb[0].mxu0
        %4089 = vmatprep.mubr.f32.mxu0 0.0
        %4090 = vmatmul.mubr.f32.gmra.mrb[0].mxu0 %v3620
        %v4091 = vpop.f32.mrb[0].mxu0
        %v4092 = vadd.f32 %v3867, %v4091
        %v4093 = vpop.f32.mrb[0].mxu0
        %4094 = vmatprep.mubr.f32.mxu0 0.0
        %4095 = vmatmul.mubr.f32.gmra.mrb[0].mxu0 %v3621
        %v4096 = vpop.f32.mrb[0].mxu0
        %v4097 = vadd.f32 %v3872, %v4096
        %v4098 = vpop.f32.mrb[0].mxu0
        %4099 = vmatprep.mubr.f32.mxu0 0.0
        %4100 = vmatmul.mubr.f32.gmra.mrb[0].mxu0 %v3622
        %v4101 = vpop.f32.mrb[0].mxu0
        %v4102 = vadd.f32 %v3877, %v4101
        %v4103 = vpop.f32.mrb[0].mxu0
        %4104 = vmatprep.mubr.f32.mxu0 0.0
        %4105 = vmatmul.mubr.f32.gmra.mrb[0].mxu0 %v3623
        %v4106 = vpop.f32.mrb[0].mxu0
        %v4107 = vadd.f32 %v3882, %v4106
        %v4108 = vpop.f32.mrb[0].mxu0
        %4109 = vmatprep.mubr.f32.mxu0 0.0
        %4110 = vmatmul.mubr.f32.gmra.mrb[0].mxu0 %v3624
        %v4111 = vpop.f32.mrb[0].mxu0
        %v4112 = vadd.f32 %v3887, %v4111
        %v4113 = vpop.f32.mrb[0].mxu0
        %4114 = vmatprep.mubr.f32.mxu0 0.0
        %4115 = vmatmul.mubr.f32.gmra.mrb[0].mxu0 %v3625
        %v4116 = vpop.f32.mrb[0].mxu0
        %v4117 = vadd.f32 %v3892, %v4116
        %v4118 = vpop.f32.mrb[0].mxu0
        %4119 = vmatprep.mubr.f32.mxu0 0.0
        %4120 = vmatmul.mubr.f32.gmra.mrb[0].mxu0 %v3626
        %v4121 = vpop.f32.mrb[0].mxu0
        %v4122 = vadd.f32 %v3897, %v4121
        %v4123 = vpop.f32.mrb[0].mxu0
        %4124 = vdwg.mxu0
        %v4125 = vadd.f32 %v3372, %v3967
        %v4126 = vadd.f32 %v3377, %v3972
        %v4127 = vadd.f32 %v3382, %v3977
        %v4128 = vadd.f32 %v3387, %v3982
        %v4129 = vadd.f32 %v3392, %v3987
        %v4130 = vadd.f32 %v3397, %v3992
        %v4131 = vadd.f32 %v3402, %v3997
        %v4132 = vadd.f32 %v3407, %v4002
        %v4133 = vadd.f32 %v3412, %v4007
        %v4134 = vadd.f32 %v3417, %v4012
        %v4135 = vadd.f32 %v3422, %v4017
        %v4136 = vadd.f32 %v3427, %v4022
        %v4137 = vadd.f32 %v3432, %v4027
        %v4138 = vadd.f32 %v3437, %v4032
        %v4139 = vadd.f32 %v3442, %v4037
        %v4140 = vadd.f32 %v3447, %v4042
        %v4141 = vadd.f32 %v3452, %v4047
        %v4142 = vadd.f32 %v3457, %v4052
        %v4143 = vadd.f32 %v3462, %v4057
        %v4144 = vadd.f32 %v3467, %v4062
        %v4145 = vadd.f32 %v3472, %v4067
        %v4146 = vadd.f32 %v3477, %v4072
        %v4147 = vadd.f32 %v3482, %v4077
        %v4148 = vadd.f32 %v3487, %v4082
        %v4149 = vadd.f32 %v3492, %v4087
        %v4150 = vadd.f32 %v3497, %v4092
        %v4151 = vadd.f32 %v3502, %v4097
        %v4152 = vadd.f32 %v3507, %v4102
        %v4153 = vadd.f32 %v3512, %v4107
        %v4154 = vadd.f32 %v3517, %v4112
        %v4155 = vadd.f32 %v3522, %v4117
        %v4156 = vadd.f32 %v3527, %v4122
        %v4157 = vld [vmem:[%s4] sm:$0x1]
        %v4159 = vlaneseq
        %v4160 = vshrl.u32 %v4159, 7
        %v4161 = vsub.s32 0, %v4160
        %v4162 = vrot.slane %v4157, %v4161
        %v4164 = vadd.f32 %v4125, %v4162
        %v4165 = vadd.f32 %v4126, %v4162
        %v4166 = vadd.f32 %v4127, %v4162
        %v4167 = vadd.f32 %v4128, %v4162
        %v4168 = vadd.f32 %v4129, %v4162
        %v4169 = vadd.f32 %v4130, %v4162
        %v4170 = vadd.f32 %v4131, %v4162
        %v4171 = vadd.f32 %v4132, %v4162
        %v4172 = vadd.f32 %v4133, %v4162
        %v4173 = vadd.f32 %v4134, %v4162
        %v4174 = vadd.f32 %v4135, %v4162
        %v4175 = vadd.f32 %v4136, %v4162
        %v4176 = vadd.f32 %v4137, %v4162
        %v4177 = vadd.f32 %v4138, %v4162
        %v4178 = vadd.f32 %v4139, %v4162
        %v4179 = vadd.f32 %v4140, %v4162
        %v4180 = vadd.f32 %v4141, %v4162
        %v4181 = vadd.f32 %v4142, %v4162
        %v4182 = vadd.f32 %v4143, %v4162
        %v4183 = vadd.f32 %v4144, %v4162
        %v4184 = vadd.f32 %v4145, %v4162
        %v4185 = vadd.f32 %v4146, %v4162
        %v4186 = vadd.f32 %v4147, %v4162
        %v4187 = vadd.f32 %v4148, %v4162
        %v4188 = vadd.f32 %v4149, %v4162
        %v4189 = vadd.f32 %v4150, %v4162
        %v4190 = vadd.f32 %v4151, %v4162
        %v4191 = vadd.f32 %v4152, %v4162
        %v4192 = vadd.f32 %v4153, %v4162
        %v4193 = vadd.f32 %v4154, %v4162
        %v4194 = vadd.f32 %v4155, %v4162
        %v4195 = vadd.f32 %v4156, %v4162
        %v4196 = vadd.f32 %v4164, %v358
        %v4197 = vadd.f32 %v4165, %v359
        %v4198 = vadd.f32 %v4166, %v360
        %v4199 = vadd.f32 %v4167, %v361
        %v4200 = vadd.f32 %v4168, %v362
        %v4201 = vadd.f32 %v4169, %v363
        %v4202 = vadd.f32 %v4170, %v364
        %v4203 = vadd.f32 %v4171, %v365
        %v4204 = vadd.f32 %v4172, %v366
        %v4205 = vadd.f32 %v4173, %v367
        %v4206 = vadd.f32 %v4174, %v368
        %v4207 = vadd.f32 %v4175, %v369
        %v4208 = vadd.f32 %v4176, %v370
        %v4209 = vadd.f32 %v4177, %v371
        %v4210 = vadd.f32 %v4178, %v372
        %v4211 = vadd.f32 %v4179, %v373
        %v4212 = vadd.f32 %v4180, %v374
        %v4213 = vadd.f32 %v4181, %v375
        %v4214 = vadd.f32 %v4182, %v376
        %v4215 = vadd.f32 %v4183, %v377
        %v4216 = vadd.f32 %v4184, %v378
        %v4217 = vadd.f32 %v4185, %v379
        %v4218 = vadd.f32 %v4186, %v380
        %v4219 = vadd.f32 %v4187, %v381
        %v4220 = vadd.f32 %v4188, %v382
        %v4221 = vadd.f32 %v4189, %v383
        %v4222 = vadd.f32 %v4190, %v384
        %v4223 = vadd.f32 %v4191, %v385
        %v4224 = vadd.f32 %v4192, %v386
        %v4225 = vadd.f32 %v4193, %v387
        %v4226 = vadd.f32 %v4194, %v388
        %v4227 = vadd.f32 %v4195, %v389
        %v4228 = vmax.f32 %v4196, 0.0
        %v4229 = vmax.f32 %v4197, 0.0
        %v4230 = vmax.f32 %v4198, 0.0
        %v4231 = vmax.f32 %v4199, 0.0
        %v4232 = vmax.f32 %v4200, 0.0
        %v4233 = vmax.f32 %v4201, 0.0
        %v4234 = vmax.f32 %v4202, 0.0
        %v4235 = vmax.f32 %v4203, 0.0
        %v4236 = vmax.f32 %v4204, 0.0
        %v4237 = vmax.f32 %v4205, 0.0
        %v4238 = vmax.f32 %v4206, 0.0
        %v4239 = vmax.f32 %v4207, 0.0
        %v4240 = vmax.f32 %v4208, 0.0
        %v4241 = vmax.f32 %v4209, 0.0
        %v4242 = vmax.f32 %v4210, 0.0
        %v4243 = vmax.f32 %v4211, 0.0
        %v4244 = vmax.f32 %v4212, 0.0
        %v4245 = vmax.f32 %v4213, 0.0
        %v4246 = vmax.f32 %v4214, 0.0
        %v4247 = vmax.f32 %v4215, 0.0
        %v4248 = vmax.f32 %v4216, 0.0
        %v4249 = vmax.f32 %v4217, 0.0
        %v4250 = vmax.f32 %v4218, 0.0
        %v4251 = vmax.f32 %v4219, 0.0
        %v4252 = vmax.f32 %v4220, 0.0
        %v4253 = vmax.f32 %v4221, 0.0
        %v4254 = vmax.f32 %v4222, 0.0
        %v4255 = vmax.f32 %v4223, 0.0
        %v4256 = vmax.f32 %v4224, 0.0
        %v4257 = vmax.f32 %v4225, 0.0
        %v4258 = vmax.f32 %v4226, 0.0
        %v4259 = vmax.f32 %v4227, 0.0
        %4260 = vst [vmem:[%s271] sm:$0xff] %v4228
        %4261 = vst [vmem:[%s271 + $0x8] sm:$0xff] %v4229
        %4262 = vst [vmem:[%s271 + $0x10] sm:$0xff] %v4230
        %4263 = vst [vmem:[%s271 + $0x18] sm:$0xff] %v4231
        %4264 = vst [vmem:[%s271 + $0x20] sm:$0xff] %v4232
        %4265 = vst [vmem:[%s271 + $0x28] sm:$0xff] %v4233
        %4266 = vst [vmem:[%s271 + $0x30] sm:$0xff] %v4234
        %4267 = vst [vmem:[%s271 + $0x38] sm:$0xff] %v4235
        %4268 = vst [vmem:[%s271 + $0x40] sm:$0xff] %v4236
        %4269 = vst [vmem:[%s271 + $0x48] sm:$0xff] %v4237
        %4270 = vst [vmem:[%s271 + $0x50] sm:$0xff] %v4238
        %4271 = vst [vmem:[%s271 + $0x58] sm:$0xff] %v4239
        %4272 = vst [vmem:[%s271 + $0x60] sm:$0xff] %v4240
        %4273 = vst [vmem:[%s271 + $0x68] sm:$0xff] %v4241
        %4274 = vst [vmem:[%s271 + $0x70] sm:$0xff] %v4242
        %4275 = vst [vmem:[%s271 + $0x78] sm:$0xff] %v4243
        %4276 = vst [vmem:[%s271 + $0x80] sm:$0xff] %v4244
        %4277 = vst [vmem:[%s271 + $0x88] sm:$0xff] %v4245
        %4278 = vst [vmem:[%s271 + $0x90] sm:$0xff] %v4246
        %4279 = vst [vmem:[%s271 + $0x98] sm:$0xff] %v4247
        %4280 = vst [vmem:[%s271 + $0xa0] sm:$0xff] %v4248
        %4281 = vst [vmem:[%s271 + $0xa8] sm:$0xff] %v4249
        %4282 = vst [vmem:[%s271 + $0xb0] sm:$0xff] %v4250
        %4283 = vst [vmem:[%s271 + $0xb8] sm:$0xff] %v4251
        %4284 = vst [vmem:[%s271 + $0xc0] sm:$0xff] %v4252
        %4285 = vst [vmem:[%s271 + $0xc8] sm:$0xff] %v4253
        %4286 = vst [vmem:[%s271 + $0xd0] sm:$0xff] %v4254
        %4287 = vst [vmem:[%s271 + $0xd8] sm:$0xff] %v4255
        %4288 = vst [vmem:[%s271 + $0xe0] sm:$0xff] %v4256
        %4289 = vst [vmem:[%s271 + $0xe8] sm:$0xff] %v4257
        %4290 = vst [vmem:[%s271 + $0xf0] sm:$0xff] %v4258
        %4291 = vst [vmem:[%s271 + $0xf8] sm:$0xff] %v4259
        %s4292 = sand.u32 %s141, 1
        %s4293 = scalar_lea.sflag [#allocation6], %s4292
        %s4294 = sand.u32 %s141, 1
        %s4295 = smul.addr %s4294, 256
        %s4296 = scalar_lea.vmem [#allocation10], %s4295
        // Predicated region
        $region53: #{tpu_custom_call.1} parent=39 // pred_check
          %p4297 = pneg %p151
        $region54: #{tpu_custom_call.1} parent=39 // pred_check_branch
          %4299 = sbr.rel (%p4297) target = $region56
        $region55: #{tpu_custom_call.1} parent=39 // pred_region
          %s4301 = ssub.s32 4096, 4096
          %4302 = vsyncadd %s4293, %s4301
          %s4303 = smul.addr %s23, 32
          %s4304 = smul.addr %s4303, 128
          %s4305 = scalar_lea.hbm %s5, %s4304
          %s4306 = sshll.u32 %s4296, 4
          %s4307 = int_to_ptr.vmem [resolvable:$true] %s4306
          %4312 = dma.vmem_to_hbm [thread:$0]  %s4307, 4096, %s4305, %s4293, 128, 128, 8
        $region56: #{tpu_custom_call.1} parent=39 // pred_fallthru
          _
      $region40: #{tpu_custom_call.1} parent=5 // pred_fallthru
        _
      %p4313 = scmp.le.s32.totalorder 2, %s18
      // Predicated region
      $region57: #{tpu_custom_call.1} parent=5 // pred_check
        %p4314 = pneg %p4313
      $region58: #{tpu_custom_call.1} parent=5 // pred_check_branch
        %4316 = sbr.rel (%p4314) target = $region60
      $region59: #{tpu_custom_call.1} parent=5 // pred_region
        %s4317 = ssub.s32 %s18, 2
        // Predicated region
        $region61: #{tpu_custom_call.1} parent=59 // pred_check
          %p4318 = pneg %p157
        $region62: #{tpu_custom_call.1} parent=59 // pred_check_branch
          %4320 = sbr.rel (%p4318) target = $region64
        $region63: #{tpu_custom_call.1} parent=59 // pred_region
          %s4321 = sand.u32 %s142, 1
          %s4322 = scalar_lea.sflag [#allocation6], %s4321
          %s4323 = sand.u32 %s142, 1
          %s4324 = smul.addr %s4323, 256
          %s4325 = scalar_lea.vmem [#allocation10], %s4324
          %4326 = dma.done %s4322, 4096
        $region64: #{tpu_custom_call.1} parent=59 // pred_fallthru
          _
      $region60: #{tpu_custom_call.1} parent=5 // pred_fallthru
        _
    $region6: #{tpu_custom_call.1} parent=1 // loop_footer
      %s22 = sadd.s32 1, %s18
    $region7: #{tpu_custom_call.1} parent=1 // loop_footer_branch
      %17 = sbr.rel target = $region3
    $region8: #{tpu_custom_call.1} parent=1 // loop_exit
      _
    %4327 = vsyncpa [#allocation5], 1
    %s4328 = scalar_lea.sflag [#allocation5], 1
    %4329 = vsyncpa %s4328, 1
    %4330 = vsyncpa [#allocation8], 1
    %4331 = vsyncpa [#allocation6], 1
    %s4332 = scalar_lea.sflag [#allocation6], 1
    %4333 = vsyncpa %s4332, 1

// kernel: tpu_custom_call.1
$region0: #{tpu_custom_call.1}
  #allocation0 [shape = 'u32[]', space=smem, size = 0x4, offset = 0x4, fixed_abs, tag = 'smem constant byte address 0x4 - core index']
  #allocation1 [shape = 'u32[144,128]{1,0:T(1,128)}', space=vmem, size = 0x12000, scoped, tag = 'internal scratch']
  #allocation2 [shape = 'f32[18,18,128]{2,1,0:T(8,128)}', space=vmem, size = 0x36000, scoped, tag = 'scratch operand']
  #allocation3 [shape = 'f32[18,18,128]{2,1,0:T(8,128)}', space=vmem, size = 0x36000, scoped, tag = 'scratch operand']
  %s0 = inlined_call_operand.hbm [shape: f32[2,256,128], index: 0, kind: input, shape index: {}]
  %s1 = inlined_call_operand.hbm [shape: f32[1152,128], index: 1, kind: input, shape index: {}]
  %s2 = inlined_call_operand.vmem [shape: f32[1,128], index: 2, kind: input, shape index: {}]
  %s3 = inlined_call_operand.hbm [shape: f32[1152,128], index: 3, kind: input, shape index: {}]
  %s4 = inlined_call_operand.vmem [shape: f32[1,128], index: 4, kind: input, shape index: {}]
  %s5 = inlined_call_operand.hbm [shape: f32[2,256,128], index: 5, kind: output, shape index: {}]
  %s6 = sld [smem:[#allocation0]]
  $region65: #{tpu_custom_call.1} parent=0
    _
  %s8 = ssub.s32 1, %s6
  %s9 = scalar_select 0, %s8, %s6
  $region1: #{tpu_custom_call.1} parent=0
    #allocation4 [shape = 'u8[262144]{0}', space=vmem, size = 0x40000, scoped, tag = 'input window, operand 0']
    #allocation5 [shape = 's32[2]{0}', space=sflag, size = 0x8, scoped, tag = 'scoped memory for tpu_custom_call.1']
    #allocation6 [shape = 's32[2]{0}', space=sflag, size = 0x8, scoped, tag = 'scoped memory for tpu_custom_call.1']
    #allocation7 [shape = 'u8[589824]{0}', space=vmem, size = 0x90000, scoped, tag = 'input window, operand 1, single buffered']
    #allocation8 [shape = 's32[1]{0}', space=sflag, size = 0x4, scoped, tag = 'scoped memory for tpu_custom_call.1']
    #allocation9 [shape = 'u8[589824]{0}', space=vmem, size = 0x90000, scoped, tag = 'input window, operand 3, single buffered']
    #allocation10 [shape = 'u8[262144]{0}', space=vmem, size = 0x40000, scoped, tag = 'output window, operand 0']
    %10 = vsyncpa [#allocation5], 0
    %s11 = scalar_lea.sflag [#allocation5], 1
    %12 = vsyncpa %s11, 0
    %13 = vsyncpa [#allocation8], 0
    %14 = vsyncpa [#allocation6], 0
    %s15 = scalar_lea.sflag [#allocation6], 1
    %16 = vsyncpa %s15, 0
    loop: start=0, step=1, limit=4
    $region2: #{tpu_custom_call.1} parent=1 // loop_pre_header
      _
    $region3: #{tpu_custom_call.1} parent=1 // loop_header
      %s18 = sphi 0, %s22
      %p19 = scmp.ge.s32.totalorder %s18, 4
      %s28 = sphi 0, %s30
      %s31 = sphi 0, %s28
      %s32 = sphi 0, %s31
      %s48 = sphi 0, %s32
      %s52 = sphi 0, %s52
      %s54 = sphi 0, %s52
      %s55 = sphi 0, %s54
      %s69 = sphi 0, %s55
      %s73 = sphi 0, %s73
      %s75 = sphi 0, %s73
      %s76 = sphi 0, %s75
      %s90 = sphi 0, %s76
      %s94 = sphi 0, %s94
      %s96 = sphi 0, %s94
      %s97 = sphi 0, %s96
      %s111 = sphi 0, %s97
      %s115 = sphi 0, %s115
      %s117 = sphi 0, %s115
      %s118 = sphi 0, %s117
      %s132 = sphi 0, %s118
      %s138 = sphi 0, %s140
      %s141 = sphi 0, %s138
      %s142 = sphi 0, %s141
      %s158 = sphi 0, %s142
    $region4: #{tpu_custom_call.1} parent=1 // loop_header_branch
      %21 = sbr.rel (%p19) target = $region8
    $region5: #{tpu_custom_call.1} parent=1 // loop_body
      %s23 = ssub.s32 %s18, 1
      %s24 = ssub.s32 %s18, 2
      %s25 = sadd.s32 %s18, 1
      %s26 = ssub.s32 %s18, %s25
      %p27 = scmp.eq.s32.totalorder %s26, 0
      %s29 = sadd.s32 %s28, 1
      %s30 = scalar_select %p27, %s28, %s29
      %p33 = pneg %p27
      %p34 = scmp.eq.s32.totalorder %s18, 1
      %p35 = por %p33, %p34
      %p36 = scmp.ne.s32.totalorder %s28, %s31
      %p37 = scmp.eq.s32.totalorder %s18, 0
      %p38 = por %p36, %p37
      %p39 = scmp.ne.s32.totalorder %s28, %s31
      %p40 = scmp.eq.s32.totalorder %s23, 1
      %p41 = por %p39, %p40
      %p42 = scmp.ne.s32.totalorder %s31, %s32
      %p43 = scmp.eq.s32.totalorder %s23, 0
      %p44 = por %p42, %p43
      %p45 = scmp.ne.s32.totalorder %s31, %s32
      %p46 = scmp.eq.s32.totalorder %s24, 1
      %p47 = por %p45, %p46
      %p49 = scmp.ne.s32.totalorder %s32, %s48
      %p50 = scmp.eq.s32.totalorder %s24, 0
      %p51 = por %p49, %p50
      %s53 = sadd.s32 %s52, 1
      %p56 = scmp.eq.s32.totalorder %s18, 1
      %p57 = scmp.ne.s32.totalorder %s52, %s54
      %p58 = scmp.eq.s32.totalorder %s18, 0
      %p59 = por %p57, %p58
      %p60 = scmp.ne.s32.totalorder %s52, %s54
      %p61 = scmp.eq.s32.totalorder %s23, 1
      %p62 = por %p60, %p61
      %p63 = scmp.ne.s32.totalorder %s54, %s55
      %p64 = scmp.eq.s32.totalorder %s23, 0
      %p65 = por %p63, %p64
      %p66 = scmp.ne.s32.totalorder %s54, %s55
      %p67 = scmp.eq.s32.totalorder %s24, 1
      %p68 = por %p66, %p67
      %p70 = scmp.ne.s32.totalorder %s55, %s69
      %p71 = scmp.eq.s32.totalorder %s24, 0
      %p72 = por %p70, %p71
      %s74 = sadd.s32 %s73, 1
      %p77 = scmp.eq.s32.totalorder %s18, 1
      %p78 = scmp.ne.s32.totalorder %s73, %s75
      %p79 = scmp.eq.s32.totalorder %s18, 0
      %p80 = por %p78, %p79
      %p81 = scmp.ne.s32.totalorder %s73, %s75
      %p82 = scmp.eq.s32.totalorder %s23, 1
      %p83 = por %p81, %p82
      %p84 = scmp.ne.s32.totalorder %s75, %s76
      %p85 = scmp.eq.s32.totalorder %s23, 0
      %p86 = por %p84, %p85
      %p87 = scmp.ne.s32.totalorder %s75, %s76
      %p88 = scmp.eq.s32.totalorder %s24, 1
      %p89 = por %p87, %p88
      %p91 = scmp.ne.s32.totalorder %s76, %s90
      %p92 = scmp.eq.s32.totalorder %s24, 0
      %p93 = por %p91, %p92
      %s95 = sadd.s32 %s94, 1
      %p98 = scmp.eq.s32.totalorder %s18, 1
      %p99 = scmp.ne.s32.totalorder %s94, %s96
      %p100 = scmp.eq.s32.totalorder %s18, 0
      %p101 = por %p99, %p100
      %p102 = scmp.ne.s32.totalorder %s94, %s96
      %p103 = scmp.eq.s32.totalorder %s23, 1
      %p104 = por %p102, %p103
      %p105 = scmp.ne.s32.totalorder %s96, %s97
      %p106 = scmp.eq.s32.totalorder %s23, 0
      %p107 = por %p105, %p106
      %p108 = scmp.ne.s32.totalorder %s96, %s97
      %p109 = scmp.eq.s32.totalorder %s24, 1
      %p110 = por %p108, %p109
      %p112 = scmp.ne.s32.totalorder %s97, %s111
      %p113 = scmp.eq.s32.totalorder %s24, 0
      %p114 = por %p112, %p113
      %s116 = sadd.s32 %s115, 1
      %p119 = scmp.eq.s32.totalorder %s18, 1
      %p120 = scmp.ne.s32.totalorder %s115, %s117
      %p121 = scmp.eq.s32.totalorder %s18, 0
      %p122 = por %p120, %p121
      %p123 = scmp.ne.s32.totalorder %s115, %s117
      %p124 = scmp.eq.s32.totalorder %s23, 1
      %p125 = por %p123, %p124
      %p126 = scmp.ne.s32.totalorder %s117, %s118
      %p127 = scmp.eq.s32.totalorder %s23, 0
      %p128 = por %p126, %p127
      %p129 = scmp.ne.s32.totalorder %s117, %s118
      %p130 = scmp.eq.s32.totalorder %s24, 1
      %p131 = por %p129, %p130
      %p133 = scmp.ne.s32.totalorder %s118, %s132
      %p134 = scmp.eq.s32.totalorder %s24, 0
      %p135 = por %p133, %p134
      %s136 = ssub.s32 %s18, %s25
      %p137 = scmp.eq.s32.totalorder %s136, 0
      %s139 = sadd.s32 %s138, 1
      %s140 = scalar_select %p137, %s138, %s139
      %p143 = pneg %p137
      %p144 = scmp.eq.s32.totalorder %s18, 1
      %p145 = por %p143, %p144
      %p146 = scmp.ne.s32.totalorder %s138, %s141
      %p147 = scmp.eq.s32.totalorder %s18, 0
      %p148 = por %p146, %p147
      %p149 = scmp.ne.s32.totalorder %s138, %s141
      %p150 = scmp.eq.s32.totalorder %s23, 1
      %p151 = por %p149, %p150
      %p152 = scmp.ne.s32.totalorder %s141, %s142
      %p153 = scmp.eq.s32.totalorder %s23, 0
      %p154 = por %p152, %p153
      %p155 = scmp.ne.s32.totalorder %s141, %s142
      %p156 = scmp.eq.s32.totalorder %s24, 1
      %p157 = por %p155, %p156
      %p159 = scmp.ne.s32.totalorder %s142, %s158
      %p160 = scmp.eq.s32.totalorder %s24, 0
      %p161 = por %p159, %p160
      %p162 = scmp.le.s32.totalorder 1, %s18
      %p163 = scmp.lt.s32.totalorder %s18, 3
      %p164 = pnand %p162, %p163
      %p165 = pneg %p164
      // Predicated region
      $region9: #{tpu_custom_call.1} parent=5 // pred_check
        _
      $region10: #{tpu_custom_call.1} parent=5 // pred_check_branch
        %167 = sbr.rel (%p164) target = $region12
      $region11: #{tpu_custom_call.1} parent=5 // pred_region
        %s168 = ssub.s32 %s18, 1
        // Predicated region
        $region13: #{tpu_custom_call.1} parent=11 // pred_check
          %p169 = pneg %p65
        $region14: #{tpu_custom_call.1} parent=11 // pred_check_branch
          %171 = sbr.rel (%p169) target = $region16
        $region15: #{tpu_custom_call.1} parent=11 // pred_region
          %s173 = ssub.s32 18432, 18432
          %174 = vsyncadd [#allocation8], %s173
          %s175 = sshll.u32 [#allocation7], 4
          %s176 = int_to_ptr.vmem [resolvable:$true] %s175
          %181 = dma.hbm_to_vmem [thread:$0]  %s1, 18432, %s176, [#allocation8], 128, 128, 8
        $region16: #{tpu_custom_call.1} parent=11 // pred_fallthru
          _
        // Predicated region
        $region17: #{tpu_custom_call.1} parent=11 // pred_check
          %p182 = pneg %p86
        $region18: #{tpu_custom_call.1} parent=11 // pred_check_branch
          %184 = sbr.rel (%p182) target = $region20
        $region19: #{tpu_custom_call.1} parent=11 // pred_region
          _
        $region20: #{tpu_custom_call.1} parent=11 // pred_fallthru
          _
        // Predicated region
        $region21: #{tpu_custom_call.1} parent=11 // pred_check
          %p185 = pneg %p107
        $region22: #{tpu_custom_call.1} parent=11 // pred_check_branch
          %187 = sbr.rel (%p185) target = $region24
        $region23: #{tpu_custom_call.1} parent=11 // pred_region
          %s189 = ssub.s32 18432, 18432
          %190 = vsyncadd [#allocation8], %s189
          %s191 = sshll.u32 [#allocation9], 4
          %s192 = int_to_ptr.vmem [resolvable:$true] %s191
          %197 = dma.hbm_to_vmem [thread:$0]  %s3, 18432, %s192, [#allocation8], 128, 128, 8
        $region24: #{tpu_custom_call.1} parent=11 // pred_fallthru
          _
        // Predicated region
        $region25: #{tpu_custom_call.1} parent=11 // pred_check
          %p198 = pneg %p128
        $region26: #{tpu_custom_call.1} parent=11 // pred_check_branch
          %200 = sbr.rel (%p198) target = $region28
        $region27: #{tpu_custom_call.1} parent=11 // pred_region
          _
        $region28: #{tpu_custom_call.1} parent=11 // pred_fallthru
          _
      $region12: #{tpu_custom_call.1} parent=5 // pred_fallthru
        _
      %p201 = scmp.lt.s32.totalorder %s18, 2
      // Predicated region
      $region29: #{tpu_custom_call.1} parent=5 // pred_check
        %p202 = pneg %p201
      $region30: #{tpu_custom_call.1} parent=5 // pred_check_branch
        %204 = sbr.rel (%p202) target = $region32
      $region31: #{tpu_custom_call.1} parent=5 // pred_region
        // Predicated region
        $region33: #{tpu_custom_call.1} parent=31 // pred_check
          %p205 = pneg %p38
        $region34: #{tpu_custom_call.1} parent=31 // pred_check_branch
          %207 = sbr.rel (%p205) target = $region36
        $region35: #{tpu_custom_call.1} parent=31 // pred_region
          %s208 = sand.u32 %s28, 1
          %s209 = scalar_lea.sflag [#allocation5], %s208
          %s210 = sand.u32 %s28, 1
          %s211 = smul.addr %s210, 256
          %s212 = scalar_lea.vmem [#allocation4], %s211
          %s214 = ssub.s32 4096, 4096
          %215 = vsyncadd %s209, %s214
          %s216 = smul.addr %s18, 32
          %s217 = smul.addr %s216, 128
          %s218 = scalar_lea.hbm %s0, %s217
          %s219 = sshll.u32 %s212, 4
          %s220 = int_to_ptr.vmem [resolvable:$true] %s219
          %225 = dma.hbm_to_vmem [thread:$0]  %s218, 4096, %s220, %s209, 128, 128, 8
        $region36: #{tpu_custom_call.1} parent=31 // pred_fallthru
          _
      $region32: #{tpu_custom_call.1} parent=5 // pred_fallthru
        _
      %p226 = scmp.le.s32.totalorder 1, %s18
      %p227 = scmp.lt.s32.totalorder %s18, 3
      %p228 = pnand %p226, %p227
      %p229 = pneg %p228
      // Predicated region
      $region37: #{tpu_custom_call.1} parent=5 // pred_check
        _
      $region38: #{tpu_custom_call.1} parent=5 // pred_check_branch
        %231 = sbr.rel (%p228) target = $region40
      $region39: #{tpu_custom_call.1} parent=5 // pred_region
        %s232 = ssub.s32 %s18, 1
        %s233 = sand.u32 %s31, 1
        %s234 = scalar_lea.sflag [#allocation5], %s233
        %s235 = sand.u32 %s31, 1
        %s236 = smul.addr %s235, 256
        %s237 = scalar_lea.vmem [#allocation4], %s236
        // Predicated region
        $region41: #{tpu_custom_call.1} parent=39 // pred_check
          %p238 = pneg %p44
        $region42: #{tpu_custom_call.1} parent=39 // pred_check_branch
          %240 = sbr.rel (%p238) target = $region44
        $region43: #{tpu_custom_call.1} parent=39 // pred_region
          %241 = dma.done %s234, 4096
        $region44: #{tpu_custom_call.1} parent=39 // pred_fallthru
          _
        // Predicated region
        $region45: #{tpu_custom_call.1} parent=39 // pred_check
          %p242 = pneg %p65
        $region46: #{tpu_custom_call.1} parent=39 // pred_check_branch
          %244 = sbr.rel (%p242) target = $region48
        $region47: #{tpu_custom_call.1} parent=39 // pred_region
          %245 = dma.done [#allocation8], 18432
        $region48: #{tpu_custom_call.1} parent=39 // pred_fallthru
          _
        // Predicated region
        $region49: #{tpu_custom_call.1} parent=39 // pred_check
          %p246 = pneg %p107
        $region50: #{tpu_custom_call.1} parent=39 // pred_check_branch
          %248 = sbr.rel (%p246) target = $region52
        $region51: #{tpu_custom_call.1} parent=39 // pred_region
          %249 = dma.done [#allocation8], 18432
        $region52: #{tpu_custom_call.1} parent=39 // pred_fallthru
          _
        %s250 = sand.u32 %s31, 1
        %s251 = scalar_lea.sflag [#allocation5], %s250
        %s252 = sand.u32 %s31, 1
        %s253 = smul.addr %s252, 256
        %s254 = scalar_lea.vmem [#allocation4], %s253
        %p255 = pneg %p44
        %p256 = pneg %p41
        %p257 = pneg %p65
        %p258 = pneg %p62
        %p259 = pneg %p86
        %p260 = pneg %p83
        %p261 = pneg %p107
        %p262 = pneg %p104
        %p263 = pneg %p128
        %p264 = pneg %p125
        %p265 = pneg %p154
        %p266 = pneg %p151
        %s267 = sand.u32 %s141, 1
        %s268 = scalar_lea.sflag [#allocation6], %s267
        %s269 = sand.u32 %s141, 1
        %s270 = smul.addr %s269, 256
        %s271 = scalar_lea.vmem [#allocation10], %s270
        %272 = vst [vmem:[#allocation2] sm:$0xff] 0.0
        %273 = vst [vmem:[#allocation2 + $0x8] sm:$0xff] 0.0
        %274 = vst [vmem:[#allocation2 + $0x10] sm:$0x3] 0.0
        %s275 = scalar_lea.vmem [#allocation2], 408
        %276 = vst [vmem:[%s275] sm:$0xff] 0.0
        %277 = vst [vmem:[%s275 + $0x8] sm:$0xff] 0.0
        %278 = vst [vmem:[%s275 + $0x10] sm:$0x3] 0.0
        %279 = vst [vmem:[#allocation2] sm:$0x1] 0.0
        %280 = vst [vmem:[#allocation2 + $0x18] sm:$0x1] 0.0
        %281 = vst [vmem:[#allocation2 + $0x30] sm:$0x1] 0.0
        %282 = vst [vmem:[#allocation2 + $0x48] sm:$0x1] 0.0
        %283 = vst [vmem:[#allocation2 + $0x60] sm:$0x1] 0.0
        %284 = vst [vmem:[#allocation2 + $0x78] sm:$0x1] 0.0
        %285 = vst [vmem:[#allocation2 + $0x90] sm:$0x1] 0.0
        %286 = vst [vmem:[#allocation2 + $0xa8] sm:$0x1] 0.0
        %287 = vst [vmem:[#allocation2 + $0xc0] sm:$0x1] 0.0
        %288 = vst [vmem:[#allocation2 + $0xd8] sm:$0x1] 0.0
        %289 = vst [vmem:[#allocation2 + $0xf0] sm:$0x1] 0.0
        %290 = vst [vmem:[#allocation2 + $0x108] sm:$0x1] 0.0
        %291 = vst [vmem:[#allocation2 + $0x120] sm:$0x1] 0.0
        %292 = vst [vmem:[#allocation2 + $0x138] sm:$0x1] 0.0
        %293 = vst [vmem:[#allocation2 + $0x150] sm:$0x1] 0.0
        %294 = vst [vmem:[#allocation2 + $0x168] sm:$0x1] 0.0
        %295 = vst [vmem:[#allocation2 + $0x180] sm:$0x1] 0.0
        %296 = vst [vmem:[#allocation2 + $0x198] sm:$0x1] 0.0
        %297 = vst [vmem:[#allocation2 + $0x11] sm:$0x1] 0.0
        %298 = vst [vmem:[#allocation2 + $0x29] sm:$0x1] 0.0
        %299 = vst [vmem:[#allocation2 + $0x41] sm:$0x1] 0.0
        %300 = vst [vmem:[#allocation2 + $0x59] sm:$0x1] 0.0
        %301 = vst [vmem:[#allocation2 + $0x71] sm:$0x1] 0.0
        %302 = vst [vmem:[#allocation2 + $0x89] sm:$0x1] 0.0
        %303 = vst [vmem:[#allocation2 + $0xa1] sm:$0x1] 0.0
        %304 = vst [vmem:[#allocation2 + $0xb9] sm:$0x1] 0.0
        %305 = vst [vmem:[#allocation2 + $0xd1] sm:$0x1] 0.0
        %306 = vst [vmem:[#allocation2 + $0xe9] sm:$0x1] 0.0
        %307 = vst [vmem:[#allocation2 + $0x101] sm:$0x1] 0.0
        %308 = vst [vmem:[#allocation2 + $0x119] sm:$0x1] 0.0
        %309 = vst [vmem:[#allocation2 + $0x131] sm:$0x1] 0.0
        %310 = vst [vmem:[#allocation2 + $0x149] sm:$0x1] 0.0
        %311 = vst [vmem:[#allocation2 + $0x161] sm:$0x1] 0.0
        %312 = vst [vmem:[#allocation2 + $0x179] sm:$0x1] 0.0
        %313 = vst [vmem:[#allocation2 + $0x191] sm:$0x1] 0.0
        %314 = vst [vmem:[#allocation2 + $0x1a9] sm:$0x1] 0.0
        %315 = vst [vmem:[#allocation3] sm:$0xff] 0.0
        %316 = vst [vmem:[#allocation3 + $0x8] sm:$0xff] 0.0
        %317 = vst [vmem:[#allocation3 + $0x10] sm:$0x3] 0.0
        %s318 = scalar_lea.vmem [#allocation3], 408
        %319 = vst [vmem:[%s318] sm:$0xff] 0.0
        %320 = vst [vmem:[%s318 + $0x8] sm:$0xff] 0.0
        %321 = vst [vmem:[%s318 + $0x10] sm:$0x3] 0.0
        %322 = vst [vmem:[#allocation3] sm:$0x1] 0.0
        %323 = vst [vmem:[#allocation3 + $0x18] sm:$0x1] 0.0
        %324 = vst [vmem:[#allocation3 + $0x30] sm:$0x1] 0.0
        %325 = vst [vmem:[#allocation3 + $0x48] sm:$0x1] 0.0
        %326 = vst [vmem:[#allocation3 + $0x60] sm:$0x1] 0.0
        %327 = vst [vmem:[#allocation3 + $0x78] sm:$0x1] 0.0
        %328 = vst [vmem:[#allocation3 + $0x90] sm:$0x1] 0.0
        %329 = vst [vmem:[#allocation3 + $0xa8] sm:$0x1] 0.0
        %330 = vst [vmem:[#allocation3 + $0xc0] sm:$0x1] 0.0
        %331 = vst [vmem:[#allocation3 + $0xd8] sm:$0x1] 0.0
        %332 = vst [vmem:[#allocation3 + $0xf0] sm:$0x1] 0.0
        %333 = vst [vmem:[#allocation3 + $0x108] sm:$0x1] 0.0
        %334 = vst [vmem:[#allocation3 + $0x120] sm:$0x1] 0.0
        %335 = vst [vmem:[#allocation3 + $0x138] sm:$0x1] 0.0
        %336 = vst [vmem:[#allocation3 + $0x150] sm:$0x1] 0.0
        %337 = vst [vmem:[#allocation3 + $0x168] sm:$0x1] 0.0
        %338 = vst [vmem:[#allocation3 + $0x180] sm:$0x1] 0.0
        %339 = vst [vmem:[#allocation3 + $0x198] sm:$0x1] 0.0
        %340 = vst [vmem:[#allocation3 + $0x11] sm:$0x1] 0.0
        %341 = vst [vmem:[#allocation3 + $0x29] sm:$0x1] 0.0
        %342 = vst [vmem:[#allocation3 + $0x41] sm:$0x1] 0.0
        %343 = vst [vmem:[#allocation3 + $0x59] sm:$0x1] 0.0
        %344 = vst [vmem:[#allocation3 + $0x71] sm:$0x1] 0.0
        %345 = vst [vmem:[#allocation3 + $0x89] sm:$0x1] 0.0
        %346 = vst [vmem:[#allocation3 + $0xa1] sm:$0x1] 0.0
        %347 = vst [vmem:[#allocation3 + $0xb9] sm:$0x1] 0.0
        %348 = vst [vmem:[#allocation3 + $0xd1] sm:$0x1] 0.0
        %349 = vst [vmem:[#allocation3 + $0xe9] sm:$0x1] 0.0
        %350 = vst [vmem:[#allocation3 + $0x101] sm:$0x1] 0.0
        %351 = vst [vmem:[#allocation3 + $0x119] sm:$0x1] 0.0
        %352 = vst [vmem:[#allocation3 + $0x131] sm:$0x1] 0.0
        %353 = vst [vmem:[#allocation3 + $0x149] sm:$0x1] 0.0
        %354 = vst [vmem:[#allocation3 + $0x161] sm:$0x1] 0.0
        %355 = vst [vmem:[#allocation3 + $0x179] sm:$0x1] 0.0
        %356 = vst [vmem:[#allocation3 + $0x191] sm:$0x1] 0.0
        %357 = vst [vmem:[#allocation3 + $0x1a9] sm:$0x1] 0.0
        %v358 = vld [vmem:[%s237] sm:$0xff]
        %v359 = vld [vmem:[%s237 + $0x8] sm:$0xff]
        %v360 = vld [vmem:[%s237 + $0x10] sm:$0xff]
        %v361 = vld [vmem:[%s237 + $0x18] sm:$0xff]
        %v362 = vld [vmem:[%s237 + $0x20] sm:$0xff]
        %v363 = vld [vmem:[%s237 + $0x28] sm:$0xff]
        %v364 = vld [vmem:[%s237 + $0x30] sm:$0xff]
        %v365 = vld [vmem:[%s237 + $0x38] sm:$0xff]
        %v366 = vld [vmem:[%s237 + $0x40] sm:$0xff]
        %v367 = vld [vmem:[%s237 + $0x48] sm:$0xff]
        %v368 = vld [vmem:[%s237 + $0x50] sm:$0xff]
        %v369 = vld [vmem:[%s237 + $0x58] sm:$0xff]
        %v370 = vld [vmem:[%s237 + $0x60] sm:$0xff]
        %v371 = vld [vmem:[%s237 + $0x68] sm:$0xff]
        %v372 = vld [vmem:[%s237 + $0x70] sm:$0xff]
        %v373 = vld [vmem:[%s237 + $0x78] sm:$0xff]
        %v374 = vld [vmem:[%s237 + $0x80] sm:$0xff]
        %v375 = vld [vmem:[%s237 + $0x88] sm:$0xff]
        %v376 = vld [vmem:[%s237 + $0x90] sm:$0xff]
        %v377 = vld [vmem:[%s237 + $0x98] sm:$0xff]
        %v378 = vld [vmem:[%s237 + $0xa0] sm:$0xff]
        %v379 = vld [vmem:[%s237 + $0xa8] sm:$0xff]
        %v380 = vld [vmem:[%s237 + $0xb0] sm:$0xff]
        %v381 = vld [vmem:[%s237 + $0xb8] sm:$0xff]
        %v382 = vld [vmem:[%s237 + $0xc0] sm:$0xff]
        %v383 = vld [vmem:[%s237 + $0xc8] sm:$0xff]
        %v384 = vld [vmem:[%s237 + $0xd0] sm:$0xff]
        %v385 = vld [vmem:[%s237 + $0xd8] sm:$0xff]
        %v386 = vld [vmem:[%s237 + $0xe0] sm:$0xff]
        %v387 = vld [vmem:[%s237 + $0xe8] sm:$0xff]
        %v388 = vld [vmem:[%s237 + $0xf0] sm:$0xff]
        %v389 = vld [vmem:[%s237 + $0xf8] sm:$0xff]
        %s390 = scalar_lea.vmem [#allocation2], 24
        %391 = vst [vmem:[%s390 + $0x1] sm:$0xff] %v358
        %392 = vst [vmem:[%s390 + $0x9] sm:$0xff] %v359
        %393 = vst [vmem:[%s390 + $0x19] sm:$0xff] %v360
        %394 = vst [vmem:[%s390 + $0x21] sm:$0xff] %v361
        %395 = vst [vmem:[%s390 + $0x31] sm:$0xff] %v362
        %396 = vst [vmem:[%s390 + $0x39] sm:$0xff] %v363
        %397 = vst [vmem:[%s390 + $0x49] sm:$0xff] %v364
        %398 = vst [vmem:[%s390 + $0x51] sm:$0xff] %v365
        %399 = vst [vmem:[%s390 + $0x61] sm:$0xff] %v366
        %400 = vst [vmem:[%s390 + $0x69] sm:$0xff] %v367
        %401 = vst [vmem:[%s390 + $0x79] sm:$0xff] %v368
        %402 = vst [vmem:[%s390 + $0x81] sm:$0xff] %v369
        %403 = vst [vmem:[%s390 + $0x91] sm:$0xff] %v370
        %404 = vst [vmem:[%s390 + $0x99] sm:$0xff] %v371
        %405 = vst [vmem:[%s390 + $0xa9] sm:$0xff] %v372
        %406 = vst [vmem:[%s390 + $0xb1] sm:$0xff] %v373
        %407 = vst [vmem:[%s390 + $0xc1] sm:$0xff] %v374
        %408 = vst [vmem:[%s390 + $0xc9] sm:$0xff] %v375
        %409 = vst [vmem:[%s390 + $0xd9] sm:$0xff] %v376
        %410 = vst [vmem:[%s390 + $0xe1] sm:$0xff] %v377
        %411 = vst [vmem:[%s390 + $0xf1] sm:$0xff] %v378
        %412 = vst [vmem:[%s390 + $0xf9] sm:$0xff] %v379
        %413 = vst [vmem:[%s390 + $0x109] sm:$0xff] %v380
        %414 = vst [vmem:[%s390 + $0x111] sm:$0xff] %v381
        %415 = vst [vmem:[%s390 + $0x121] sm:$0xff] %v382
        %416 = vst [vmem:[%s390 + $0x129] sm:$0xff] %v383
        %417 = vst [vmem:[%s390 + $0x139] sm:$0xff] %v384
        %418 = vst [vmem:[%s390 + $0x141] sm:$0xff] %v385
        %419 = vst [vmem:[%s390 + $0x151] sm:$0xff] %v386
        %420 = vst [vmem:[%s390 + $0x159] sm:$0xff] %v387
        %421 = vst [vmem:[%s390 + $0x169] sm:$0xff] %v388
        %422 = vst [vmem:[%s390 + $0x171] sm:$0xff] %v389
        %v423 = vld [vmem:[#allocation2] sm:$0xff]
        %v424 = vld [vmem:[#allocation2 + $0x8] sm:$0xff]
        %v425 = vld [vmem:[#allocation2 + $0x18] sm:$0xff]
        %v426 = vld [vmem:[#allocation2 + $0x20] sm:$0xff]
        %v427 = vld [vmem:[#allocation2 + $0x30] sm:$0xff]
        %v428 = vld [vmem:[#allocation2 + $0x38] sm:$0xff]
        %v429 = vld [vmem:[#allocation2 + $0x48] sm:$0xff]
        %v430 = vld [vmem:[#allocation2 + $0x50] sm:$0xff]
        %v431 = vld [vmem:[#allocation2 + $0x60] sm:$0xff]
        %v432 = vld [vmem:[#allocation2 + $0x68] sm:$0xff]
        %v433 = vld [vmem:[#allocation2 + $0x78] sm:$0xff]
        %v434 = vld [vmem:[#allocation2 + $0x80] sm:$0xff]
        %v435 = vld [vmem:[#allocation2 + $0x90] sm:$0xff]
        %v436 = vld [vmem:[#allocation2 + $0x98] sm:$0xff]
        %v437 = vld [vmem:[#allocation2 + $0xa8] sm:$0xff]
        %v438 = vld [vmem:[#allocation2 + $0xb0] sm:$0xff]
        %v439 = vld [vmem:[#allocation2 + $0xc0] sm:$0xff]
        %v440 = vld [vmem:[#allocation2 + $0xc8] sm:$0xff]
        %v441 = vld [vmem:[#allocation2 + $0xd8] sm:$0xff]
        %v442 = vld [vmem:[#allocation2 + $0xe0] sm:$0xff]
        %v443 = vld [vmem:[#allocation2 + $0xf0] sm:$0xff]
        %v444 = vld [vmem:[#allocation2 + $0xf8] sm:$0xff]
        %v445 = vld [vmem:[#allocation2 + $0x108] sm:$0xff]
        %v446 = vld [vmem:[#allocation2 + $0x110] sm:$0xff]
        %v447 = vld [vmem:[#allocation2 + $0x120] sm:$0xff]
        %v448 = vld [vmem:[#allocation2 + $0x128] sm:$0xff]
        %v449 = vld [vmem:[#allocation2 + $0x138] sm:$0xff]
        %v450 = vld [vmem:[#allocation2 + $0x140] sm:$0xff]
        %v451 = vld [vmem:[#allocation2 + $0x150] sm:$0xff]
        %v452 = vld [vmem:[#allocation2 + $0x158] sm:$0xff]
        %v453 = vld [vmem:[#allocation2 + $0x168] sm:$0xff]
        %v454 = vld [vmem:[#allocation2 + $0x170] sm:$0xff]
        %v455 = vld [vmem:[#allocation2 + $0x1] sm:$0xff]
        %v456 = vld [vmem:[#allocation2 + $0x9] sm:$0xff]
        %v457 = vld [vmem:[#allocation2 + $0x19] sm:$0xff]
        %v458 = vld [vmem:[#allocation2 + $0x21] sm:$0xff]
        %v459 = vld [vmem:[#allocation2 + $0x31] sm:$0xff]
        %v460 = vld [vmem:[#allocation2 + $0x39] sm:$0xff]
        %v461 = vld [vmem:[#allocation2 + $0x49] sm:$0xff]
        %v462 = vld [vmem:[#allocation2 + $0x51] sm:$0xff]
        %v463 = vld [vmem:[#allocation2 + $0x61] sm:$0xff]
        %v464 = vld [vmem:[#allocation2 + $0x69] sm:$0xff]
        %v465 = vld [vmem:[#allocation2 + $0x79] sm:$0xff]
        %v466 = vld [vmem:[#allocation2 + $0x81] sm:$0xff]
        %v467 = vld [vmem:[#allocation2 + $0x91] sm:$0xff]
        %v468 = vld [vmem:[#allocation2 + $0x99] sm:$0xff]
        %v469 = vld [vmem:[#allocation2 + $0xa9] sm:$0xff]
        %v470 = vld [vmem:[#allocation2 + $0xb1] sm:$0xff]
        %v471 = vld [vmem:[#allocation2 + $0xc1] sm:$0xff]
        %v472 = vld [vmem:[#allocation2 + $0xc9] sm:$0xff]
        %v473 = vld [vmem:[#allocation2 + $0xd9] sm:$0xff]
        %v474 = vld [vmem:[#allocation2 + $0xe1] sm:$0xff]
        %v475 = vld [vmem:[#allocation2 + $0xf1] sm:$0xff]
        %v476 = vld [vmem:[#allocation2 + $0xf9] sm:$0xff]
        %v477 = vld [vmem:[#allocation2 + $0x109] sm:$0xff]
        %v478 = vld [vmem:[#allocation2 + $0x111] sm:$0xff]
        %v479 = vld [vmem:[#allocation2 + $0x121] sm:$0xff]
        %v480 = vld [vmem:[#allocation2 + $0x129] sm:$0xff]
        %v481 = vld [vmem:[#allocation2 + $0x139] sm:$0xff]
        %v482 = vld [vmem:[#allocation2 + $0x141] sm:$0xff]
        %v483 = vld [vmem:[#allocation2 + $0x151] sm:$0xff]
        %v484 = vld [vmem:[#allocation2 + $0x159] sm:$0xff]
        %v485 = vld [vmem:[#allocation2 + $0x169] sm:$0xff]
        %v486 = vld [vmem:[#allocation2 + $0x171] sm:$0xff]
        %v487 = vld [vmem:[#allocation2 + $0x2] sm:$0xff]
        %v488 = vld [vmem:[#allocation2 + $0xa] sm:$0xff]
        %v489 = vld [vmem:[#allocation2 + $0x1a] sm:$0xff]
        %v490 = vld [vmem:[#allocation2 + $0x22] sm:$0xff]
        %v491 = vld [vmem:[#allocation2 + $0x32] sm:$0xff]
        %v492 = vld [vmem:[#allocation2 + $0x3a] sm:$0xff]
        %v493 = vld [vmem:[#allocation2 + $0x4a] sm:$0xff]
        %v494 = vld [vmem:[#allocation2 + $0x52] sm:$0xff]
        %v495 = vld [vmem:[#allocation2 + $0x62] sm:$0xff]
        %v496 = vld [vmem:[#allocation2 + $0x6a] sm:$0xff]
        %v497 = vld [vmem:[#allocation2 + $0x7a] sm:$0xff]
        %v498 = vld [vmem:[#allocation2 + $0x82] sm:$0xff]
        %v499 = vld [vmem:[#allocation2 + $0x92] sm:$0xff]
        %v500 = vld [vmem:[#allocation2 + $0x9a] sm:$0xff]
        %v501 = vld [vmem:[#allocation2 + $0xaa] sm:$0xff]
        %v502 = vld [vmem:[#allocation2 + $0xb2] sm:$0xff]
        %v503 = vld [vmem:[#allocation2 + $0xc2] sm:$0xff]
        %v504 = vld [vmem:[#allocation2 + $0xca] sm:$0xff]
        %v505 = vld [vmem:[#allocation2 + $0xda] sm:$0xff]
        %v506 = vld [vmem:[#allocation2 + $0xe2] sm:$0xff]
        %v507 = vld [vmem:[#allocation2 + $0xf2] sm:$0xff]
        %v508 = vld [vmem:[#allocation2 + $0xfa] sm:$0xff]
        %v509 = vld [vmem:[#allocation2 + $0x10a] sm:$0xff]
        %v510 = vld [vmem:[#allocation2 + $0x112] sm:$0xff]
        %v511 = vld [vmem:[#allocation2 + $0x122] sm:$0xff]
        %v512 = vld [vmem:[#allocation2 + $0x12a] sm:$0xff]
        %v513 = vld [vmem:[#allocation2 + $0x13a] sm:$0xff]
        %v514 = vld [vmem:[#allocation2 + $0x142] sm:$0xff]
        %v515 = vld [vmem:[#allocation2 + $0x152] sm:$0xff]
        %v516 = vld [vmem:[#allocation2 + $0x15a] sm:$0xff]
        %v517 = vld [vmem:[#allocation2 + $0x16a] sm:$0xff]
        %v518 = vld [vmem:[#allocation2 + $0x172] sm:$0xff]
        %v519 = vld [vmem:[#allocation7] sm:$0xff]
        %v520 = vld [vmem:[#allocation7 + $0x8] sm:$0xff]
        %v521 = vld [vmem:[#allocation7 + $0x10] sm:$0xff]
        %v522 = vld [vmem:[#allocation7 + $0x18] sm:$0xff]
        %v523 = vld [vmem:[#allocation7 + $0x20] sm:$0xff]
        %v524 = vld [vmem:[#allocation7 + $0x28] sm:$0xff]
        %v525 = vld [vmem:[#allocation7 + $0x30] sm:$0xff]
        %v526 = vld [vmem:[#allocation7 + $0x38] sm:$0xff]
        %v527 = vld [vmem:[#allocation7 + $0x40] sm:$0xff]
        %v528 = vld [vmem:[#allocation7 + $0x48] sm:$0xff]
        %v529 = vld [vmem:[#allocation7 + $0x50] sm:$0xff]
        %v530 = vld [vmem:[#allocation7 + $0x58] sm:$0xff]
        %v531 = vld [vmem:[#allocation7 + $0x60] sm:$0xff]
        %v532 = vld [vmem:[#allocation7 + $0x68] sm:$0xff]
        %v533 = vld [vmem:[#allocation7 + $0x70] sm:$0xff]
        %v534 = vld [vmem:[#allocation7 + $0x78] sm:$0xff]
        %v535 = vld [vmem:[#allocation7 + $0x80] sm:$0xff]
        %v536 = vld [vmem:[#allocation7 + $0x88] sm:$0xff]
        %v537 = vld [vmem:[#allocation7 + $0x90] sm:$0xff]
        %v538 = vld [vmem:[#allocation7 + $0x98] sm:$0xff]
        %v539 = vld [vmem:[#allocation7 + $0xa0] sm:$0xff]
        %v540 = vld [vmem:[#allocation7 + $0xa8] sm:$0xff]
        %v541 = vld [vmem:[#allocation7 + $0xb0] sm:$0xff]
        %v542 = vld [vmem:[#allocation7 + $0xb8] sm:$0xff]
        %v543 = vld [vmem:[#allocation7 + $0xc0] sm:$0xff]
        %v544 = vld [vmem:[#allocation7 + $0xc8] sm:$0xff]
        %v545 = vld [vmem:[#allocation7 + $0xd0] sm:$0xff]
        %v546 = vld [vmem:[#allocation7 + $0xd8] sm:$0xff]
        %v547 = vld [vmem:[#allocation7 + $0xe0] sm:$0xff]
        %v548 = vld [vmem:[#allocation7 + $0xe8] sm:$0xff]
        %v549 = vld [vmem:[#allocation7 + $0xf0] sm:$0xff]
        %v550 = vld [vmem:[#allocation7 + $0xf8] sm:$0xff]
        %v551 = vld [vmem:[#allocation7 + $0x100] sm:$0xff]
        %v552 = vld [vmem:[#allocation7 + $0x108] sm:$0xff]
        %v553 = vld [vmem:[#allocation7 + $0x110] sm:$0xff]
        %v554 = vld [vmem:[#allocation7 + $0x118] sm:$0xff]
        %v555 = vld [vmem:[#allocation7 + $0x120] sm:$0xff]
        %v556 = vld [vmem:[#allocation7 + $0x128] sm:$0xff]
        %v557 = vld [vmem:[#allocation7 + $0x130] sm:$0xff]
        %v558 = vld [vmem:[#allocation7 + $0x138] sm:$0xff]
        %v559 = vld [vmem:[#allocation7 + $0x140] sm:$0xff]
        %v560 = vld [vmem:[#allocation7 + $0x148] sm:$0xff]
        %v561 = vld [vmem:[#allocation7 + $0x150] sm:$0xff]
        %v562 = vld [vmem:[#allocation7 + $0x158] sm:$0xff]
        %v563 = vld [vmem:[#allocation7 + $0x160] sm:$0xff]
        %v564 = vld [vmem:[#allocation7 + $0x168] sm:$0xff]
        %v565 = vld [vmem:[#allocation7 + $0x170] sm:$0xff]
        %v566 = vld [vmem:[#allocation7 + $0x178] sm:$0xff]
        %v567 = vld [vmem:[%s390] sm:$0xff]
        %v568 = vld [vmem:[%s390 + $0x8] sm:$0xff]
        %v569 = vld [vmem:[%s390 + $0x18] sm:$0xff]
        %v570 = vld [vmem:[%s390 + $0x20] sm:$0xff]
        %v571 = vld [vmem:[%s390 + $0x30] sm:$0xff]
        %v572 = vld [vmem:[%s390 + $0x38] sm:$0xff]
        %v573 = vld [vmem:[%s390 + $0x48] sm:$0xff]
        %v574 = vld [vmem:[%s390 + $0x50] sm:$0xff]
        %v575 = vld [vmem:[%s390 + $0x60] sm:$0xff]
        %v576 = vld [vmem:[%s390 + $0x68] sm:$0xff]
        %v577 = vld [vmem:[%s390 + $0x78] sm:$0xff]
        %v578 = vld [vmem:[%s390 + $0x80] sm:$0xff]
        %v579 = vld [vmem:[%s390 + $0x90] sm:$0xff]
        %v580 = vld [vmem:[%s390 + $0x98] sm:$0xff]
        %v581 = vld [vmem:[%s390 + $0xa8] sm:$0xff]
        %v582 = vld [vmem:[%s390 + $0xb0] sm:$0xff]
        %v583 = vld [vmem:[%s390 + $0xc0] sm:$0xff]
        %v584 = vld [vmem:[%s390 + $0xc8] sm:$0xff]
        %v585 = vld [vmem:[%s390 + $0xd8] sm:$0xff]
        %v586 = vld [vmem:[%s390 + $0xe0] sm:$0xff]
        %v587 = vld [vmem:[%s390 + $0xf0] sm:$0xff]
        %v588 = vld [vmem:[%s390 + $0xf8] sm:$0xff]
        %v589 = vld [vmem:[%s390 + $0x108] sm:$0xff]
        %v590 = vld [vmem:[%s390 + $0x110] sm:$0xff]
        %v591 = vld [vmem:[%s390 + $0x120] sm:$0xff]
        %v592 = vld [vmem:[%s390 + $0x128] sm:$0xff]
        %v593 = vld [vmem:[%s390 + $0x138] sm:$0xff]
        %v594 = vld [vmem:[%s390 + $0x140] sm:$0xff]
        %v595 = vld [vmem:[%s390 + $0x150] sm:$0xff]
        %v596 = vld [vmem:[%s390 + $0x158] sm:$0xff]
        %v597 = vld [vmem:[%s390 + $0x168] sm:$0xff]
        %v598 = vld [vmem:[%s390 + $0x170] sm:$0xff]
        %v599 = vld [vmem:[%s390 + $0x1] sm:$0xff]
        %v600 = vld [vmem:[%s390 + $0x9] sm:$0xff]
        %v601 = vld [vmem:[%s390 + $0x19] sm:$0xff]
        %v602 = vld [vmem:[%s390 + $0x21] sm:$0xff]
        %v603 = vld [vmem:[%s390 + $0x31] sm:$0xff]
        %v604 = vld [vmem:[%s390 + $0x39] sm:$0xff]
        %v605 = vld [vmem:[%s390 + $0x49] sm:$0xff]
        %v606 = vld [vmem:[%s390 + $0x51] sm:$0xff]
        %v607 = vld [vmem:[%s390 + $0x61] sm:$0xff]
        %v608 = vld [vmem:[%s390 + $0x69] sm:$0xff]
        %v609 = vld [vmem:[%s390 + $0x79] sm:$0xff]
        %v610 = vld [vmem:[%s390 + $0x81] sm:$0xff]
        %v611 = vld [vmem:[%s390 + $0x91] sm:$0xff]
        %v612 = vld [vmem:[%s390 + $0x99] sm:$0xff]
        %v613 = vld [vmem:[%s390 + $0xa9] sm:$0xff]
        %v614 = vld [vmem:[%s390 + $0xb1] sm:$0xff]
        %v615 = vld [vmem:[%s390 + $0xc1] sm:$0xff]
        %v616 = vld [vmem:[%s390 + $0xc9] sm:$0xff]
        %v617 = vld [vmem:[%s390 + $0xd9] sm:$0xff]
        %v618 = vld [vmem:[%s390 + $0xe1] sm:$0xff]
        %v619 = vld [vmem:[%s390 + $0xf1] sm:$0xff]
        %v620 = vld [vmem:[%s390 + $0xf9] sm:$0xff]
        %v621 = vld [vmem:[%s390 + $0x109] sm:$0xff]
        %v622 = vld [vmem:[%s390 + $0x111] sm:$0xff]
        %v623 = vld [vmem:[%s390 + $0x121] sm:$0xff]
        %v624 = vld [vmem:[%s390 + $0x129] sm:$0xff]
        %v625 = vld [vmem:[%s390 + $0x139] sm:$0xff]
        %v626 = vld [vmem:[%s390 + $0x141] sm:$0xff]
        %v627 = vld [vmem:[%s390 + $0x151] sm:$0xff]
        %v628 = vld [vmem:[%s390 + $0x159] sm:$0xff]
        %v629 = vld [vmem:[%s390 + $0x169] sm:$0xff]
        %v630 = vld [vmem:[%s390 + $0x171] sm:$0xff]
        %v631 = vld [vmem:[%s390 + $0x2] sm:$0xff]
        %v632 = vld [vmem:[%s390 + $0xa] sm:$0xff]
        %v633 = vld [vmem:[%s390 + $0x1a] sm:$0xff]
        %v634 = vld [vmem:[%s390 + $0x22] sm:$0xff]
        %v635 = vld [vmem:[%s390 + $0x32] sm:$0xff]
        %v636 = vld [vmem:[%s390 + $0x3a] sm:$0xff]
        %v637 = vld [vmem:[%s390 + $0x4a] sm:$0xff]
        %v638 = vld [vmem:[%s390 + $0x52] sm:$0xff]
        %v639 = vld [vmem:[%s390 + $0x62] sm:$0xff]
        %v640 = vld [vmem:[%s390 + $0x6a] sm:$0xff]
        %v641 = vld [vmem:[%s390 + $0x7a] sm:$0xff]
        %v642 = vld [vmem:[%s390 + $0x82] sm:$0xff]
        %v643 = vld [vmem:[%s390 + $0x92] sm:$0xff]
        %v644 = vld [vmem:[%s390 + $0x9a] sm:$0xff]
        %v645 = vld [vmem:[%s390 + $0xaa] sm:$0xff]
        %v646 = vld [vmem:[%s390 + $0xb2] sm:$0xff]
        %v647 = vld [vmem:[%s390 + $0xc2] sm:$0xff]
        %v648 = vld [vmem:[%s390 + $0xca] sm:$0xff]
        %v649 = vld [vmem:[%s390 + $0xda] sm:$0xff]
        %v650 = vld [vmem:[%s390 + $0xe2] sm:$0xff]
        %v651 = vld [vmem:[%s390 + $0xf2] sm:$0xff]
        %v652 = vld [vmem:[%s390 + $0xfa] sm:$0xff]
        %v653 = vld [vmem:[%s390 + $0x10a] sm:$0xff]
        %v654 = vld [vmem:[%s390 + $0x112] sm:$0xff]
        %v655 = vld [vmem:[%s390 + $0x122] sm:$0xff]
        %v656 = vld [vmem:[%s390 + $0x12a] sm:$0xff]
        %v657 = vld [vmem:[%s390 + $0x13a] sm:$0xff]
        %v658 = vld [vmem:[%s390 + $0x142] sm:$0xff]
        %v659 = vld [vmem:[%s390 + $0x152] sm:$0xff]
        %v660 = vld [vmem:[%s390 + $0x15a] sm:$0xff]
        %v661 = vld [vmem:[%s390 + $0x16a] sm:$0xff]
        %v662 = vld [vmem:[%s390 + $0x172] sm:$0xff]
        %v663 = vld [vmem:[#allocation7 + $0x180] sm:$0xff]
        %v664 = vld [vmem:[#allocation7 + $0x188] sm:$0xff]
        %v665 = vld [vmem:[#allocation7 + $0x190] sm:$0xff]
        %v666 = vld [vmem:[#allocation7 + $0x198] sm:$0xff]
        %v667 = vld [vmem:[#allocation7 + $0x1a0] sm:$0xff]
        %v668 = vld [vmem:[#allocation7 + $0x1a8] sm:$0xff]
        %v669 = vld [vmem:[#allocation7 + $0x1b0] sm:$0xff]
        %v670 = vld [vmem:[#allocation7 + $0x1b8] sm:$0xff]
        %v671 = vld [vmem:[#allocation7 + $0x1c0] sm:$0xff]
        %v672 = vld [vmem:[#allocation7 + $0x1c8] sm:$0xff]
        %v673 = vld [vmem:[#allocation7 + $0x1d0] sm:$0xff]
        %v674 = vld [vmem:[#allocation7 + $0x1d8] sm:$0xff]
        %v675 = vld [vmem:[#allocation7 + $0x1e0] sm:$0xff]
        %v676 = vld [vmem:[#allocation7 + $0x1e8] sm:$0xff]
        %v677 = vld [vmem:[#allocation7 + $0x1f0] sm:$0xff]
        %v678 = vld [vmem:[#allocation7 + $0x1f8] sm:$0xff]
        %v679 = vld [vmem:[#allocation7 + $0x200] sm:$0xff]
        %v680 = vld [vmem:[#allocation7 + $0x208] sm:$0xff]
        %v681 = vld [vmem:[#allocation7 + $0x210] sm:$0xff]
        %v682 = vld [vmem:[#allocation7 + $0x218] sm:$0xff]
        %v683 = vld [vmem:[#allocation7 + $0x220] sm:$0xff]
        %v684 = vld [vmem:[#allocation7 + $0x228] sm:$0xff]
        %v685 = vld [vmem:[#allocation7 + $0x230] sm:$0xff]
        %v686 = vld [vmem:[#allocation7 + $0x238] sm:$0xff]
        %v687 = vld [vmem:[#allocation7 + $0x240] sm:$0xff]
        %v688 = vld [vmem:[#allocation7 + $0x248] sm:$0xff]
        %v689 = vld [vmem:[#allocation7 + $0x250] sm:$0xff]
        %v690 = vld [vmem:[#allocation7 + $0x258] sm:$0xff]
        %v691 = vld [vmem:[#allocation7 + $0x260] sm:$0xff]
        %v692 = vld [vmem:[#allocation7 + $0x268] sm:$0xff]
        %v693 = vld [vmem:[#allocation7 + $0x270] sm:$0xff]
        %v694 = vld [vmem:[#allocation7 + $0x278] sm:$0xff]
        %v695 = vld [vmem:[#allocation7 + $0x280] sm:$0xff]
        %v696 = vld [vmem:[#allocation7 + $0x288] sm:$0xff]
        %v697 = vld [vmem:[#allocation7 + $0x290] sm:$0xff]
        %v698 = vld [vmem:[#allocation7 + $0x298] sm:$0xff]
        %v699 = vld [vmem:[#allocation7 + $0x2a0] sm:$0xff]
        %v700 = vld [vmem:[#allocation7 + $0x2a8] sm:$0xff]
        %v701 = vld [vmem:[#allocation7 + $0x2b0] sm:$0xff]
        %v702 = vld [vmem:[#allocation7 + $0x2b8] sm:$0xff]
        %v703 = vld [vmem:[#allocation7 + $0x2c0] sm:$0xff]
        %v704 = vld [vmem:[#allocation7 + $0x2c8] sm:$0xff]
        %v705 = vld [vmem:[#allocation7 + $0x2d0] sm:$0xff]
        %v706 = vld [vmem:[#allocation7 + $0x2d8] sm:$0xff]
        %v707 = vld [vmem:[#allocation7 + $0x2e0] sm:$0xff]
        %v708 = vld [vmem:[#allocation7 + $0x2e8] sm:$0xff]
        %v709 = vld [vmem:[#allocation7 + $0x2f0] sm:$0xff]
        %v710 = vld [vmem:[#allocation7 + $0x2f8] sm:$0xff]
        %711 = vmatprep.subr.mxu0 0.0
        %712 = vmatpush1.msra.mxu0 %v663
        %713 = vmatprep.subr.mxu0 0.0
        %714 = vmatpush1.msra.mxu0 %v664
        %715 = vmatprep.subr.mxu0 0.0
        %716 = vmatpush1.msra.mxu0 %v665
        %717 = vmatprep.subr.mxu0 0.0
        %718 = vmatpush1.msra.mxu0 %v666
        %719 = vmatprep.subr.mxu0 0.0
        %720 = vmatpush1.msra.mxu0 %v667
        %721 = vmatprep.subr.mxu0 0.0
        %722 = vmatpush1.msra.mxu0 %v668
        %723 = vmatprep.subr.mxu0 0.0
        %724 = vmatpush1.msra.mxu0 %v669
        %725 = vmatprep.subr.mxu0 0.0
        %726 = vmatpush1.msra.mxu0 %v670
        %727 = vmatprep.subr.mxu0 0.0
        %728 = vmatpush1.msra.mxu0 %v671
        %729 = vmatprep.subr.mxu0 0.0
        %730 = vmatpush1.msra.mxu0 %v672
        %731 = vmatprep.subr.mxu0 0.0
        %732 = vmatpush1.msra.mxu0 %v673
        %733 = vmatprep.subr.mxu0 0.0
        %734 = vmatpush1.msra.mxu0 %v674
        %735 = vmatprep.subr.mxu0 0.0
        %736 = vmatpush1.msra.mxu0 %v675
        %737 = vmatprep.subr.mxu0 0.0
        %738 = vmatpush1.msra.mxu0 %v676
        %739 = vmatprep.subr.mxu0 0.0
        %740 = vmatpush1.msra.mxu0 %v677
        %741 = vmatprep.subr.mxu0 0.0
        %742 = vmatpush1.msra.mxu0 %v678
        %743 = vmatprep.subr.mxu0 0.0
        %744 = vmatpush1.msra.mxu0 %v679
        %745 = vmatprep.subr.mxu0 0.0
        %746 = vmatpush1.msra.mxu0 %v680
        %747 = vmatprep.subr.mxu0 0.0
        %748 = vmatpush1.msra.mxu0 %v681
        %749 = vmatprep.subr.mxu0 0.0
        %750 = vmatpush1.msra.mxu0 %v682
        %751 = vmatprep.subr.mxu0 0.0
        %752 = vmatpush1.msra.mxu0 %v683
        %753 = vmatprep.subr.mxu0 0.0
        %754 = vmatpush1.msra.mxu0 %v684
        %755 = vmatprep.subr.mxu0 0.0
        %756 = vmatpush1.msra.mxu0 %v685
        %757 = vmatprep.subr.mxu0 0.0
        %758 = vmatpush1.msra.mxu0 %v686
        %759 = vmatprep.subr.mxu0 0.0
        %760 = vmatpush1.msra.mxu0 %v687
        %761 = vmatprep.subr.mxu0 0.0
        %762 = vmatpush1.msra.mxu0 %v688
        %763 = vmatprep.subr.mxu0 0.0
        %764 = vmatpush1.msra.mxu0 %v689
        %765 = vmatprep.subr.mxu0 0.0
        %766 = vmatpush1.msra.mxu0 %v690
        %767 = vmatprep.subr.mxu0 0.0
        %768 = vmatpush1.msra.mxu0 %v691
        %769 = vmatprep.subr.mxu0 0.0
        %770 = vmatpush1.msra.mxu0 %v692
        %771 = vmatprep.subr.mxu0 0.0
        %772 = vmatpush1.msra.mxu0 %v693
        %773 = vmatprep.subr.mxu0 0.0
        %774 = vmatpush1.msra.mxu0 %v694
        %775 = vmatprep.mubr.f32.mxu0 %v599
        %776 = vmatmul.mubr.f32.gmra.mrb[0].mxu0 %v567
        %v777 = vpop.f32.mrb[0].mxu0
        %v778 = vadd.f32 0.0, %v777
        %v779 = vpop.f32.mrb[0].mxu0
        %780 = vmatprep.mubr.f32.mxu0 %v600
        %781 = vmatmul.mubr.f32.gmra.mrb[0].mxu0 %v568
        %v782 = vpop.f32.mrb[0].mxu0
        %v783 = vadd.f32 0.0, %v782
        %v784 = vpop.f32.mrb[0].mxu0
        %785 = vmatprep.mubr.f32.mxu0 %v601
        %786 = vmatmul.mubr.f32.gmra.mrb[0].mxu0 %v569
        %v787 = vpop.f32.mrb[0].mxu0
        %v788 = vadd.f32 0.0, %v787
        %v789 = vpop.f32.mrb[0].mxu0
        %790 = vmatprep.mubr.f32.mxu0 %v602
        %791 = vmatmul.mubr.f32.gmra.mrb[0].mxu0 %v570
        %v792 = vpop.f32.mrb[0].mxu0
        %v793 = vadd.f32 0.0, %v792
        %v794 = vpop.f32.mrb[0].mxu0
        %795 = vmatprep.mubr.f32.mxu0 %v603
        %796 = vmatmul.mubr.f32.gmra.mrb[0].mxu0 %v571
        %v797 = vpop.f32.mrb[0].mxu0
        %v798 = vadd.f32 0.0, %v797
        %v799 = vpop.f32.mrb[0].mxu0
        %800 = vmatprep.mubr.f32.mxu0 %v604
        %801 = vmatmul.mubr.f32.gmra.mrb[0].mxu0 %v572
        %v802 = vpop.f32.mrb[0].mxu0
        %v803 = vadd.f32 0.0, %v802
        %v804 = vpop.f32.mrb[0].mxu0
        %805 = vmatprep.mubr.f32.mxu0 %v605
        %806 = vmatmul.mubr.f32.gmra.mrb[0].mxu0 %v573
        %v807 = vpop.f32.mrb[0].mxu0
        %v808 = vadd.f32 0.0, %v807
        %v809 = vpop.f32.mrb[0].mxu0
        %810 = vmatprep.mubr.f32.mxu0 %v606
        %811 = vmatmul.mubr.f32.gmra.mrb[0].mxu0 %v574
        %v812 = vpop.f32.mrb[0].mxu0
        %v813 = vadd.f32 0.0, %v812
        %v814 = vpop.f32.mrb[0].mxu0
        %815 = vmatprep.mubr.f32.mxu0 %v607
        %816 = vmatmul.mubr.f32.gmra.mrb[0].mxu0 %v575
        %v817 = vpop.f32.mrb[0].mxu0
        %v818 = vadd.f32 0.0, %v817
        %v819 = vpop.f32.mrb[0].mxu0
        %820 = vmatprep.mubr.f32.mxu0 %v608
        %821 = vmatmul.mubr.f32.gmra.mrb[0].mxu0 %v576
        %v822 = vpop.f32.mrb[0].mxu0
        %v823 = vadd.f32 0.0, %v822
        %v824 = vpop.f32.mrb[0].mxu0
        %825 = vmatprep.mubr.f32.mxu0 %v609
        %826 = vmatmul.mubr.f32.gmra.mrb[0].mxu0 %v577
        %v827 = vpop.f32.mrb[0].mxu0
        %v828 = vadd.f32 0.0, %v827
        %v829 = vpop.f32.mrb[0].mxu0
        %830 = vmatprep.mubr.f32.mxu0 %v610
        %831 = vmatmul.mubr.f32.gmra.mrb[0].mxu0 %v578
        %v832 = vpop.f32.mrb[0].mxu0
        %v833 = vadd.f32 0.0, %v832
        %v834 = vpop.f32.mrb[0].mxu0
        %835 = vmatprep.mubr.f32.mxu0 %v611
        %836 = vmatmul.mubr.f32.gmra.mrb[0].mxu0 %v579
        %v837 = vpop.f32.mrb[0].mxu0
        %v838 = vadd.f32 0.0, %v837
        %v839 = vpop.f32.mrb[0].mxu0
        %840 = vmatprep.mubr.f32.mxu0 %v612
        %841 = vmatmul.mubr.f32.gmra.mrb[0].mxu0 %v580
        %v842 = vpop.f32.mrb[0].mxu0
        %v843 = vadd.f32 0.0, %v842
        %v844 = vpop.f32.mrb[0].mxu0
        %845 = vmatprep.mubr.f32.mxu0 %v613
        %846 = vmatmul.mubr.f32.gmra.mrb[0].mxu0 %v581
        %v847 = vpop.f32.mrb[0].mxu0
        %v848 = vadd.f32 0.0, %v847
        %v849 = vpop.f32.mrb[0].mxu0
        %850 = vmatprep.mubr.f32.mxu0 %v614
        %851 = vmatmul.mubr.f32.gmra.mrb[0].mxu0 %v582
        %v852 = vpop.f32.mrb[0].mxu0
        %v853 = vadd.f32 0.0, %v852
        %v854 = vpop.f32.mrb[0].mxu0
        %855 = vmatprep.mubr.f32.mxu0 %v615
        %856 = vmatmul.mubr.f32.gmra.mrb[0].mxu0 %v583
        %v857 = vpop.f32.mrb[0].mxu0
        %v858 = vadd.f32 0.0, %v857
        %v859 = vpop.f32.mrb[0].mxu0
        %860 = vmatprep.mubr.f32.mxu0 %v616
        %861 = vmatmul.mubr.f32.gmra.mrb[0].mxu0 %v584
        %v862 = vpop.f32.mrb[0].mxu0
        %v863 = vadd.f32 0.0, %v862
        %v864 = vpop.f32.mrb[0].mxu0
        %865 = vmatprep.mubr.f32.mxu0 %v617
        %866 = vmatmul.mubr.f32.gmra.mrb[0].mxu0 %v585
        %v867 = vpop.f32.mrb[0].mxu0
        %v868 = vadd.f32 0.0, %v867
        %v869 = vpop.f32.mrb[0].mxu0
        %870 = vmatprep.mubr.f32.mxu0 %v618
        %871 = vmatmul.mubr.f32.gmra.mrb[0].mxu0 %v586
        %v872 = vpop.f32.mrb[0].mxu0
        %v873 = vadd.f32 0.0, %v872
        %v874 = vpop.f32.mrb[0].mxu0
        %875 = vmatprep.mubr.f32.mxu0 %v619
        %876 = vmatmul.mubr.f32.gmra.mrb[0].mxu0 %v587
        %v877 = vpop.f32.mrb[0].mxu0
        %v878 = vadd.f32 0.0, %v877
        %v879 = vpop.f32.mrb[0].mxu0
        %880 = vmatprep.mubr.f32.mxu0 %v620
        %881 = vmatmul.mubr.f32.gmra.mrb[0].mxu0 %v588
        %v882 = vpop.f32.mrb[0].mxu0
        %v883 = vadd.f32 0.0, %v882
        %v884 = vpop.f32.mrb[0].mxu0
        %885 = vmatprep.mubr.f32.mxu0 %v621
        %886 = vmatmul.mubr.f32.gmra.mrb[0].mxu0 %v589
        %v887 = vpop.f32.mrb[0].mxu0
        %v888 = vadd.f32 0.0, %v887
        %v889 = vpop.f32.mrb[0].mxu0
        %890 = vmatprep.mubr.f32.mxu0 %v622
        %891 = vmatmul.mubr.f32.gmra.mrb[0].mxu0 %v590
        %v892 = vpop.f32.mrb[0].mxu0
        %v893 = vadd.f32 0.0, %v892
        %v894 = vpop.f32.mrb[0].mxu0
        %895 = vmatprep.mubr.f32.mxu0 %v623
        %896 = vmatmul.mubr.f32.gmra.mrb[0].mxu0 %v591
        %v897 = vpop.f32.mrb[0].mxu0
        %v898 = vadd.f32 0.0, %v897
        %v899 = vpop.f32.mrb[0].mxu0
        %900 = vmatprep.mubr.f32.mxu0 %v624
        %901 = vmatmul.mubr.f32.gmra.mrb[0].mxu0 %v592
        %v902 = vpop.f32.mrb[0].mxu0
        %v903 = vadd.f32 0.0, %v902
        %v904 = vpop.f32.mrb[0].mxu0
        %905 = vmatprep.mubr.f32.mxu0 %v625
        %906 = vmatmul.mubr.f32.gmra.mrb[0].mxu0 %v593
        %v907 = vpop.f32.mrb[0].mxu0
        %v908 = vadd.f32 0.0, %v907
        %v909 = vpop.f32.mrb[0].mxu0
        %910 = vmatprep.mubr.f32.mxu0 %v626
        %911 = vmatmul.mubr.f32.gmra.mrb[0].mxu0 %v594
        %v912 = vpop.f32.mrb[0].mxu0
        %v913 = vadd.f32 0.0, %v912
        %v914 = vpop.f32.mrb[0].mxu0
        %915 = vmatprep.mubr.f32.mxu0 %v627
        %916 = vmatmul.mubr.f32.gmra.mrb[0].mxu0 %v595
        %v917 = vpop.f32.mrb[0].mxu0
        %v918 = vadd.f32 0.0, %v917
        %v919 = vpop.f32.mrb[0].mxu0
        %920 = vmatprep.mubr.f32.mxu0 %v628
        %921 = vmatmul.mubr.f32.gmra.mrb[0].mxu0 %v596
        %v922 = vpop.f32.mrb[0].mxu0
        %v923 = vadd.f32 0.0, %v922
        %v924 = vpop.f32.mrb[0].mxu0
        %925 = vmatprep.mubr.f32.mxu0 %v629
        %926 = vmatmul.mubr.f32.gmra.mrb[0].mxu0 %v597
        %v927 = vpop.f32.mrb[0].mxu0
        %v928 = vadd.f32 0.0, %v927
        %v929 = vpop.f32.mrb[0].mxu0
        %930 = vmatprep.mubr.f32.mxu0 %v630
        %931 = vmatmul.mubr.f32.gmra.mrb[0].mxu0 %v598
        %v932 = vpop.f32.mrb[0].mxu0
        %v933 = vadd.f32 0.0, %v932
        %v934 = vpop.f32.mrb[0].mxu0
        %935 = vdwg.mxu0
        %936 = vmatprep.subr.mxu0 0.0
        %937 = vmatpush1.msra.mxu0 %v695
        %938 = vmatprep.subr.mxu0 0.0
        %939 = vmatpush1.msra.mxu0 %v696
        %940 = vmatprep.subr.mxu0 0.0
        %941 = vmatpush1.msra.mxu0 %v697
        %942 = vmatprep.subr.mxu0 0.0
        %943 = vmatpush1.msra.mxu0 %v698
        %944 = vmatprep.subr.mxu0 0.0
        %945 = vmatpush1.msra.mxu0 %v699
        %946 = vmatprep.subr.mxu0 0.0
        %947 = vmatpush1.msra.mxu0 %v700
        %948 = vmatprep.subr.mxu0 0.0
        %949 = vmatpush1.msra.mxu0 %v701
        %950 = vmatprep.subr.mxu0 0.0
        %951 = vmatpush1.msra.mxu0 %v702
        %952 = vmatprep.subr.mxu0 0.0
        %953 = vmatpush1.msra.mxu0 %v703
        %954 = vmatprep.subr.mxu0 0.0
        %955 = vmatpush1.msra.mxu0 %v704
        %956 = vmatprep.subr.mxu0 0.0
        %957 = vmatpush1.msra.mxu0 %v705
        %958 = vmatprep.subr.mxu0 0.0
        %959 = vmatpush1.msra.mxu0 %v706
        %960 = vmatprep.subr.mxu0 0.0
        %961 = vmatpush1.msra.mxu0 %v707
        %962 = vmatprep.subr.mxu0 0.0
        %963 = vmatpush1.msra.mxu0 %v708
        %964 = vmatprep.subr.mxu0 0.0
        %965 = vmatpush1.msra.mxu0 %v709
        %966 = vmatprep.subr.mxu0 0.0
        %967 = vmatpush1.msra.mxu0 %v710
        %968 = vmatprep.subr.mxu0 0.0
        %969 = vmatpush1.msra.mxu0 0.0
        %970 = vmatprep.subr.mxu0 0.0
        %971 = vmatpush1.msra.mxu0 0.0
        %972 = vmatprep.subr.mxu0 0.0
        %973 = vmatpush1.msra.mxu0 0.0
        %974 = vmatprep.subr.mxu0 0.0
        %975 = vmatpush1.msra.mxu0 0.0
        %976 = vmatprep.subr.mxu0 0.0
        %977 = vmatpush1.msra.mxu0 0.0
        %978 = vmatprep.subr.mxu0 0.0
        %979 = vmatpush1.msra.mxu0 0.0
        %980 = vmatprep.subr.mxu0 0.0
        %981 = vmatpush1.msra.mxu0 0.0
        %982 = vmatprep.subr.mxu0 0.0
        %983 = vmatpush1.msra.mxu0 0.0
        %984 = vmatprep.subr.mxu0 0.0
        %985 = vmatpush1.msra.mxu0 0.0
        %986 = vmatprep.subr.mxu0 0.0
        %987 = vmatpush1.msra.mxu0 0.0
        %988 = vmatprep.subr.mxu0 0.0
        %989 = vmatpush1.msra.mxu0 0.0
        %990 = vmatprep.subr.mxu0 0.0
        %991 = vmatpush1.msra.mxu0 0.0
        %992 = vmatprep.subr.mxu0 0.0
        %993 = vmatpush1.msra.mxu0 0.0
        %994 = vmatprep.subr.mxu0 0.0
        %995 = vmatpush1.msra.mxu0 0.0
        %996 = vmatprep.subr.mxu0 0.0
        %997 = vmatpush1.msra.mxu0 0.0
        %998 = vmatprep.subr.mxu0 0.0
        %999 = vmatpush1.msra.mxu0 0.0
        %1000 = vmatprep.mubr.f32.mxu0 0.0
        %1001 = vmatmul.mubr.f32.gmra.mrb[0].mxu0 %v631
        %v1002 = vpop.f32.mrb[0].mxu0
        %v1003 = vadd.f32 %v778, %v1002
        %v1004 = vpop.f32.mrb[0].mxu0
        %1005 = vmatprep.mubr.f32.mxu0 0.0
        %1006 = vmatmul.mubr.f32.gmra.mrb[0].mxu0 %v632
        %v1007 = vpop.f32.mrb[0].mxu0
        %v1008 = vadd.f32 %v783, %v1007
        %v1009 = vpop.f32.mrb[0].mxu0
        %1010 = vmatprep.mubr.f32.mxu0 0.0
        %1011 = vmatmul.mubr.f32.gmra.mrb[0].mxu0 %v633
        %v1012 = vpop.f32.mrb[0].mxu0
        %v1013 = vadd.f32 %v788, %v1012
        %v1014 = vpop.f32.mrb[0].mxu0
        %1015 = vmatprep.mubr.f32.mxu0 0.0
        %1016 = vmatmul.mubr.f32.gmra.mrb[0].mxu0 %v634
        %v1017 = vpop.f32.mrb[0].mxu0
        %v1018 = vadd.f32 %v793, %v1017
        %v1019 = vpop.f32.mrb[0].mxu0
        %1020 = vmatprep.mubr.f32.mxu0 0.0
        %1021 = vmatmul.mubr.f32.gmra.mrb[0].mxu0 %v635
        %v1022 = vpop.f32.mrb[0].mxu0
        %v1023 = vadd.f32 %v798, %v1022
        %v1024 = vpop.f32.mrb[0].mxu0
        %1025 = vmatprep.mubr.f32.mxu0 0.0
        %1026 = vmatmul.mubr.f32.gmra.mrb[0].mxu0 %v636
        %v1027 = vpop.f32.mrb[0].mxu0
        %v1028 = vadd.f32 %v803, %v1027
        %v1029 = vpop.f32.mrb[0].mxu0
        %1030 = vmatprep.mubr.f32.mxu0 0.0
        %1031 = vmatmul.mubr.f32.gmra.mrb[0].mxu0 %v637
        %v1032 = vpop.f32.mrb[0].mxu0
        %v1033 = vadd.f32 %v808, %v1032
        %v1034 = vpop.f32.mrb[0].mxu0
        %1035 = vmatprep.mubr.f32.mxu0 0.0
        %1036 = vmatmul.mubr.f32.gmra.mrb[0].mxu0 %v638
        %v1037 = vpop.f32.mrb[0].mxu0
        %v1038 = vadd.f32 %v813, %v1037
        %v1039 = vpop.f32.mrb[0].mxu0
        %1040 = vmatprep.mubr.f32.mxu0 0.0
        %1041 = vmatmul.mubr.f32.gmra.mrb[0].mxu0 %v639
        %v1042 = vpop.f32.mrb[0].mxu0
        %v1043 = vadd.f32 %v818, %v1042
        %v1044 = vpop.f32.mrb[0].mxu0
        %1045 = vmatprep.mubr.f32.mxu0 0.0
        %1046 = vmatmul.mubr.f32.gmra.mrb[0].mxu0 %v640
        %v1047 = vpop.f32.mrb[0].mxu0
        %v1048 = vadd.f32 %v823, %v1047
        %v1049 = vpop.f32.mrb[0].mxu0
        %1050 = vmatprep.mubr.f32.mxu0 0.0
        %1051 = vmatmul.mubr.f32.gmra.mrb[0].mxu0 %v641
        %v1052 = vpop.f32.mrb[0].mxu0
        %v1053 = vadd.f32 %v828, %v1052
        %v1054 = vpop.f32.mrb[0].mxu0
        %1055 = vmatprep.mubr.f32.mxu0 0.0
        %1056 = vmatmul.mubr.f32.gmra.mrb[0].mxu0 %v642
        %v1057 = vpop.f32.mrb[0].mxu0
        %v1058 = vadd.f32 %v833, %v1057
        %v1059 = vpop.f32.mrb[0].mxu0
        %1060 = vmatprep.mubr.f32.mxu0 0.0
        %1061 = vmatmul.mubr.f32.gmra.mrb[0].mxu0 %v643
        %v1062 = vpop.f32.mrb[0].mxu0
        %v1063 = vadd.f32 %v838, %v1062
        %v1064 = vpop.f32.mrb[0].mxu0
        %1065 = vmatprep.mubr.f32.mxu0 0.0
        %1066 = vmatmul.mubr.f32.gmra.mrb[0].mxu0 %v644
        %v1067 = vpop.f32.mrb[0].mxu0
        %v1068 = vadd.f32 %v843, %v1067
        %v1069 = vpop.f32.mrb[0].mxu0
        %1070 = vmatprep.mubr.f32.mxu0 0.0
        %1071 = vmatmul.mubr.f32.gmra.mrb[0].mxu0 %v645
        %v1072 = vpop.f32.mrb[0].mxu0
        %v1073 = vadd.f32 %v848, %v1072
        %v1074 = vpop.f32.mrb[0].mxu0
        %1075 = vmatprep.mubr.f32.mxu0 0.0
        %1076 = vmatmul.mubr.f32.gmra.mrb[0].mxu0 %v646
        %v1077 = vpop.f32.mrb[0].mxu0
        %v1078 = vadd.f32 %v853, %v1077
        %v1079 = vpop.f32.mrb[0].mxu0
        %1080 = vmatprep.mubr.f32.mxu0 0.0
        %1081 = vmatmul.mubr.f32.gmra.mrb[0].mxu0 %v647
        %v1082 = vpop.f32.mrb[0].mxu0
        %v1083 = vadd.f32 %v858, %v1082
        %v1084 = vpop.f32.mrb[0].mxu0
        %1085 = vmatprep.mubr.f32.mxu0 0.0
        %1086 = vmatmul.mubr.f32.gmra.mrb[0].mxu0 %v648
        %v1087 = vpop.f32.mrb[0].mxu0
        %v1088 = vadd.f32 %v863, %v1087
        %v1089 = vpop.f32.mrb[0].mxu0
        %1090 = vmatprep.mubr.f32.mxu0 0.0
        %1091 = vmatmul.mubr.f32.gmra.mrb[0].mxu0 %v649
        %v1092 = vpop.f32.mrb[0].mxu0
        %v1093 = vadd.f32 %v868, %v1092
        %v1094 = vpop.f32.mrb[0].mxu0
        %1095 = vmatprep.mubr.f32.mxu0 0.0
        %1096 = vmatmul.mubr.f32.gmra.mrb[0].mxu0 %v650
        %v1097 = vpop.f32.mrb[0].mxu0
        %v1098 = vadd.f32 %v873, %v1097
        %v1099 = vpop.f32.mrb[0].mxu0
        %1100 = vmatprep.mubr.f32.mxu0 0.0
        %1101 = vmatmul.mubr.f32.gmra.mrb[0].mxu0 %v651
        %v1102 = vpop.f32.mrb[0].mxu0
        %v1103 = vadd.f32 %v878, %v1102
        %v1104 = vpop.f32.mrb[0].mxu0
        %1105 = vmatprep.mubr.f32.mxu0 0.0
        %1106 = vmatmul.mubr.f32.gmra.mrb[0].mxu0 %v652
        %v1107 = vpop.f32.mrb[0].mxu0
        %v1108 = vadd.f32 %v883, %v1107
        %v1109 = vpop.f32.mrb[0].mxu0
        %1110 = vmatprep.mubr.f32.mxu0 0.0
        %1111 = vmatmul.mubr.f32.gmra.mrb[0].mxu0 %v653
        %v1112 = vpop.f32.mrb[0].mxu0
        %v1113 = vadd.f32 %v888, %v1112
        %v1114 = vpop.f32.mrb[0].mxu0
        %1115 = vmatprep.mubr.f32.mxu0 0.0
        %1116 = vmatmul.mubr.f32.gmra.mrb[0].mxu0 %v654
        %v1117 = vpop.f32.mrb[0].mxu0
        %v1118 = vadd.f32 %v893, %v1117
        %v1119 = vpop.f32.mrb[0].mxu0
        %1120 = vmatprep.mubr.f32.mxu0 0.0
        %1121 = vmatmul.mubr.f32.gmra.mrb[0].mxu0 %v655
        %v1122 = vpop.f32.mrb[0].mxu0
        %v1123 = vadd.f32 %v898, %v1122
        %v1124 = vpop.f32.mrb[0].mxu0
        %1125 = vmatprep.mubr.f32.mxu0 0.0
        %1126 = vmatmul.mubr.f32.gmra.mrb[0].mxu0 %v656
        %v1127 = vpop.f32.mrb[0].mxu0
        %v1128 = vadd.f32 %v903, %v1127
        %v1129 = vpop.f32.mrb[0].mxu0
        %1130 = vmatprep.mubr.f32.mxu0 0.0
        %1131 = vmatmul.mubr.f32.gmra.mrb[0].mxu0 %v657
        %v1132 = vpop.f32.mrb[0].mxu0
        %v1133 = vadd.f32 %v908, %v1132
        %v1134 = vpop.f32.mrb[0].mxu0
        %1135 = vmatprep.mubr.f32.mxu0 0.0
        %1136 = vmatmul.mubr.f32.gmra.mrb[0].mxu0 %v658
        %v1137 = vpop.f32.mrb[0].mxu0
        %v1138 = vadd.f32 %v913, %v1137
        %v1139 = vpop.f32.mrb[0].mxu0
        %1140 = vmatprep.mubr.f32.mxu0 0.0
        %1141 = vmatmul.mubr.f32.gmra.mrb[0].mxu0 %v659
        %v1142 = vpop.f32.mrb[0].mxu0
        %v1143 = vadd.f32 %v918, %v1142
        %v1144 = vpop.f32.mrb[0].mxu0
        %1145 = vmatprep.mubr.f32.mxu0 0.0
        %1146 = vmatmul.mubr.f32.gmra.mrb[0].mxu0 %v660
        %v1147 = vpop.f32.mrb[0].mxu0
        %v1148 = vadd.f32 %v923, %v1147
        %v1149 = vpop.f32.mrb[0].mxu0
        %1150 = vmatprep.mubr.f32.mxu0 0.0
        %1151 = vmatmul.mubr.f32.gmra.mrb[0].mxu0 %v661
        %v1152 = vpop.f32.mrb[0].mxu0
        %v1153 = vadd.f32 %v928, %v1152
        %v1154 = vpop.f32.mrb[0].mxu0
        %1155 = vmatprep.mubr.f32.mxu0 0.0
        %1156 = vmatmul.mubr.f32.gmra.mrb[0].mxu0 %v662
        %v1157 = vpop.f32.mrb[0].mxu0
        %v1158 = vadd.f32 %v933, %v1157
        %v1159 = vpop.f32.mrb[0].mxu0
        %1160 = vdwg.mxu0
        %1161 = vmatprep.subr.mxu0 0.0
        %1162 = vmatpush1.msra.mxu0 %v519
        %1163 = vmatprep.subr.mxu0 0.0
        %1164 = vmatpush1.msra.mxu0 %v520
        %1165 = vmatprep.subr.mxu0 0.0
        %1166 = vmatpush1.msra.mxu0 %v521
        %1167 = vmatprep.subr.mxu0 0.0
        %1168 = vmatpush1.msra.mxu0 %v522
        %1169 = vmatprep.subr.mxu0 0.0
        %1170 = vmatpush1.msra.mxu0 %v523
        %1171 = vmatprep.subr.mxu0 0.0
        %1172 = vmatpush1.msra.mxu0 %v524
        %1173 = vmatprep.subr.mxu0 0.0
        %1174 = vmatpush1.msra.mxu0 %v525
        %1175 = vmatprep.subr.mxu0 0.0
        %1176 = vmatpush1.msra.mxu0 %v526
        %1177 = vmatprep.subr.mxu0 0.0
        %1178 = vmatpush1.msra.mxu0 %v527
        %1179 = vmatprep.subr.mxu0 0.0
        %1180 = vmatpush1.msra.mxu0 %v528
        %1181 = vmatprep.subr.mxu0 0.0
        %1182 = vmatpush1.msra.mxu0 %v529
        %1183 = vmatprep.subr.mxu0 0.0
        %1184 = vmatpush1.msra.mxu0 %v530
        %1185 = vmatprep.subr.mxu0 0.0
        %1186 = vmatpush1.msra.mxu0 %v531
        %1187 = vmatprep.subr.mxu0 0.0
        %1188 = vmatpush1.msra.mxu0 %v532
        %1189 = vmatprep.subr.mxu0 0.0
        %1190 = vmatpush1.msra.mxu0 %v533
        %1191 = vmatprep.subr.mxu0 0.0
        %1192 = vmatpush1.msra.mxu0 %v534
        %1193 = vmatprep.subr.mxu0 0.0
        %1194 = vmatpush1.msra.mxu0 %v535
        %1195 = vmatprep.subr.mxu0 0.0
        %1196 = vmatpush1.msra.mxu0 %v536
        %1197 = vmatprep.subr.mxu0 0.0
        %1198 = vmatpush1.msra.mxu0 %v537
        %1199 = vmatprep.subr.mxu0 0.0
        %1200 = vmatpush1.msra.mxu0 %v538
        %1201 = vmatprep.subr.mxu0 0.0
        %1202 = vmatpush1.msra.mxu0 %v539
        %1203 = vmatprep.subr.mxu0 0.0
        %1204 = vmatpush1.msra.mxu0 %v540
        %1205 = vmatprep.subr.mxu0 0.0
        %1206 = vmatpush1.msra.mxu0 %v541
        %1207 = vmatprep.subr.mxu0 0.0
        %1208 = vmatpush1.msra.mxu0 %v542
        %1209 = vmatprep.subr.mxu0 0.0
        %1210 = vmatpush1.msra.mxu0 %v543
        %1211 = vmatprep.subr.mxu0 0.0
        %1212 = vmatpush1.msra.mxu0 %v544
        %1213 = vmatprep.subr.mxu0 0.0
        %1214 = vmatpush1.msra.mxu0 %v545
        %1215 = vmatprep.subr.mxu0 0.0
        %1216 = vmatpush1.msra.mxu0 %v546
        %1217 = vmatprep.subr.mxu0 0.0
        %1218 = vmatpush1.msra.mxu0 %v547
        %1219 = vmatprep.subr.mxu0 0.0
        %1220 = vmatpush1.msra.mxu0 %v548
        %1221 = vmatprep.subr.mxu0 0.0
        %1222 = vmatpush1.msra.mxu0 %v549
        %1223 = vmatprep.subr.mxu0 0.0
        %1224 = vmatpush1.msra.mxu0 %v550
        %1225 = vmatprep.mubr.f32.mxu0 %v455
        %1226 = vmatmul.mubr.f32.gmra.mrb[0].mxu0 %v423
        %v1227 = vpop.f32.mrb[0].mxu0
        %v1228 = vadd.f32 %v1003, %v1227
        %v1229 = vpop.f32.mrb[0].mxu0
        %1230 = vmatprep.mubr.f32.mxu0 %v456
        %1231 = vmatmul.mubr.f32.gmra.mrb[0].mxu0 %v424
        %v1232 = vpop.f32.mrb[0].mxu0
        %v1233 = vadd.f32 %v1008, %v1232
        %v1234 = vpop.f32.mrb[0].mxu0
        %1235 = vmatprep.mubr.f32.mxu0 %v457
        %1236 = vmatmul.mubr.f32.gmra.mrb[0].mxu0 %v425
        %v1237 = vpop.f32.mrb[0].mxu0
        %v1238 = vadd.f32 %v1013, %v1237
        %v1239 = vpop.f32.mrb[0].mxu0
        %1240 = vmatprep.mubr.f32.mxu0 %v458
        %1241 = vmatmul.mubr.f32.gmra.mrb[0].mxu0 %v426
        %v1242 = vpop.f32.mrb[0].mxu0
        %v1243 = vadd.f32 %v1018, %v1242
        %v1244 = vpop.f32.mrb[0].mxu0
        %1245 = vmatprep.mubr.f32.mxu0 %v459
        %1246 = vmatmul.mubr.f32.gmra.mrb[0].mxu0 %v427
        %v1247 = vpop.f32.mrb[0].mxu0
        %v1248 = vadd.f32 %v1023, %v1247
        %v1249 = vpop.f32.mrb[0].mxu0
        %1250 = vmatprep.mubr.f32.mxu0 %v460
        %1251 = vmatmul.mubr.f32.gmra.mrb[0].mxu0 %v428
        %v1252 = vpop.f32.mrb[0].mxu0
        %v1253 = vadd.f32 %v1028, %v1252
        %v1254 = vpop.f32.mrb[0].mxu0
        %1255 = vmatprep.mubr.f32.mxu0 %v461
        %1256 = vmatmul.mubr.f32.gmra.mrb[0].mxu0 %v429
        %v1257 = vpop.f32.mrb[0].mxu0
        %v1258 = vadd.f32 %v1033, %v1257
        %v1259 = vpop.f32.mrb[0].mxu0
        %1260 = vmatprep.mubr.f32.mxu0 %v462
        %1261 = vmatmul.mubr.f32.gmra.mrb[0].mxu0 %v430
        %v1262 = vpop.f32.mrb[0].mxu0
        %v1263 = vadd.f32 %v1038, %v1262
        %v1264 = vpop.f32.mrb[0].mxu0
        %1265 = vmatprep.mubr.f32.mxu0 %v463
        %1266 = vmatmul.mubr.f32.gmra.mrb[0].mxu0 %v431
        %v1267 = vpop.f32.mrb[0].mxu0
        %v1268 = vadd.f32 %v1043, %v1267
        %v1269 = vpop.f32.mrb[0].mxu0
        %1270 = vmatprep.mubr.f32.mxu0 %v464
        %1271 = vmatmul.mubr.f32.gmra.mrb[0].mxu0 %v432
        %v1272 = vpop.f32.mrb[0].mxu0
        %v1273 = vadd.f32 %v1048, %v1272
        %v1274 = vpop.f32.mrb[0].mxu0
        %1275 = vmatprep.mubr.f32.mxu0 %v465
        %1276 = vmatmul.mubr.f32.gmra.mrb[0].mxu0 %v433
        %v1277 = vpop.f32.mrb[0].mxu0
        %v1278 = vadd.f32 %v1053, %v1277
        %v1279 = vpop.f32.mrb[0].mxu0
        %1280 = vmatprep.mubr.f32.mxu0 %v466
        %1281 = vmatmul.mubr.f32.gmra.mrb[0].mxu0 %v434
        %v1282 = vpop.f32.mrb[0].mxu0
        %v1283 = vadd.f32 %v1058, %v1282
        %v1284 = vpop.f32.mrb[0].mxu0
        %1285 = vmatprep.mubr.f32.mxu0 %v467
        %1286 = vmatmul.mubr.f32.gmra.mrb[0].mxu0 %v435
        %v1287 = vpop.f32.mrb[0].mxu0
        %v1288 = vadd.f32 %v1063, %v1287
        %v1289 = vpop.f32.mrb[0].mxu0
        %1290 = vmatprep.mubr.f32.mxu0 %v468
        %1291 = vmatmul.mubr.f32.gmra.mrb[0].mxu0 %v436
        %v1292 = vpop.f32.mrb[0].mxu0
        %v1293 = vadd.f32 %v1068, %v1292
        %v1294 = vpop.f32.mrb[0].mxu0
        %1295 = vmatprep.mubr.f32.mxu0 %v469
        %1296 = vmatmul.mubr.f32.gmra.mrb[0].mxu0 %v437
        %v1297 = vpop.f32.mrb[0].mxu0
        %v1298 = vadd.f32 %v1073, %v1297
        %v1299 = vpop.f32.mrb[0].mxu0
        %1300 = vmatprep.mubr.f32.mxu0 %v470
        %1301 = vmatmul.mubr.f32.gmra.mrb[0].mxu0 %v438
        %v1302 = vpop.f32.mrb[0].mxu0
        %v1303 = vadd.f32 %v1078, %v1302
        %v1304 = vpop.f32.mrb[0].mxu0
        %1305 = vmatprep.mubr.f32.mxu0 %v471
        %1306 = vmatmul.mubr.f32.gmra.mrb[0].mxu0 %v439
        %v1307 = vpop.f32.mrb[0].mxu0
        %v1308 = vadd.f32 %v1083, %v1307
        %v1309 = vpop.f32.mrb[0].mxu0
        %1310 = vmatprep.mubr.f32.mxu0 %v472
        %1311 = vmatmul.mubr.f32.gmra.mrb[0].mxu0 %v440
        %v1312 = vpop.f32.mrb[0].mxu0
        %v1313 = vadd.f32 %v1088, %v1312
        %v1314 = vpop.f32.mrb[0].mxu0
        %1315 = vmatprep.mubr.f32.mxu0 %v473
        %1316 = vmatmul.mubr.f32.gmra.mrb[0].mxu0 %v441
        %v1317 = vpop.f32.mrb[0].mxu0
        %v1318 = vadd.f32 %v1093, %v1317
        %v1319 = vpop.f32.mrb[0].mxu0
        %1320 = vmatprep.mubr.f32.mxu0 %v474
        %1321 = vmatmul.mubr.f32.gmra.mrb[0].mxu0 %v442
        %v1322 = vpop.f32.mrb[0].mxu0
        %v1323 = vadd.f32 %v1098, %v1322
        %v1324 = vpop.f32.mrb[0].mxu0
        %1325 = vmatprep.mubr.f32.mxu0 %v475
        %1326 = vmatmul.mubr.f32.gmra.mrb[0].mxu0 %v443
        %v1327 = vpop.f32.mrb[0].mxu0
        %v1328 = vadd.f32 %v1103, %v1327
        %v1329 = vpop.f32.mrb[0].mxu0
        %1330 = vmatprep.mubr.f32.mxu0 %v476
        %1331 = vmatmul.mubr.f32.gmra.mrb[0].mxu0 %v444
        %v1332 = vpop.f32.mrb[0].mxu0
        %v1333 = vadd.f32 %v1108, %v1332
        %v1334 = vpop.f32.mrb[0].mxu0
        %1335 = vmatprep.mubr.f32.mxu0 %v477
        %1336 = vmatmul.mubr.f32.gmra.mrb[0].mxu0 %v445
        %v1337 = vpop.f32.mrb[0].mxu0
        %v1338 = vadd.f32 %v1113, %v1337
        %v1339 = vpop.f32.mrb[0].mxu0
        %1340 = vmatprep.mubr.f32.mxu0 %v478
        %1341 = vmatmul.mubr.f32.gmra.mrb[0].mxu0 %v446
        %v1342 = vpop.f32.mrb[0].mxu0
        %v1343 = vadd.f32 %v1118, %v1342
        %v1344 = vpop.f32.mrb[0].mxu0
        %1345 = vmatprep.mubr.f32.mxu0 %v479
        %1346 = vmatmul.mubr.f32.gmra.mrb[0].mxu0 %v447
        %v1347 = vpop.f32.mrb[0].mxu0
        %v1348 = vadd.f32 %v1123, %v1347
        %v1349 = vpop.f32.mrb[0].mxu0
        %1350 = vmatprep.mubr.f32.mxu0 %v480
        %1351 = vmatmul.mubr.f32.gmra.mrb[0].mxu0 %v448
        %v1352 = vpop.f32.mrb[0].mxu0
        %v1353 = vadd.f32 %v1128, %v1352
        %v1354 = vpop.f32.mrb[0].mxu0
        %1355 = vmatprep.mubr.f32.mxu0 %v481
        %1356 = vmatmul.mubr.f32.gmra.mrb[0].mxu0 %v449
        %v1357 = vpop.f32.mrb[0].mxu0
        %v1358 = vadd.f32 %v1133, %v1357
        %v1359 = vpop.f32.mrb[0].mxu0
        %1360 = vmatprep.mubr.f32.mxu0 %v482
        %1361 = vmatmul.mubr.f32.gmra.mrb[0].mxu0 %v450
        %v1362 = vpop.f32.mrb[0].mxu0
        %v1363 = vadd.f32 %v1138, %v1362
        %v1364 = vpop.f32.mrb[0].mxu0
        %1365 = vmatprep.mubr.f32.mxu0 %v483
        %1366 = vmatmul.mubr.f32.gmra.mrb[0].mxu0 %v451
        %v1367 = vpop.f32.mrb[0].mxu0
        %v1368 = vadd.f32 %v1143, %v1367
        %v1369 = vpop.f32.mrb[0].mxu0
        %1370 = vmatprep.mubr.f32.mxu0 %v484
        %1371 = vmatmul.mubr.f32.gmra.mrb[0].mxu0 %v452
        %v1372 = vpop.f32.mrb[0].mxu0
        %v1373 = vadd.f32 %v1148, %v1372
        %v1374 = vpop.f32.mrb[0].mxu0
        %1375 = vmatprep.mubr.f32.mxu0 %v485
        %1376 = vmatmul.mubr.f32.gmra.mrb[0].mxu0 %v453
        %v1377 = vpop.f32.mrb[0].mxu0
        %v1378 = vadd.f32 %v1153, %v1377
        %v1379 = vpop.f32.mrb[0].mxu0
        %1380 = vmatprep.mubr.f32.mxu0 %v486
        %1381 = vmatmul.mubr.f32.gmra.mrb[0].mxu0 %v454
        %v1382 = vpop.f32.mrb[0].mxu0
        %v1383 = vadd.f32 %v1158, %v1382
        %v1384 = vpop.f32.mrb[0].mxu0
        %1385 = vdwg.mxu0
        %1386 = vmatprep.subr.mxu0 0.0
        %1387 = vmatpush1.msra.mxu0 %v551
        %1388 = vmatprep.subr.mxu0 0.0
        %1389 = vmatpush1.msra.mxu0 %v552
        %1390 = vmatprep.subr.mxu0 0.0
        %1391 = vmatpush1.msra.mxu0 %v553
        %1392 = vmatprep.subr.mxu0 0.0
        %1393 = vmatpush1.msra.mxu0 %v554
        %1394 = vmatprep.subr.mxu0 0.0
        %1395 = vmatpush1.msra.mxu0 %v555
        %1396 = vmatprep.subr.mxu0 0.0
        %1397 = vmatpush1.msra.mxu0 %v556
        %1398 = vmatprep.subr.mxu0 0.0
        %1399 = vmatpush1.msra.mxu0 %v557
        %1400 = vmatprep.subr.mxu0 0.0
        %1401 = vmatpush1.msra.mxu0 %v558
        %1402 = vmatprep.subr.mxu0 0.0
        %1403 = vmatpush1.msra.mxu0 %v559
        %1404 = vmatprep.subr.mxu0 0.0
        %1405 = vmatpush1.msra.mxu0 %v560
        %1406 = vmatprep.subr.mxu0 0.0
        %1407 = vmatpush1.msra.mxu0 %v561
        %1408 = vmatprep.subr.mxu0 0.0
        %1409 = vmatpush1.msra.mxu0 %v562
        %1410 = vmatprep.subr.mxu0 0.0
        %1411 = vmatpush1.msra.mxu0 %v563
        %1412 = vmatprep.subr.mxu0 0.0
        %1413 = vmatpush1.msra.mxu0 %v564
        %1414 = vmatprep.subr.mxu0 0.0
        %1415 = vmatpush1.msra.mxu0 %v565
        %1416 = vmatprep.subr.mxu0 0.0
        %1417 = vmatpush1.msra.mxu0 %v566
        %1418 = vmatprep.subr.mxu0 0.0
        %1419 = vmatpush1.msra.mxu0 0.0
        %1420 = vmatprep.subr.mxu0 0.0
        %1421 = vmatpush1.msra.mxu0 0.0
        %1422 = vmatprep.subr.mxu0 0.0
        %1423 = vmatpush1.msra.mxu0 0.0
        %1424 = vmatprep.subr.mxu0 0.0
        %1425 = vmatpush1.msra.mxu0 0.0
        %1426 = vmatprep.subr.mxu0 0.0
        %1427 = vmatpush1.msra.mxu0 0.0
        %1428 = vmatprep.subr.mxu0 0.0
        %1429 = vmatpush1.msra.mxu0 0.0
        %1430 = vmatprep.subr.mxu0 0.0
        %1431 = vmatpush1.msra.mxu0 0.0
        %1432 = vmatprep.subr.mxu0 0.0
        %1433 = vmatpush1.msra.mxu0 0.0
        %1434 = vmatprep.subr.mxu0 0.0
        %1435 = vmatpush1.msra.mxu0 0.0
        %1436 = vmatprep.subr.mxu0 0.0
        %1437 = vmatpush1.msra.mxu0 0.0
        %1438 = vmatprep.subr.mxu0 0.0
        %1439 = vmatpush1.msra.mxu0 0.0
        %1440 = vmatprep.subr.mxu0 0.0
        %1441 = vmatpush1.msra.mxu0 0.0
        %1442 = vmatprep.subr.mxu0 0.0
        %1443 = vmatpush1.msra.mxu0 0.0
        %1444 = vmatprep.subr.mxu0 0.0
        %1445 = vmatpush1.msra.mxu0 0.0
        %1446 = vmatprep.subr.mxu0 0.0
        %1447 = vmatpush1.msra.mxu0 0.0
        %1448 = vmatprep.subr.mxu0 0.0
        %1449 = vmatpush1.msra.mxu0 0.0
        %1450 = vmatprep.mubr.f32.mxu0 0.0
        %1451 = vmatmul.mubr.f32.gmra.mrb[0].mxu0 %v487
        %v1452 = vpop.f32.mrb[0].mxu0
        %v1453 = vadd.f32 %v1228, %v1452
        %v1454 = vpop.f32.mrb[0].mxu0
        %1455 = vmatprep.mubr.f32.mxu0 0.0
        %1456 = vmatmul.mubr.f32.gmra.mrb[0].mxu0 %v488
        %v1457 = vpop.f32.mrb[0].mxu0
        %v1458 = vadd.f32 %v1233, %v1457
        %v1459 = vpop.f32.mrb[0].mxu0
        %1460 = vmatprep.mubr.f32.mxu0 0.0
        %1461 = vmatmul.mubr.f32.gmra.mrb[0].mxu0 %v489
        %v1462 = vpop.f32.mrb[0].mxu0
        %v1463 = vadd.f32 %v1238, %v1462
        %v1464 = vpop.f32.mrb[0].mxu0
        %1465 = vmatprep.mubr.f32.mxu0 0.0
        %1466 = vmatmul.mubr.f32.gmra.mrb[0].mxu0 %v490
        %v1467 = vpop.f32.mrb[0].mxu0
        %v1468 = vadd.f32 %v1243, %v1467
        %v1469 = vpop.f32.mrb[0].mxu0
        %1470 = vmatprep.mubr.f32.mxu0 0.0
        %1471 = vmatmul.mubr.f32.gmra.mrb[0].mxu0 %v491
        %v1472 = vpop.f32.mrb[0].mxu0
        %v1473 = vadd.f32 %v1248, %v1472
        %v1474 = vpop.f32.mrb[0].mxu0
        %1475 = vmatprep.mubr.f32.mxu0 0.0
        %1476 = vmatmul.mubr.f32.gmra.mrb[0].mxu0 %v492
        %v1477 = vpop.f32.mrb[0].mxu0
        %v1478 = vadd.f32 %v1253, %v1477
        %v1479 = vpop.f32.mrb[0].mxu0
        %1480 = vmatprep.mubr.f32.mxu0 0.0
        %1481 = vmatmul.mubr.f32.gmra.mrb[0].mxu0 %v493
        %v1482 = vpop.f32.mrb[0].mxu0
        %v1483 = vadd.f32 %v1258, %v1482
        %v1484 = vpop.f32.mrb[0].mxu0
        %1485 = vmatprep.mubr.f32.mxu0 0.0
        %1486 = vmatmul.mubr.f32.gmra.mrb[0].mxu0 %v494
        %v1487 = vpop.f32.mrb[0].mxu0
        %v1488 = vadd.f32 %v1263, %v1487
        %v1489 = vpop.f32.mrb[0].mxu0
        %1490 = vmatprep.mubr.f32.mxu0 0.0
        %1491 = vmatmul.mubr.f32.gmra.mrb[0].mxu0 %v495
        %v1492 = vpop.f32.mrb[0].mxu0
        %v1493 = vadd.f32 %v1268, %v1492
        %v1494 = vpop.f32.mrb[0].mxu0
        %1495 = vmatprep.mubr.f32.mxu0 0.0
        %1496 = vmatmul.mubr.f32.gmra.mrb[0].mxu0 %v496
        %v1497 = vpop.f32.mrb[0].mxu0
        %v1498 = vadd.f32 %v1273, %v1497
        %v1499 = vpop.f32.mrb[0].mxu0
        %1500 = vmatprep.mubr.f32.mxu0 0.0
        %1501 = vmatmul.mubr.f32.gmra.mrb[0].mxu0 %v497
        %v1502 = vpop.f32.mrb[0].mxu0
        %v1503 = vadd.f32 %v1278, %v1502
        %v1504 = vpop.f32.mrb[0].mxu0
        %1505 = vmatprep.mubr.f32.mxu0 0.0
        %1506 = vmatmul.mubr.f32.gmra.mrb[0].mxu0 %v498
        %v1507 = vpop.f32.mrb[0].mxu0
        %v1508 = vadd.f32 %v1283, %v1507
        %v1509 = vpop.f32.mrb[0].mxu0
        %1510 = vmatprep.mubr.f32.mxu0 0.0
        %1511 = vmatmul.mubr.f32.gmra.mrb[0].mxu0 %v499
        %v1512 = vpop.f32.mrb[0].mxu0
        %v1513 = vadd.f32 %v1288, %v1512
        %v1514 = vpop.f32.mrb[0].mxu0
        %1515 = vmatprep.mubr.f32.mxu0 0.0
        %1516 = vmatmul.mubr.f32.gmra.mrb[0].mxu0 %v500
        %v1517 = vpop.f32.mrb[0].mxu0
        %v1518 = vadd.f32 %v1293, %v1517
        %v1519 = vpop.f32.mrb[0].mxu0
        %1520 = vmatprep.mubr.f32.mxu0 0.0
        %1521 = vmatmul.mubr.f32.gmra.mrb[0].mxu0 %v501
        %v1522 = vpop.f32.mrb[0].mxu0
        %v1523 = vadd.f32 %v1298, %v1522
        %v1524 = vpop.f32.mrb[0].mxu0
        %1525 = vmatprep.mubr.f32.mxu0 0.0
        %1526 = vmatmul.mubr.f32.gmra.mrb[0].mxu0 %v502
        %v1527 = vpop.f32.mrb[0].mxu0
        %v1528 = vadd.f32 %v1303, %v1527
        %v1529 = vpop.f32.mrb[0].mxu0
        %1530 = vmatprep.mubr.f32.mxu0 0.0
        %1531 = vmatmul.mubr.f32.gmra.mrb[0].mxu0 %v503
        %v1532 = vpop.f32.mrb[0].mxu0
        %v1533 = vadd.f32 %v1308, %v1532
        %v1534 = vpop.f32.mrb[0].mxu0
        %1535 = vmatprep.mubr.f32.mxu0 0.0
        %1536 = vmatmul.mubr.f32.gmra.mrb[0].mxu0 %v504
        %v1537 = vpop.f32.mrb[0].mxu0
        %v1538 = vadd.f32 %v1313, %v1537
        %v1539 = vpop.f32.mrb[0].mxu0
        %1540 = vmatprep.mubr.f32.mxu0 0.0
        %1541 = vmatmul.mubr.f32.gmra.mrb[0].mxu0 %v505
        %v1542 = vpop.f32.mrb[0].mxu0
        %v1543 = vadd.f32 %v1318, %v1542
        %v1544 = vpop.f32.mrb[0].mxu0
        %1545 = vmatprep.mubr.f32.mxu0 0.0
        %1546 = vmatmul.mubr.f32.gmra.mrb[0].mxu0 %v506
        %v1547 = vpop.f32.mrb[0].mxu0
        %v1548 = vadd.f32 %v1323, %v1547
        %v1549 = vpop.f32.mrb[0].mxu0
        %1550 = vmatprep.mubr.f32.mxu0 0.0
        %1551 = vmatmul.mubr.f32.gmra.mrb[0].mxu0 %v507
        %v1552 = vpop.f32.mrb[0].mxu0
        %v1553 = vadd.f32 %v1328, %v1552
        %v1554 = vpop.f32.mrb[0].mxu0
        %1555 = vmatprep.mubr.f32.mxu0 0.0
        %1556 = vmatmul.mubr.f32.gmra.mrb[0].mxu0 %v508
        %v1557 = vpop.f32.mrb[0].mxu0
        %v1558 = vadd.f32 %v1333, %v1557
        %v1559 = vpop.f32.mrb[0].mxu0
        %1560 = vmatprep.mubr.f32.mxu0 0.0
        %1561 = vmatmul.mubr.f32.gmra.mrb[0].mxu0 %v509
        %v1562 = vpop.f32.mrb[0].mxu0
        %v1563 = vadd.f32 %v1338, %v1562
        %v1564 = vpop.f32.mrb[0].mxu0
        %1565 = vmatprep.mubr.f32.mxu0 0.0
        %1566 = vmatmul.mubr.f32.gmra.mrb[0].mxu0 %v510
        %v1567 = vpop.f32.mrb[0].mxu0
        %v1568 = vadd.f32 %v1343, %v1567
        %v1569 = vpop.f32.mrb[0].mxu0
        %1570 = vmatprep.mubr.f32.mxu0 0.0
        %1571 = vmatmul.mubr.f32.gmra.mrb[0].mxu0 %v511
        %v1572 = vpop.f32.mrb[0].mxu0
        %v1573 = vadd.f32 %v1348, %v1572
        %v1574 = vpop.f32.mrb[0].mxu0
        %1575 = vmatprep.mubr.f32.mxu0 0.0
        %1576 = vmatmul.mubr.f32.gmra.mrb[0].mxu0 %v512
        %v1577 = vpop.f32.mrb[0].mxu0
        %v1578 = vadd.f32 %v1353, %v1577
        %v1579 = vpop.f32.mrb[0].mxu0
        %1580 = vmatprep.mubr.f32.mxu0 0.0
        %1581 = vmatmul.mubr.f32.gmra.mrb[0].mxu0 %v513
        %v1582 = vpop.f32.mrb[0].mxu0
        %v1583 = vadd.f32 %v1358, %v1582
        %v1584 = vpop.f32.mrb[0].mxu0
        %1585 = vmatprep.mubr.f32.mxu0 0.0
        %1586 = vmatmul.mubr.f32.gmra.mrb[0].mxu0 %v514
        %v1587 = vpop.f32.mrb[0].mxu0
        %v1588 = vadd.f32 %v1363, %v1587
        %v1589 = vpop.f32.mrb[0].mxu0
        %1590 = vmatprep.mubr.f32.mxu0 0.0
        %1591 = vmatmul.mubr.f32.gmra.mrb[0].mxu0 %v515
        %v1592 = vpop.f32.mrb[0].mxu0
        %v1593 = vadd.f32 %v1368, %v1592
        %v1594 = vpop.f32.mrb[0].mxu0
        %1595 = vmatprep.mubr.f32.mxu0 0.0
        %1596 = vmatmul.mubr.f32.gmra.mrb[0].mxu0 %v516
        %v1597 = vpop.f32.mrb[0].mxu0
        %v1598 = vadd.f32 %v1373, %v1597
        %v1599 = vpop.f32.mrb[0].mxu0
        %1600 = vmatprep.mubr.f32.mxu0 0.0
        %1601 = vmatmul.mubr.f32.gmra.mrb[0].mxu0 %v517
        %v1602 = vpop.f32.mrb[0].mxu0
        %v1603 = vadd.f32 %v1378, %v1602
        %v1604 = vpop.f32.mrb[0].mxu0
        %1605 = vmatprep.mubr.f32.mxu0 0.0
        %1606 = vmatmul.mubr.f32.gmra.mrb[0].mxu0 %v518
        %v1607 = vpop.f32.mrb[0].mxu0
        %v1608 = vadd.f32 %v1383, %v1607
        %v1609 = vpop.f32.mrb[0].mxu0
        %1610 = vdwg.mxu0
        %s1611 = scalar_lea.vmem [#allocation2], 48
        %v1612 = vld [vmem:[%s1611] sm:$0xff]
        %v1613 = vld [vmem:[%s1611 + $0x8] sm:$0xff]
        %v1614 = vld [vmem:[%s1611 + $0x18] sm:$0xff]
        %v1615 = vld [vmem:[%s1611 + $0x20] sm:$0xff]
        %v1616 = vld [vmem:[%s1611 + $0x30] sm:$0xff]
        %v1617 = vld [vmem:[%s1611 + $0x38] sm:$0xff]
        %v1618 = vld [vmem:[%s1611 + $0x48] sm:$0xff]
        %v1619 = vld [vmem:[%s1611 + $0x50] sm:$0xff]
        %v1620 = vld [vmem:[%s1611 + $0x60] sm:$0xff]
        %v1621 = vld [vmem:[%s1611 + $0x68] sm:$0xff]
        %v1622 = vld [vmem:[%s1611 + $0x78] sm:$0xff]
        %v1623 = vld [vmem:[%s1611 + $0x80] sm:$0xff]
        %v1624 = vld [vmem:[%s1611 + $0x90] sm:$0xff]
        %v1625 = vld [vmem:[%s1611 + $0x98] sm:$0xff]
        %v1626 = vld [vmem:[%s1611 + $0xa8] sm:$0xff]
        %v1627 = vld [vmem:[%s1611 + $0xb0] sm:$0xff]
        %v1628 = vld [vmem:[%s1611 + $0xc0] sm:$0xff]
        %v1629 = vld [vmem:[%s1611 + $0xc8] sm:$0xff]
        %v1630 = vld [vmem:[%s1611 + $0xd8] sm:$0xff]
        %v1631 = vld [vmem:[%s1611 + $0xe0] sm:$0xff]
        %v1632 = vld [vmem:[%s1611 + $0xf0] sm:$0xff]
        %v1633 = vld [vmem:[%s1611 + $0xf8] sm:$0xff]
        %v1634 = vld [vmem:[%s1611 + $0x108] sm:$0xff]
        %v1635 = vld [vmem:[%s1611 + $0x110] sm:$0xff]
        %v1636 = vld [vmem:[%s1611 + $0x120] sm:$0xff]
        %v1637 = vld [vmem:[%s1611 + $0x128] sm:$0xff]
        %v1638 = vld [vmem:[%s1611 + $0x138] sm:$0xff]
        %v1639 = vld [vmem:[%s1611 + $0x140] sm:$0xff]
        %v1640 = vld [vmem:[%s1611 + $0x150] sm:$0xff]
        %v1641 = vld [vmem:[%s1611 + $0x158] sm:$0xff]
        %v1642 = vld [vmem:[%s1611 + $0x168] sm:$0xff]
        %v1643 = vld [vmem:[%s1611 + $0x170] sm:$0xff]
        %v1644 = vld [vmem:[%s1611 + $0x1] sm:$0xff]
        %v1645 = vld [vmem:[%s1611 + $0x9] sm:$0xff]
        %v1646 = vld [vmem:[%s1611 + $0x19] sm:$0xff]
        %v1647 = vld [vmem:[%s1611 + $0x21] sm:$0xff]
        %v1648 = vld [vmem:[%s1611 + $0x31] sm:$0xff]
        %v1649 = vld [vmem:[%s1611 + $0x39] sm:$0xff]
        %v1650 = vld [vmem:[%s1611 + $0x49] sm:$0xff]
        %v1651 = vld [vmem:[%s1611 + $0x51] sm:$0xff]
        %v1652 = vld [vmem:[%s1611 + $0x61] sm:$0xff]
        %v1653 = vld [vmem:[%s1611 + $0x69] sm:$0xff]
        %v1654 = vld [vmem:[%s1611 + $0x79] sm:$0xff]
        %v1655 = vld [vmem:[%s1611 + $0x81] sm:$0xff]
        %v1656 = vld [vmem:[%s1611 + $0x91] sm:$0xff]
        %v1657 = vld [vmem:[%s1611 + $0x99] sm:$0xff]
        %v1658 = vld [vmem:[%s1611 + $0xa9] sm:$0xff]
        %v1659 = vld [vmem:[%s1611 + $0xb1] sm:$0xff]
        %v1660 = vld [vmem:[%s1611 + $0xc1] sm:$0xff]
        %v1661 = vld [vmem:[%s1611 + $0xc9] sm:$0xff]
        %v1662 = vld [vmem:[%s1611 + $0xd9] sm:$0xff]
        %v1663 = vld [vmem:[%s1611 + $0xe1] sm:$0xff]
        %v1664 = vld [vmem:[%s1611 + $0xf1] sm:$0xff]
        %v1665 = vld [vmem:[%s1611 + $0xf9] sm:$0xff]
        %v1666 = vld [vmem:[%s1611 + $0x109] sm:$0xff]
        %v1667 = vld [vmem:[%s1611 + $0x111] sm:$0xff]
        %v1668 = vld [vmem:[%s1611 + $0x121] sm:$0xff]
        %v1669 = vld [vmem:[%s1611 + $0x129] sm:$0xff]
        %v1670 = vld [vmem:[%s1611 + $0x139] sm:$0xff]
        %v1671 = vld [vmem:[%s1611 + $0x141] sm:$0xff]
        %v1672 = vld [vmem:[%s1611 + $0x151] sm:$0xff]
        %v1673 = vld [vmem:[%s1611 + $0x159] sm:$0xff]
        %v1674 = vld [vmem:[%s1611 + $0x169] sm:$0xff]
        %v1675 = vld [vmem:[%s1611 + $0x171] sm:$0xff]
        %v1676 = vld [vmem:[%s1611 + $0x2] sm:$0xff]
        %v1677 = vld [vmem:[%s1611 + $0xa] sm:$0xff]
        %v1678 = vld [vmem:[%s1611 + $0x1a] sm:$0xff]
        %v1679 = vld [vmem:[%s1611 + $0x22] sm:$0xff]
        %v1680 = vld [vmem:[%s1611 + $0x32] sm:$0xff]
        %v1681 = vld [vmem:[%s1611 + $0x3a] sm:$0xff]
        %v1682 = vld [vmem:[%s1611 + $0x4a] sm:$0xff]
        %v1683 = vld [vmem:[%s1611 + $0x52] sm:$0xff]
        %v1684 = vld [vmem:[%s1611 + $0x62] sm:$0xff]
        %v1685 = vld [vmem:[%s1611 + $0x6a] sm:$0xff]
        %v1686 = vld [vmem:[%s1611 + $0x7a] sm:$0xff]
        %v1687 = vld [vmem:[%s1611 + $0x82] sm:$0xff]
        %v1688 = vld [vmem:[%s1611 + $0x92] sm:$0xff]
        %v1689 = vld [vmem:[%s1611 + $0x9a] sm:$0xff]
        %v1690 = vld [vmem:[%s1611 + $0xaa] sm:$0xff]
        %v1691 = vld [vmem:[%s1611 + $0xb2] sm:$0xff]
        %v1692 = vld [vmem:[%s1611 + $0xc2] sm:$0xff]
        %v1693 = vld [vmem:[%s1611 + $0xca] sm:$0xff]
        %v1694 = vld [vmem:[%s1611 + $0xda] sm:$0xff]
        %v1695 = vld [vmem:[%s1611 + $0xe2] sm:$0xff]
        %v1696 = vld [vmem:[%s1611 + $0xf2] sm:$0xff]
        %v1697 = vld [vmem:[%s1611 + $0xfa] sm:$0xff]
        %v1698 = vld [vmem:[%s1611 + $0x10a] sm:$0xff]
        %v1699 = vld [vmem:[%s1611 + $0x112] sm:$0xff]
        %v1700 = vld [vmem:[%s1611 + $0x122] sm:$0xff]
        %v1701 = vld [vmem:[%s1611 + $0x12a] sm:$0xff]
        %v1702 = vld [vmem:[%s1611 + $0x13a] sm:$0xff]
        %v1703 = vld [vmem:[%s1611 + $0x142] sm:$0xff]
        %v1704 = vld [vmem:[%s1611 + $0x152] sm:$0xff]
        %v1705 = vld [vmem:[%s1611 + $0x15a] sm:$0xff]
        %v1706 = vld [vmem:[%s1611 + $0x16a] sm:$0xff]
        %v1707 = vld [vmem:[%s1611 + $0x172] sm:$0xff]
        %v1708 = vld [vmem:[#allocation7 + $0x300] sm:$0xff]
        %v1709 = vld [vmem:[#allocation7 + $0x308] sm:$0xff]
        %v1710 = vld [vmem:[#allocation7 + $0x310] sm:$0xff]
        %v1711 = vld [vmem:[#allocation7 + $0x318] sm:$0xff]
        %v1712 = vld [vmem:[#allocation7 + $0x320] sm:$0xff]
        %v1713 = vld [vmem:[#allocation7 + $0x328] sm:$0xff]
        %v1714 = vld [vmem:[#allocation7 + $0x330] sm:$0xff]
        %v1715 = vld [vmem:[#allocation7 + $0x338] sm:$0xff]
        %v1716 = vld [vmem:[#allocation7 + $0x340] sm:$0xff]
        %v1717 = vld [vmem:[#allocation7 + $0x348] sm:$0xff]
        %v1718 = vld [vmem:[#allocation7 + $0x350] sm:$0xff]
        %v1719 = vld [vmem:[#allocation7 + $0x358] sm:$0xff]
        %v1720 = vld [vmem:[#allocation7 + $0x360] sm:$0xff]
        %v1721 = vld [vmem:[#allocation7 + $0x368] sm:$0xff]
        %v1722 = vld [vmem:[#allocation7 + $0x370] sm:$0xff]
        %v1723 = vld [vmem:[#allocation7 + $0x378] sm:$0xff]
        %v1724 = vld [vmem:[#allocation7 + $0x380] sm:$0xff]
        %v1725 = vld [vmem:[#allocation7 + $0x388] sm:$0xff]
        %v1726 = vld [vmem:[#allocation7 + $0x390] sm:$0xff]
        %v1727 = vld [vmem:[#allocation7 + $0x398] sm:$0xff]
        %v1728 = vld [vmem:[#allocation7 + $0x3a0] sm:$0xff]
        %v1729 = vld [vmem:[#allocation7 + $0x3a8] sm:$0xff]
        %v1730 = vld [vmem:[#allocation7 + $0x3b0] sm:$0xff]
        %v1731 = vld [vmem:[#allocation7 + $0x3b8] sm:$0xff]
        %v1732 = vld [vmem:[#allocation7 + $0x3c0] sm:$0xff]
        %v1733 = vld [vmem:[#allocation7 + $0x3c8] sm:$0xff]
        %v1734 = vld [vmem:[#allocation7 + $0x3d0] sm:$0xff]
        %v1735 = vld [vmem:[#allocation7 + $0x3d8] sm:$0xff]
        %v1736 = vld [vmem:[#allocation7 + $0x3e0] sm:$0xff]
        %v1737 = vld [vmem:[#allocation7 + $0x3e8] sm:$0xff]
        %v1738 = vld [vmem:[#allocation7 + $0x3f0] sm:$0xff]
        %v1739 = vld [vmem:[#allocation7 + $0x3f8] sm:$0xff]
        %v1740 = vld [vmem:[#allocation7 + $0x400] sm:$0xff]
        %v1741 = vld [vmem:[#allocation7 + $0x408] sm:$0xff]
        %v1742 = vld [vmem:[#allocation7 + $0x410] sm:$0xff]
        %v1743 = vld [vmem:[#allocation7 + $0x418] sm:$0xff]
        %v1744 = vld [vmem:[#allocation7 + $0x420] sm:$0xff]
        %v1745 = vld [vmem:[#allocation7 + $0x428] sm:$0xff]
        %v1746 = vld [vmem:[#allocation7 + $0x430] sm:$0xff]
        %v1747 = vld [vmem:[#allocation7 + $0x438] sm:$0xff]
        %v1748 = vld [vmem:[#allocation7 + $0x440] sm:$0xff]
        %v1749 = vld [vmem:[#allocation7 + $0x448] sm:$0xff]
        %v1750 = vld [vmem:[#allocation7 + $0x450] sm:$0xff]
        %v1751 = vld [vmem:[#allocation7 + $0x458] sm:$0xff]
        %v1752 = vld [vmem:[#allocation7 + $0x460] sm:$0xff]
        %v1753 = vld [vmem:[#allocation7 + $0x468] sm:$0xff]
        %v1754 = vld [vmem:[#allocation7 + $0x470] sm:$0xff]
        %v1755 = vld [vmem:[#allocation7 + $0x478] sm:$0xff]
        %1756 = vmatprep.subr.mxu0 0.0
        %1757 = vmatpush1.msra.mxu0 %v1708
        %1758 = vmatprep.subr.mxu0 0.0
        %1759 = vmatpush1.msra.mxu0 %v1709
        %1760 = vmatprep.subr.mxu0 0.0
        %1761 = vmatpush1.msra.mxu0 %v1710
        %1762 = vmatprep.subr.mxu0 0.0
        %1763 = vmatpush1.msra.mxu0 %v1711
        %1764 = vmatprep.subr.mxu0 0.0
        %1765 = vmatpush1.msra.mxu0 %v1712
        %1766 = vmatprep.subr.mxu0 0.0
        %1767 = vmatpush1.msra.mxu0 %v1713
        %1768 = vmatprep.subr.mxu0 0.0
        %1769 = vmatpush1.msra.mxu0 %v1714
        %1770 = vmatprep.subr.mxu0 0.0
        %1771 = vmatpush1.msra.mxu0 %v1715
        %1772 = vmatprep.subr.mxu0 0.0
        %1773 = vmatpush1.msra.mxu0 %v1716
        %1774 = vmatprep.subr.mxu0 0.0
        %1775 = vmatpush1.msra.mxu0 %v1717
        %1776 = vmatprep.subr.mxu0 0.0
        %1777 = vmatpush1.msra.mxu0 %v1718
        %1778 = vmatprep.subr.mxu0 0.0
        %1779 = vmatpush1.msra.mxu0 %v1719
        %1780 = vmatprep.subr.mxu0 0.0
        %1781 = vmatpush1.msra.mxu0 %v1720
        %1782 = vmatprep.subr.mxu0 0.0
        %1783 = vmatpush1.msra.mxu0 %v1721
        %1784 = vmatprep.subr.mxu0 0.0
        %1785 = vmatpush1.msra.mxu0 %v1722
        %1786 = vmatprep.subr.mxu0 0.0
        %1787 = vmatpush1.msra.mxu0 %v1723
        %1788 = vmatprep.subr.mxu0 0.0
        %1789 = vmatpush1.msra.mxu0 %v1724
        %1790 = vmatprep.subr.mxu0 0.0
        %1791 = vmatpush1.msra.mxu0 %v1725
        %1792 = vmatprep.subr.mxu0 0.0
        %1793 = vmatpush1.msra.mxu0 %v1726
        %1794 = vmatprep.subr.mxu0 0.0
        %1795 = vmatpush1.msra.mxu0 %v1727
        %1796 = vmatprep.subr.mxu0 0.0
        %1797 = vmatpush1.msra.mxu0 %v1728
        %1798 = vmatprep.subr.mxu0 0.0
        %1799 = vmatpush1.msra.mxu0 %v1729
        %1800 = vmatprep.subr.mxu0 0.0
        %1801 = vmatpush1.msra.mxu0 %v1730
        %1802 = vmatprep.subr.mxu0 0.0
        %1803 = vmatpush1.msra.mxu0 %v1731
        %1804 = vmatprep.subr.mxu0 0.0
        %1805 = vmatpush1.msra.mxu0 %v1732
        %1806 = vmatprep.subr.mxu0 0.0
        %1807 = vmatpush1.msra.mxu0 %v1733
        %1808 = vmatprep.subr.mxu0 0.0
        %1809 = vmatpush1.msra.mxu0 %v1734
        %1810 = vmatprep.subr.mxu0 0.0
        %1811 = vmatpush1.msra.mxu0 %v1735
        %1812 = vmatprep.subr.mxu0 0.0
        %1813 = vmatpush1.msra.mxu0 %v1736
        %1814 = vmatprep.subr.mxu0 0.0
        %1815 = vmatpush1.msra.mxu0 %v1737
        %1816 = vmatprep.subr.mxu0 0.0
        %1817 = vmatpush1.msra.mxu0 %v1738
        %1818 = vmatprep.subr.mxu0 0.0
        %1819 = vmatpush1.msra.mxu0 %v1739
        %1820 = vmatprep.mubr.f32.mxu0 %v1644
        %1821 = vmatmul.mubr.f32.gmra.mrb[0].mxu0 %v1612
        %v1822 = vpop.f32.mrb[0].mxu0
        %v1823 = vadd.f32 0.0, %v1822
        %v1824 = vpop.f32.mrb[0].mxu0
        %1825 = vmatprep.mubr.f32.mxu0 %v1645
        %1826 = vmatmul.mubr.f32.gmra.mrb[0].mxu0 %v1613
        %v1827 = vpop.f32.mrb[0].mxu0
        %v1828 = vadd.f32 0.0, %v1827
        %v1829 = vpop.f32.mrb[0].mxu0
        %1830 = vmatprep.mubr.f32.mxu0 %v1646
        %1831 = vmatmul.mubr.f32.gmra.mrb[0].mxu0 %v1614
        %v1832 = vpop.f32.mrb[0].mxu0
        %v1833 = vadd.f32 0.0, %v1832
        %v1834 = vpop.f32.mrb[0].mxu0
        %1835 = vmatprep.mubr.f32.mxu0 %v1647
        %1836 = vmatmul.mubr.f32.gmra.mrb[0].mxu0 %v1615
        %v1837 = vpop.f32.mrb[0].mxu0
        %v1838 = vadd.f32 0.0, %v1837
        %v1839 = vpop.f32.mrb[0].mxu0
        %1840 = vmatprep.mubr.f32.mxu0 %v1648
        %1841 = vmatmul.mubr.f32.gmra.mrb[0].mxu0 %v1616
        %v1842 = vpop.f32.mrb[0].mxu0
        %v1843 = vadd.f32 0.0, %v1842
        %v1844 = vpop.f32.mrb[0].mxu0
        %1845 = vmatprep.mubr.f32.mxu0 %v1649
        %1846 = vmatmul.mubr.f32.gmra.mrb[0].mxu0 %v1617
        %v1847 = vpop.f32.mrb[0].mxu0
        %v1848 = vadd.f32 0.0, %v1847
        %v1849 = vpop.f32.mrb[0].mxu0
        %1850 = vmatprep.mubr.f32.mxu0 %v1650
        %1851 = vmatmul.mubr.f32.gmra.mrb[0].mxu0 %v1618
        %v1852 = vpop.f32.mrb[0].mxu0
        %v1853 = vadd.f32 0.0, %v1852
        %v1854 = vpop.f32.mrb[0].mxu0
        %1855 = vmatprep.mubr.f32.mxu0 %v1651
        %1856 = vmatmul.mubr.f32.gmra.mrb[0].mxu0 %v1619
        %v1857 = vpop.f32.mrb[0].mxu0
        %v1858 = vadd.f32 0.0, %v1857
        %v1859 = vpop.f32.mrb[0].mxu0
        %1860 = vmatprep.mubr.f32.mxu0 %v1652
        %1861 = vmatmul.mubr.f32.gmra.mrb[0].mxu0 %v1620
        %v1862 = vpop.f32.mrb[0].mxu0
        %v1863 = vadd.f32 0.0, %v1862
        %v1864 = vpop.f32.mrb[0].mxu0
        %1865 = vmatprep.mubr.f32.mxu0 %v1653
        %1866 = vmatmul.mubr.f32.gmra.mrb[0].mxu0 %v1621
        %v1867 = vpop.f32.mrb[0].mxu0
        %v1868 = vadd.f32 0.0, %v1867
        %v1869 = vpop.f32.mrb[0].mxu0
        %1870 = vmatprep.mubr.f32.mxu0 %v1654
        %1871 = vmatmul.mubr.f32.gmra.mrb[0].mxu0 %v1622
        %v1872 = vpop.f32.mrb[0].mxu0
        %v1873 = vadd.f32 0.0, %v1872
        %v1874 = vpop.f32.mrb[0].mxu0
        %1875 = vmatprep.mubr.f32.mxu0 %v1655
        %1876 = vmatmul.mubr.f32.gmra.mrb[0].mxu0 %v1623
        %v1877 = vpop.f32.mrb[0].mxu0
        %v1878 = vadd.f32 0.0, %v1877
        %v1879 = vpop.f32.mrb[0].mxu0
        %1880 = vmatprep.mubr.f32.mxu0 %v1656
        %1881 = vmatmul.mubr.f32.gmra.mrb[0].mxu0 %v1624
        %v1882 = vpop.f32.mrb[0].mxu0
        %v1883 = vadd.f32 0.0, %v1882
        %v1884 = vpop.f32.mrb[0].mxu0
        %1885 = vmatprep.mubr.f32.mxu0 %v1657
        %1886 = vmatmul.mubr.f32.gmra.mrb[0].mxu0 %v1625
        %v1887 = vpop.f32.mrb[0].mxu0
        %v1888 = vadd.f32 0.0, %v1887
        %v1889 = vpop.f32.mrb[0].mxu0
        %1890 = vmatprep.mubr.f32.mxu0 %v1658
        %1891 = vmatmul.mubr.f32.gmra.mrb[0].mxu0 %v1626
        %v1892 = vpop.f32.mrb[0].mxu0
        %v1893 = vadd.f32 0.0, %v1892
        %v1894 = vpop.f32.mrb[0].mxu0
        %1895 = vmatprep.mubr.f32.mxu0 %v1659
        %1896 = vmatmul.mubr.f32.gmra.mrb[0].mxu0 %v1627
        %v1897 = vpop.f32.mrb[0].mxu0
        %v1898 = vadd.f32 0.0, %v1897
        %v1899 = vpop.f32.mrb[0].mxu0
        %1900 = vmatprep.mubr.f32.mxu0 %v1660
        %1901 = vmatmul.mubr.f32.gmra.mrb[0].mxu0 %v1628
        %v1902 = vpop.f32.mrb[0].mxu0
        %v1903 = vadd.f32 0.0, %v1902
        %v1904 = vpop.f32.mrb[0].mxu0
        %1905 = vmatprep.mubr.f32.mxu0 %v1661
        %1906 = vmatmul.mubr.f32.gmra.mrb[0].mxu0 %v1629
        %v1907 = vpop.f32.mrb[0].mxu0
        %v1908 = vadd.f32 0.0, %v1907
        %v1909 = vpop.f32.mrb[0].mxu0
        %1910 = vmatprep.mubr.f32.mxu0 %v1662
        %1911 = vmatmul.mubr.f32.gmra.mrb[0].mxu0 %v1630
        %v1912 = vpop.f32.mrb[0].mxu0
        %v1913 = vadd.f32 0.0, %v1912
        %v1914 = vpop.f32.mrb[0].mxu0
        %1915 = vmatprep.mubr.f32.mxu0 %v1663
        %1916 = vmatmul.mubr.f32.gmra.mrb[0].mxu0 %v1631
        %v1917 = vpop.f32.mrb[0].mxu0
        %v1918 = vadd.f32 0.0, %v1917
        %v1919 = vpop.f32.mrb[0].mxu0
        %1920 = vmatprep.mubr.f32.mxu0 %v1664
        %1921 = vmatmul.mubr.f32.gmra.mrb[0].mxu0 %v1632
        %v1922 = vpop.f32.mrb[0].mxu0
        %v1923 = vadd.f32 0.0, %v1922
        %v1924 = vpop.f32.mrb[0].mxu0
        %1925 = vmatprep.mubr.f32.mxu0 %v1665
        %1926 = vmatmul.mubr.f32.gmra.mrb[0].mxu0 %v1633
        %v1927 = vpop.f32.mrb[0].mxu0
        %v1928 = vadd.f32 0.0, %v1927
        %v1929 = vpop.f32.mrb[0].mxu0
        %1930 = vmatprep.mubr.f32.mxu0 %v1666
        %1931 = vmatmul.mubr.f32.gmra.mrb[0].mxu0 %v1634
        %v1932 = vpop.f32.mrb[0].mxu0
        %v1933 = vadd.f32 0.0, %v1932
        %v1934 = vpop.f32.mrb[0].mxu0
        %1935 = vmatprep.mubr.f32.mxu0 %v1667
        %1936 = vmatmul.mubr.f32.gmra.mrb[0].mxu0 %v1635
        %v1937 = vpop.f32.mrb[0].mxu0
        %v1938 = vadd.f32 0.0, %v1937
        %v1939 = vpop.f32.mrb[0].mxu0
        %1940 = vmatprep.mubr.f32.mxu0 %v1668
        %1941 = vmatmul.mubr.f32.gmra.mrb[0].mxu0 %v1636
        %v1942 = vpop.f32.mrb[0].mxu0
        %v1943 = vadd.f32 0.0, %v1942
        %v1944 = vpop.f32.mrb[0].mxu0
        %1945 = vmatprep.mubr.f32.mxu0 %v1669
        %1946 = vmatmul.mubr.f32.gmra.mrb[0].mxu0 %v1637
        %v1947 = vpop.f32.mrb[0].mxu0
        %v1948 = vadd.f32 0.0, %v1947
        %v1949 = vpop.f32.mrb[0].mxu0
        %1950 = vmatprep.mubr.f32.mxu0 %v1670
        %1951 = vmatmul.mubr.f32.gmra.mrb[0].mxu0 %v1638
        %v1952 = vpop.f32.mrb[0].mxu0
        %v1953 = vadd.f32 0.0, %v1952
        %v1954 = vpop.f32.mrb[0].mxu0
        %1955 = vmatprep.mubr.f32.mxu0 %v1671
        %1956 = vmatmul.mubr.f32.gmra.mrb[0].mxu0 %v1639
        %v1957 = vpop.f32.mrb[0].mxu0
        %v1958 = vadd.f32 0.0, %v1957
        %v1959 = vpop.f32.mrb[0].mxu0
        %1960 = vmatprep.mubr.f32.mxu0 %v1672
        %1961 = vmatmul.mubr.f32.gmra.mrb[0].mxu0 %v1640
        %v1962 = vpop.f32.mrb[0].mxu0
        %v1963 = vadd.f32 0.0, %v1962
        %v1964 = vpop.f32.mrb[0].mxu0
        %1965 = vmatprep.mubr.f32.mxu0 %v1673
        %1966 = vmatmul.mubr.f32.gmra.mrb[0].mxu0 %v1641
        %v1967 = vpop.f32.mrb[0].mxu0
        %v1968 = vadd.f32 0.0, %v1967
        %v1969 = vpop.f32.mrb[0].mxu0
        %1970 = vmatprep.mubr.f32.mxu0 %v1674
        %1971 = vmatmul.mubr.f32.gmra.mrb[0].mxu0 %v1642
        %v1972 = vpop.f32.mrb[0].mxu0
        %v1973 = vadd.f32 0.0, %v1972
        %v1974 = vpop.f32.mrb[0].mxu0
        %1975 = vmatprep.mubr.f32.mxu0 %v1675
        %1976 = vmatmul.mubr.f32.gmra.mrb[0].mxu0 %v1643
        %v1977 = vpop.f32.mrb[0].mxu0
        %v1978 = vadd.f32 0.0, %v1977
        %v1979 = vpop.f32.mrb[0].mxu0
        %1980 = vdwg.mxu0
        %1981 = vmatprep.subr.mxu0 0.0
        %1982 = vmatpush1.msra.mxu0 %v1740
        %1983 = vmatprep.subr.mxu0 0.0
        %1984 = vmatpush1.msra.mxu0 %v1741
        %1985 = vmatprep.subr.mxu0 0.0
        %1986 = vmatpush1.msra.mxu0 %v1742
        %1987 = vmatprep.subr.mxu0 0.0
        %1988 = vmatpush1.msra.mxu0 %v1743
        %1989 = vmatprep.subr.mxu0 0.0
        %1990 = vmatpush1.msra.mxu0 %v1744
        %1991 = vmatprep.subr.mxu0 0.0
        %1992 = vmatpush1.msra.mxu0 %v1745
        %1993 = vmatprep.subr.mxu0 0.0
        %1994 = vmatpush1.msra.mxu0 %v1746
        %1995 = vmatprep.subr.mxu0 0.0
        %1996 = vmatpush1.msra.mxu0 %v1747
        %1997 = vmatprep.subr.mxu0 0.0
        %1998 = vmatpush1.msra.mxu0 %v1748
        %1999 = vmatprep.subr.mxu0 0.0
        %2000 = vmatpush1.msra.mxu0 %v1749
        %2001 = vmatprep.subr.mxu0 0.0
        %2002 = vmatpush1.msra.mxu0 %v1750
        %2003 = vmatprep.subr.mxu0 0.0
        %2004 = vmatpush1.msra.mxu0 %v1751
        %2005 = vmatprep.subr.mxu0 0.0
        %2006 = vmatpush1.msra.mxu0 %v1752
        %2007 = vmatprep.subr.mxu0 0.0
        %2008 = vmatpush1.msra.mxu0 %v1753
        %2009 = vmatprep.subr.mxu0 0.0
        %2010 = vmatpush1.msra.mxu0 %v1754
        %2011 = vmatprep.subr.mxu0 0.0
        %2012 = vmatpush1.msra.mxu0 %v1755
        %2013 = vmatprep.subr.mxu0 0.0
        %2014 = vmatpush1.msra.mxu0 0.0
        %2015 = vmatprep.subr.mxu0 0.0
        %2016 = vmatpush1.msra.mxu0 0.0
        %2017 = vmatprep.subr.mxu0 0.0
        %2018 = vmatpush1.msra.mxu0 0.0
        %2019 = vmatprep.subr.mxu0 0.0
        %2020 = vmatpush1.msra.mxu0 0.0
        %2021 = vmatprep.subr.mxu0 0.0
        %2022 = vmatpush1.msra.mxu0 0.0
        %2023 = vmatprep.subr.mxu0 0.0
        %2024 = vmatpush1.msra.mxu0 0.0
        %2025 = vmatprep.subr.mxu0 0.0
        %2026 = vmatpush1.msra.mxu0 0.0
        %2027 = vmatprep.subr.mxu0 0.0
        %2028 = vmatpush1.msra.mxu0 0.0
        %2029 = vmatprep.subr.mxu0 0.0
        %2030 = vmatpush1.msra.mxu0 0.0
        %2031 = vmatprep.subr.mxu0 0.0
        %2032 = vmatpush1.msra.mxu0 0.0
        %2033 = vmatprep.subr.mxu0 0.0
        %2034 = vmatpush1.msra.mxu0 0.0
        %2035 = vmatprep.subr.mxu0 0.0
        %2036 = vmatpush1.msra.mxu0 0.0
        %2037 = vmatprep.subr.mxu0 0.0
        %2038 = vmatpush1.msra.mxu0 0.0
        %2039 = vmatprep.subr.mxu0 0.0
        %2040 = vmatpush1.msra.mxu0 0.0
        %2041 = vmatprep.subr.mxu0 0.0
        %2042 = vmatpush1.msra.mxu0 0.0
        %2043 = vmatprep.subr.mxu0 0.0
        %2044 = vmatpush1.msra.mxu0 0.0
        %2045 = vmatprep.mubr.f32.mxu0 0.0
        %2046 = vmatmul.mubr.f32.gmra.mrb[0].mxu0 %v1676
        %v2047 = vpop.f32.mrb[0].mxu0
        %v2048 = vadd.f32 %v1823, %v2047
        %v2049 = vpop.f32.mrb[0].mxu0
        %2050 = vmatprep.mubr.f32.mxu0 0.0
        %2051 = vmatmul.mubr.f32.gmra.mrb[0].mxu0 %v1677
        %v2052 = vpop.f32.mrb[0].mxu0
        %v2053 = vadd.f32 %v1828, %v2052
        %v2054 = vpop.f32.mrb[0].mxu0
        %2055 = vmatprep.mubr.f32.mxu0 0.0
        %2056 = vmatmul.mubr.f32.gmra.mrb[0].mxu0 %v1678
        %v2057 = vpop.f32.mrb[0].mxu0
        %v2058 = vadd.f32 %v1833, %v2057
        %v2059 = vpop.f32.mrb[0].mxu0
        %2060 = vmatprep.mubr.f32.mxu0 0.0
        %2061 = vmatmul.mubr.f32.gmra.mrb[0].mxu0 %v1679
        %v2062 = vpop.f32.mrb[0].mxu0
        %v2063 = vadd.f32 %v1838, %v2062
        %v2064 = vpop.f32.mrb[0].mxu0
        %2065 = vmatprep.mubr.f32.mxu0 0.0
        %2066 = vmatmul.mubr.f32.gmra.mrb[0].mxu0 %v1680
        %v2067 = vpop.f32.mrb[0].mxu0
        %v2068 = vadd.f32 %v1843, %v2067
        %v2069 = vpop.f32.mrb[0].mxu0
        %2070 = vmatprep.mubr.f32.mxu0 0.0
        %2071 = vmatmul.mubr.f32.gmra.mrb[0].mxu0 %v1681
        %v2072 = vpop.f32.mrb[0].mxu0
        %v2073 = vadd.f32 %v1848, %v2072
        %v2074 = vpop.f32.mrb[0].mxu0
        %2075 = vmatprep.mubr.f32.mxu0 0.0
        %2076 = vmatmul.mubr.f32.gmra.mrb[0].mxu0 %v1682
        %v2077 = vpop.f32.mrb[0].mxu0
        %v2078 = vadd.f32 %v1853, %v2077
        %v2079 = vpop.f32.mrb[0].mxu0
        %2080 = vmatprep.mubr.f32.mxu0 0.0
        %2081 = vmatmul.mubr.f32.gmra.mrb[0].mxu0 %v1683
        %v2082 = vpop.f32.mrb[0].mxu0
        %v2083 = vadd.f32 %v1858, %v2082
        %v2084 = vpop.f32.mrb[0].mxu0
        %2085 = vmatprep.mubr.f32.mxu0 0.0
        %2086 = vmatmul.mubr.f32.gmra.mrb[0].mxu0 %v1684
        %v2087 = vpop.f32.mrb[0].mxu0
        %v2088 = vadd.f32 %v1863, %v2087
        %v2089 = vpop.f32.mrb[0].mxu0
        %2090 = vmatprep.mubr.f32.mxu0 0.0
        %2091 = vmatmul.mubr.f32.gmra.mrb[0].mxu0 %v1685
        %v2092 = vpop.f32.mrb[0].mxu0
        %v2093 = vadd.f32 %v1868, %v2092
        %v2094 = vpop.f32.mrb[0].mxu0
        %2095 = vmatprep.mubr.f32.mxu0 0.0
        %2096 = vmatmul.mubr.f32.gmra.mrb[0].mxu0 %v1686
        %v2097 = vpop.f32.mrb[0].mxu0
        %v2098 = vadd.f32 %v1873, %v2097
        %v2099 = vpop.f32.mrb[0].mxu0
        %2100 = vmatprep.mubr.f32.mxu0 0.0
        %2101 = vmatmul.mubr.f32.gmra.mrb[0].mxu0 %v1687
        %v2102 = vpop.f32.mrb[0].mxu0
        %v2103 = vadd.f32 %v1878, %v2102
        %v2104 = vpop.f32.mrb[0].mxu0
        %2105 = vmatprep.mubr.f32.mxu0 0.0
        %2106 = vmatmul.mubr.f32.gmra.mrb[0].mxu0 %v1688
        %v2107 = vpop.f32.mrb[0].mxu0
        %v2108 = vadd.f32 %v1883, %v2107
        %v2109 = vpop.f32.mrb[0].mxu0
        %2110 = vmatprep.mubr.f32.mxu0 0.0
        %2111 = vmatmul.mubr.f32.gmra.mrb[0].mxu0 %v1689
        %v2112 = vpop.f32.mrb[0].mxu0
        %v2113 = vadd.f32 %v1888, %v2112
        %v2114 = vpop.f32.mrb[0].mxu0
        %2115 = vmatprep.mubr.f32.mxu0 0.0
        %2116 = vmatmul.mubr.f32.gmra.mrb[0].mxu0 %v1690
        %v2117 = vpop.f32.mrb[0].mxu0
        %v2118 = vadd.f32 %v1893, %v2117
        %v2119 = vpop.f32.mrb[0].mxu0
        %2120 = vmatprep.mubr.f32.mxu0 0.0
        %2121 = vmatmul.mubr.f32.gmra.mrb[0].mxu0 %v1691
        %v2122 = vpop.f32.mrb[0].mxu0
        %v2123 = vadd.f32 %v1898, %v2122
        %v2124 = vpop.f32.mrb[0].mxu0
        %2125 = vmatprep.mubr.f32.mxu0 0.0
        %2126 = vmatmul.mubr.f32.gmra.mrb[0].mxu0 %v1692
        %v2127 = vpop.f32.mrb[0].mxu0
        %v2128 = vadd.f32 %v1903, %v2127
        %v2129 = vpop.f32.mrb[0].mxu0
        %2130 = vmatprep.mubr.f32.mxu0 0.0
        %2131 = vmatmul.mubr.f32.gmra.mrb[0].mxu0 %v1693
        %v2132 = vpop.f32.mrb[0].mxu0
        %v2133 = vadd.f32 %v1908, %v2132
        %v2134 = vpop.f32.mrb[0].mxu0
        %2135 = vmatprep.mubr.f32.mxu0 0.0
        %2136 = vmatmul.mubr.f32.gmra.mrb[0].mxu0 %v1694
        %v2137 = vpop.f32.mrb[0].mxu0
        %v2138 = vadd.f32 %v1913, %v2137
        %v2139 = vpop.f32.mrb[0].mxu0
        %2140 = vmatprep.mubr.f32.mxu0 0.0
        %2141 = vmatmul.mubr.f32.gmra.mrb[0].mxu0 %v1695
        %v2142 = vpop.f32.mrb[0].mxu0
        %v2143 = vadd.f32 %v1918, %v2142
        %v2144 = vpop.f32.mrb[0].mxu0
        %2145 = vmatprep.mubr.f32.mxu0 0.0
        %2146 = vmatmul.mubr.f32.gmra.mrb[0].mxu0 %v1696
        %v2147 = vpop.f32.mrb[0].mxu0
        %v2148 = vadd.f32 %v1923, %v2147
        %v2149 = vpop.f32.mrb[0].mxu0
        %2150 = vmatprep.mubr.f32.mxu0 0.0
        %2151 = vmatmul.mubr.f32.gmra.mrb[0].mxu0 %v1697
        %v2152 = vpop.f32.mrb[0].mxu0
        %v2153 = vadd.f32 %v1928, %v2152
        %v2154 = vpop.f32.mrb[0].mxu0
        %2155 = vmatprep.mubr.f32.mxu0 0.0
        %2156 = vmatmul.mubr.f32.gmra.mrb[0].mxu0 %v1698
        %v2157 = vpop.f32.mrb[0].mxu0
        %v2158 = vadd.f32 %v1933, %v2157
        %v2159 = vpop.f32.mrb[0].mxu0
        %2160 = vmatprep.mubr.f32.mxu0 0.0
        %2161 = vmatmul.mubr.f32.gmra.mrb[0].mxu0 %v1699
        %v2162 = vpop.f32.mrb[0].mxu0
        %v2163 = vadd.f32 %v1938, %v2162
        %v2164 = vpop.f32.mrb[0].mxu0
        %2165 = vmatprep.mubr.f32.mxu0 0.0
        %2166 = vmatmul.mubr.f32.gmra.mrb[0].mxu0 %v1700
        %v2167 = vpop.f32.mrb[0].mxu0
        %v2168 = vadd.f32 %v1943, %v2167
        %v2169 = vpop.f32.mrb[0].mxu0
        %2170 = vmatprep.mubr.f32.mxu0 0.0
        %2171 = vmatmul.mubr.f32.gmra.mrb[0].mxu0 %v1701
        %v2172 = vpop.f32.mrb[0].mxu0
        %v2173 = vadd.f32 %v1948, %v2172
        %v2174 = vpop.f32.mrb[0].mxu0
        %2175 = vmatprep.mubr.f32.mxu0 0.0
        %2176 = vmatmul.mubr.f32.gmra.mrb[0].mxu0 %v1702
        %v2177 = vpop.f32.mrb[0].mxu0
        %v2178 = vadd.f32 %v1953, %v2177
        %v2179 = vpop.f32.mrb[0].mxu0
        %2180 = vmatprep.mubr.f32.mxu0 0.0
        %2181 = vmatmul.mubr.f32.gmra.mrb[0].mxu0 %v1703
        %v2182 = vpop.f32.mrb[0].mxu0
        %v2183 = vadd.f32 %v1958, %v2182
        %v2184 = vpop.f32.mrb[0].mxu0
        %2185 = vmatprep.mubr.f32.mxu0 0.0
        %2186 = vmatmul.mubr.f32.gmra.mrb[0].mxu0 %v1704
        %v2187 = vpop.f32.mrb[0].mxu0
        %v2188 = vadd.f32 %v1963, %v2187
        %v2189 = vpop.f32.mrb[0].mxu0
        %2190 = vmatprep.mubr.f32.mxu0 0.0
        %2191 = vmatmul.mubr.f32.gmra.mrb[0].mxu0 %v1705
        %v2192 = vpop.f32.mrb[0].mxu0
        %v2193 = vadd.f32 %v1968, %v2192
        %v2194 = vpop.f32.mrb[0].mxu0
        %2195 = vmatprep.mubr.f32.mxu0 0.0
        %2196 = vmatmul.mubr.f32.gmra.mrb[0].mxu0 %v1706
        %v2197 = vpop.f32.mrb[0].mxu0
        %v2198 = vadd.f32 %v1973, %v2197
        %v2199 = vpop.f32.mrb[0].mxu0
        %2200 = vmatprep.mubr.f32.mxu0 0.0
        %2201 = vmatmul.mubr.f32.gmra.mrb[0].mxu0 %v1707
        %v2202 = vpop.f32.mrb[0].mxu0
        %v2203 = vadd.f32 %v1978, %v2202
        %v2204 = vpop.f32.mrb[0].mxu0
        %2205 = vdwg.mxu0
        %v2206 = vadd.f32 %v1453, %v2048
        %v2207 = vadd.f32 %v1458, %v2053
        %v2208 = vadd.f32 %v1463, %v2058
        %v2209 = vadd.f32 %v1468, %v2063
        %v2210 = vadd.f32 %v1473, %v2068
        %v2211 = vadd.f32 %v1478, %v2073
        %v2212 = vadd.f32 %v1483, %v2078
        %v2213 = vadd.f32 %v1488, %v2083
        %v2214 = vadd.f32 %v1493, %v2088
        %v2215 = vadd.f32 %v1498, %v2093
        %v2216 = vadd.f32 %v1503, %v2098
        %v2217 = vadd.f32 %v1508, %v2103
        %v2218 = vadd.f32 %v1513, %v2108
        %v2219 = vadd.f32 %v1518, %v2113
        %v2220 = vadd.f32 %v1523, %v2118
        %v2221 = vadd.f32 %v1528, %v2123
        %v2222 = vadd.f32 %v1533, %v2128
        %v2223 = vadd.f32 %v1538, %v2133
        %v2224 = vadd.f32 %v1543, %v2138
        %v2225 = vadd.f32 %v1548, %v2143
        %v2226 = vadd.f32 %v1553, %v2148
        %v2227 = vadd.f32 %v1558, %v2153
        %v2228 = vadd.f32 %v1563, %v2158
        %v2229 = vadd.f32 %v1568, %v2163
        %v2230 = vadd.f32 %v1573, %v2168
        %v2231 = vadd.f32 %v1578, %v2173
        %v2232 = vadd.f32 %v1583, %v2178
        %v2233 = vadd.f32 %v1588, %v2183
        %v2234 = vadd.f32 %v1593, %v2188
        %v2235 = vadd.f32 %v1598, %v2193
        %v2236 = vadd.f32 %v1603, %v2198
        %v2237 = vadd.f32 %v1608, %v2203
        %v2238 = vld [vmem:[%s2] sm:$0x1]
        %v2240 = vlaneseq
        %v2241 = vshrl.u32 %v2240, 7
        %v2242 = vsub.s32 0, %v2241
        %v2243 = vrot.slane %v2238, %v2242
        %v2245 = vadd.f32 %v2206, %v2243
        %v2246 = vadd.f32 %v2207, %v2243
        %v2247 = vadd.f32 %v2208, %v2243
        %v2248 = vadd.f32 %v2209, %v2243
        %v2249 = vadd.f32 %v2210, %v2243
        %v2250 = vadd.f32 %v2211, %v2243
        %v2251 = vadd.f32 %v2212, %v2243
        %v2252 = vadd.f32 %v2213, %v2243
        %v2253 = vadd.f32 %v2214, %v2243
        %v2254 = vadd.f32 %v2215, %v2243
        %v2255 = vadd.f32 %v2216, %v2243
        %v2256 = vadd.f32 %v2217, %v2243
        %v2257 = vadd.f32 %v2218, %v2243
        %v2258 = vadd.f32 %v2219, %v2243
        %v2259 = vadd.f32 %v2220, %v2243
        %v2260 = vadd.f32 %v2221, %v2243
        %v2261 = vadd.f32 %v2222, %v2243
        %v2262 = vadd.f32 %v2223, %v2243
        %v2263 = vadd.f32 %v2224, %v2243
        %v2264 = vadd.f32 %v2225, %v2243
        %v2265 = vadd.f32 %v2226, %v2243
        %v2266 = vadd.f32 %v2227, %v2243
        %v2267 = vadd.f32 %v2228, %v2243
        %v2268 = vadd.f32 %v2229, %v2243
        %v2269 = vadd.f32 %v2230, %v2243
        %v2270 = vadd.f32 %v2231, %v2243
        %v2271 = vadd.f32 %v2232, %v2243
        %v2272 = vadd.f32 %v2233, %v2243
        %v2273 = vadd.f32 %v2234, %v2243
        %v2274 = vadd.f32 %v2235, %v2243
        %v2275 = vadd.f32 %v2236, %v2243
        %v2276 = vadd.f32 %v2237, %v2243
        %v2277 = vmax.f32 %v2245, 0.0
        %v2278 = vmax.f32 %v2246, 0.0
        %v2279 = vmax.f32 %v2247, 0.0
        %v2280 = vmax.f32 %v2248, 0.0
        %v2281 = vmax.f32 %v2249, 0.0
        %v2282 = vmax.f32 %v2250, 0.0
        %v2283 = vmax.f32 %v2251, 0.0
        %v2284 = vmax.f32 %v2252, 0.0
        %v2285 = vmax.f32 %v2253, 0.0
        %v2286 = vmax.f32 %v2254, 0.0
        %v2287 = vmax.f32 %v2255, 0.0
        %v2288 = vmax.f32 %v2256, 0.0
        %v2289 = vmax.f32 %v2257, 0.0
        %v2290 = vmax.f32 %v2258, 0.0
        %v2291 = vmax.f32 %v2259, 0.0
        %v2292 = vmax.f32 %v2260, 0.0
        %v2293 = vmax.f32 %v2261, 0.0
        %v2294 = vmax.f32 %v2262, 0.0
        %v2295 = vmax.f32 %v2263, 0.0
        %v2296 = vmax.f32 %v2264, 0.0
        %v2297 = vmax.f32 %v2265, 0.0
        %v2298 = vmax.f32 %v2266, 0.0
        %v2299 = vmax.f32 %v2267, 0.0
        %v2300 = vmax.f32 %v2268, 0.0
        %v2301 = vmax.f32 %v2269, 0.0
        %v2302 = vmax.f32 %v2270, 0.0
        %v2303 = vmax.f32 %v2271, 0.0
        %v2304 = vmax.f32 %v2272, 0.0
        %v2305 = vmax.f32 %v2273, 0.0
        %v2306 = vmax.f32 %v2274, 0.0
        %v2307 = vmax.f32 %v2275, 0.0
        %v2308 = vmax.f32 %v2276, 0.0
        %s2309 = scalar_lea.vmem [#allocation3], 24
        %2310 = vst [vmem:[%s2309 + $0x1] sm:$0xff] %v2277
        %2311 = vst [vmem:[%s2309 + $0x9] sm:$0xff] %v2278
        %2312 = vst [vmem:[%s2309 + $0x19] sm:$0xff] %v2279
        %2313 = vst [vmem:[%s2309 + $0x21] sm:$0xff] %v2280
        %2314 = vst [vmem:[%s2309 + $0x31] sm:$0xff] %v2281
        %2315 = vst [vmem:[%s2309 + $0x39] sm:$0xff] %v2282
        %2316 = vst [vmem:[%s2309 + $0x49] sm:$0xff] %v2283
        %2317 = vst [vmem:[%s2309 + $0x51] sm:$0xff] %v2284
        %2318 = vst [vmem:[%s2309 + $0x61] sm:$0xff] %v2285
        %2319 = vst [vmem:[%s2309 + $0x69] sm:$0xff] %v2286
        %2320 = vst [vmem:[%s2309 + $0x79] sm:$0xff] %v2287
        %2321 = vst [vmem:[%s2309 + $0x81] sm:$0xff] %v2288
        %2322 = vst [vmem:[%s2309 + $0x91] sm:$0xff] %v2289
        %2323 = vst [vmem:[%s2309 + $0x99] sm:$0xff] %v2290
        %2324 = vst [vmem:[%s2309 + $0xa9] sm:$0xff] %v2291
        %2325 = vst [vmem:[%s2309 + $0xb1] sm:$0xff] %v2292
        %2326 = vst [vmem:[%s2309 + $0xc1] sm:$0xff] %v2293
        %2327 = vst [vmem:[%s2309 + $0xc9] sm:$0xff] %v2294
        %2328 = vst [vmem:[%s2309 + $0xd9] sm:$0xff] %v2295
        %2329 = vst [vmem:[%s2309 + $0xe1] sm:$0xff] %v2296
        %2330 = vst [vmem:[%s2309 + $0xf1] sm:$0xff] %v2297
        %2331 = vst [vmem:[%s2309 + $0xf9] sm:$0xff] %v2298
        %2332 = vst [vmem:[%s2309 + $0x109] sm:$0xff] %v2299
        %2333 = vst [vmem:[%s2309 + $0x111] sm:$0xff] %v2300
        %2334 = vst [vmem:[%s2309 + $0x121] sm:$0xff] %v2301
        %2335 = vst [vmem:[%s2309 + $0x129] sm:$0xff] %v2302
        %2336 = vst [vmem:[%s2309 + $0x139] sm:$0xff] %v2303
        %2337 = vst [vmem:[%s2309 + $0x141] sm:$0xff] %v2304
        %2338 = vst [vmem:[%s2309 + $0x151] sm:$0xff] %v2305
        %2339 = vst [vmem:[%s2309 + $0x159] sm:$0xff] %v2306
        %2340 = vst [vmem:[%s2309 + $0x169] sm:$0xff] %v2307
        %2341 = vst [vmem:[%s2309 + $0x171] sm:$0xff] %v2308
        %v2342 = vld [vmem:[#allocation3] sm:$0xff]
        %v2343 = vld [vmem:[#allocation3 + $0x8] sm:$0xff]
        %v2344 = vld [vmem:[#allocation3 + $0x18] sm:$0xff]
        %v2345 = vld [vmem:[#allocation3 + $0x20] sm:$0xff]
        %v2346 = vld [vmem:[#allocation3 + $0x30] sm:$0xff]
        %v2347 = vld [vmem:[#allocation3 + $0x38] sm:$0xff]
        %v2348 = vld [vmem:[#allocation3 + $0x48] sm:$0xff]
        %v2349 = vld [vmem:[#allocation3 + $0x50] sm:$0xff]
        %v2350 = vld [vmem:[#allocation3 + $0x60] sm:$0xff]
        %v2351 = vld [vmem:[#allocation3 + $0x68] sm:$0xff]
        %v2352 = vld [vmem:[#allocation3 + $0x78] sm:$0xff]
        %v2353 = vld [vmem:[#allocation3 + $0x80] sm:$0xff]
        %v2354 = vld [vmem:[#allocation3 + $0x90] sm:$0xff]
        %v2355 = vld [vmem:[#allocation3 + $0x98] sm:$0xff]
        %v2356 = vld [vmem:[#allocation3 + $0xa8] sm:$0xff]
        %v2357 = vld [vmem:[#allocation3 + $0xb0] sm:$0xff]
        %v2358 = vld [vmem:[#allocation3 + $0xc0] sm:$0xff]
        %v2359 = vld [vmem:[#allocation3 + $0xc8] sm:$0xff]
        %v2360 = vld [vmem:[#allocation3 + $0xd8] sm:$0xff]
        %v2361 = vld [vmem:[#allocation3 + $0xe0] sm:$0xff]
        %v2362 = vld [vmem:[#allocation3 + $0xf0] sm:$0xff]
        %v2363 = vld [vmem:[#allocation3 + $0xf8] sm:$0xff]
        %v2364 = vld [vmem:[#allocation3 + $0x108] sm:$0xff]
        %v2365 = vld [vmem:[#allocation3 + $0x110] sm:$0xff]
        %v2366 = vld [vmem:[#allocation3 + $0x120] sm:$0xff]
        %v2367 = vld [vmem:[#allocation3 + $0x128] sm:$0xff]
        %v2368 = vld [vmem:[#allocation3 + $0x138] sm:$0xff]
        %v2369 = vld [vmem:[#allocation3 + $0x140] sm:$0xff]
        %v2370 = vld [vmem:[#allocation3 + $0x150] sm:$0xff]
        %v2371 = vld [vmem:[#allocation3 + $0x158] sm:$0xff]
        %v2372 = vld [vmem:[#allocation3 + $0x168] sm:$0xff]
        %v2373 = vld [vmem:[#allocation3 + $0x170] sm:$0xff]
        %v2374 = vld [vmem:[#allocation3 + $0x1] sm:$0xff]
        %v2375 = vld [vmem:[#allocation3 + $0x9] sm:$0xff]
        %v2376 = vld [vmem:[#allocation3 + $0x19] sm:$0xff]
        %v2377 = vld [vmem:[#allocation3 + $0x21] sm:$0xff]
        %v2378 = vld [vmem:[#allocation3 + $0x31] sm:$0xff]
        %v2379 = vld [vmem:[#allocation3 + $0x39] sm:$0xff]
        %v2380 = vld [vmem:[#allocation3 + $0x49] sm:$0xff]
        %v2381 = vld [vmem:[#allocation3 + $0x51] sm:$0xff]
        %v2382 = vld [vmem:[#allocation3 + $0x61] sm:$0xff]
        %v2383 = vld [vmem:[#allocation3 + $0x69] sm:$0xff]
        %v2384 = vld [vmem:[#allocation3 + $0x79] sm:$0xff]
        %v2385 = vld [vmem:[#allocation3 + $0x81] sm:$0xff]
        %v2386 = vld [vmem:[#allocation3 + $0x91] sm:$0xff]
        %v2387 = vld [vmem:[#allocation3 + $0x99] sm:$0xff]
        %v2388 = vld [vmem:[#allocation3 + $0xa9] sm:$0xff]
        %v2389 = vld [vmem:[#allocation3 + $0xb1] sm:$0xff]
        %v2390 = vld [vmem:[#allocation3 + $0xc1] sm:$0xff]
        %v2391 = vld [vmem:[#allocation3 + $0xc9] sm:$0xff]
        %v2392 = vld [vmem:[#allocation3 + $0xd9] sm:$0xff]
        %v2393 = vld [vmem:[#allocation3 + $0xe1] sm:$0xff]
        %v2394 = vld [vmem:[#allocation3 + $0xf1] sm:$0xff]
        %v2395 = vld [vmem:[#allocation3 + $0xf9] sm:$0xff]
        %v2396 = vld [vmem:[#allocation3 + $0x109] sm:$0xff]
        %v2397 = vld [vmem:[#allocation3 + $0x111] sm:$0xff]
        %v2398 = vld [vmem:[#allocation3 + $0x121] sm:$0xff]
        %v2399 = vld [vmem:[#allocation3 + $0x129] sm:$0xff]
        %v2400 = vld [vmem:[#allocation3 + $0x139] sm:$0xff]
        %v2401 = vld [vmem:[#allocation3 + $0x141] sm:$0xff]
        %v2402 = vld [vmem:[#allocation3 + $0x151] sm:$0xff]
        %v2403 = vld [vmem:[#allocation3 + $0x159] sm:$0xff]
        %v2404 = vld [vmem:[#allocation3 + $0x169] sm:$0xff]
        %v2405 = vld [vmem:[#allocation3 + $0x171] sm:$0xff]
        %v2406 = vld [vmem:[#allocation3 + $0x2] sm:$0xff]
        %v2407 = vld [vmem:[#allocation3 + $0xa] sm:$0xff]
        %v2408 = vld [vmem:[#allocation3 + $0x1a] sm:$0xff]
        %v2409 = vld [vmem:[#allocation3 + $0x22] sm:$0xff]
        %v2410 = vld [vmem:[#allocation3 + $0x32] sm:$0xff]
        %v2411 = vld [vmem:[#allocation3 + $0x3a] sm:$0xff]
        %v2412 = vld [vmem:[#allocation3 + $0x4a] sm:$0xff]
        %v2413 = vld [vmem:[#allocation3 + $0x52] sm:$0xff]
        %v2414 = vld [vmem:[#allocation3 + $0x62] sm:$0xff]
        %v2415 = vld [vmem:[#allocation3 + $0x6a] sm:$0xff]
        %v2416 = vld [vmem:[#allocation3 + $0x7a] sm:$0xff]
        %v2417 = vld [vmem:[#allocation3 + $0x82] sm:$0xff]
        %v2418 = vld [vmem:[#allocation3 + $0x92] sm:$0xff]
        %v2419 = vld [vmem:[#allocation3 + $0x9a] sm:$0xff]
        %v2420 = vld [vmem:[#allocation3 + $0xaa] sm:$0xff]
        %v2421 = vld [vmem:[#allocation3 + $0xb2] sm:$0xff]
        %v2422 = vld [vmem:[#allocation3 + $0xc2] sm:$0xff]
        %v2423 = vld [vmem:[#allocation3 + $0xca] sm:$0xff]
        %v2424 = vld [vmem:[#allocation3 + $0xda] sm:$0xff]
        %v2425 = vld [vmem:[#allocation3 + $0xe2] sm:$0xff]
        %v2426 = vld [vmem:[#allocation3 + $0xf2] sm:$0xff]
        %v2427 = vld [vmem:[#allocation3 + $0xfa] sm:$0xff]
        %v2428 = vld [vmem:[#allocation3 + $0x10a] sm:$0xff]
        %v2429 = vld [vmem:[#allocation3 + $0x112] sm:$0xff]
        %v2430 = vld [vmem:[#allocation3 + $0x122] sm:$0xff]
        %v2431 = vld [vmem:[#allocation3 + $0x12a] sm:$0xff]
        %v2432 = vld [vmem:[#allocation3 + $0x13a] sm:$0xff]
        %v2433 = vld [vmem:[#allocation3 + $0x142] sm:$0xff]
        %v2434 = vld [vmem:[#allocation3 + $0x152] sm:$0xff]
        %v2435 = vld [vmem:[#allocation3 + $0x15a] sm:$0xff]
        %v2436 = vld [vmem:[#allocation3 + $0x16a] sm:$0xff]
        %v2437 = vld [vmem:[#allocation3 + $0x172] sm:$0xff]
        %v2438 = vld [vmem:[#allocation9] sm:$0xff]
        %v2439 = vld [vmem:[#allocation9 + $0x8] sm:$0xff]
        %v2440 = vld [vmem:[#allocation9 + $0x10] sm:$0xff]
        %v2441 = vld [vmem:[#allocation9 + $0x18] sm:$0xff]
        %v2442 = vld [vmem:[#allocation9 + $0x20] sm:$0xff]
        %v2443 = vld [vmem:[#allocation9 + $0x28] sm:$0xff]
        %v2444 = vld [vmem:[#allocation9 + $0x30] sm:$0xff]
        %v2445 = vld [vmem:[#allocation9 + $0x38] sm:$0xff]
        %v2446 = vld [vmem:[#allocation9 + $0x40] sm:$0xff]
        %v2447 = vld [vmem:[#allocation9 + $0x48] sm:$0xff]
        %v2448 = vld [vmem:[#allocation9 + $0x50] sm:$0xff]
        %v2449 = vld [vmem:[#allocation9 + $0x58] sm:$0xff]
        %v2450 = vld [vmem:[#allocation9 + $0x60] sm:$0xff]
        %v2451 = vld [vmem:[#allocation9 + $0x68] sm:$0xff]
        %v2452 = vld [vmem:[#allocation9 + $0x70] sm:$0xff]
        %v2453 = vld [vmem:[#allocation9 + $0x78] sm:$0xff]
        %v2454 = vld [vmem:[#allocation9 + $0x80] sm:$0xff]
        %v2455 = vld [vmem:[#allocation9 + $0x88] sm:$0xff]
        %v2456 = vld [vmem:[#allocation9 + $0x90] sm:$0xff]
        %v2457 = vld [vmem:[#allocation9 + $0x98] sm:$0xff]
        %v2458 = vld [vmem:[#allocation9 + $0xa0] sm:$0xff]
        %v2459 = vld [vmem:[#allocation9 + $0xa8] sm:$0xff]
        %v2460 = vld [vmem:[#allocation9 + $0xb0] sm:$0xff]
        %v2461 = vld [vmem:[#allocation9 + $0xb8] sm:$0xff]
        %v2462 = vld [vmem:[#allocation9 + $0xc0] sm:$0xff]
        %v2463 = vld [vmem:[#allocation9 + $0xc8] sm:$0xff]
        %v2464 = vld [vmem:[#allocation9 + $0xd0] sm:$0xff]
        %v2465 = vld [vmem:[#allocation9 + $0xd8] sm:$0xff]
        %v2466 = vld [vmem:[#allocation9 + $0xe0] sm:$0xff]
        %v2467 = vld [vmem:[#allocation9 + $0xe8] sm:$0xff]
        %v2468 = vld [vmem:[#allocation9 + $0xf0] sm:$0xff]
        %v2469 = vld [vmem:[#allocation9 + $0xf8] sm:$0xff]
        %v2470 = vld [vmem:[#allocation9 + $0x100] sm:$0xff]
        %v2471 = vld [vmem:[#allocation9 + $0x108] sm:$0xff]
        %v2472 = vld [vmem:[#allocation9 + $0x110] sm:$0xff]
        %v2473 = vld [vmem:[#allocation9 + $0x118] sm:$0xff]
        %v2474 = vld [vmem:[#allocation9 + $0x120] sm:$0xff]
        %v2475 = vld [vmem:[#allocation9 + $0x128] sm:$0xff]
        %v2476 = vld [vmem:[#allocation9 + $0x130] sm:$0xff]
        %v2477 = vld [vmem:[#allocation9 + $0x138] sm:$0xff]
        %v2478 = vld [vmem:[#allocation9 + $0x140] sm:$0xff]
        %v2479 = vld [vmem:[#allocation9 + $0x148] sm:$0xff]
        %v2480 = vld [vmem:[#allocation9 + $0x150] sm:$0xff]
        %v2481 = vld [vmem:[#allocation9 + $0x158] sm:$0xff]
        %v2482 = vld [vmem:[#allocation9 + $0x160] sm:$0xff]
        %v2483 = vld [vmem:[#allocation9 + $0x168] sm:$0xff]
        %v2484 = vld [vmem:[#allocation9 + $0x170] sm:$0xff]
        %v2485 = vld [vmem:[#allocation9 + $0x178] sm:$0xff]
        %v2486 = vld [vmem:[%s2309] sm:$0xff]
        %v2487 = vld [vmem:[%s2309 + $0x8] sm:$0xff]
        %v2488 = vld [vmem:[%s2309 + $0x18] sm:$0xff]
        %v2489 = vld [vmem:[%s2309 + $0x20] sm:$0xff]
        %v2490 = vld [vmem:[%s2309 + $0x30] sm:$0xff]
        %v2491 = vld [vmem:[%s2309 + $0x38] sm:$0xff]
        %v2492 = vld [vmem:[%s2309 + $0x48] sm:$0xff]
        %v2493 = vld [vmem:[%s2309 + $0x50] sm:$0xff]
        %v2494 = vld [vmem:[%s2309 + $0x60] sm:$0xff]
        %v2495 = vld [vmem:[%s2309 + $0x68] sm:$0xff]
        %v2496 = vld [vmem:[%s2309 + $0x78] sm:$0xff]
        %v2497 = vld [vmem:[%s2309 + $0x80] sm:$0xff]
        %v2498 = vld [vmem:[%s2309 + $0x90] sm:$0xff]
        %v2499 = vld [vmem:[%s2309 + $0x98] sm:$0xff]
        %v2500 = vld [vmem:[%s2309 + $0xa8] sm:$0xff]
        %v2501 = vld [vmem:[%s2309 + $0xb0] sm:$0xff]
        %v2502 = vld [vmem:[%s2309 + $0xc0] sm:$0xff]
        %v2503 = vld [vmem:[%s2309 + $0xc8] sm:$0xff]
        %v2504 = vld [vmem:[%s2309 + $0xd8] sm:$0xff]
        %v2505 = vld [vmem:[%s2309 + $0xe0] sm:$0xff]
        %v2506 = vld [vmem:[%s2309 + $0xf0] sm:$0xff]
        %v2507 = vld [vmem:[%s2309 + $0xf8] sm:$0xff]
        %v2508 = vld [vmem:[%s2309 + $0x108] sm:$0xff]
        %v2509 = vld [vmem:[%s2309 + $0x110] sm:$0xff]
        %v2510 = vld [vmem:[%s2309 + $0x120] sm:$0xff]
        %v2511 = vld [vmem:[%s2309 + $0x128] sm:$0xff]
        %v2512 = vld [vmem:[%s2309 + $0x138] sm:$0xff]
        %v2513 = vld [vmem:[%s2309 + $0x140] sm:$0xff]
        %v2514 = vld [vmem:[%s2309 + $0x150] sm:$0xff]
        %v2515 = vld [vmem:[%s2309 + $0x158] sm:$0xff]
        %v2516 = vld [vmem:[%s2309 + $0x168] sm:$0xff]
        %v2517 = vld [vmem:[%s2309 + $0x170] sm:$0xff]
        %v2518 = vld [vmem:[%s2309 + $0x1] sm:$0xff]
        %v2519 = vld [vmem:[%s2309 + $0x9] sm:$0xff]
        %v2520 = vld [vmem:[%s2309 + $0x19] sm:$0xff]
        %v2521 = vld [vmem:[%s2309 + $0x21] sm:$0xff]
        %v2522 = vld [vmem:[%s2309 + $0x31] sm:$0xff]
        %v2523 = vld [vmem:[%s2309 + $0x39] sm:$0xff]
        %v2524 = vld [vmem:[%s2309 + $0x49] sm:$0xff]
        %v2525 = vld [vmem:[%s2309 + $0x51] sm:$0xff]
        %v2526 = vld [vmem:[%s2309 + $0x61] sm:$0xff]
        %v2527 = vld [vmem:[%s2309 + $0x69] sm:$0xff]
        %v2528 = vld [vmem:[%s2309 + $0x79] sm:$0xff]
        %v2529 = vld [vmem:[%s2309 + $0x81] sm:$0xff]
        %v2530 = vld [vmem:[%s2309 + $0x91] sm:$0xff]
        %v2531 = vld [vmem:[%s2309 + $0x99] sm:$0xff]
        %v2532 = vld [vmem:[%s2309 + $0xa9] sm:$0xff]
        %v2533 = vld [vmem:[%s2309 + $0xb1] sm:$0xff]
        %v2534 = vld [vmem:[%s2309 + $0xc1] sm:$0xff]
        %v2535 = vld [vmem:[%s2309 + $0xc9] sm:$0xff]
        %v2536 = vld [vmem:[%s2309 + $0xd9] sm:$0xff]
        %v2537 = vld [vmem:[%s2309 + $0xe1] sm:$0xff]
        %v2538 = vld [vmem:[%s2309 + $0xf1] sm:$0xff]
        %v2539 = vld [vmem:[%s2309 + $0xf9] sm:$0xff]
        %v2540 = vld [vmem:[%s2309 + $0x109] sm:$0xff]
        %v2541 = vld [vmem:[%s2309 + $0x111] sm:$0xff]
        %v2542 = vld [vmem:[%s2309 + $0x121] sm:$0xff]
        %v2543 = vld [vmem:[%s2309 + $0x129] sm:$0xff]
        %v2544 = vld [vmem:[%s2309 + $0x139] sm:$0xff]
        %v2545 = vld [vmem:[%s2309 + $0x141] sm:$0xff]
        %v2546 = vld [vmem:[%s2309 + $0x151] sm:$0xff]
        %v2547 = vld [vmem:[%s2309 + $0x159] sm:$0xff]
        %v2548 = vld [vmem:[%s2309 + $0x169] sm:$0xff]
        %v2549 = vld [vmem:[%s2309 + $0x171] sm:$0xff]
        %v2550 = vld [vmem:[%s2309 + $0x2] sm:$0xff]
        %v2551 = vld [vmem:[%s2309 + $0xa] sm:$0xff]
        %v2552 = vld [vmem:[%s2309 + $0x1a] sm:$0xff]
        %v2553 = vld [vmem:[%s2309 + $0x22] sm:$0xff]
        %v2554 = vld [vmem:[%s2309 + $0x32] sm:$0xff]
        %v2555 = vld [vmem:[%s2309 + $0x3a] sm:$0xff]
        %v2556 = vld [vmem:[%s2309 + $0x4a] sm:$0xff]
        %v2557 = vld [vmem:[%s2309 + $0x52] sm:$0xff]
        %v2558 = vld [vmem:[%s2309 + $0x62] sm:$0xff]
        %v2559 = vld [vmem:[%s2309 + $0x6a] sm:$0xff]
        %v2560 = vld [vmem:[%s2309 + $0x7a] sm:$0xff]
        %v2561 = vld [vmem:[%s2309 + $0x82] sm:$0xff]
        %v2562 = vld [vmem:[%s2309 + $0x92] sm:$0xff]
        %v2563 = vld [vmem:[%s2309 + $0x9a] sm:$0xff]
        %v2564 = vld [vmem:[%s2309 + $0xaa] sm:$0xff]
        %v2565 = vld [vmem:[%s2309 + $0xb2] sm:$0xff]
        %v2566 = vld [vmem:[%s2309 + $0xc2] sm:$0xff]
        %v2567 = vld [vmem:[%s2309 + $0xca] sm:$0xff]
        %v2568 = vld [vmem:[%s2309 + $0xda] sm:$0xff]
        %v2569 = vld [vmem:[%s2309 + $0xe2] sm:$0xff]
        %v2570 = vld [vmem:[%s2309 + $0xf2] sm:$0xff]
        %v2571 = vld [vmem:[%s2309 + $0xfa] sm:$0xff]
        %v2572 = vld [vmem:[%s2309 + $0x10a] sm:$0xff]
        %v2573 = vld [vmem:[%s2309 + $0x112] sm:$0xff]
        %v2574 = vld [vmem:[%s2309 + $0x122] sm:$0xff]
        %v2575 = vld [vmem:[%s2309 + $0x12a] sm:$0xff]
        %v2576 = vld [vmem:[%s2309 + $0x13a] sm:$0xff]
        %v2577 = vld [vmem:[%s2309 + $0x142] sm:$0xff]
        %v2578 = vld [vmem:[%s2309 + $0x152] sm:$0xff]
        %v2579 = vld [vmem:[%s2309 + $0x15a] sm:$0xff]
        %v2580 = vld [vmem:[%s2309 + $0x16a] sm:$0xff]
        %v2581 = vld [vmem:[%s2309 + $0x172] sm:$0xff]
        %v2582 = vld [vmem:[#allocation9 + $0x180] sm:$0xff]
        %v2583 = vld [vmem:[#allocation9 + $0x188] sm:$0xff]
        %v2584 = vld [vmem:[#allocation9 + $0x190] sm:$0xff]
        %v2585 = vld [vmem:[#allocation9 + $0x198] sm:$0xff]
        %v2586 = vld [vmem:[#allocation9 + $0x1a0] sm:$0xff]
        %v2587 = vld [vmem:[#allocation9 + $0x1a8] sm:$0xff]
        %v2588 = vld [vmem:[#allocation9 + $0x1b0] sm:$0xff]
        %v2589 = vld [vmem:[#allocation9 + $0x1b8] sm:$0xff]
        %v2590 = vld [vmem:[#allocation9 + $0x1c0] sm:$0xff]
        %v2591 = vld [vmem:[#allocation9 + $0x1c8] sm:$0xff]
        %v2592 = vld [vmem:[#allocation9 + $0x1d0] sm:$0xff]
        %v2593 = vld [vmem:[#allocation9 + $0x1d8] sm:$0xff]
        %v2594 = vld [vmem:[#allocation9 + $0x1e0] sm:$0xff]
        %v2595 = vld [vmem:[#allocation9 + $0x1e8] sm:$0xff]
        %v2596 = vld [vmem:[#allocation9 + $0x1f0] sm:$0xff]
        %v2597 = vld [vmem:[#allocation9 + $0x1f8] sm:$0xff]
        %v2598 = vld [vmem:[#allocation9 + $0x200] sm:$0xff]
        %v2599 = vld [vmem:[#allocation9 + $0x208] sm:$0xff]
        %v2600 = vld [vmem:[#allocation9 + $0x210] sm:$0xff]
        %v2601 = vld [vmem:[#allocation9 + $0x218] sm:$0xff]
        %v2602 = vld [vmem:[#allocation9 + $0x220] sm:$0xff]
        %v2603 = vld [vmem:[#allocation9 + $0x228] sm:$0xff]
        %v2604 = vld [vmem:[#allocation9 + $0x230] sm:$0xff]
        %v2605 = vld [vmem:[#allocation9 + $0x238] sm:$0xff]
        %v2606 = vld [vmem:[#allocation9 + $0x240] sm:$0xff]
        %v2607 = vld [vmem:[#allocation9 + $0x248] sm:$0xff]
        %v2608 = vld [vmem:[#allocation9 + $0x250] sm:$0xff]
        %v2609 = vld [vmem:[#allocation9 + $0x258] sm:$0xff]
        %v2610 = vld [vmem:[#allocation9 + $0x260] sm:$0xff]
        %v2611 = vld [vmem:[#allocation9 + $0x268] sm:$0xff]
        %v2612 = vld [vmem:[#allocation9 + $0x270] sm:$0xff]
        %v2613 = vld [vmem:[#allocation9 + $0x278] sm:$0xff]
        %v2614 = vld [vmem:[#allocation9 + $0x280] sm:$0xff]
        %v2615 = vld [vmem:[#allocation9 + $0x288] sm:$0xff]
        %v2616 = vld [vmem:[#allocation9 + $0x290] sm:$0xff]
        %v2617 = vld [vmem:[#allocation9 + $0x298] sm:$0xff]
        %v2618 = vld [vmem:[#allocation9 + $0x2a0] sm:$0xff]
        %v2619 = vld [vmem:[#allocation9 + $0x2a8] sm:$0xff]
        %v2620 = vld [vmem:[#allocation9 + $0x2b0] sm:$0xff]
        %v2621 = vld [vmem:[#allocation9 + $0x2b8] sm:$0xff]
        %v2622 = vld [vmem:[#allocation9 + $0x2c0] sm:$0xff]
        %v2623 = vld [vmem:[#allocation9 + $0x2c8] sm:$0xff]
        %v2624 = vld [vmem:[#allocation9 + $0x2d0] sm:$0xff]
        %v2625 = vld [vmem:[#allocation9 + $0x2d8] sm:$0xff]
        %v2626 = vld [vmem:[#allocation9 + $0x2e0] sm:$0xff]
        %v2627 = vld [vmem:[#allocation9 + $0x2e8] sm:$0xff]
        %v2628 = vld [vmem:[#allocation9 + $0x2f0] sm:$0xff]
        %v2629 = vld [vmem:[#allocation9 + $0x2f8] sm:$0xff]
        %2630 = vmatprep.subr.mxu0 0.0
        %2631 = vmatpush1.msra.mxu0 %v2582
        %2632 = vmatprep.subr.mxu0 0.0
        %2633 = vmatpush1.msra.mxu0 %v2583
        %2634 = vmatprep.subr.mxu0 0.0
        %2635 = vmatpush1.msra.mxu0 %v2584
        %2636 = vmatprep.subr.mxu0 0.0
        %2637 = vmatpush1.msra.mxu0 %v2585
        %2638 = vmatprep.subr.mxu0 0.0
        %2639 = vmatpush1.msra.mxu0 %v2586
        %2640 = vmatprep.subr.mxu0 0.0
        %2641 = vmatpush1.msra.mxu0 %v2587
        %2642 = vmatprep.subr.mxu0 0.0
        %2643 = vmatpush1.msra.mxu0 %v2588
        %2644 = vmatprep.subr.mxu0 0.0
        %2645 = vmatpush1.msra.mxu0 %v2589
        %2646 = vmatprep.subr.mxu0 0.0
        %2647 = vmatpush1.msra.mxu0 %v2590
        %2648 = vmatprep.subr.mxu0 0.0
        %2649 = vmatpush1.msra.mxu0 %v2591
        %2650 = vmatprep.subr.mxu0 0.0
        %2651 = vmatpush1.msra.mxu0 %v2592
        %2652 = vmatprep.subr.mxu0 0.0
        %2653 = vmatpush1.msra.mxu0 %v2593
        %2654 = vmatprep.subr.mxu0 0.0
        %2655 = vmatpush1.msra.mxu0 %v2594
        %2656 = vmatprep.subr.mxu0 0.0
        %2657 = vmatpush1.msra.mxu0 %v2595
        %2658 = vmatprep.subr.mxu0 0.0
        %2659 = vmatpush1.msra.mxu0 %v2596
        %2660 = vmatprep.subr.mxu0 0.0
        %2661 = vmatpush1.msra.mxu0 %v2597
        %2662 = vmatprep.subr.mxu0 0.0
        %2663 = vmatpush1.msra.mxu0 %v2598
        %2664 = vmatprep.subr.mxu0 0.0
        %2665 = vmatpush1.msra.mxu0 %v2599
        %2666 = vmatprep.subr.mxu0 0.0
        %2667 = vmatpush1.msra.mxu0 %v2600
        %2668 = vmatprep.subr.mxu0 0.0
        %2669 = vmatpush1.msra.mxu0 %v2601
        %2670 = vmatprep.subr.mxu0 0.0
        %2671 = vmatpush1.msra.mxu0 %v2602
        %2672 = vmatprep.subr.mxu0 0.0
        %2673 = vmatpush1.msra.mxu0 %v2603
        %2674 = vmatprep.subr.mxu0 0.0
        %2675 = vmatpush1.msra.mxu0 %v2604
        %2676 = vmatprep.subr.mxu0 0.0
        %2677 = vmatpush1.msra.mxu0 %v2605
        %2678 = vmatprep.subr.mxu0 0.0
        %2679 = vmatpush1.msra.mxu0 %v2606
        %2680 = vmatprep.subr.mxu0 0.0
        %2681 = vmatpush1.msra.mxu0 %v2607
        %2682 = vmatprep.subr.mxu0 0.0
        %2683 = vmatpush1.msra.mxu0 %v2608
        %2684 = vmatprep.subr.mxu0 0.0
        %2685 = vmatpush1.msra.mxu0 %v2609
        %2686 = vmatprep.subr.mxu0 0.0
        %2687 = vmatpush1.msra.mxu0 %v2610
        %2688 = vmatprep.subr.mxu0 0.0
        %2689 = vmatpush1.msra.mxu0 %v2611
        %2690 = vmatprep.subr.mxu0 0.0
        %2691 = vmatpush1.msra.mxu0 %v2612
        %2692 = vmatprep.subr.mxu0 0.0
        %2693 = vmatpush1.msra.mxu0 %v2613
        %2694 = vmatprep.mubr.f32.mxu0 %v2518
        %2695 = vmatmul.mubr.f32.gmra.mrb[0].mxu0 %v2486
        %v2696 = vpop.f32.mrb[0].mxu0
        %v2697 = vadd.f32 0.0, %v2696
        %v2698 = vpop.f32.mrb[0].mxu0
        %2699 = vmatprep.mubr.f32.mxu0 %v2519
        %2700 = vmatmul.mubr.f32.gmra.mrb[0].mxu0 %v2487
        %v2701 = vpop.f32.mrb[0].mxu0
        %v2702 = vadd.f32 0.0, %v2701
        %v2703 = vpop.f32.mrb[0].mxu0
        %2704 = vmatprep.mubr.f32.mxu0 %v2520
        %2705 = vmatmul.mubr.f32.gmra.mrb[0].mxu0 %v2488
        %v2706 = vpop.f32.mrb[0].mxu0
        %v2707 = vadd.f32 0.0, %v2706
        %v2708 = vpop.f32.mrb[0].mxu0
        %2709 = vmatprep.mubr.f32.mxu0 %v2521
        %2710 = vmatmul.mubr.f32.gmra.mrb[0].mxu0 %v2489
        %v2711 = vpop.f32.mrb[0].mxu0
        %v2712 = vadd.f32 0.0, %v2711
        %v2713 = vpop.f32.mrb[0].mxu0
        %2714 = vmatprep.mubr.f32.mxu0 %v2522
        %2715 = vmatmul.mubr.f32.gmra.mrb[0].mxu0 %v2490
        %v2716 = vpop.f32.mrb[0].mxu0
        %v2717 = vadd.f32 0.0, %v2716
        %v2718 = vpop.f32.mrb[0].mxu0
        %2719 = vmatprep.mubr.f32.mxu0 %v2523
        %2720 = vmatmul.mubr.f32.gmra.mrb[0].mxu0 %v2491
        %v2721 = vpop.f32.mrb[0].mxu0
        %v2722 = vadd.f32 0.0, %v2721
        %v2723 = vpop.f32.mrb[0].mxu0
        %2724 = vmatprep.mubr.f32.mxu0 %v2524
        %2725 = vmatmul.mubr.f32.gmra.mrb[0].mxu0 %v2492
        %v2726 = vpop.f32.mrb[0].mxu0
        %v2727 = vadd.f32 0.0, %v2726
        %v2728 = vpop.f32.mrb[0].mxu0
        %2729 = vmatprep.mubr.f32.mxu0 %v2525
        %2730 = vmatmul.mubr.f32.gmra.mrb[0].mxu0 %v2493
        %v2731 = vpop.f32.mrb[0].mxu0
        %v2732 = vadd.f32 0.0, %v2731
        %v2733 = vpop.f32.mrb[0].mxu0
        %2734 = vmatprep.mubr.f32.mxu0 %v2526
        %2735 = vmatmul.mubr.f32.gmra.mrb[0].mxu0 %v2494
        %v2736 = vpop.f32.mrb[0].mxu0
        %v2737 = vadd.f32 0.0, %v2736
        %v2738 = vpop.f32.mrb[0].mxu0
        %2739 = vmatprep.mubr.f32.mxu0 %v2527
        %2740 = vmatmul.mubr.f32.gmra.mrb[0].mxu0 %v2495
        %v2741 = vpop.f32.mrb[0].mxu0
        %v2742 = vadd.f32 0.0, %v2741
        %v2743 = vpop.f32.mrb[0].mxu0
        %2744 = vmatprep.mubr.f32.mxu0 %v2528
        %2745 = vmatmul.mubr.f32.gmra.mrb[0].mxu0 %v2496
        %v2746 = vpop.f32.mrb[0].mxu0
        %v2747 = vadd.f32 0.0, %v2746
        %v2748 = vpop.f32.mrb[0].mxu0
        %2749 = vmatprep.mubr.f32.mxu0 %v2529
        %2750 = vmatmul.mubr.f32.gmra.mrb[0].mxu0 %v2497
        %v2751 = vpop.f32.mrb[0].mxu0
        %v2752 = vadd.f32 0.0, %v2751
        %v2753 = vpop.f32.mrb[0].mxu0
        %2754 = vmatprep.mubr.f32.mxu0 %v2530
        %2755 = vmatmul.mubr.f32.gmra.mrb[0].mxu0 %v2498
        %v2756 = vpop.f32.mrb[0].mxu0
        %v2757 = vadd.f32 0.0, %v2756
        %v2758 = vpop.f32.mrb[0].mxu0
        %2759 = vmatprep.mubr.f32.mxu0 %v2531
        %2760 = vmatmul.mubr.f32.gmra.mrb[0].mxu0 %v2499
        %v2761 = vpop.f32.mrb[0].mxu0
        %v2762 = vadd.f32 0.0, %v2761
        %v2763 = vpop.f32.mrb[0].mxu0
        %2764 = vmatprep.mubr.f32.mxu0 %v2532
        %2765 = vmatmul.mubr.f32.gmra.mrb[0].mxu0 %v2500
        %v2766 = vpop.f32.mrb[0].mxu0
        %v2767 = vadd.f32 0.0, %v2766
        %v2768 = vpop.f32.mrb[0].mxu0
        %2769 = vmatprep.mubr.f32.mxu0 %v2533
        %2770 = vmatmul.mubr.f32.gmra.mrb[0].mxu0 %v2501
        %v2771 = vpop.f32.mrb[0].mxu0
        %v2772 = vadd.f32 0.0, %v2771
        %v2773 = vpop.f32.mrb[0].mxu0
        %2774 = vmatprep.mubr.f32.mxu0 %v2534
        %2775 = vmatmul.mubr.f32.gmra.mrb[0].mxu0 %v2502
        %v2776 = vpop.f32.mrb[0].mxu0
        %v2777 = vadd.f32 0.0, %v2776
        %v2778 = vpop.f32.mrb[0].mxu0
        %2779 = vmatprep.mubr.f32.mxu0 %v2535
        %2780 = vmatmul.mubr.f32.gmra.mrb[0].mxu0 %v2503
        %v2781 = vpop.f32.mrb[0].mxu0
        %v2782 = vadd.f32 0.0, %v2781
        %v2783 = vpop.f32.mrb[0].mxu0
        %2784 = vmatprep.mubr.f32.mxu0 %v2536
        %2785 = vmatmul.mubr.f32.gmra.mrb[0].mxu0 %v2504
        %v2786 = vpop.f32.mrb[0].mxu0
        %v2787 = vadd.f32 0.0, %v2786
        %v2788 = vpop.f32.mrb[0].mxu0
        %2789 = vmatprep.mubr.f32.mxu0 %v2537
        %2790 = vmatmul.mubr.f32.gmra.mrb[0].mxu0 %v2505
        %v2791 = vpop.f32.mrb[0].mxu0
        %v2792 = vadd.f32 0.0, %v2791
        %v2793 = vpop.f32.mrb[0].mxu0
        %2794 = vmatprep.mubr.f32.mxu0 %v2538
        %2795 = vmatmul.mubr.f32.gmra.mrb[0].mxu0 %v2506
        %v2796 = vpop.f32.mrb[0].mxu0
        %v2797 = vadd.f32 0.0, %v2796
        %v2798 = vpop.f32.mrb[0].mxu0
        %2799 = vmatprep.mubr.f32.mxu0 %v2539
        %2800 = vmatmul.mubr.f32.gmra.mrb[0].mxu0 %v2507
        %v2801 = vpop.f32.mrb[0].mxu0
        %v2802 = vadd.f32 0.0, %v2801
        %v2803 = vpop.f32.mrb[0].mxu0
        %2804 = vmatprep.mubr.f32.mxu0 %v2540
        %2805 = vmatmul.mubr.f32.gmra.mrb[0].mxu0 %v2508
        %v2806 = vpop.f32.mrb[0].mxu0
        %v2807 = vadd.f32 0.0, %v2806
        %v2808 = vpop.f32.mrb[0].mxu0
        %2809 = vmatprep.mubr.f32.mxu0 %v2541
        %2810 = vmatmul.mubr.f32.gmra.mrb[0].mxu0 %v2509
        %v2811 = vpop.f32.mrb[0].mxu0
        %v2812 = vadd.f32 0.0, %v2811
        %v2813 = vpop.f32.mrb[0].mxu0
        %2814 = vmatprep.mubr.f32.mxu0 %v2542
        %2815 = vmatmul.mubr.f32.gmra.mrb[0].mxu0 %v2510
        %v2816 = vpop.f32.mrb[0].mxu0
        %v2817 = vadd.f32 0.0, %v2816
        %v2818 = vpop.f32.mrb[0].mxu0
        %2819 = vmatprep.mubr.f32.mxu0 %v2543
        %2820 = vmatmul.mubr.f32.gmra.mrb[0].mxu0 %v2511
        %v2821 = vpop.f32.mrb[0].mxu0
        %v2822 = vadd.f32 0.0, %v2821
        %v2823 = vpop.f32.mrb[0].mxu0
        %2824 = vmatprep.mubr.f32.mxu0 %v2544
        %2825 = vmatmul.mubr.f32.gmra.mrb[0].mxu0 %v2512
        %v2826 = vpop.f32.mrb[0].mxu0
        %v2827 = vadd.f32 0.0, %v2826
        %v2828 = vpop.f32.mrb[0].mxu0
        %2829 = vmatprep.mubr.f32.mxu0 %v2545
        %2830 = vmatmul.mubr.f32.gmra.mrb[0].mxu0 %v2513
        %v2831 = vpop.f32.mrb[0].mxu0
        %v2832 = vadd.f32 0.0, %v2831
        %v2833 = vpop.f32.mrb[0].mxu0
        %2834 = vmatprep.mubr.f32.mxu0 %v2546
        %2835 = vmatmul.mubr.f32.gmra.mrb[0].mxu0 %v2514
        %v2836 = vpop.f32.mrb[0].mxu0
        %v2837 = vadd.f32 0.0, %v2836
        %v2838 = vpop.f32.mrb[0].mxu0
        %2839 = vmatprep.mubr.f32.mxu0 %v2547
        %2840 = vmatmul.mubr.f32.gmra.mrb[0].mxu0 %v2515
        %v2841 = vpop.f32.mrb[0].mxu0
        %v2842 = vadd.f32 0.0, %v2841
        %v2843 = vpop.f32.mrb[0].mxu0
        %2844 = vmatprep.mubr.f32.mxu0 %v2548
        %2845 = vmatmul.mubr.f32.gmra.mrb[0].mxu0 %v2516
        %v2846 = vpop.f32.mrb[0].mxu0
        %v2847 = vadd.f32 0.0, %v2846
        %v2848 = vpop.f32.mrb[0].mxu0
        %2849 = vmatprep.mubr.f32.mxu0 %v2549
        %2850 = vmatmul.mubr.f32.gmra.mrb[0].mxu0 %v2517
        %v2851 = vpop.f32.mrb[0].mxu0
        %v2852 = vadd.f32 0.0, %v2851
        %v2853 = vpop.f32.mrb[0].mxu0
        %2854 = vdwg.mxu0
        %2855 = vmatprep.subr.mxu0 0.0
        %2856 = vmatpush1.msra.mxu0 %v2614
        %2857 = vmatprep.subr.mxu0 0.0
        %2858 = vmatpush1.msra.mxu0 %v2615
        %2859 = vmatprep.subr.mxu0 0.0
        %2860 = vmatpush1.msra.mxu0 %v2616
        %2861 = vmatprep.subr.mxu0 0.0
        %2862 = vmatpush1.msra.mxu0 %v2617
        %2863 = vmatprep.subr.mxu0 0.0
        %2864 = vmatpush1.msra.mxu0 %v2618
        %2865 = vmatprep.subr.mxu0 0.0
        %2866 = vmatpush1.msra.mxu0 %v2619
        %2867 = vmatprep.subr.mxu0 0.0
        %2868 = vmatpush1.msra.mxu0 %v2620
        %2869 = vmatprep.subr.mxu0 0.0
        %2870 = vmatpush1.msra.mxu0 %v2621
        %2871 = vmatprep.subr.mxu0 0.0
        %2872 = vmatpush1.msra.mxu0 %v2622
        %2873 = vmatprep.subr.mxu0 0.0
        %2874 = vmatpush1.msra.mxu0 %v2623
        %2875 = vmatprep.subr.mxu0 0.0
        %2876 = vmatpush1.msra.mxu0 %v2624
        %2877 = vmatprep.subr.mxu0 0.0
        %2878 = vmatpush1.msra.mxu0 %v2625
        %2879 = vmatprep.subr.mxu0 0.0
        %2880 = vmatpush1.msra.mxu0 %v2626
        %2881 = vmatprep.subr.mxu0 0.0
        %2882 = vmatpush1.msra.mxu0 %v2627
        %2883 = vmatprep.subr.mxu0 0.0
        %2884 = vmatpush1.msra.mxu0 %v2628
        %2885 = vmatprep.subr.mxu0 0.0
        %2886 = vmatpush1.msra.mxu0 %v2629
        %2887 = vmatprep.subr.mxu0 0.0
        %2888 = vmatpush1.msra.mxu0 0.0
        %2889 = vmatprep.subr.mxu0 0.0
        %2890 = vmatpush1.msra.mxu0 0.0
        %2891 = vmatprep.subr.mxu0 0.0
        %2892 = vmatpush1.msra.mxu0 0.0
        %2893 = vmatprep.subr.mxu0 0.0
        %2894 = vmatpush1.msra.mxu0 0.0
        %2895 = vmatprep.subr.mxu0 0.0
        %2896 = vmatpush1.msra.mxu0 0.0
        %2897 = vmatprep.subr.mxu0 0.0
        %2898 = vmatpush1.msra.mxu0 0.0
        %2899 = vmatprep.subr.mxu0 0.0
        %2900 = vmatpush1.msra.mxu0 0.0
        %2901 = vmatprep.subr.mxu0 0.0
        %2902 = vmatpush1.msra.mxu0 0.0
        %2903 = vmatprep.subr.mxu0 0.0
        %2904 = vmatpush1.msra.mxu0 0.0
        %2905 = vmatprep.subr.mxu0 0.0
        %2906 = vmatpush1.msra.mxu0 0.0
        %2907 = vmatprep.subr.mxu0 0.0
        %2908 = vmatpush1.msra.mxu0 0.0
        %2909 = vmatprep.subr.mxu0 0.0
        %2910 = vmatpush1.msra.mxu0 0.0
        %2911 = vmatprep.subr.mxu0 0.0
        %2912 = vmatpush1.msra.mxu0 0.0
        %2913 = vmatprep.subr.mxu0 0.0
        %2914 = vmatpush1.msra.mxu0 0.0
        %2915 = vmatprep.subr.mxu0 0.0
        %2916 = vmatpush1.msra.mxu0 0.0
        %2917 = vmatprep.subr.mxu0 0.0
        %2918 = vmatpush1.msra.mxu0 0.0
        %2919 = vmatprep.mubr.f32.mxu0 0.0
        %2920 = vmatmul.mubr.f32.gmra.mrb[0].mxu0 %v2550
        %v2921 = vpop.f32.mrb[0].mxu0
        %v2922 = vadd.f32 %v2697, %v2921
        %v2923 = vpop.f32.mrb[0].mxu0
        %2924 = vmatprep.mubr.f32.mxu0 0.0
        %2925 = vmatmul.mubr.f32.gmra.mrb[0].mxu0 %v2551
        %v2926 = vpop.f32.mrb[0].mxu0
        %v2927 = vadd.f32 %v2702, %v2926
        %v2928 = vpop.f32.mrb[0].mxu0
        %2929 = vmatprep.mubr.f32.mxu0 0.0
        %2930 = vmatmul.mubr.f32.gmra.mrb[0].mxu0 %v2552
        %v2931 = vpop.f32.mrb[0].mxu0
        %v2932 = vadd.f32 %v2707, %v2931
        %v2933 = vpop.f32.mrb[0].mxu0
        %2934 = vmatprep.mubr.f32.mxu0 0.0
        %2935 = vmatmul.mubr.f32.gmra.mrb[0].mxu0 %v2553
        %v2936 = vpop.f32.mrb[0].mxu0
        %v2937 = vadd.f32 %v2712, %v2936
        %v2938 = vpop.f32.mrb[0].mxu0
        %2939 = vmatprep.mubr.f32.mxu0 0.0
        %2940 = vmatmul.mubr.f32.gmra.mrb[0].mxu0 %v2554
        %v2941 = vpop.f32.mrb[0].mxu0
        %v2942 = vadd.f32 %v2717, %v2941
        %v2943 = vpop.f32.mrb[0].mxu0
        %2944 = vmatprep.mubr.f32.mxu0 0.0
        %2945 = vmatmul.mubr.f32.gmra.mrb[0].mxu0 %v2555
        %v2946 = vpop.f32.mrb[0].mxu0
        %v2947 = vadd.f32 %v2722, %v2946
        %v2948 = vpop.f32.mrb[0].mxu0
        %2949 = vmatprep.mubr.f32.mxu0 0.0
        %2950 = vmatmul.mubr.f32.gmra.mrb[0].mxu0 %v2556
        %v2951 = vpop.f32.mrb[0].mxu0
        %v2952 = vadd.f32 %v2727, %v2951
        %v2953 = vpop.f32.mrb[0].mxu0
        %2954 = vmatprep.mubr.f32.mxu0 0.0
        %2955 = vmatmul.mubr.f32.gmra.mrb[0].mxu0 %v2557
        %v2956 = vpop.f32.mrb[0].mxu0
        %v2957 = vadd.f32 %v2732, %v2956
        %v2958 = vpop.f32.mrb[0].mxu0
        %2959 = vmatprep.mubr.f32.mxu0 0.0
        %2960 = vmatmul.mubr.f32.gmra.mrb[0].mxu0 %v2558
        %v2961 = vpop.f32.mrb[0].mxu0
        %v2962 = vadd.f32 %v2737, %v2961
        %v2963 = vpop.f32.mrb[0].mxu0
        %2964 = vmatprep.mubr.f32.mxu0 0.0
        %2965 = vmatmul.mubr.f32.gmra.mrb[0].mxu0 %v2559
        %v2966 = vpop.f32.mrb[0].mxu0
        %v2967 = vadd.f32 %v2742, %v2966
        %v2968 = vpop.f32.mrb[0].mxu0
        %2969 = vmatprep.mubr.f32.mxu0 0.0
        %2970 = vmatmul.mubr.f32.gmra.mrb[0].mxu0 %v2560
        %v2971 = vpop.f32.mrb[0].mxu0
        %v2972 = vadd.f32 %v2747, %v2971
        %v2973 = vpop.f32.mrb[0].mxu0
        %2974 = vmatprep.mubr.f32.mxu0 0.0
        %2975 = vmatmul.mubr.f32.gmra.mrb[0].mxu0 %v2561
        %v2976 = vpop.f32.mrb[0].mxu0
        %v2977 = vadd.f32 %v2752, %v2976
        %v2978 = vpop.f32.mrb[0].mxu0
        %2979 = vmatprep.mubr.f32.mxu0 0.0
        %2980 = vmatmul.mubr.f32.gmra.mrb[0].mxu0 %v2562
        %v2981 = vpop.f32.mrb[0].mxu0
        %v2982 = vadd.f32 %v2757, %v2981
        %v2983 = vpop.f32.mrb[0].mxu0
        %2984 = vmatprep.mubr.f32.mxu0 0.0
        %2985 = vmatmul.mubr.f32.gmra.mrb[0].mxu0 %v2563
        %v2986 = vpop.f32.mrb[0].mxu0
        %v2987 = vadd.f32 %v2762, %v2986
        %v2988 = vpop.f32.mrb[0].mxu0
        %2989 = vmatprep.mubr.f32.mxu0 0.0
        %2990 = vmatmul.mubr.f32.gmra.mrb[0].mxu0 %v2564
        %v2991 = vpop.f32.mrb[0].mxu0
        %v2992 = vadd.f32 %v2767, %v2991
        %v2993 = vpop.f32.mrb[0].mxu0
        %2994 = vmatprep.mubr.f32.mxu0 0.0
        %2995 = vmatmul.mubr.f32.gmra.mrb[0].mxu0 %v2565
        %v2996 = vpop.f32.mrb[0].mxu0
        %v2997 = vadd.f32 %v2772, %v2996
        %v2998 = vpop.f32.mrb[0].mxu0
        %2999 = vmatprep.mubr.f32.mxu0 0.0
        %3000 = vmatmul.mubr.f32.gmra.mrb[0].mxu0 %v2566
        %v3001 = vpop.f32.mrb[0].mxu0
        %v3002 = vadd.f32 %v2777, %v3001
        %v3003 = vpop.f32.mrb[0].mxu0
        %3004 = vmatprep.mubr.f32.mxu0 0.0
        %3005 = vmatmul.mubr.f32.gmra.mrb[0].mxu0 %v2567
        %v3006 = vpop.f32.mrb[0].mxu0
        %v3007 = vadd.f32 %v2782, %v3006
        %v3008 = vpop.f32.mrb[0].mxu0
        %3009 = vmatprep.mubr.f32.mxu0 0.0
        %3010 = vmatmul.mubr.f32.gmra.mrb[0].mxu0 %v2568
        %v3011 = vpop.f32.mrb[0].mxu0
        %v3012 = vadd.f32 %v2787, %v3011
        %v3013 = vpop.f32.mrb[0].mxu0
        %3014 = vmatprep.mubr.f32.mxu0 0.0
        %3015 = vmatmul.mubr.f32.gmra.mrb[0].mxu0 %v2569
        %v3016 = vpop.f32.mrb[0].mxu0
        %v3017 = vadd.f32 %v2792, %v3016
        %v3018 = vpop.f32.mrb[0].mxu0
        %3019 = vmatprep.mubr.f32.mxu0 0.0
        %3020 = vmatmul.mubr.f32.gmra.mrb[0].mxu0 %v2570
        %v3021 = vpop.f32.mrb[0].mxu0
        %v3022 = vadd.f32 %v2797, %v3021
        %v3023 = vpop.f32.mrb[0].mxu0
        %3024 = vmatprep.mubr.f32.mxu0 0.0
        %3025 = vmatmul.mubr.f32.gmra.mrb[0].mxu0 %v2571
        %v3026 = vpop.f32.mrb[0].mxu0
        %v3027 = vadd.f32 %v2802, %v3026
        %v3028 = vpop.f32.mrb[0].mxu0
        %3029 = vmatprep.mubr.f32.mxu0 0.0
        %3030 = vmatmul.mubr.f32.gmra.mrb[0].mxu0 %v2572
        %v3031 = vpop.f32.mrb[0].mxu0
        %v3032 = vadd.f32 %v2807, %v3031
        %v3033 = vpop.f32.mrb[0].mxu0
        %3034 = vmatprep.mubr.f32.mxu0 0.0
        %3035 = vmatmul.mubr.f32.gmra.mrb[0].mxu0 %v2573
        %v3036 = vpop.f32.mrb[0].mxu0
        %v3037 = vadd.f32 %v2812, %v3036
        %v3038 = vpop.f32.mrb[0].mxu0
        %3039 = vmatprep.mubr.f32.mxu0 0.0
        %3040 = vmatmul.mubr.f32.gmra.mrb[0].mxu0 %v2574
        %v3041 = vpop.f32.mrb[0].mxu0
        %v3042 = vadd.f32 %v2817, %v3041
        %v3043 = vpop.f32.mrb[0].mxu0
        %3044 = vmatprep.mubr.f32.mxu0 0.0
        %3045 = vmatmul.mubr.f32.gmra.mrb[0].mxu0 %v2575
        %v3046 = vpop.f32.mrb[0].mxu0
        %v3047 = vadd.f32 %v2822, %v3046
        %v3048 = vpop.f32.mrb[0].mxu0
        %3049 = vmatprep.mubr.f32.mxu0 0.0
        %3050 = vmatmul.mubr.f32.gmra.mrb[0].mxu0 %v2576
        %v3051 = vpop.f32.mrb[0].mxu0
        %v3052 = vadd.f32 %v2827, %v3051
        %v3053 = vpop.f32.mrb[0].mxu0
        %3054 = vmatprep.mubr.f32.mxu0 0.0
        %3055 = vmatmul.mubr.f32.gmra.mrb[0].mxu0 %v2577
        %v3056 = vpop.f32.mrb[0].mxu0
        %v3057 = vadd.f32 %v2832, %v3056
        %v3058 = vpop.f32.mrb[0].mxu0
        %3059 = vmatprep.mubr.f32.mxu0 0.0
        %3060 = vmatmul.mubr.f32.gmra.mrb[0].mxu0 %v2578
        %v3061 = vpop.f32.mrb[0].mxu0
        %v3062 = vadd.f32 %v2837, %v3061
        %v3063 = vpop.f32.mrb[0].mxu0
        %3064 = vmatprep.mubr.f32.mxu0 0.0
        %3065 = vmatmul.mubr.f32.gmra.mrb[0].mxu0 %v2579
        %v3066 = vpop.f32.mrb[0].mxu0
        %v3067 = vadd.f32 %v2842, %v3066
        %v3068 = vpop.f32.mrb[0].mxu0
        %3069 = vmatprep.mubr.f32.mxu0 0.0
        %3070 = vmatmul.mubr.f32.gmra.mrb[0].mxu0 %v2580
        %v3071 = vpop.f32.mrb[0].mxu0
        %v3072 = vadd.f32 %v2847, %v3071
        %v3073 = vpop.f32.mrb[0].mxu0
        %3074 = vmatprep.mubr.f32.mxu0 0.0
        %3075 = vmatmul.mubr.f32.gmra.mrb[0].mxu0 %v2581
        %v3076 = vpop.f32.mrb[0].mxu0
        %v3077 = vadd.f32 %v2852, %v3076
        %v3078 = vpop.f32.mrb[0].mxu0
        %3079 = vdwg.mxu0
        %3080 = vmatprep.subr.mxu0 0.0
        %3081 = vmatpush1.msra.mxu0 %v2438
        %3082 = vmatprep.subr.mxu0 0.0
        %3083 = vmatpush1.msra.mxu0 %v2439
        %3084 = vmatprep.subr.mxu0 0.0
        %3085 = vmatpush1.msra.mxu0 %v2440
        %3086 = vmatprep.subr.mxu0 0.0
        %3087 = vmatpush1.msra.mxu0 %v2441
        %3088 = vmatprep.subr.mxu0 0.0
        %3089 = vmatpush1.msra.mxu0 %v2442
        %3090 = vmatprep.subr.mxu0 0.0
        %3091 = vmatpush1.msra.mxu0 %v2443
        %3092 = vmatprep.subr.mxu0 0.0
        %3093 = vmatpush1.msra.mxu0 %v2444
        %3094 = vmatprep.subr.mxu0 0.0
        %3095 = vmatpush1.msra.mxu0 %v2445
        %3096 = vmatprep.subr.mxu0 0.0
        %3097 = vmatpush1.msra.mxu0 %v2446
        %3098 = vmatprep.subr.mxu0 0.0
        %3099 = vmatpush1.msra.mxu0 %v2447
        %3100 = vmatprep.subr.mxu0 0.0
        %3101 = vmatpush1.msra.mxu0 %v2448
        %3102 = vmatprep.subr.mxu0 0.0
        %3103 = vmatpush1.msra.mxu0 %v2449
        %3104 = vmatprep.subr.mxu0 0.0
        %3105 = vmatpush1.msra.mxu0 %v2450
        %3106 = vmatprep.subr.mxu0 0.0
        %3107 = vmatpush1.msra.mxu0 %v2451
        %3108 = vmatprep.subr.mxu0 0.0
        %3109 = vmatpush1.msra.mxu0 %v2452
        %3110 = vmatprep.subr.mxu0 0.0
        %3111 = vmatpush1.msra.mxu0 %v2453
        %3112 = vmatprep.subr.mxu0 0.0
        %3113 = vmatpush1.msra.mxu0 %v2454
        %3114 = vmatprep.subr.mxu0 0.0
        %3115 = vmatpush1.msra.mxu0 %v2455
        %3116 = vmatprep.subr.mxu0 0.0
        %3117 = vmatpush1.msra.mxu0 %v2456
        %3118 = vmatprep.subr.mxu0 0.0
        %3119 = vmatpush1.msra.mxu0 %v2457
        %3120 = vmatprep.subr.mxu0 0.0
        %3121 = vmatpush1.msra.mxu0 %v2458
        %3122 = vmatprep.subr.mxu0 0.0
        %3123 = vmatpush1.msra.mxu0 %v2459
        %3124 = vmatprep.subr.mxu0 0.0
        %3125 = vmatpush1.msra.mxu0 %v2460
        %3126 = vmatprep.subr.mxu0 0.0
        %3127 = vmatpush1.msra.mxu0 %v2461
        %3128 = vmatprep.subr.mxu0 0.0
        %3129 = vmatpush1.msra.mxu0 %v2462
        %3130 = vmatprep.subr.mxu0 0.0
        %3131 = vmatpush1.msra.mxu0 %v2463
        %3132 = vmatprep.subr.mxu0 0.0
        %3133 = vmatpush1.msra.mxu0 %v2464
        %3134 = vmatprep.subr.mxu0 0.0
        %3135 = vmatpush1.msra.mxu0 %v2465
        %3136 = vmatprep.subr.mxu0 0.0
        %3137 = vmatpush1.msra.mxu0 %v2466
        %3138 = vmatprep.subr.mxu0 0.0
        %3139 = vmatpush1.msra.mxu0 %v2467
        %3140 = vmatprep.subr.mxu0 0.0
        %3141 = vmatpush1.msra.mxu0 %v2468
        %3142 = vmatprep.subr.mxu0 0.0
        %3143 = vmatpush1.msra.mxu0 %v2469
        %3144 = vmatprep.mubr.f32.mxu0 %v2374
        %3145 = vmatmul.mubr.f32.gmra.mrb[0].mxu0 %v2342
        %v3146 = vpop.f32.mrb[0].mxu0
        %v3147 = vadd.f32 %v2922, %v3146
        %v3148 = vpop.f32.mrb[0].mxu0
        %3149 = vmatprep.mubr.f32.mxu0 %v2375
        %3150 = vmatmul.mubr.f32.gmra.mrb[0].mxu0 %v2343
        %v3151 = vpop.f32.mrb[0].mxu0
        %v3152 = vadd.f32 %v2927, %v3151
        %v3153 = vpop.f32.mrb[0].mxu0
        %3154 = vmatprep.mubr.f32.mxu0 %v2376
        %3155 = vmatmul.mubr.f32.gmra.mrb[0].mxu0 %v2344
        %v3156 = vpop.f32.mrb[0].mxu0
        %v3157 = vadd.f32 %v2932, %v3156
        %v3158 = vpop.f32.mrb[0].mxu0
        %3159 = vmatprep.mubr.f32.mxu0 %v2377
        %3160 = vmatmul.mubr.f32.gmra.mrb[0].mxu0 %v2345
        %v3161 = vpop.f32.mrb[0].mxu0
        %v3162 = vadd.f32 %v2937, %v3161
        %v3163 = vpop.f32.mrb[0].mxu0
        %3164 = vmatprep.mubr.f32.mxu0 %v2378
        %3165 = vmatmul.mubr.f32.gmra.mrb[0].mxu0 %v2346
        %v3166 = vpop.f32.mrb[0].mxu0
        %v3167 = vadd.f32 %v2942, %v3166
        %v3168 = vpop.f32.mrb[0].mxu0
        %3169 = vmatprep.mubr.f32.mxu0 %v2379
        %3170 = vmatmul.mubr.f32.gmra.mrb[0].mxu0 %v2347
        %v3171 = vpop.f32.mrb[0].mxu0
        %v3172 = vadd.f32 %v2947, %v3171
        %v3173 = vpop.f32.mrb[0].mxu0
        %3174 = vmatprep.mubr.f32.mxu0 %v2380
        %3175 = vmatmul.mubr.f32.gmra.mrb[0].mxu0 %v2348
        %v3176 = vpop.f32.mrb[0].mxu0
        %v3177 = vadd.f32 %v2952, %v3176
        %v3178 = vpop.f32.mrb[0].mxu0
        %3179 = vmatprep.mubr.f32.mxu0 %v2381
        %3180 = vmatmul.mubr.f32.gmra.mrb[0].mxu0 %v2349
        %v3181 = vpop.f32.mrb[0].mxu0
        %v3182 = vadd.f32 %v2957, %v3181
        %v3183 = vpop.f32.mrb[0].mxu0
        %3184 = vmatprep.mubr.f32.mxu0 %v2382
        %3185 = vmatmul.mubr.f32.gmra.mrb[0].mxu0 %v2350
        %v3186 = vpop.f32.mrb[0].mxu0
        %v3187 = vadd.f32 %v2962, %v3186
        %v3188 = vpop.f32.mrb[0].mxu0
        %3189 = vmatprep.mubr.f32.mxu0 %v2383
        %3190 = vmatmul.mubr.f32.gmra.mrb[0].mxu0 %v2351
        %v3191 = vpop.f32.mrb[0].mxu0
        %v3192 = vadd.f32 %v2967, %v3191
        %v3193 = vpop.f32.mrb[0].mxu0
        %3194 = vmatprep.mubr.f32.mxu0 %v2384
        %3195 = vmatmul.mubr.f32.gmra.mrb[0].mxu0 %v2352
        %v3196 = vpop.f32.mrb[0].mxu0
        %v3197 = vadd.f32 %v2972, %v3196
        %v3198 = vpop.f32.mrb[0].mxu0
        %3199 = vmatprep.mubr.f32.mxu0 %v2385
        %3200 = vmatmul.mubr.f32.gmra.mrb[0].mxu0 %v2353
        %v3201 = vpop.f32.mrb[0].mxu0
        %v3202 = vadd.f32 %v2977, %v3201
        %v3203 = vpop.f32.mrb[0].mxu0
        %3204 = vmatprep.mubr.f32.mxu0 %v2386
        %3205 = vmatmul.mubr.f32.gmra.mrb[0].mxu0 %v2354
        %v3206 = vpop.f32.mrb[0].mxu0
        %v3207 = vadd.f32 %v2982, %v3206
        %v3208 = vpop.f32.mrb[0].mxu0
        %3209 = vmatprep.mubr.f32.mxu0 %v2387
        %3210 = vmatmul.mubr.f32.gmra.mrb[0].mxu0 %v2355
        %v3211 = vpop.f32.mrb[0].mxu0
        %v3212 = vadd.f32 %v2987, %v3211
        %v3213 = vpop.f32.mrb[0].mxu0
        %3214 = vmatprep.mubr.f32.mxu0 %v2388
        %3215 = vmatmul.mubr.f32.gmra.mrb[0].mxu0 %v2356
        %v3216 = vpop.f32.mrb[0].mxu0
        %v3217 = vadd.f32 %v2992, %v3216
        %v3218 = vpop.f32.mrb[0].mxu0
        %3219 = vmatprep.mubr.f32.mxu0 %v2389
        %3220 = vmatmul.mubr.f32.gmra.mrb[0].mxu0 %v2357
        %v3221 = vpop.f32.mrb[0].mxu0
        %v3222 = vadd.f32 %v2997, %v3221
        %v3223 = vpop.f32.mrb[0].mxu0
        %3224 = vmatprep.mubr.f32.mxu0 %v2390
        %3225 = vmatmul.mubr.f32.gmra.mrb[0].mxu0 %v2358
        %v3226 = vpop.f32.mrb[0].mxu0
        %v3227 = vadd.f32 %v3002, %v3226
        %v3228 = vpop.f32.mrb[0].mxu0
        %3229 = vmatprep.mubr.f32.mxu0 %v2391
        %3230 = vmatmul.mubr.f32.gmra.mrb[0].mxu0 %v2359
        %v3231 = vpop.f32.mrb[0].mxu0
        %v3232 = vadd.f32 %v3007, %v3231
        %v3233 = vpop.f32.mrb[0].mxu0
        %3234 = vmatprep.mubr.f32.mxu0 %v2392
        %3235 = vmatmul.mubr.f32.gmra.mrb[0].mxu0 %v2360
        %v3236 = vpop.f32.mrb[0].mxu0
        %v3237 = vadd.f32 %v3012, %v3236
        %v3238 = vpop.f32.mrb[0].mxu0
        %3239 = vmatprep.mubr.f32.mxu0 %v2393
        %3240 = vmatmul.mubr.f32.gmra.mrb[0].mxu0 %v2361
        %v3241 = vpop.f32.mrb[0].mxu0
        %v3242 = vadd.f32 %v3017, %v3241
        %v3243 = vpop.f32.mrb[0].mxu0
        %3244 = vmatprep.mubr.f32.mxu0 %v2394
        %3245 = vmatmul.mubr.f32.gmra.mrb[0].mxu0 %v2362
        %v3246 = vpop.f32.mrb[0].mxu0
        %v3247 = vadd.f32 %v3022, %v3246
        %v3248 = vpop.f32.mrb[0].mxu0
        %3249 = vmatprep.mubr.f32.mxu0 %v2395
        %3250 = vmatmul.mubr.f32.gmra.mrb[0].mxu0 %v2363
        %v3251 = vpop.f32.mrb[0].mxu0
        %v3252 = vadd.f32 %v3027, %v3251
        %v3253 = vpop.f32.mrb[0].mxu0
        %3254 = vmatprep.mubr.f32.mxu0 %v2396
        %3255 = vmatmul.mubr.f32.gmra.mrb[0].mxu0 %v2364
        %v3256 = vpop.f32.mrb[0].mxu0
        %v3257 = vadd.f32 %v3032, %v3256
        %v3258 = vpop.f32.mrb[0].mxu0
        %3259 = vmatprep.mubr.f32.mxu0 %v2397
        %3260 = vmatmul.mubr.f32.gmra.mrb[0].mxu0 %v2365
        %v3261 = vpop.f32.mrb[0].mxu0
        %v3262 = vadd.f32 %v3037, %v3261
        %v3263 = vpop.f32.mrb[0].mxu0
        %3264 = vmatprep.mubr.f32.mxu0 %v2398
        %3265 = vmatmul.mubr.f32.gmra.mrb[0].mxu0 %v2366
        %v3266 = vpop.f32.mrb[0].mxu0
        %v3267 = vadd.f32 %v3042, %v3266
        %v3268 = vpop.f32.mrb[0].mxu0
        %3269 = vmatprep.mubr.f32.mxu0 %v2399
        %3270 = vmatmul.mubr.f32.gmra.mrb[0].mxu0 %v2367
        %v3271 = vpop.f32.mrb[0].mxu0
        %v3272 = vadd.f32 %v3047, %v3271
        %v3273 = vpop.f32.mrb[0].mxu0
        %3274 = vmatprep.mubr.f32.mxu0 %v2400
        %3275 = vmatmul.mubr.f32.gmra.mrb[0].mxu0 %v2368
        %v3276 = vpop.f32.mrb[0].mxu0
        %v3277 = vadd.f32 %v3052, %v3276
        %v3278 = vpop.f32.mrb[0].mxu0
        %3279 = vmatprep.mubr.f32.mxu0 %v2401
        %3280 = vmatmul.mubr.f32.gmra.mrb[0].mxu0 %v2369
        %v3281 = vpop.f32.mrb[0].mxu0
        %v3282 = vadd.f32 %v3057, %v3281
        %v3283 = vpop.f32.mrb[0].mxu0
        %3284 = vmatprep.mubr.f32.mxu0 %v2402
        %3285 = vmatmul.mubr.f32.gmra.mrb[0].mxu0 %v2370
        %v3286 = vpop.f32.mrb[0].mxu0
        %v3287 = vadd.f32 %v3062, %v3286
        %v3288 = vpop.f32.mrb[0].mxu0
        %3289 = vmatprep.mubr.f32.mxu0 %v2403
        %3290 = vmatmul.mubr.f32.gmra.mrb[0].mxu0 %v2371
        %v3291 = vpop.f32.mrb[0].mxu0
        %v3292 = vadd.f32 %v3067, %v3291
        %v3293 = vpop.f32.mrb[0].mxu0
        %3294 = vmatprep.mubr.f32.mxu0 %v2404
        %3295 = vmatmul.mubr.f32.gmra.mrb[0].mxu0 %v2372
        %v3296 = vpop.f32.mrb[0].mxu0
        %v3297 = vadd.f32 %v3072, %v3296
        %v3298 = vpop.f32.mrb[0].mxu0
        %3299 = vmatprep.mubr.f32.mxu0 %v2405
        %3300 = vmatmul.mubr.f32.gmra.mrb[0].mxu0 %v2373
        %v3301 = vpop.f32.mrb[0].mxu0
        %v3302 = vadd.f32 %v3077, %v3301
        %v3303 = vpop.f32.mrb[0].mxu0
        %3304 = vdwg.mxu0
        %3305 = vmatprep.subr.mxu0 0.0
        %3306 = vmatpush1.msra.mxu0 %v2470
        %3307 = vmatprep.subr.mxu0 0.0
        %3308 = vmatpush1.msra.mxu0 %v2471
        %3309 = vmatprep.subr.mxu0 0.0
        %3310 = vmatpush1.msra.mxu0 %v2472
        %3311 = vmatprep.subr.mxu0 0.0
        %3312 = vmatpush1.msra.mxu0 %v2473
        %3313 = vmatprep.subr.mxu0 0.0
        %3314 = vmatpush1.msra.mxu0 %v2474
        %3315 = vmatprep.subr.mxu0 0.0
        %3316 = vmatpush1.msra.mxu0 %v2475
        %3317 = vmatprep.subr.mxu0 0.0
        %3318 = vmatpush1.msra.mxu0 %v2476
        %3319 = vmatprep.subr.mxu0 0.0
        %3320 = vmatpush1.msra.mxu0 %v2477
        %3321 = vmatprep.subr.mxu0 0.0
        %3322 = vmatpush1.msra.mxu0 %v2478
        %3323 = vmatprep.subr.mxu0 0.0
        %3324 = vmatpush1.msra.mxu0 %v2479
        %3325 = vmatprep.subr.mxu0 0.0
        %3326 = vmatpush1.msra.mxu0 %v2480
        %3327 = vmatprep.subr.mxu0 0.0
        %3328 = vmatpush1.msra.mxu0 %v2481
        %3329 = vmatprep.subr.mxu0 0.0
        %3330 = vmatpush1.msra.mxu0 %v2482
        %3331 = vmatprep.subr.mxu0 0.0
        %3332 = vmatpush1.msra.mxu0 %v2483
        %3333 = vmatprep.subr.mxu0 0.0
        %3334 = vmatpush1.msra.mxu0 %v2484
        %3335 = vmatprep.subr.mxu0 0.0
        %3336 = vmatpush1.msra.mxu0 %v2485
        %3337 = vmatprep.subr.mxu0 0.0
        %3338 = vmatpush1.msra.mxu0 0.0
        %3339 = vmatprep.subr.mxu0 0.0
        %3340 = vmatpush1.msra.mxu0 0.0
        %3341 = vmatprep.subr.mxu0 0.0
        %3342 = vmatpush1.msra.mxu0 0.0
        %3343 = vmatprep.subr.mxu0 0.0
        %3344 = vmatpush1.msra.mxu0 0.0
        %3345 = vmatprep.subr.mxu0 0.0
        %3346 = vmatpush1.msra.mxu0 0.0
        %3347 = vmatprep.subr.mxu0 0.0
        %3348 = vmatpush1.msra.mxu0 0.0
        %3349 = vmatprep.subr.mxu0 0.0
        %3350 = vmatpush1.msra.mxu0 0.0
        %3351 = vmatprep.subr.mxu0 0.0
        %3352 = vmatpush1.msra.mxu0 0.0
        %3353 = vmatprep.subr.mxu0 0.0
        %3354 = vmatpush1.msra.mxu0 0.0
        %3355 = vmatprep.subr.mxu0 0.0
        %3356 = vmatpush1.msra.mxu0 0.0
        %3357 = vmatprep.subr.mxu0 0.0
        %3358 = vmatpush1.msra.mxu0 0.0
        %3359 = vmatprep.subr.mxu0 0.0
        %3360 = vmatpush1.msra.mxu0 0.0
        %3361 = vmatprep.subr.mxu0 0.0
        %3362 = vmatpush1.msra.mxu0 0.0
        %3363 = vmatprep.subr.mxu0 0.0
        %3364 = vmatpush1.msra.mxu0 0.0
        %3365 = vmatprep.subr.mxu0 0.0
        %3366 = vmatpush1.msra.mxu0 0.0
        %3367 = vmatprep.subr.mxu0 0.0
        %3368 = vmatpush1.msra.mxu0 0.0
        %3369 = vmatprep.mubr.f32.mxu0 0.0
        %3370 = vmatmul.mubr.f32.gmra.mrb[0].mxu0 %v2406
        %v3371 = vpop.f32.mrb[0].mxu0
        %v3372 = vadd.f32 %v3147, %v3371
        %v3373 = vpop.f32.mrb[0].mxu0
        %3374 = vmatprep.mubr.f32.mxu0 0.0
        %3375 = vmatmul.mubr.f32.gmra.mrb[0].mxu0 %v2407
        %v3376 = vpop.f32.mrb[0].mxu0
        %v3377 = vadd.f32 %v3152, %v3376
        %v3378 = vpop.f32.mrb[0].mxu0
        %3379 = vmatprep.mubr.f32.mxu0 0.0
        %3380 = vmatmul.mubr.f32.gmra.mrb[0].mxu0 %v2408
        %v3381 = vpop.f32.mrb[0].mxu0
        %v3382 = vadd.f32 %v3157, %v3381
        %v3383 = vpop.f32.mrb[0].mxu0
        %3384 = vmatprep.mubr.f32.mxu0 0.0
        %3385 = vmatmul.mubr.f32.gmra.mrb[0].mxu0 %v2409
        %v3386 = vpop.f32.mrb[0].mxu0
        %v3387 = vadd.f32 %v3162, %v3386
        %v3388 = vpop.f32.mrb[0].mxu0
        %3389 = vmatprep.mubr.f32.mxu0 0.0
        %3390 = vmatmul.mubr.f32.gmra.mrb[0].mxu0 %v2410
        %v3391 = vpop.f32.mrb[0].mxu0
        %v3392 = vadd.f32 %v3167, %v3391
        %v3393 = vpop.f32.mrb[0].mxu0
        %3394 = vmatprep.mubr.f32.mxu0 0.0
        %3395 = vmatmul.mubr.f32.gmra.mrb[0].mxu0 %v2411
        %v3396 = vpop.f32.mrb[0].mxu0
        %v3397 = vadd.f32 %v3172, %v3396
        %v3398 = vpop.f32.mrb[0].mxu0
        %3399 = vmatprep.mubr.f32.mxu0 0.0
        %3400 = vmatmul.mubr.f32.gmra.mrb[0].mxu0 %v2412
        %v3401 = vpop.f32.mrb[0].mxu0
        %v3402 = vadd.f32 %v3177, %v3401
        %v3403 = vpop.f32.mrb[0].mxu0
        %3404 = vmatprep.mubr.f32.mxu0 0.0
        %3405 = vmatmul.mubr.f32.gmra.mrb[0].mxu0 %v2413
        %v3406 = vpop.f32.mrb[0].mxu0
        %v3407 = vadd.f32 %v3182, %v3406
        %v3408 = vpop.f32.mrb[0].mxu0
        %3409 = vmatprep.mubr.f32.mxu0 0.0
        %3410 = vmatmul.mubr.f32.gmra.mrb[0].mxu0 %v2414
        %v3411 = vpop.f32.mrb[0].mxu0
        %v3412 = vadd.f32 %v3187, %v3411
        %v3413 = vpop.f32.mrb[0].mxu0
        %3414 = vmatprep.mubr.f32.mxu0 0.0
        %3415 = vmatmul.mubr.f32.gmra.mrb[0].mxu0 %v2415
        %v3416 = vpop.f32.mrb[0].mxu0
        %v3417 = vadd.f32 %v3192, %v3416
        %v3418 = vpop.f32.mrb[0].mxu0
        %3419 = vmatprep.mubr.f32.mxu0 0.0
        %3420 = vmatmul.mubr.f32.gmra.mrb[0].mxu0 %v2416
        %v3421 = vpop.f32.mrb[0].mxu0
        %v3422 = vadd.f32 %v3197, %v3421
        %v3423 = vpop.f32.mrb[0].mxu0
        %3424 = vmatprep.mubr.f32.mxu0 0.0
        %3425 = vmatmul.mubr.f32.gmra.mrb[0].mxu0 %v2417
        %v3426 = vpop.f32.mrb[0].mxu0
        %v3427 = vadd.f32 %v3202, %v3426
        %v3428 = vpop.f32.mrb[0].mxu0
        %3429 = vmatprep.mubr.f32.mxu0 0.0
        %3430 = vmatmul.mubr.f32.gmra.mrb[0].mxu0 %v2418
        %v3431 = vpop.f32.mrb[0].mxu0
        %v3432 = vadd.f32 %v3207, %v3431
        %v3433 = vpop.f32.mrb[0].mxu0
        %3434 = vmatprep.mubr.f32.mxu0 0.0
        %3435 = vmatmul.mubr.f32.gmra.mrb[0].mxu0 %v2419
        %v3436 = vpop.f32.mrb[0].mxu0
        %v3437 = vadd.f32 %v3212, %v3436
        %v3438 = vpop.f32.mrb[0].mxu0
        %3439 = vmatprep.mubr.f32.mxu0 0.0
        %3440 = vmatmul.mubr.f32.gmra.mrb[0].mxu0 %v2420
        %v3441 = vpop.f32.mrb[0].mxu0
        %v3442 = vadd.f32 %v3217, %v3441
        %v3443 = vpop.f32.mrb[0].mxu0
        %3444 = vmatprep.mubr.f32.mxu0 0.0
        %3445 = vmatmul.mubr.f32.gmra.mrb[0].mxu0 %v2421
        %v3446 = vpop.f32.mrb[0].mxu0
        %v3447 = vadd.f32 %v3222, %v3446
        %v3448 = vpop.f32.mrb[0].mxu0
        %3449 = vmatprep.mubr.f32.mxu0 0.0
        %3450 = vmatmul.mubr.f32.gmra.mrb[0].mxu0 %v2422
        %v3451 = vpop.f32.mrb[0].mxu0
        %v3452 = vadd.f32 %v3227, %v3451
        %v3453 = vpop.f32.mrb[0].mxu0
        %3454 = vmatprep.mubr.f32.mxu0 0.0
        %3455 = vmatmul.mubr.f32.gmra.mrb[0].mxu0 %v2423
        %v3456 = vpop.f32.mrb[0].mxu0
        %v3457 = vadd.f32 %v3232, %v3456
        %v3458 = vpop.f32.mrb[0].mxu0
        %3459 = vmatprep.mubr.f32.mxu0 0.0
        %3460 = vmatmul.mubr.f32.gmra.mrb[0].mxu0 %v2424
        %v3461 = vpop.f32.mrb[0].mxu0
        %v3462 = vadd.f32 %v3237, %v3461
        %v3463 = vpop.f32.mrb[0].mxu0
        %3464 = vmatprep.mubr.f32.mxu0 0.0
        %3465 = vmatmul.mubr.f32.gmra.mrb[0].mxu0 %v2425
        %v3466 = vpop.f32.mrb[0].mxu0
        %v3467 = vadd.f32 %v3242, %v3466
        %v3468 = vpop.f32.mrb[0].mxu0
        %3469 = vmatprep.mubr.f32.mxu0 0.0
        %3470 = vmatmul.mubr.f32.gmra.mrb[0].mxu0 %v2426
        %v3471 = vpop.f32.mrb[0].mxu0
        %v3472 = vadd.f32 %v3247, %v3471
        %v3473 = vpop.f32.mrb[0].mxu0
        %3474 = vmatprep.mubr.f32.mxu0 0.0
        %3475 = vmatmul.mubr.f32.gmra.mrb[0].mxu0 %v2427
        %v3476 = vpop.f32.mrb[0].mxu0
        %v3477 = vadd.f32 %v3252, %v3476
        %v3478 = vpop.f32.mrb[0].mxu0
        %3479 = vmatprep.mubr.f32.mxu0 0.0
        %3480 = vmatmul.mubr.f32.gmra.mrb[0].mxu0 %v2428
        %v3481 = vpop.f32.mrb[0].mxu0
        %v3482 = vadd.f32 %v3257, %v3481
        %v3483 = vpop.f32.mrb[0].mxu0
        %3484 = vmatprep.mubr.f32.mxu0 0.0
        %3485 = vmatmul.mubr.f32.gmra.mrb[0].mxu0 %v2429
        %v3486 = vpop.f32.mrb[0].mxu0
        %v3487 = vadd.f32 %v3262, %v3486
        %v3488 = vpop.f32.mrb[0].mxu0
        %3489 = vmatprep.mubr.f32.mxu0 0.0
        %3490 = vmatmul.mubr.f32.gmra.mrb[0].mxu0 %v2430
        %v3491 = vpop.f32.mrb[0].mxu0
        %v3492 = vadd.f32 %v3267, %v3491
        %v3493 = vpop.f32.mrb[0].mxu0
        %3494 = vmatprep.mubr.f32.mxu0 0.0
        %3495 = vmatmul.mubr.f32.gmra.mrb[0].mxu0 %v2431
        %v3496 = vpop.f32.mrb[0].mxu0
        %v3497 = vadd.f32 %v3272, %v3496
        %v3498 = vpop.f32.mrb[0].mxu0
        %3499 = vmatprep.mubr.f32.mxu0 0.0
        %3500 = vmatmul.mubr.f32.gmra.mrb[0].mxu0 %v2432
        %v3501 = vpop.f32.mrb[0].mxu0
        %v3502 = vadd.f32 %v3277, %v3501
        %v3503 = vpop.f32.mrb[0].mxu0
        %3504 = vmatprep.mubr.f32.mxu0 0.0
        %3505 = vmatmul.mubr.f32.gmra.mrb[0].mxu0 %v2433
        %v3506 = vpop.f32.mrb[0].mxu0
        %v3507 = vadd.f32 %v3282, %v3506
        %v3508 = vpop.f32.mrb[0].mxu0
        %3509 = vmatprep.mubr.f32.mxu0 0.0
        %3510 = vmatmul.mubr.f32.gmra.mrb[0].mxu0 %v2434
        %v3511 = vpop.f32.mrb[0].mxu0
        %v3512 = vadd.f32 %v3287, %v3511
        %v3513 = vpop.f32.mrb[0].mxu0
        %3514 = vmatprep.mubr.f32.mxu0 0.0
        %3515 = vmatmul.mubr.f32.gmra.mrb[0].mxu0 %v2435
        %v3516 = vpop.f32.mrb[0].mxu0
        %v3517 = vadd.f32 %v3292, %v3516
        %v3518 = vpop.f32.mrb[0].mxu0
        %3519 = vmatprep.mubr.f32.mxu0 0.0
        %3520 = vmatmul.mubr.f32.gmra.mrb[0].mxu0 %v2436
        %v3521 = vpop.f32.mrb[0].mxu0
        %v3522 = vadd.f32 %v3297, %v3521
        %v3523 = vpop.f32.mrb[0].mxu0
        %3524 = vmatprep.mubr.f32.mxu0 0.0
        %3525 = vmatmul.mubr.f32.gmra.mrb[0].mxu0 %v2437
        %v3526 = vpop.f32.mrb[0].mxu0
        %v3527 = vadd.f32 %v3302, %v3526
        %v3528 = vpop.f32.mrb[0].mxu0
        %3529 = vdwg.mxu0
        %s3530 = scalar_lea.vmem [#allocation3], 48
        %v3531 = vld [vmem:[%s3530] sm:$0xff]
        %v3532 = vld [vmem:[%s3530 + $0x8] sm:$0xff]
        %v3533 = vld [vmem:[%s3530 + $0x18] sm:$0xff]
        %v3534 = vld [vmem:[%s3530 + $0x20] sm:$0xff]
        %v3535 = vld [vmem:[%s3530 + $0x30] sm:$0xff]
        %v3536 = vld [vmem:[%s3530 + $0x38] sm:$0xff]
        %v3537 = vld [vmem:[%s3530 + $0x48] sm:$0xff]
        %v3538 = vld [vmem:[%s3530 + $0x50] sm:$0xff]
        %v3539 = vld [vmem:[%s3530 + $0x60] sm:$0xff]
        %v3540 = vld [vmem:[%s3530 + $0x68] sm:$0xff]
        %v3541 = vld [vmem:[%s3530 + $0x78] sm:$0xff]
        %v3542 = vld [vmem:[%s3530 + $0x80] sm:$0xff]
        %v3543 = vld [vmem:[%s3530 + $0x90] sm:$0xff]
        %v3544 = vld [vmem:[%s3530 + $0x98] sm:$0xff]
        %v3545 = vld [vmem:[%s3530 + $0xa8] sm:$0xff]
        %v3546 = vld [vmem:[%s3530 + $0xb0] sm:$0xff]
        %v3547 = vld [vmem:[%s3530 + $0xc0] sm:$0xff]
        %v3548 = vld [vmem:[%s3530 + $0xc8] sm:$0xff]
        %v3549 = vld [vmem:[%s3530 + $0xd8] sm:$0xff]
        %v3550 = vld [vmem:[%s3530 + $0xe0] sm:$0xff]
        %v3551 = vld [vmem:[%s3530 + $0xf0] sm:$0xff]
        %v3552 = vld [vmem:[%s3530 + $0xf8] sm:$0xff]
        %v3553 = vld [vmem:[%s3530 + $0x108] sm:$0xff]
        %v3554 = vld [vmem:[%s3530 + $0x110] sm:$0xff]
        %v3555 = vld [vmem:[%s3530 + $0x120] sm:$0xff]
        %v3556 = vld [vmem:[%s3530 + $0x128] sm:$0xff]
        %v3557 = vld [vmem:[%s3530 + $0x138] sm:$0xff]
        %v3558 = vld [vmem:[%s3530 + $0x140] sm:$0xff]
        %v3559 = vld [vmem:[%s3530 + $0x150] sm:$0xff]
        %v3560 = vld [vmem:[%s3530 + $0x158] sm:$0xff]
        %v3561 = vld [vmem:[%s3530 + $0x168] sm:$0xff]
        %v3562 = vld [vmem:[%s3530 + $0x170] sm:$0xff]
        %v3563 = vld [vmem:[%s3530 + $0x1] sm:$0xff]
        %v3564 = vld [vmem:[%s3530 + $0x9] sm:$0xff]
        %v3565 = vld [vmem:[%s3530 + $0x19] sm:$0xff]
        %v3566 = vld [vmem:[%s3530 + $0x21] sm:$0xff]
        %v3567 = vld [vmem:[%s3530 + $0x31] sm:$0xff]
        %v3568 = vld [vmem:[%s3530 + $0x39] sm:$0xff]
        %v3569 = vld [vmem:[%s3530 + $0x49] sm:$0xff]
        %v3570 = vld [vmem:[%s3530 + $0x51] sm:$0xff]
        %v3571 = vld [vmem:[%s3530 + $0x61] sm:$0xff]
        %v3572 = vld [vmem:[%s3530 + $0x69] sm:$0xff]
        %v3573 = vld [vmem:[%s3530 + $0x79] sm:$0xff]
        %v3574 = vld [vmem:[%s3530 + $0x81] sm:$0xff]
        %v3575 = vld [vmem:[%s3530 + $0x91] sm:$0xff]
        %v3576 = vld [vmem:[%s3530 + $0x99] sm:$0xff]
        %v3577 = vld [vmem:[%s3530 + $0xa9] sm:$0xff]
        %v3578 = vld [vmem:[%s3530 + $0xb1] sm:$0xff]
        %v3579 = vld [vmem:[%s3530 + $0xc1] sm:$0xff]
        %v3580 = vld [vmem:[%s3530 + $0xc9] sm:$0xff]
        %v3581 = vld [vmem:[%s3530 + $0xd9] sm:$0xff]
        %v3582 = vld [vmem:[%s3530 + $0xe1] sm:$0xff]
        %v3583 = vld [vmem:[%s3530 + $0xf1] sm:$0xff]
        %v3584 = vld [vmem:[%s3530 + $0xf9] sm:$0xff]
        %v3585 = vld [vmem:[%s3530 + $0x109] sm:$0xff]
        %v3586 = vld [vmem:[%s3530 + $0x111] sm:$0xff]
        %v3587 = vld [vmem:[%s3530 + $0x121] sm:$0xff]
        %v3588 = vld [vmem:[%s3530 + $0x129] sm:$0xff]
        %v3589 = vld [vmem:[%s3530 + $0x139] sm:$0xff]
        %v3590 = vld [vmem:[%s3530 + $0x141] sm:$0xff]
        %v3591 = vld [vmem:[%s3530 + $0x151] sm:$0xff]
        %v3592 = vld [vmem:[%s3530 + $0x159] sm:$0xff]
        %v3593 = vld [vmem:[%s3530 + $0x169] sm:$0xff]
        %v3594 = vld [vmem:[%s3530 + $0x171] sm:$0xff]
        %v3595 = vld [vmem:[%s3530 + $0x2] sm:$0xff]
        %v3596 = vld [vmem:[%s3530 + $0xa] sm:$0xff]
        %v3597 = vld [vmem:[%s3530 + $0x1a] sm:$0xff]
        %v3598 = vld [vmem:[%s3530 + $0x22] sm:$0xff]
        %v3599 = vld [vmem:[%s3530 + $0x32] sm:$0xff]
        %v3600 = vld [vmem:[%s3530 + $0x3a] sm:$0xff]
        %v3601 = vld [vmem:[%s3530 + $0x4a] sm:$0xff]
        %v3602 = vld [vmem:[%s3530 + $0x52] sm:$0xff]
        %v3603 = vld [vmem:[%s3530 + $0x62] sm:$0xff]
        %v3604 = vld [vmem:[%s3530 + $0x6a] sm:$0xff]
        %v3605 = vld [vmem:[%s3530 + $0x7a] sm:$0xff]
        %v3606 = vld [vmem:[%s3530 + $0x82] sm:$0xff]
        %v3607 = vld [vmem:[%s3530 + $0x92] sm:$0xff]
        %v3608 = vld [vmem:[%s3530 + $0x9a] sm:$0xff]
        %v3609 = vld [vmem:[%s3530 + $0xaa] sm:$0xff]
        %v3610 = vld [vmem:[%s3530 + $0xb2] sm:$0xff]
        %v3611 = vld [vmem:[%s3530 + $0xc2] sm:$0xff]
        %v3612 = vld [vmem:[%s3530 + $0xca] sm:$0xff]
        %v3613 = vld [vmem:[%s3530 + $0xda] sm:$0xff]
        %v3614 = vld [vmem:[%s3530 + $0xe2] sm:$0xff]
        %v3615 = vld [vmem:[%s3530 + $0xf2] sm:$0xff]
        %v3616 = vld [vmem:[%s3530 + $0xfa] sm:$0xff]
        %v3617 = vld [vmem:[%s3530 + $0x10a] sm:$0xff]
        %v3618 = vld [vmem:[%s3530 + $0x112] sm:$0xff]
        %v3619 = vld [vmem:[%s3530 + $0x122] sm:$0xff]
        %v3620 = vld [vmem:[%s3530 + $0x12a] sm:$0xff]
        %v3621 = vld [vmem:[%s3530 + $0x13a] sm:$0xff]
        %v3622 = vld [vmem:[%s3530 + $0x142] sm:$0xff]
        %v3623 = vld [vmem:[%s3530 + $0x152] sm:$0xff]
        %v3624 = vld [vmem:[%s3530 + $0x15a] sm:$0xff]
        %v3625 = vld [vmem:[%s3530 + $0x16a] sm:$0xff]
        %v3626 = vld [vmem:[%s3530 + $0x172] sm:$0xff]
        %v3627 = vld [vmem:[#allocation9 + $0x300] sm:$0xff]
        %v3628 = vld [vmem:[#allocation9 + $0x308] sm:$0xff]
        %v3629 = vld [vmem:[#allocation9 + $0x310] sm:$0xff]
        %v3630 = vld [vmem:[#allocation9 + $0x318] sm:$0xff]
        %v3631 = vld [vmem:[#allocation9 + $0x320] sm:$0xff]
        %v3632 = vld [vmem:[#allocation9 + $0x328] sm:$0xff]
        %v3633 = vld [vmem:[#allocation9 + $0x330] sm:$0xff]
        %v3634 = vld [vmem:[#allocation9 + $0x338] sm:$0xff]
        %v3635 = vld [vmem:[#allocation9 + $0x340] sm:$0xff]
        %v3636 = vld [vmem:[#allocation9 + $0x348] sm:$0xff]
        %v3637 = vld [vmem:[#allocation9 + $0x350] sm:$0xff]
        %v3638 = vld [vmem:[#allocation9 + $0x358] sm:$0xff]
        %v3639 = vld [vmem:[#allocation9 + $0x360] sm:$0xff]
        %v3640 = vld [vmem:[#allocation9 + $0x368] sm:$0xff]
        %v3641 = vld [vmem:[#allocation9 + $0x370] sm:$0xff]
        %v3642 = vld [vmem:[#allocation9 + $0x378] sm:$0xff]
        %v3643 = vld [vmem:[#allocation9 + $0x380] sm:$0xff]
        %v3644 = vld [vmem:[#allocation9 + $0x388] sm:$0xff]
        %v3645 = vld [vmem:[#allocation9 + $0x390] sm:$0xff]
        %v3646 = vld [vmem:[#allocation9 + $0x398] sm:$0xff]
        %v3647 = vld [vmem:[#allocation9 + $0x3a0] sm:$0xff]
        %v3648 = vld [vmem:[#allocation9 + $0x3a8] sm:$0xff]
        %v3649 = vld [vmem:[#allocation9 + $0x3b0] sm:$0xff]
        %v3650 = vld [vmem:[#allocation9 + $0x3b8] sm:$0xff]
        %v3651 = vld [vmem:[#allocation9 + $0x3c0] sm:$0xff]
        %v3652 = vld [vmem:[#allocation9 + $0x3c8] sm:$0xff]
        %v3653 = vld [vmem:[#allocation9 + $0x3d0] sm:$0xff]
        %v3654 = vld [vmem:[#allocation9 + $0x3d8] sm:$0xff]
        %v3655 = vld [vmem:[#allocation9 + $0x3e0] sm:$0xff]
        %v3656 = vld [vmem:[#allocation9 + $0x3e8] sm:$0xff]
        %v3657 = vld [vmem:[#allocation9 + $0x3f0] sm:$0xff]
        %v3658 = vld [vmem:[#allocation9 + $0x3f8] sm:$0xff]
        %v3659 = vld [vmem:[#allocation9 + $0x400] sm:$0xff]
        %v3660 = vld [vmem:[#allocation9 + $0x408] sm:$0xff]
        %v3661 = vld [vmem:[#allocation9 + $0x410] sm:$0xff]
        %v3662 = vld [vmem:[#allocation9 + $0x418] sm:$0xff]
        %v3663 = vld [vmem:[#allocation9 + $0x420] sm:$0xff]
        %v3664 = vld [vmem:[#allocation9 + $0x428] sm:$0xff]
        %v3665 = vld [vmem:[#allocation9 + $0x430] sm:$0xff]
        %v3666 = vld [vmem:[#allocation9 + $0x438] sm:$0xff]
        %v3667 = vld [vmem:[#allocation9 + $0x440] sm:$0xff]
        %v3668 = vld [vmem:[#allocation9 + $0x448] sm:$0xff]
        %v3669 = vld [vmem:[#allocation9 + $0x450] sm:$0xff]
        %v3670 = vld [vmem:[#allocation9 + $0x458] sm:$0xff]
        %v3671 = vld [vmem:[#allocation9 + $0x460] sm:$0xff]
        %v3672 = vld [vmem:[#allocation9 + $0x468] sm:$0xff]
        %v3673 = vld [vmem:[#allocation9 + $0x470] sm:$0xff]
        %v3674 = vld [vmem:[#allocation9 + $0x478] sm:$0xff]
        %3675 = vmatprep.subr.mxu0 0.0
        %3676 = vmatpush1.msra.mxu0 %v3627
        %3677 = vmatprep.subr.mxu0 0.0
        %3678 = vmatpush1.msra.mxu0 %v3628
        %3679 = vmatprep.subr.mxu0 0.0
        %3680 = vmatpush1.msra.mxu0 %v3629
        %3681 = vmatprep.subr.mxu0 0.0
        %3682 = vmatpush1.msra.mxu0 %v3630
        %3683 = vmatprep.subr.mxu0 0.0
        %3684 = vmatpush1.msra.mxu0 %v3631
        %3685 = vmatprep.subr.mxu0 0.0
        %3686 = vmatpush1.msra.mxu0 %v3632
        %3687 = vmatprep.subr.mxu0 0.0
        %3688 = vmatpush1.msra.mxu0 %v3633
        %3689 = vmatprep.subr.mxu0 0.0
        %3690 = vmatpush1.msra.mxu0 %v3634
        %3691 = vmatprep.subr.mxu0 0.0
        %3692 = vmatpush1.msra.mxu0 %v3635
        %3693 = vmatprep.subr.mxu0 0.0
        %3694 = vmatpush1.msra.mxu0 %v3636
        %3695 = vmatprep.subr.mxu0 0.0
        %3696 = vmatpush1.msra.mxu0 %v3637
        %3697 = vmatprep.subr.mxu0 0.0
        %3698 = vmatpush1.msra.mxu0 %v3638
        %3699 = vmatprep.subr.mxu0 0.0
        %3700 = vmatpush1.msra.mxu0 %v3639
        %3701 = vmatprep.subr.mxu0 0.0
        %3702 = vmatpush1.msra.mxu0 %v3640
        %3703 = vmatprep.subr.mxu0 0.0
        %3704 = vmatpush1.msra.mxu0 %v3641
        %3705 = vmatprep.subr.mxu0 0.0
        %3706 = vmatpush1.msra.mxu0 %v3642
        %3707 = vmatprep.subr.mxu0 0.0
        %3708 = vmatpush1.msra.mxu0 %v3643
        %3709 = vmatprep.subr.mxu0 0.0
        %3710 = vmatpush1.msra.mxu0 %v3644
        %3711 = vmatprep.subr.mxu0 0.0
        %3712 = vmatpush1.msra.mxu0 %v3645
        %3713 = vmatprep.subr.mxu0 0.0
        %3714 = vmatpush1.msra.mxu0 %v3646
        %3715 = vmatprep.subr.mxu0 0.0
        %3716 = vmatpush1.msra.mxu0 %v3647
        %3717 = vmatprep.subr.mxu0 0.0
        %3718 = vmatpush1.msra.mxu0 %v3648
        %3719 = vmatprep.subr.mxu0 0.0
        %3720 = vmatpush1.msra.mxu0 %v3649
        %3721 = vmatprep.subr.mxu0 0.0
        %3722 = vmatpush1.msra.mxu0 %v3650
        %3723 = vmatprep.subr.mxu0 0.0
        %3724 = vmatpush1.msra.mxu0 %v3651
        %3725 = vmatprep.subr.mxu0 0.0
        %3726 = vmatpush1.msra.mxu0 %v3652
        %3727 = vmatprep.subr.mxu0 0.0
        %3728 = vmatpush1.msra.mxu0 %v3653
        %3729 = vmatprep.subr.mxu0 0.0
        %3730 = vmatpush1.msra.mxu0 %v3654
        %3731 = vmatprep.subr.mxu0 0.0
        %3732 = vmatpush1.msra.mxu0 %v3655
        %3733 = vmatprep.subr.mxu0 0.0
        %3734 = vmatpush1.msra.mxu0 %v3656
        %3735 = vmatprep.subr.mxu0 0.0
        %3736 = vmatpush1.msra.mxu0 %v3657
        %3737 = vmatprep.subr.mxu0 0.0
        %3738 = vmatpush1.msra.mxu0 %v3658
        %3739 = vmatprep.mubr.f32.mxu0 %v3563
        %3740 = vmatmul.mubr.f32.gmra.mrb[0].mxu0 %v3531
        %v3741 = vpop.f32.mrb[0].mxu0
        %v3742 = vadd.f32 0.0, %v3741
        %v3743 = vpop.f32.mrb[0].mxu0
        %3744 = vmatprep.mubr.f32.mxu0 %v3564
        %3745 = vmatmul.mubr.f32.gmra.mrb[0].mxu0 %v3532
        %v3746 = vpop.f32.mrb[0].mxu0
        %v3747 = vadd.f32 0.0, %v3746
        %v3748 = vpop.f32.mrb[0].mxu0
        %3749 = vmatprep.mubr.f32.mxu0 %v3565
        %3750 = vmatmul.mubr.f32.gmra.mrb[0].mxu0 %v3533
        %v3751 = vpop.f32.mrb[0].mxu0
        %v3752 = vadd.f32 0.0, %v3751
        %v3753 = vpop.f32.mrb[0].mxu0
        %3754 = vmatprep.mubr.f32.mxu0 %v3566
        %3755 = vmatmul.mubr.f32.gmra.mrb[0].mxu0 %v3534
        %v3756 = vpop.f32.mrb[0].mxu0
        %v3757 = vadd.f32 0.0, %v3756
        %v3758 = vpop.f32.mrb[0].mxu0
        %3759 = vmatprep.mubr.f32.mxu0 %v3567
        %3760 = vmatmul.mubr.f32.gmra.mrb[0].mxu0 %v3535
        %v3761 = vpop.f32.mrb[0].mxu0
        %v3762 = vadd.f32 0.0, %v3761
        %v3763 = vpop.f32.mrb[0].mxu0
        %3764 = vmatprep.mubr.f32.mxu0 %v3568
        %3765 = vmatmul.mubr.f32.gmra.mrb[0].mxu0 %v3536
        %v3766 = vpop.f32.mrb[0].mxu0
        %v3767 = vadd.f32 0.0, %v3766
        %v3768 = vpop.f32.mrb[0].mxu0
        %3769 = vmatprep.mubr.f32.mxu0 %v3569
        %3770 = vmatmul.mubr.f32.gmra.mrb[0].mxu0 %v3537
        %v3771 = vpop.f32.mrb[0].mxu0
        %v3772 = vadd.f32 0.0, %v3771
        %v3773 = vpop.f32.mrb[0].mxu0
        %3774 = vmatprep.mubr.f32.mxu0 %v3570
        %3775 = vmatmul.mubr.f32.gmra.mrb[0].mxu0 %v3538
        %v3776 = vpop.f32.mrb[0].mxu0
        %v3777 = vadd.f32 0.0, %v3776
        %v3778 = vpop.f32.mrb[0].mxu0
        %3779 = vmatprep.mubr.f32.mxu0 %v3571
        %3780 = vmatmul.mubr.f32.gmra.mrb[0].mxu0 %v3539
        %v3781 = vpop.f32.mrb[0].mxu0
        %v3782 = vadd.f32 0.0, %v3781
        %v3783 = vpop.f32.mrb[0].mxu0
        %3784 = vmatprep.mubr.f32.mxu0 %v3572
        %3785 = vmatmul.mubr.f32.gmra.mrb[0].mxu0 %v3540
        %v3786 = vpop.f32.mrb[0].mxu0
        %v3787 = vadd.f32 0.0, %v3786
        %v3788 = vpop.f32.mrb[0].mxu0
        %3789 = vmatprep.mubr.f32.mxu0 %v3573
        %3790 = vmatmul.mubr.f32.gmra.mrb[0].mxu0 %v3541
        %v3791 = vpop.f32.mrb[0].mxu0
        %v3792 = vadd.f32 0.0, %v3791
        %v3793 = vpop.f32.mrb[0].mxu0
        %3794 = vmatprep.mubr.f32.mxu0 %v3574
        %3795 = vmatmul.mubr.f32.gmra.mrb[0].mxu0 %v3542
        %v3796 = vpop.f32.mrb[0].mxu0
        %v3797 = vadd.f32 0.0, %v3796
        %v3798 = vpop.f32.mrb[0].mxu0
        %3799 = vmatprep.mubr.f32.mxu0 %v3575
        %3800 = vmatmul.mubr.f32.gmra.mrb[0].mxu0 %v3543
        %v3801 = vpop.f32.mrb[0].mxu0
        %v3802 = vadd.f32 0.0, %v3801
        %v3803 = vpop.f32.mrb[0].mxu0
        %3804 = vmatprep.mubr.f32.mxu0 %v3576
        %3805 = vmatmul.mubr.f32.gmra.mrb[0].mxu0 %v3544
        %v3806 = vpop.f32.mrb[0].mxu0
        %v3807 = vadd.f32 0.0, %v3806
        %v3808 = vpop.f32.mrb[0].mxu0
        %3809 = vmatprep.mubr.f32.mxu0 %v3577
        %3810 = vmatmul.mubr.f32.gmra.mrb[0].mxu0 %v3545
        %v3811 = vpop.f32.mrb[0].mxu0
        %v3812 = vadd.f32 0.0, %v3811
        %v3813 = vpop.f32.mrb[0].mxu0
        %3814 = vmatprep.mubr.f32.mxu0 %v3578
        %3815 = vmatmul.mubr.f32.gmra.mrb[0].mxu0 %v3546
        %v3816 = vpop.f32.mrb[0].mxu0
        %v3817 = vadd.f32 0.0, %v3816
        %v3818 = vpop.f32.mrb[0].mxu0
        %3819 = vmatprep.mubr.f32.mxu0 %v3579
        %3820 = vmatmul.mubr.f32.gmra.mrb[0].mxu0 %v3547
        %v3821 = vpop.f32.mrb[0].mxu0
        %v3822 = vadd.f32 0.0, %v3821
        %v3823 = vpop.f32.mrb[0].mxu0
        %3824 = vmatprep.mubr.f32.mxu0 %v3580
        %3825 = vmatmul.mubr.f32.gmra.mrb[0].mxu0 %v3548
        %v3826 = vpop.f32.mrb[0].mxu0
        %v3827 = vadd.f32 0.0, %v3826
        %v3828 = vpop.f32.mrb[0].mxu0
        %3829 = vmatprep.mubr.f32.mxu0 %v3581
        %3830 = vmatmul.mubr.f32.gmra.mrb[0].mxu0 %v3549
        %v3831 = vpop.f32.mrb[0].mxu0
        %v3832 = vadd.f32 0.0, %v3831
        %v3833 = vpop.f32.mrb[0].mxu0
        %3834 = vmatprep.mubr.f32.mxu0 %v3582
        %3835 = vmatmul.mubr.f32.gmra.mrb[0].mxu0 %v3550
        %v3836 = vpop.f32.mrb[0].mxu0
        %v3837 = vadd.f32 0.0, %v3836
        %v3838 = vpop.f32.mrb[0].mxu0
        %3839 = vmatprep.mubr.f32.mxu0 %v3583
        %3840 = vmatmul.mubr.f32.gmra.mrb[0].mxu0 %v3551
        %v3841 = vpop.f32.mrb[0].mxu0
        %v3842 = vadd.f32 0.0, %v3841
        %v3843 = vpop.f32.mrb[0].mxu0
        %3844 = vmatprep.mubr.f32.mxu0 %v3584
        %3845 = vmatmul.mubr.f32.gmra.mrb[0].mxu0 %v3552
        %v3846 = vpop.f32.mrb[0].mxu0
        %v3847 = vadd.f32 0.0, %v3846
        %v3848 = vpop.f32.mrb[0].mxu0
        %3849 = vmatprep.mubr.f32.mxu0 %v3585
        %3850 = vmatmul.mubr.f32.gmra.mrb[0].mxu0 %v3553
        %v3851 = vpop.f32.mrb[0].mxu0
        %v3852 = vadd.f32 0.0, %v3851
        %v3853 = vpop.f32.mrb[0].mxu0
        %3854 = vmatprep.mubr.f32.mxu0 %v3586
        %3855 = vmatmul.mubr.f32.gmra.mrb[0].mxu0 %v3554
        %v3856 = vpop.f32.mrb[0].mxu0
        %v3857 = vadd.f32 0.0, %v3856
        %v3858 = vpop.f32.mrb[0].mxu0
        %3859 = vmatprep.mubr.f32.mxu0 %v3587
        %3860 = vmatmul.mubr.f32.gmra.mrb[0].mxu0 %v3555
        %v3861 = vpop.f32.mrb[0].mxu0
        %v3862 = vadd.f32 0.0, %v3861
        %v3863 = vpop.f32.mrb[0].mxu0
        %3864 = vmatprep.mubr.f32.mxu0 %v3588
        %3865 = vmatmul.mubr.f32.gmra.mrb[0].mxu0 %v3556
        %v3866 = vpop.f32.mrb[0].mxu0
        %v3867 = vadd.f32 0.0, %v3866
        %v3868 = vpop.f32.mrb[0].mxu0
        %3869 = vmatprep.mubr.f32.mxu0 %v3589
        %3870 = vmatmul.mubr.f32.gmra.mrb[0].mxu0 %v3557
        %v3871 = vpop.f32.mrb[0].mxu0
        %v3872 = vadd.f32 0.0, %v3871
        %v3873 = vpop.f32.mrb[0].mxu0
        %3874 = vmatprep.mubr.f32.mxu0 %v3590
        %3875 = vmatmul.mubr.f32.gmra.mrb[0].mxu0 %v3558
        %v3876 = vpop.f32.mrb[0].mxu0
        %v3877 = vadd.f32 0.0, %v3876
        %v3878 = vpop.f32.mrb[0].mxu0
        %3879 = vmatprep.mubr.f32.mxu0 %v3591
        %3880 = vmatmul.mubr.f32.gmra.mrb[0].mxu0 %v3559
        %v3881 = vpop.f32.mrb[0].mxu0
        %v3882 = vadd.f32 0.0, %v3881
        %v3883 = vpop.f32.mrb[0].mxu0
        %3884 = vmatprep.mubr.f32.mxu0 %v3592
        %3885 = vmatmul.mubr.f32.gmra.mrb[0].mxu0 %v3560
        %v3886 = vpop.f32.mrb[0].mxu0
        %v3887 = vadd.f32 0.0, %v3886
        %v3888 = vpop.f32.mrb[0].mxu0
        %3889 = vmatprep.mubr.f32.mxu0 %v3593
        %3890 = vmatmul.mubr.f32.gmra.mrb[0].mxu0 %v3561
        %v3891 = vpop.f32.mrb[0].mxu0
        %v3892 = vadd.f32 0.0, %v3891
        %v3893 = vpop.f32.mrb[0].mxu0
        %3894 = vmatprep.mubr.f32.mxu0 %v3594
        %3895 = vmatmul.mubr.f32.gmra.mrb[0].mxu0 %v3562
        %v3896 = vpop.f32.mrb[0].mxu0
        %v3897 = vadd.f32 0.0, %v3896
        %v3898 = vpop.f32.mrb[0].mxu0
        %3899 = vdwg.mxu0
        %3900 = vmatprep.subr.mxu0 0.0
        %3901 = vmatpush1.msra.mxu0 %v3659
        %3902 = vmatprep.subr.mxu0 0.0
        %3903 = vmatpush1.msra.mxu0 %v3660
        %3904 = vmatprep.subr.mxu0 0.0
        %3905 = vmatpush1.msra.mxu0 %v3661
        %3906 = vmatprep.subr.mxu0 0.0
        %3907 = vmatpush1.msra.mxu0 %v3662
        %3908 = vmatprep.subr.mxu0 0.0
        %3909 = vmatpush1.msra.mxu0 %v3663
        %3910 = vmatprep.subr.mxu0 0.0
        %3911 = vmatpush1.msra.mxu0 %v3664
        %3912 = vmatprep.subr.mxu0 0.0
        %3913 = vmatpush1.msra.mxu0 %v3665
        %3914 = vmatprep.subr.mxu0 0.0
        %3915 = vmatpush1.msra.mxu0 %v3666
        %3916 = vmatprep.subr.mxu0 0.0
        %3917 = vmatpush1.msra.mxu0 %v3667
        %3918 = vmatprep.subr.mxu0 0.0
        %3919 = vmatpush1.msra.mxu0 %v3668
        %3920 = vmatprep.subr.mxu0 0.0
        %3921 = vmatpush1.msra.mxu0 %v3669
        %3922 = vmatprep.subr.mxu0 0.0
        %3923 = vmatpush1.msra.mxu0 %v3670
        %3924 = vmatprep.subr.mxu0 0.0
        %3925 = vmatpush1.msra.mxu0 %v3671
        %3926 = vmatprep.subr.mxu0 0.0
        %3927 = vmatpush1.msra.mxu0 %v3672
        %3928 = vmatprep.subr.mxu0 0.0
        %3929 = vmatpush1.msra.mxu0 %v3673
        %3930 = vmatprep.subr.mxu0 0.0
        %3931 = vmatpush1.msra.mxu0 %v3674
        %3932 = vmatprep.subr.mxu0 0.0
        %3933 = vmatpush1.msra.mxu0 0.0
        %3934 = vmatprep.subr.mxu0 0.0
        %3935 = vmatpush1.msra.mxu0 0.0
        %3936 = vmatprep.subr.mxu0 0.0
        %3937 = vmatpush1.msra.mxu0 0.0
        %3938 = vmatprep.subr.mxu0 0.0
        %3939 = vmatpush1.msra.mxu0 0.0
        %3940 = vmatprep.subr.mxu0 0.0
        %3941 = vmatpush1.msra.mxu0 0.0
        %3942 = vmatprep.subr.mxu0 0.0
        %3943 = vmatpush1.msra.mxu0 0.0
        %3944 = vmatprep.subr.mxu0 0.0
        %3945 = vmatpush1.msra.mxu0 0.0
        %3946 = vmatprep.subr.mxu0 0.0
        %3947 = vmatpush1.msra.mxu0 0.0
        %3948 = vmatprep.subr.mxu0 0.0
        %3949 = vmatpush1.msra.mxu0 0.0
        %3950 = vmatprep.subr.mxu0 0.0
        %3951 = vmatpush1.msra.mxu0 0.0
        %3952 = vmatprep.subr.mxu0 0.0
        %3953 = vmatpush1.msra.mxu0 0.0
        %3954 = vmatprep.subr.mxu0 0.0
        %3955 = vmatpush1.msra.mxu0 0.0
        %3956 = vmatprep.subr.mxu0 0.0
        %3957 = vmatpush1.msra.mxu0 0.0
        %3958 = vmatprep.subr.mxu0 0.0
        %3959 = vmatpush1.msra.mxu0 0.0
        %3960 = vmatprep.subr.mxu0 0.0
        %3961 = vmatpush1.msra.mxu0 0.0
        %3962 = vmatprep.subr.mxu0 0.0
        %3963 = vmatpush1.msra.mxu0 0.0
        %3964 = vmatprep.mubr.f32.mxu0 0.0
        %3965 = vmatmul.mubr.f32.gmra.mrb[0].mxu0 %v3595
        %v3966 = vpop.f32.mrb[0].mxu0
        %v3967 = vadd.f32 %v3742, %v3966
        %v3968 = vpop.f32.mrb[0].mxu0
        %3969 = vmatprep.mubr.f32.mxu0 0.0
        %3970 = vmatmul.mubr.f32.gmra.mrb[0].mxu0 %v3596
        %v3971 = vpop.f32.mrb[0].mxu0
        %v3972 = vadd.f32 %v3747, %v3971
        %v3973 = vpop.f32.mrb[0].mxu0
        %3974 = vmatprep.mubr.f32.mxu0 0.0
        %3975 = vmatmul.mubr.f32.gmra.mrb[0].mxu0 %v3597
        %v3976 = vpop.f32.mrb[0].mxu0
        %v3977 = vadd.f32 %v3752, %v3976
        %v3978 = vpop.f32.mrb[0].mxu0
        %3979 = vmatprep.mubr.f32.mxu0 0.0
        %3980 = vmatmul.mubr.f32.gmra.mrb[0].mxu0 %v3598
        %v3981 = vpop.f32.mrb[0].mxu0
        %v3982 = vadd.f32 %v3757, %v3981
        %v3983 = vpop.f32.mrb[0].mxu0
        %3984 = vmatprep.mubr.f32.mxu0 0.0
        %3985 = vmatmul.mubr.f32.gmra.mrb[0].mxu0 %v3599
        %v3986 = vpop.f32.mrb[0].mxu0
        %v3987 = vadd.f32 %v3762, %v3986
        %v3988 = vpop.f32.mrb[0].mxu0
        %3989 = vmatprep.mubr.f32.mxu0 0.0
        %3990 = vmatmul.mubr.f32.gmra.mrb[0].mxu0 %v3600
        %v3991 = vpop.f32.mrb[0].mxu0
        %v3992 = vadd.f32 %v3767, %v3991
        %v3993 = vpop.f32.mrb[0].mxu0
        %3994 = vmatprep.mubr.f32.mxu0 0.0
        %3995 = vmatmul.mubr.f32.gmra.mrb[0].mxu0 %v3601
        %v3996 = vpop.f32.mrb[0].mxu0
        %v3997 = vadd.f32 %v3772, %v3996
        %v3998 = vpop.f32.mrb[0].mxu0
        %3999 = vmatprep.mubr.f32.mxu0 0.0
        %4000 = vmatmul.mubr.f32.gmra.mrb[0].mxu0 %v3602
        %v4001 = vpop.f32.mrb[0].mxu0
        %v4002 = vadd.f32 %v3777, %v4001
        %v4003 = vpop.f32.mrb[0].mxu0
        %4004 = vmatprep.mubr.f32.mxu0 0.0
        %4005 = vmatmul.mubr.f32.gmra.mrb[0].mxu0 %v3603
        %v4006 = vpop.f32.mrb[0].mxu0
        %v4007 = vadd.f32 %v3782, %v4006
        %v4008 = vpop.f32.mrb[0].mxu0
        %4009 = vmatprep.mubr.f32.mxu0 0.0
        %4010 = vmatmul.mubr.f32.gmra.mrb[0].mxu0 %v3604
        %v4011 = vpop.f32.mrb[0].mxu0
        %v4012 = vadd.f32 %v3787, %v4011
        %v4013 = vpop.f32.mrb[0].mxu0
        %4014 = vmatprep.mubr.f32.mxu0 0.0
        %4015 = vmatmul.mubr.f32.gmra.mrb[0].mxu0 %v3605
        %v4016 = vpop.f32.mrb[0].mxu0
        %v4017 = vadd.f32 %v3792, %v4016
        %v4018 = vpop.f32.mrb[0].mxu0
        %4019 = vmatprep.mubr.f32.mxu0 0.0
        %4020 = vmatmul.mubr.f32.gmra.mrb[0].mxu0 %v3606
        %v4021 = vpop.f32.mrb[0].mxu0
        %v4022 = vadd.f32 %v3797, %v4021
        %v4023 = vpop.f32.mrb[0].mxu0
        %4024 = vmatprep.mubr.f32.mxu0 0.0
        %4025 = vmatmul.mubr.f32.gmra.mrb[0].mxu0 %v3607
        %v4026 = vpop.f32.mrb[0].mxu0
        %v4027 = vadd.f32 %v3802, %v4026
        %v4028 = vpop.f32.mrb[0].mxu0
        %4029 = vmatprep.mubr.f32.mxu0 0.0
        %4030 = vmatmul.mubr.f32.gmra.mrb[0].mxu0 %v3608
        %v4031 = vpop.f32.mrb[0].mxu0
        %v4032 = vadd.f32 %v3807, %v4031
        %v4033 = vpop.f32.mrb[0].mxu0
        %4034 = vmatprep.mubr.f32.mxu0 0.0
        %4035 = vmatmul.mubr.f32.gmra.mrb[0].mxu0 %v3609
        %v4036 = vpop.f32.mrb[0].mxu0
        %v4037 = vadd.f32 %v3812, %v4036
        %v4038 = vpop.f32.mrb[0].mxu0
        %4039 = vmatprep.mubr.f32.mxu0 0.0
        %4040 = vmatmul.mubr.f32.gmra.mrb[0].mxu0 %v3610
        %v4041 = vpop.f32.mrb[0].mxu0
        %v4042 = vadd.f32 %v3817, %v4041
        %v4043 = vpop.f32.mrb[0].mxu0
        %4044 = vmatprep.mubr.f32.mxu0 0.0
        %4045 = vmatmul.mubr.f32.gmra.mrb[0].mxu0 %v3611
        %v4046 = vpop.f32.mrb[0].mxu0
        %v4047 = vadd.f32 %v3822, %v4046
        %v4048 = vpop.f32.mrb[0].mxu0
        %4049 = vmatprep.mubr.f32.mxu0 0.0
        %4050 = vmatmul.mubr.f32.gmra.mrb[0].mxu0 %v3612
        %v4051 = vpop.f32.mrb[0].mxu0
        %v4052 = vadd.f32 %v3827, %v4051
        %v4053 = vpop.f32.mrb[0].mxu0
        %4054 = vmatprep.mubr.f32.mxu0 0.0
        %4055 = vmatmul.mubr.f32.gmra.mrb[0].mxu0 %v3613
        %v4056 = vpop.f32.mrb[0].mxu0
        %v4057 = vadd.f32 %v3832, %v4056
        %v4058 = vpop.f32.mrb[0].mxu0
        %4059 = vmatprep.mubr.f32.mxu0 0.0
        %4060 = vmatmul.mubr.f32.gmra.mrb[0].mxu0 %v3614
        %v4061 = vpop.f32.mrb[0].mxu0
        %v4062 = vadd.f32 %v3837, %v4061
        %v4063 = vpop.f32.mrb[0].mxu0
        %4064 = vmatprep.mubr.f32.mxu0 0.0
        %4065 = vmatmul.mubr.f32.gmra.mrb[0].mxu0 %v3615
        %v4066 = vpop.f32.mrb[0].mxu0
        %v4067 = vadd.f32 %v3842, %v4066
        %v4068 = vpop.f32.mrb[0].mxu0
        %4069 = vmatprep.mubr.f32.mxu0 0.0
        %4070 = vmatmul.mubr.f32.gmra.mrb[0].mxu0 %v3616
        %v4071 = vpop.f32.mrb[0].mxu0
        %v4072 = vadd.f32 %v3847, %v4071
        %v4073 = vpop.f32.mrb[0].mxu0
        %4074 = vmatprep.mubr.f32.mxu0 0.0
        %4075 = vmatmul.mubr.f32.gmra.mrb[0].mxu0 %v3617
        %v4076 = vpop.f32.mrb[0].mxu0
        %v4077 = vadd.f32 %v3852, %v4076
        %v4078 = vpop.f32.mrb[0].mxu0
        %4079 = vmatprep.mubr.f32.mxu0 0.0
        %4080 = vmatmul.mubr.f32.gmra.mrb[0].mxu0 %v3618
        %v4081 = vpop.f32.mrb[0].mxu0
        %v4082 = vadd.f32 %v3857, %v4081
        %v4083 = vpop.f32.mrb[0].mxu0
        %4084 = vmatprep.mubr.f32.mxu0 0.0
        %4085 = vmatmul.mubr.f32.gmra.mrb[0].mxu0 %v3619
        %v4086 = vpop.f32.mrb[0].mxu0
        %v4087 = vadd.f32 %v3862, %v4086
        %v4088 = vpop.f32.mrb[0].mxu0
        %4089 = vmatprep.mubr.f32.mxu0 0.0
        %4090 = vmatmul.mubr.f32.gmra.mrb[0].mxu0 %v3620
        %v4091 = vpop.f32.mrb[0].mxu0
        %v4092 = vadd.f32 %v3867, %v4091
        %v4093 = vpop.f32.mrb[0].mxu0
        %4094 = vmatprep.mubr.f32.mxu0 0.0
        %4095 = vmatmul.mubr.f32.gmra.mrb[0].mxu0 %v3621
        %v4096 = vpop.f32.mrb[0].mxu0
        %v4097 = vadd.f32 %v3872, %v4096
        %v4098 = vpop.f32.mrb[0].mxu0
        %4099 = vmatprep.mubr.f32.mxu0 0.0
        %4100 = vmatmul.mubr.f32.gmra.mrb[0].mxu0 %v3622
        %v4101 = vpop.f32.mrb[0].mxu0
        %v4102 = vadd.f32 %v3877, %v4101
        %v4103 = vpop.f32.mrb[0].mxu0
        %4104 = vmatprep.mubr.f32.mxu0 0.0
        %4105 = vmatmul.mubr.f32.gmra.mrb[0].mxu0 %v3623
        %v4106 = vpop.f32.mrb[0].mxu0
        %v4107 = vadd.f32 %v3882, %v4106
        %v4108 = vpop.f32.mrb[0].mxu0
        %4109 = vmatprep.mubr.f32.mxu0 0.0
        %4110 = vmatmul.mubr.f32.gmra.mrb[0].mxu0 %v3624
        %v4111 = vpop.f32.mrb[0].mxu0
        %v4112 = vadd.f32 %v3887, %v4111
        %v4113 = vpop.f32.mrb[0].mxu0
        %4114 = vmatprep.mubr.f32.mxu0 0.0
        %4115 = vmatmul.mubr.f32.gmra.mrb[0].mxu0 %v3625
        %v4116 = vpop.f32.mrb[0].mxu0
        %v4117 = vadd.f32 %v3892, %v4116
        %v4118 = vpop.f32.mrb[0].mxu0
        %4119 = vmatprep.mubr.f32.mxu0 0.0
        %4120 = vmatmul.mubr.f32.gmra.mrb[0].mxu0 %v3626
        %v4121 = vpop.f32.mrb[0].mxu0
        %v4122 = vadd.f32 %v3897, %v4121
        %v4123 = vpop.f32.mrb[0].mxu0
        %4124 = vdwg.mxu0
        %v4125 = vadd.f32 %v3372, %v3967
        %v4126 = vadd.f32 %v3377, %v3972
        %v4127 = vadd.f32 %v3382, %v3977
        %v4128 = vadd.f32 %v3387, %v3982
        %v4129 = vadd.f32 %v3392, %v3987
        %v4130 = vadd.f32 %v3397, %v3992
        %v4131 = vadd.f32 %v3402, %v3997
        %v4132 = vadd.f32 %v3407, %v4002
        %v4133 = vadd.f32 %v3412, %v4007
        %v4134 = vadd.f32 %v3417, %v4012
        %v4135 = vadd.f32 %v3422, %v4017
        %v4136 = vadd.f32 %v3427, %v4022
        %v4137 = vadd.f32 %v3432, %v4027
        %v4138 = vadd.f32 %v3437, %v4032
        %v4139 = vadd.f32 %v3442, %v4037
        %v4140 = vadd.f32 %v3447, %v4042
        %v4141 = vadd.f32 %v3452, %v4047
        %v4142 = vadd.f32 %v3457, %v4052
        %v4143 = vadd.f32 %v3462, %v4057
        %v4144 = vadd.f32 %v3467, %v4062
        %v4145 = vadd.f32 %v3472, %v4067
        %v4146 = vadd.f32 %v3477, %v4072
        %v4147 = vadd.f32 %v3482, %v4077
        %v4148 = vadd.f32 %v3487, %v4082
        %v4149 = vadd.f32 %v3492, %v4087
        %v4150 = vadd.f32 %v3497, %v4092
        %v4151 = vadd.f32 %v3502, %v4097
        %v4152 = vadd.f32 %v3507, %v4102
        %v4153 = vadd.f32 %v3512, %v4107
        %v4154 = vadd.f32 %v3517, %v4112
        %v4155 = vadd.f32 %v3522, %v4117
        %v4156 = vadd.f32 %v3527, %v4122
        %v4157 = vld [vmem:[%s4] sm:$0x1]
        %v4159 = vlaneseq
        %v4160 = vshrl.u32 %v4159, 7
        %v4161 = vsub.s32 0, %v4160
        %v4162 = vrot.slane %v4157, %v4161
        %v4164 = vadd.f32 %v4125, %v4162
        %v4165 = vadd.f32 %v4126, %v4162
        %v4166 = vadd.f32 %v4127, %v4162
        %v4167 = vadd.f32 %v4128, %v4162
        %v4168 = vadd.f32 %v4129, %v4162
        %v4169 = vadd.f32 %v4130, %v4162
        %v4170 = vadd.f32 %v4131, %v4162
        %v4171 = vadd.f32 %v4132, %v4162
        %v4172 = vadd.f32 %v4133, %v4162
        %v4173 = vadd.f32 %v4134, %v4162
        %v4174 = vadd.f32 %v4135, %v4162
        %v4175 = vadd.f32 %v4136, %v4162
        %v4176 = vadd.f32 %v4137, %v4162
        %v4177 = vadd.f32 %v4138, %v4162
        %v4178 = vadd.f32 %v4139, %v4162
        %v4179 = vadd.f32 %v4140, %v4162
        %v4180 = vadd.f32 %v4141, %v4162
        %v4181 = vadd.f32 %v4142, %v4162
        %v4182 = vadd.f32 %v4143, %v4162
        %v4183 = vadd.f32 %v4144, %v4162
        %v4184 = vadd.f32 %v4145, %v4162
        %v4185 = vadd.f32 %v4146, %v4162
        %v4186 = vadd.f32 %v4147, %v4162
        %v4187 = vadd.f32 %v4148, %v4162
        %v4188 = vadd.f32 %v4149, %v4162
        %v4189 = vadd.f32 %v4150, %v4162
        %v4190 = vadd.f32 %v4151, %v4162
        %v4191 = vadd.f32 %v4152, %v4162
        %v4192 = vadd.f32 %v4153, %v4162
        %v4193 = vadd.f32 %v4154, %v4162
        %v4194 = vadd.f32 %v4155, %v4162
        %v4195 = vadd.f32 %v4156, %v4162
        %v4196 = vadd.f32 %v4164, %v358
        %v4197 = vadd.f32 %v4165, %v359
        %v4198 = vadd.f32 %v4166, %v360
        %v4199 = vadd.f32 %v4167, %v361
        %v4200 = vadd.f32 %v4168, %v362
        %v4201 = vadd.f32 %v4169, %v363
        %v4202 = vadd.f32 %v4170, %v364
        %v4203 = vadd.f32 %v4171, %v365
        %v4204 = vadd.f32 %v4172, %v366
        %v4205 = vadd.f32 %v4173, %v367
        %v4206 = vadd.f32 %v4174, %v368
        %v4207 = vadd.f32 %v4175, %v369
        %v4208 = vadd.f32 %v4176, %v370
        %v4209 = vadd.f32 %v4177, %v371
        %v4210 = vadd.f32 %v4178, %v372
        %v4211 = vadd.f32 %v4179, %v373
        %v4212 = vadd.f32 %v4180, %v374
        %v4213 = vadd.f32 %v4181, %v375
        %v4214 = vadd.f32 %v4182, %v376
        %v4215 = vadd.f32 %v4183, %v377
        %v4216 = vadd.f32 %v4184, %v378
        %v4217 = vadd.f32 %v4185, %v379
        %v4218 = vadd.f32 %v4186, %v380
        %v4219 = vadd.f32 %v4187, %v381
        %v4220 = vadd.f32 %v4188, %v382
        %v4221 = vadd.f32 %v4189, %v383
        %v4222 = vadd.f32 %v4190, %v384
        %v4223 = vadd.f32 %v4191, %v385
        %v4224 = vadd.f32 %v4192, %v386
        %v4225 = vadd.f32 %v4193, %v387
        %v4226 = vadd.f32 %v4194, %v388
        %v4227 = vadd.f32 %v4195, %v389
        %v4228 = vmax.f32 %v4196, 0.0
        %v4229 = vmax.f32 %v4197, 0.0
        %v4230 = vmax.f32 %v4198, 0.0
        %v4231 = vmax.f32 %v4199, 0.0
        %v4232 = vmax.f32 %v4200, 0.0
        %v4233 = vmax.f32 %v4201, 0.0
        %v4234 = vmax.f32 %v4202, 0.0
        %v4235 = vmax.f32 %v4203, 0.0
        %v4236 = vmax.f32 %v4204, 0.0
        %v4237 = vmax.f32 %v4205, 0.0
        %v4238 = vmax.f32 %v4206, 0.0
        %v4239 = vmax.f32 %v4207, 0.0
        %v4240 = vmax.f32 %v4208, 0.0
        %v4241 = vmax.f32 %v4209, 0.0
        %v4242 = vmax.f32 %v4210, 0.0
        %v4243 = vmax.f32 %v4211, 0.0
        %v4244 = vmax.f32 %v4212, 0.0
        %v4245 = vmax.f32 %v4213, 0.0
        %v4246 = vmax.f32 %v4214, 0.0
        %v4247 = vmax.f32 %v4215, 0.0
        %v4248 = vmax.f32 %v4216, 0.0
        %v4249 = vmax.f32 %v4217, 0.0
        %v4250 = vmax.f32 %v4218, 0.0
        %v4251 = vmax.f32 %v4219, 0.0
        %v4252 = vmax.f32 %v4220, 0.0
        %v4253 = vmax.f32 %v4221, 0.0
        %v4254 = vmax.f32 %v4222, 0.0
        %v4255 = vmax.f32 %v4223, 0.0
        %v4256 = vmax.f32 %v4224, 0.0
        %v4257 = vmax.f32 %v4225, 0.0
        %v4258 = vmax.f32 %v4226, 0.0
        %v4259 = vmax.f32 %v4227, 0.0
        %4260 = vst [vmem:[%s271] sm:$0xff] %v4228
        %4261 = vst [vmem:[%s271 + $0x8] sm:$0xff] %v4229
        %4262 = vst [vmem:[%s271 + $0x10] sm:$0xff] %v4230
        %4263 = vst [vmem:[%s271 + $0x18] sm:$0xff] %v4231
        %4264 = vst [vmem:[%s271 + $0x20] sm:$0xff] %v4232
        %4265 = vst [vmem:[%s271 + $0x28] sm:$0xff] %v4233
        %4266 = vst [vmem:[%s271 + $0x30] sm:$0xff] %v4234
        %4267 = vst [vmem:[%s271 + $0x38] sm:$0xff] %v4235
        %4268 = vst [vmem:[%s271 + $0x40] sm:$0xff] %v4236
        %4269 = vst [vmem:[%s271 + $0x48] sm:$0xff] %v4237
        %4270 = vst [vmem:[%s271 + $0x50] sm:$0xff] %v4238
        %4271 = vst [vmem:[%s271 + $0x58] sm:$0xff] %v4239
        %4272 = vst [vmem:[%s271 + $0x60] sm:$0xff] %v4240
        %4273 = vst [vmem:[%s271 + $0x68] sm:$0xff] %v4241
        %4274 = vst [vmem:[%s271 + $0x70] sm:$0xff] %v4242
        %4275 = vst [vmem:[%s271 + $0x78] sm:$0xff] %v4243
        %4276 = vst [vmem:[%s271 + $0x80] sm:$0xff] %v4244
        %4277 = vst [vmem:[%s271 + $0x88] sm:$0xff] %v4245
        %4278 = vst [vmem:[%s271 + $0x90] sm:$0xff] %v4246
        %4279 = vst [vmem:[%s271 + $0x98] sm:$0xff] %v4247
        %4280 = vst [vmem:[%s271 + $0xa0] sm:$0xff] %v4248
        %4281 = vst [vmem:[%s271 + $0xa8] sm:$0xff] %v4249
        %4282 = vst [vmem:[%s271 + $0xb0] sm:$0xff] %v4250
        %4283 = vst [vmem:[%s271 + $0xb8] sm:$0xff] %v4251
        %4284 = vst [vmem:[%s271 + $0xc0] sm:$0xff] %v4252
        %4285 = vst [vmem:[%s271 + $0xc8] sm:$0xff] %v4253
        %4286 = vst [vmem:[%s271 + $0xd0] sm:$0xff] %v4254
        %4287 = vst [vmem:[%s271 + $0xd8] sm:$0xff] %v4255
        %4288 = vst [vmem:[%s271 + $0xe0] sm:$0xff] %v4256
        %4289 = vst [vmem:[%s271 + $0xe8] sm:$0xff] %v4257
        %4290 = vst [vmem:[%s271 + $0xf0] sm:$0xff] %v4258
        %4291 = vst [vmem:[%s271 + $0xf8] sm:$0xff] %v4259
        %s4292 = sand.u32 %s141, 1
        %s4293 = scalar_lea.sflag [#allocation6], %s4292
        %s4294 = sand.u32 %s141, 1
        %s4295 = smul.addr %s4294, 256
        %s4296 = scalar_lea.vmem [#allocation10], %s4295
        // Predicated region
        $region53: #{tpu_custom_call.1} parent=39 // pred_check
          %p4297 = pneg %p151
        $region54: #{tpu_custom_call.1} parent=39 // pred_check_branch
          %4299 = sbr.rel (%p4297) target = $region56
        $region55: #{tpu_custom_call.1} parent=39 // pred_region
          %s4301 = ssub.s32 4096, 4096
          %4302 = vsyncadd %s4293, %s4301
          %s4303 = smul.addr %s23, 32
          %s4304 = smul.addr %s4303, 128
          %s4305 = scalar_lea.hbm %s5, %s4304
          %s4306 = sshll.u32 %s4296, 4
          %s4307 = int_to_ptr.vmem [resolvable:$true] %s4306
          %4312 = dma.vmem_to_hbm [thread:$0]  %s4307, 4096, %s4305, %s4293, 128, 128, 8
        $region56: #{tpu_custom_call.1} parent=39 // pred_fallthru
          _
      $region40: #{tpu_custom_call.1} parent=5 // pred_fallthru
        _
      %p4313 = scmp.le.s32.totalorder 2, %s18
      // Predicated region
      $region57: #{tpu_custom_call.1} parent=5 // pred_check
        %p4314 = pneg %p4313
      $region58: #{tpu_custom_call.1} parent=5 // pred_check_branch
        %4316 = sbr.rel (%p4314) target = $region60
      $region59: #{tpu_custom_call.1} parent=5 // pred_region
        %s4317 = ssub.s32 %s18, 2
        // Predicated region
        $region61: #{tpu_custom_call.1} parent=59 // pred_check
          %p4318 = pneg %p157
        $region62: #{tpu_custom_call.1} parent=59 // pred_check_branch
          %4320 = sbr.rel (%p4318) target = $region64
        $region63: #{tpu_custom_call.1} parent=59 // pred_region
          %s4321 = sand.u32 %s142, 1
          %s4322 = scalar_lea.sflag [#allocation6], %s4321
          %s4323 = sand.u32 %s142, 1
          %s4324 = smul.addr %s4323, 256
          %s4325 = scalar_lea.vmem [#allocation10], %s4324
          %4326 = dma.done %s4322, 4096
        $region64: #{tpu_custom_call.1} parent=59 // pred_fallthru
          _
      $region60: #{tpu_custom_call.1} parent=5 // pred_fallthru
        _
    $region6: #{tpu_custom_call.1} parent=1 // loop_footer
      %s22 = sadd.s32 1, %s18
    $region7: #{tpu_custom_call.1} parent=1 // loop_footer_branch
      %17 = sbr.rel target = $region3
    $region8: #{tpu_custom_call.1} parent=1 // loop_exit
      _
    %4327 = vsyncpa [#allocation5], 1
    %s4328 = scalar_lea.sflag [#allocation5], 1
    %4329 = vsyncpa %s4328, 1
    %4330 = vsyncpa [#allocation8], 1
    %4331 = vsyncpa [#allocation6], 1
    %s4332 = scalar_lea.sflag [#allocation6], 1
    %4333 = vsyncpa %s4332, 1

</llo_original>
